<compile_context>
chip_gen: v6e
topology: v6e:2x2x1
jax: 0.10.0
libtpu: 0.0.40
codegen_flags: <defaults>
</compile_context>

<pallas_src>
import functools

import numpy as np
import jax
import jax.numpy as jnp
from jax.experimental import pallas as pl
from jax.experimental.pallas import tpu as pltpu

# ---- module hyper-parameters (fixed by ModelEmbeddings.__init__) ----
CHAR_EMB = 50              # self.char_emb_size
KERNEL = 5                 # self.kernel_size
MWL = 21                   # self.max_word_length
W_OUT = MWL - KERNEL + 1   # conv1d output width (valid padding) = 17

# ---- configurable (small) sizes for the example run ----
EMBED_SIZE = 32            # embed_size
VOCAB_SIZE = 30            # len(vocab.char2id)
PAD_IDX = 0                # vocab.char2id['<pad>']


# ---------------------------------------------------------------------------
# Kernel: one tile of TN words.
#   ids_ref   : (TN, MWL)        int32 char ids
#   rep_ref   : (MWL, MWL*V)     f32   position-expansion matrix (ids -> ids[j // V])
#   modv_ref  : (1,   MWL*V)     f32   row of (j % V)
#   m_ref     : (MWL*V, W_OUT*E) f32   fused embedding+Toeplitz conv weight
#   bconv_ref : (1, E)           f32   conv bias
#   wcat_ref  : (E, 2E)          f32   [Wproj^T | Wgate^T]
#   bcat_ref  : (1, 2E)          f32   [bproj | bgate]
#   out_ref   : (TN, E)
# ---------------------------------------------------------------------------
def _char_cnn_highway_kernel(ids_ref, rep_ref, modv_ref, m_ref, bconv_ref,
                             wcat_ref, bcat_ref, out_ref):
    e = out_ref.shape[1]

    # ---- fused Embedding gather + Conv1d: one-hot(position, char) @ M -------------
    # Expand ids along the one-hot axis with a tiny MXU matmul (exact for small ints),
    # which avoids any in-kernel gather or awkward (TN, MWL, V) -> (TN, MWL*V) reshape.
    ids_f = ids_ref[...].astype(jnp.float32)                                    # (TN, MWL)
    ids_x = jnp.dot(ids_f, rep_ref[...], preferred_element_type=jnp.float32)    # (TN, MWL*V)
    onehot = (jnp.abs(ids_x - modv_ref[...]) < 0.5).astype(jnp.float32)         # exact 0/1
    # Single deep-K contraction: (TN, MWL*V) @ (MWL*V, W_OUT*E)  — the whole char-CNN.
    lin = jnp.dot(onehot, m_ref[...], preferred_element_type=jnp.float32)       # (TN, W_OUT*E)

    # ---- max-pool over the W_OUT conv positions -----------------------------------
    # (bias add and ReLU commute with max, so they are applied once afterwards)
    pooled = lin[:, 0:e]
    for t in range(1, W_OUT):                    # static, fully unrolled lane slices
        pooled = jnp.maximum(pooled, lin[:, t * e:(t + 1) * e])
    pooled = jnp.maximum(pooled + bconv_ref[...], 0.0)                          # (TN, E)

    # ---- Highway: proj | gate fused into one (E, 2E) matmul ------------------------
    hg = jnp.dot(pooled, wcat_ref[...], preferred_element_type=jnp.float32) + bcat_ref[...]
    proj = jnp.maximum(hg[:, 0:e], 0.0)
    gate = jax.nn.sigmoid(hg[:, e:2 * e])
    hw = gate * proj + (1.0 - gate) * pooled

    # TODO(synk): nn.Dropout(0.3) is identity in eval mode; training-mode stochastic
    # dropout (pltpu.prng_seed / prng_random_bits) is intentionally not applied here.
    out_ref[...] = hw.astype(out_ref.dtype)


# ---------------------------------------------------------------------------
# Wrapper
# ---------------------------------------------------------------------------
@functools.partial(jax.jit, static_argnames=("tile_n",))
def model_embeddings_forward(input_tensor, kparams, tile_n=256):
    """input_tensor: (sentence_length, batch_size, max_word_length) int32 char ids.

    Returns (sentence_length, batch_size, embed_size) float32.
    tile_n: words per grid step; sweep 256-1024 on real shapes (must be a multiple of 8).
    """
    assert tile_n % 8 == 0
    L, B, mwl = input_tensor.shape
    assert mwl == MWL
    E = kparams["bconv"].shape[1]

    n = L * B
    ids = input_tensor.reshape(n, MWL).astype(jnp.int32)

    # Pad the word count up to a multiple of tile_n (pad rows use the <pad> char id = 0
    # which is always a valid index); padded outputs are sliced off below.
    n_pad = ((n + tile_n - 1) // tile_n) * tile_n
    if n_pad != n:
        ids = jnp.pad(ids, ((0, n_pad - n), (0, 0)))

    grid = (n_pad // tile_n,)
    out = pl.pallas_call(
        _char_cnn_highway_kernel,
        out_shape=jax.ShapeDtypeStruct((n_pad, E), jnp.float32),
        grid=grid,
        in_specs=[
            pl.BlockSpec((tile_n, MWL), lambda i: (i, 0)),
            # Weights: constant block index -> DMA'd once, resident across the grid.
            pl.BlockSpec(kparams["rep"].shape, lambda i: (0, 0)),
            pl.BlockSpec(kparams["modv"].shape, lambda i: (0, 0)),
            pl.BlockSpec(kparams["m_fused"].shape, lambda i: (0, 0)),
            pl.BlockSpec(kparams["bconv"].shape, lambda i: (0, 0)),
            pl.BlockSpec(kparams["wcat"].shape, lambda i: (0, 0)),
            pl.BlockSpec(kparams["bcat"].shape, lambda i: (0, 0)),
        ],
        out_specs=pl.BlockSpec((tile_n, E), lambda i: (i, 0)),
        compiler_params=pltpu.CompilerParams(
            dimension_semantics=("parallel",),            # shards grid across TCs on v7x
            vmem_limit_bytes=32 * 1024 * 1024,            # raises v5e's 16 MiB default
        ),
    )(ids, kparams["rep"], kparams["modv"], kparams["m_fused"],
      kparams["bconv"], kparams["wcat"], kparams["bcat"])

    return out[:n].reshape(L, B, E)


# ---------------------------------------------------------------------------
# Parameters
# ---------------------------------------------------------------------------
def init_params(key, embed_size=EMBED_SIZE, vocab_size=VOCAB_SIZE, pad_idx=PAD_IDX):
    """Canonical (PyTorch-shaped) synthetic parameters."""
    ks = jax.random.split(key, 5)
    emb = 0.1 * jax.random.normal(ks[0], (vocab_size, CHAR_EMB), jnp.float32)
    emb = emb.at[pad_idx].set(0.0)                             # padding_idx row is zero
    # nn.Conv1d(CHAR_EMB, embed_size, KERNEL): weight (out, in, K), bias (out,)
    wconv = 0.1 * jax.random.normal(ks[1], (embed_size, CHAR_EMB, KERNEL), jnp.float32)
    bconv = 0.1 * jax.random.normal(ks[2], (embed_size,), jnp.float32)
    # Highway: two nn.Linear(embed_size, embed_size): weight (out, in), bias (out,)
    wproj = 0.1 * jax.random.normal(ks[3], (embed_size, embed_size), jnp.float32)
    bproj = jnp.zeros((embed_size,), jnp.float32)
    wgate = 0.1 * jax.random.normal(ks[4], (embed_size, embed_size), jnp.float32)
    bgate = jnp.zeros((embed_size,), jnp.float32)
    return dict(emb=emb, wconv=wconv, bconv=bconv,
                wproj=wproj, bproj=bproj, wgate=wgate, bgate=bgate)


def pack_params(p):
    """Pre-bake kernel-ready parameters (pure init-time re-parameterization).

    The module computes, per word n with flattened embedding
        flat[j] = emb[ids[n, j // CHAR_EMB], j % CHAR_EMB],           j in [0, MWL*CHAR_EMB)
    reinterpreted by `.view(-1, ces, mwl)` as input_cnn[c_in, w] = flat[c_in*MWL + w].
    The conv is therefore a linear map of flat: a Toeplitz matrix T[j, t, e].  Folding the
    embedding table in gives M[(pos, char), (t, e)] so gather+conv becomes one matmul of
    the per-word one-hot against M.
    """
    emb = np.asarray(p["emb"], np.float64)        # (V, CHAR_EMB)
    wc = np.asarray(p["wconv"], np.float64)       # (E, CHAR_EMB, K)
    E = wc.shape[0]
    V = emb.shape[0]

    # Toeplitz over the flat 1050-wide word vector: j = c_in*MWL + w
    j = np.arange(MWL * CHAR_EMB)
    c_in = j // MWL
    w = j % MWL
    T = np.zeros((MWL * CHAR_EMB, W_OUT, E), np.float64)
    for t in range(W_OUT):
        k = w - t
        valid = (k >= 0) & (k < KERNEL)
        T[valid, t, :] = wc[:, c_in[valid], k[valid]].T            # (n_valid, E)

    # Fold the embedding table in: flat index j = pos*CHAR_EMB + chan.
    Tr = T.reshape(MWL, CHAR_EMB, W_OUT * E)
    M = np.einsum("vc,pcf->pvf", emb, Tr).reshape(MWL * V, W_OUT * E)

    # One-hot helpers (column index j2 = pos*V + char).
    j2 = np.arange(MWL * V)
    rep = (j2[None, :] // V == np.arange(MWL)[:, None]).astype(np.float32)   # (MWL, MWL*V)
    modv = (j2 % V).astype(np.float32)[None, :]                              # (1, MWL*V)

    # Highway proj|gate fused weight, transposed to (in, out).
    wcat = np.concatenate([np.asarray(p["wproj"]).T, np.asarray(p["wgate"]).T], axis=1)
    bcat = np.concatenate([np.asarray(p["bproj"]), np.asarray(p["bgate"])])[None, :]

    return {
        "rep": jnp.asarray(rep),
        "modv": jnp.asarray(modv),
        "m_fused": jnp.asarray(M, dtype=jnp.float32),
        "bconv": jnp.asarray(np.asarray(p["bconv"])[None, :], dtype=jnp.float32),
        "wcat": jnp.asarray(wcat, dtype=jnp.float32),
        "bcat": jnp.asarray(bcat, dtype=jnp.float32),
    }


# ---------------------------------------------------------------------------
# Pure-JAX reference of the exact PyTorch forward (eval mode)
# ---------------------------------------------------------------------------
def _reference_forward(input_tensor, p):
    L, B, _ = input_tensor.shape
    E = p["wconv"].shape[0]
    emb = jnp.take(p["emb"], input_tensor, axis=0)             # (L, B, MWL, CES)
    x = emb.reshape(L * B, CHAR_EMB, MWL)                      # the module's .view(-1, ces, mwl)
    cols = jnp.stack([x[:, :, t:t + KERNEL] for t in range(W_OUT)], axis=1)  # (N, W_OUT, CES, K)
    conv = jnp.einsum("ntck,eck->nte", cols, p["wconv"], precision="highest") + p["bconv"]
    pooled = jnp.max(jnp.maximum(conv, 0.0), axis=1)           # (N, E)
    proj = jnp.maximum(jnp.dot(pooled, p["wproj"].T, precision="highest") + p["bproj"], 0.0)
    gate = jax.nn.sigmoid(jnp.dot(pooled, p["wgate"].T, precision="highest") + p["bgate"])
    out = gate * proj + (1.0 - gate) * pooled
    return out.reshape(L, B, E)


if __name__ == "__main__":
    key = jax.random.PRNGKey(0)
    k_param, k_input = jax.random.split(key)

    params = init_params(k_param)
    kparams = pack_params(params)

    sentence_length, batch_size = 8, 2                         # N = 16 words
    input_tensor = jax.random.randint(
        k_input, (sentence_length, batch_size, MWL), 0, VOCAB_SIZE, dtype=jnp.int32)

    ref = _reference_forward(input_tensor, params)

    # Production config: large tile (exercises the remainder-padding path, grid = 1).
    out = jax.block_until_ready(model_embeddings_forward(input_tensor, kparams, tile_n=256))
    assert out.shape == (sentence_length, batch_size, EMBED_SIZE)
    assert jnp.allclose(out, ref, atol=1e-3, rtol=1e-3), "mismatch vs reference (tile_n=256)"

    # Small-tile config (exercises the multi-step grid path, no padding).
    out2 = jax.block_until_ready(model_embeddings_forward(input_tensor, kparams, tile_n=8))
    assert jnp.allclose(out2, ref, atol=1e-3, rtol=1e-3), "mismatch vs reference (tile_n=8)"

    print("KERNEL_OK")
</pallas_src>

<mosaic_0001>
module attributes {stable_mosaic.version = 11 : i64} {
  func.func @_char_cnn_highway_kernel(%arg0: i32, %arg1: memref<256x21xi32, #tpu.memory_space<vmem>>, %arg2: memref<21x630xf32, #tpu.memory_space<vmem>>, %arg3: memref<1x630xf32, #tpu.memory_space<vmem>>, %arg4: memref<630x544xf32, #tpu.memory_space<vmem>>, %arg5: memref<1x32xf32, #tpu.memory_space<vmem>>, %arg6: memref<32x64xf32, #tpu.memory_space<vmem>>, %arg7: memref<1x64xf32, #tpu.memory_space<vmem>>, %arg8: memref<256x32xf32, #tpu.memory_space<vmem>>) attributes {dimension_semantics = [#tpu.dimension_semantics<parallel>], iteration_bounds = array<i64: 1>, scalar_prefetch = 0 : i64, scratch_operands = 0 : i64, tpu.core_type = #tpu.core_type<tc>, window_params = [{transform_indices = @transform_0, window_bounds = array<i64: 256, 21>}, {pipeline_mode = #tpu.pipeline_mode<synchronous>, transform_indices = @transform_1, window_bounds = array<i64: 21, 630>}, {pipeline_mode = #tpu.pipeline_mode<synchronous>, transform_indices = @transform_2, window_bounds = array<i64: 1, 630>}, {pipeline_mode = #tpu.pipeline_mode<synchronous>, transform_indices = @transform_3, window_bounds = array<i64: 630, 544>}, {pipeline_mode = #tpu.pipeline_mode<synchronous>, transform_indices = @transform_4, window_bounds = array<i64: 1, 32>}, {pipeline_mode = #tpu.pipeline_mode<synchronous>, transform_indices = @transform_5, window_bounds = array<i64: 32, 64>}, {pipeline_mode = #tpu.pipeline_mode<synchronous>, transform_indices = @transform_6, window_bounds = array<i64: 1, 64>}, {transform_indices = @transform_7, window_bounds = array<i64: 256, 32>}]} {
    %c0 = arith.constant 0 : index
    %c0_0 = arith.constant 0 : index
    %0 = vector.load %arg1[%c0, %c0_0] : memref<256x21xi32, #tpu.memory_space<vmem>>, vector<256x21xi32>
    %1 = arith.sitofp %0 : vector<256x21xi32> to vector<256x21xf32>
    %c0_1 = arith.constant 0 : index
    %c0_2 = arith.constant 0 : index
    %2 = vector.load %arg2[%c0_1, %c0_2] : memref<21x630xf32, #tpu.memory_space<vmem>>, vector<21x630xf32>
    %cst = arith.constant dense<0.000000e+00> : vector<256x630xf32>
    %3 = tpu.matmul %1, %2, %cst {dimension_numbers = #tpu.dot_dimension_numbers<[1], [0], [0], [1], [0, 0, 1, 1], [], []>} : vector<256x21xf32>, vector<21x630xf32>, vector<256x630xf32> -> vector<256x630xf32>
    %c0_3 = arith.constant 0 : index
    %c0_4 = arith.constant 0 : index
    %4 = vector.load %arg3[%c0_3, %c0_4] : memref<1x630xf32, #tpu.memory_space<vmem>>, vector<1x630xf32>
    %5 = vector.broadcast %4 : vector<1x630xf32> to vector<256x630xf32>
    %6 = arith.subf %3, %5 : vector<256x630xf32>
    %7 = math.absf %6 : vector<256x630xf32>
    %cst_5 = arith.constant 5.000000e-01 : f32
    %8 = vector.broadcast %cst_5 : f32 to vector<256x630xf32>
    %9 = arith.cmpf olt, %7, %8 : vector<256x630xf32>
    %10 = arith.extui %9 : vector<256x630xi1> to vector<256x630xi32>
    %11 = arith.sitofp %10 : vector<256x630xi32> to vector<256x630xf32>
    %c0_6 = arith.constant 0 : index
    %c0_7 = arith.constant 0 : index
    %12 = vector.load %arg4[%c0_6, %c0_7] : memref<630x544xf32, #tpu.memory_space<vmem>>, vector<630x544xf32>
    %cst_8 = arith.constant dense<0.000000e+00> : vector<256x544xf32>
    %13 = tpu.matmul %11, %12, %cst_8 {dimension_numbers = #tpu.dot_dimension_numbers<[1], [0], [0], [1], [0, 0, 1, 1], [], []>} : vector<256x630xf32>, vector<630x544xf32>, vector<256x544xf32> -> vector<256x544xf32>
    %14 = vector.extract_strided_slice %13 {offsets = [0, 0], sizes = [256, 32], strides = [1, 1]} : vector<256x544xf32> to vector<256x32xf32>
    %15 = vector.extract_strided_slice %13 {offsets = [0, 32], sizes = [256, 32], strides = [1, 1]} : vector<256x544xf32> to vector<256x32xf32>
    %16 = arith.maximumf %14, %15 : vector<256x32xf32>
    %17 = vector.extract_strided_slice %13 {offsets = [0, 64], sizes = [256, 32], strides = [1, 1]} : vector<256x544xf32> to vector<256x32xf32>
    %18 = arith.maximumf %16, %17 : vector<256x32xf32>
    %19 = vector.extract_strided_slice %13 {offsets = [0, 96], sizes = [256, 32], strides = [1, 1]} : vector<256x544xf32> to vector<256x32xf32>
    %20 = arith.maximumf %18, %19 : vector<256x32xf32>
    %21 = vector.extract_strided_slice %13 {offsets = [0, 128], sizes = [256, 32], strides = [1, 1]} : vector<256x544xf32> to vector<256x32xf32>
    %22 = arith.maximumf %20, %21 : vector<256x32xf32>
    %23 = vector.extract_strided_slice %13 {offsets = [0, 160], sizes = [256, 32], strides = [1, 1]} : vector<256x544xf32> to vector<256x32xf32>
    %24 = arith.maximumf %22, %23 : vector<256x32xf32>
    %25 = vector.extract_strided_slice %13 {offsets = [0, 192], sizes = [256, 32], strides = [1, 1]} : vector<256x544xf32> to vector<256x32xf32>
    %26 = arith.maximumf %24, %25 : vector<256x32xf32>
    %27 = vector.extract_strided_slice %13 {offsets = [0, 224], sizes = [256, 32], strides = [1, 1]} : vector<256x544xf32> to vector<256x32xf32>
    %28 = arith.maximumf %26, %27 : vector<256x32xf32>
    %29 = vector.extract_strided_slice %13 {offsets = [0, 256], sizes = [256, 32], strides = [1, 1]} : vector<256x544xf32> to vector<256x32xf32>
    %30 = arith.maximumf %28, %29 : vector<256x32xf32>
    %31 = vector.extract_strided_slice %13 {offsets = [0, 288], sizes = [256, 32], strides = [1, 1]} : vector<256x544xf32> to vector<256x32xf32>
    %32 = arith.maximumf %30, %31 : vector<256x32xf32>
    %33 = vector.extract_strided_slice %13 {offsets = [0, 320], sizes = [256, 32], strides = [1, 1]} : vector<256x544xf32> to vector<256x32xf32>
    %34 = arith.maximumf %32, %33 : vector<256x32xf32>
    %35 = vector.extract_strided_slice %13 {offsets = [0, 352], sizes = [256, 32], strides = [1, 1]} : vector<256x544xf32> to vector<256x32xf32>
    %36 = arith.maximumf %34, %35 : vector<256x32xf32>
    %37 = vector.extract_strided_slice %13 {offsets = [0, 384], sizes = [256, 32], strides = [1, 1]} : vector<256x544xf32> to vector<256x32xf32>
    %38 = arith.maximumf %36, %37 : vector<256x32xf32>
    %39 = vector.extract_strided_slice %13 {offsets = [0, 416], sizes = [256, 32], strides = [1, 1]} : vector<256x544xf32> to vector<256x32xf32>
    %40 = arith.maximumf %38, %39 : vector<256x32xf32>
    %41 = vector.extract_strided_slice %13 {offsets = [0, 448], sizes = [256, 32], strides = [1, 1]} : vector<256x544xf32> to vector<256x32xf32>
    %42 = arith.maximumf %40, %41 : vector<256x32xf32>
    %43 = vector.extract_strided_slice %13 {offsets = [0, 480], sizes = [256, 32], strides = [1, 1]} : vector<256x544xf32> to vector<256x32xf32>
    %44 = arith.maximumf %42, %43 : vector<256x32xf32>
    %45 = vector.extract_strided_slice %13 {offsets = [0, 512], sizes = [256, 32], strides = [1, 1]} : vector<256x544xf32> to vector<256x32xf32>
    %46 = arith.maximumf %44, %45 : vector<256x32xf32>
    %c0_9 = arith.constant 0 : index
    %c0_10 = arith.constant 0 : index
    %47 = vector.load %arg5[%c0_9, %c0_10] : memref<1x32xf32, #tpu.memory_space<vmem>>, vector<1x32xf32>
    %48 = vector.broadcast %47 : vector<1x32xf32> to vector<256x32xf32>
    %49 = arith.addf %46, %48 : vector<256x32xf32>
    %cst_11 = arith.constant 0.000000e+00 : f32
    %50 = vector.broadcast %cst_11 : f32 to vector<256x32xf32>
    %51 = arith.maximumf %49, %50 : vector<256x32xf32>
    %c0_12 = arith.constant 0 : index
    %c0_13 = arith.constant 0 : index
    %52 = vector.load %arg6[%c0_12, %c0_13] : memref<32x64xf32, #tpu.memory_space<vmem>>, vector<32x64xf32>
    %cst_14 = arith.constant dense<0.000000e+00> : vector<256x64xf32>
    %53 = tpu.matmul %51, %52, %cst_14 {dimension_numbers = #tpu.dot_dimension_numbers<[1], [0], [0], [1], [0, 0, 1, 1], [], []>} : vector<256x32xf32>, vector<32x64xf32>, vector<256x64xf32> -> vector<256x64xf32>
    %c0_15 = arith.constant 0 : index
    %c0_16 = arith.constant 0 : index
    %54 = vector.load %arg7[%c0_15, %c0_16] : memref<1x64xf32, #tpu.memory_space<vmem>>, vector<1x64xf32>
    %55 = vector.broadcast %54 : vector<1x64xf32> to vector<256x64xf32>
    %56 = arith.addf %53, %55 : vector<256x64xf32>
    %57 = vector.extract_strided_slice %56 {offsets = [0, 0], sizes = [256, 32], strides = [1, 1]} : vector<256x64xf32> to vector<256x32xf32>
    %cst_17 = arith.constant 0.000000e+00 : f32
    %58 = vector.broadcast %cst_17 : f32 to vector<256x32xf32>
    %59 = arith.maximumf %57, %58 : vector<256x32xf32>
    %60 = vector.extract_strided_slice %56 {offsets = [0, 32], sizes = [256, 32], strides = [1, 1]} : vector<256x64xf32> to vector<256x32xf32>
    %61 = arith.negf %60 : vector<256x32xf32>
    %62 = math.exp %61 : vector<256x32xf32>
    %cst_18 = arith.constant 1.000000e+00 : f32
    %63 = vector.broadcast %cst_18 : f32 to vector<256x32xf32>
    %64 = arith.addf %63, %62 : vector<256x32xf32>
    %65 = arith.divf %63, %64 : vector<256x32xf32>
    %66 = arith.mulf %65, %59 : vector<256x32xf32>
    %cst_19 = arith.constant 1.000000e+00 : f32
    %67 = vector.broadcast %cst_19 : f32 to vector<256x32xf32>
    %68 = arith.subf %67, %65 : vector<256x32xf32>
    %69 = arith.mulf %68, %51 : vector<256x32xf32>
    %70 = arith.addf %66, %69 : vector<256x32xf32>
    %c0_20 = arith.constant 0 : index
    %c0_21 = arith.constant 0 : index
    %71 = vector.load %arg8[%c0_20, %c0_21] : memref<256x32xf32, #tpu.memory_space<vmem>>, vector<256x32xf32>
    tpu.vector_store %arg8[%c0_20, %c0_21], %70 {strides = array<i32>} : memref<256x32xf32, #tpu.memory_space<vmem>>, vector<256x32xf32>,
    return
  }
  func.func @transform_0(%arg0: i32) -> (i32, i32) {
    %c0_i32 = arith.constant 0 : i32
    %c0_i32_0 = arith.constant 0 : i32
    return %arg0, %c0_i32 : i32, i32
  }
  func.func @transform_1(%arg0: i32) -> (i32, i32) {
    %c0_i32 = arith.constant 0 : i32
    %c0_i32_0 = arith.constant 0 : i32
    %c0_i32_1 = arith.constant 0 : i32
    return %c0_i32, %c0_i32_0 : i32, i32
  }
  func.func @transform_2(%arg0: i32) -> (i32, i32) {
    %c0_i32 = arith.constant 0 : i32
    %c0_i32_0 = arith.constant 0 : i32
    %c0_i32_1 = arith.constant 0 : i32
    return %c0_i32, %c0_i32_0 : i32, i32
  }
  func.func @transform_3(%arg0: i32) -> (i32, i32) {
    %c0_i32 = arith.constant 0 : i32
    %c0_i32_0 = arith.constant 0 : i32
    %c0_i32_1 = arith.constant 0 : i32
    return %c0_i32, %c0_i32_0 : i32, i32
  }
  func.func @transform_4(%arg0: i32) -> (i32, i32) {
    %c0_i32 = arith.constant 0 : i32
    %c0_i32_0 = arith.constant 0 : i32
    %c0_i32_1 = arith.constant 0 : i32
    return %c0_i32, %c0_i32_0 : i32, i32
  }
  func.func @transform_5(%arg0: i32) -> (i32, i32) {
    %c0_i32 = arith.constant 0 : i32
    %c0_i32_0 = arith.constant 0 : i32
    %c0_i32_1 = arith.constant 0 : i32
    return %c0_i32, %c0_i32_0 : i32, i32
  }
  func.func @transform_6(%arg0: i32) -> (i32, i32) {
    %c0_i32 = arith.constant 0 : i32
    %c0_i32_0 = arith.constant 0 : i32
    %c0_i32_1 = arith.constant 0 : i32
    return %c0_i32, %c0_i32_0 : i32, i32
  }
  func.func @transform_7(%arg0: i32) -> (i32, i32) {
    %c0_i32 = arith.constant 0 : i32
    %c0_i32_0 = arith.constant 0 : i32
    return %arg0, %c0_i32 : i32, i32
  }
}

</mosaic_0001>

<llo_original>
// kernel: model_embeddings_forward.1
$region0: #{model_embeddings_forward.1}
  #allocation0 [shape = 'u32[]', space=smem, size = 0x4, offset = 0x4, fixed_abs, tag = 'smem constant byte address 0x4 - core index']
  #allocation1 [shape = 'u32[144,128]{1,0:T(1,128)}', space=vmem, size = 0x12000, scoped, tag = 'internal scratch']
  %s0 = inlined_call_operand.vmem [shape: s32[256,21], index: 0, kind: input, shape index: {}]
  %s1 = inlined_call_operand.vmem [shape: f32[21,630], index: 1, kind: input, shape index: {}]
  %s2 = inlined_call_operand.vmem [shape: f32[1,630], index: 2, kind: input, shape index: {}]
  %s3 = inlined_call_operand.vmem [shape: f32[630,544], index: 3, kind: input, shape index: {}]
  %s4 = inlined_call_operand.vmem [shape: f32[1,32], index: 4, kind: input, shape index: {}]
  %s5 = inlined_call_operand.vmem [shape: f32[32,64], index: 5, kind: input, shape index: {}]
  %s6 = inlined_call_operand.vmem [shape: f32[1,64], index: 6, kind: input, shape index: {}]
  %s7 = inlined_call_operand.vmem [shape: f32[256,32], index: 7, kind: output, shape index: {}]
  %s8 = sld [smem:[#allocation0]]
  $region38: #{model_embeddings_forward.1} parent=0
    _
  %s10 = ssub.s32 1, %s8
  %s11 = scalar_select 0, %s10, %s8
  // Predicated region
  $region2: #{model_embeddings_forward.1} parent=0 // pred_check
    _
  $region3: #{model_embeddings_forward.1} parent=0 // pred_check_branch
    %13 = sbr.rel (0) target = $region5
  $region4: #{model_embeddings_forward.1} parent=0 // pred_region
    _
  $region5: #{model_embeddings_forward.1} parent=0 // pred_fallthru
    _
  // Predicated region
  $region6: #{model_embeddings_forward.1} parent=0 // pred_check
    _
  $region7: #{model_embeddings_forward.1} parent=0 // pred_check_branch
    %15 = sbr.rel (0) target = $region9
  $region8: #{model_embeddings_forward.1} parent=0 // pred_region
    _
  $region9: #{model_embeddings_forward.1} parent=0 // pred_fallthru
    _
  // Predicated region
  $region10: #{model_embeddings_forward.1} parent=0 // pred_check
    _
  $region11: #{model_embeddings_forward.1} parent=0 // pred_check_branch
    %17 = sbr.rel (0) target = $region13
  $region12: #{model_embeddings_forward.1} parent=0 // pred_region
    _
  $region13: #{model_embeddings_forward.1} parent=0 // pred_fallthru
    _
  // Predicated region
  $region14: #{model_embeddings_forward.1} parent=0 // pred_check
    _
  $region15: #{model_embeddings_forward.1} parent=0 // pred_check_branch
    %19 = sbr.rel (0) target = $region17
  $region16: #{model_embeddings_forward.1} parent=0 // pred_region
    _
  $region17: #{model_embeddings_forward.1} parent=0 // pred_fallthru
    _
  // Predicated region
  $region18: #{model_embeddings_forward.1} parent=0 // pred_check
    _
  $region19: #{model_embeddings_forward.1} parent=0 // pred_check_branch
    %21 = sbr.rel (0) target = $region21
  $region20: #{model_embeddings_forward.1} parent=0 // pred_region
    _
  $region21: #{model_embeddings_forward.1} parent=0 // pred_fallthru
    _
  // Predicated region
  $region22: #{model_embeddings_forward.1} parent=0 // pred_check
    _
  $region23: #{model_embeddings_forward.1} parent=0 // pred_check_branch
    %23 = sbr.rel (0) target = $region25
  $region24: #{model_embeddings_forward.1} parent=0 // pred_region
    _
  $region25: #{model_embeddings_forward.1} parent=0 // pred_fallthru
    _
  // Predicated region
  $region26: #{model_embeddings_forward.1} parent=0 // pred_check
    _
  $region27: #{model_embeddings_forward.1} parent=0 // pred_check_branch
    %25 = sbr.rel (0) target = $region29
  $region28: #{model_embeddings_forward.1} parent=0 // pred_region
    _
  $region29: #{model_embeddings_forward.1} parent=0 // pred_fallthru
    _
  %v26 = vld [vmem:[%s0] sm:$0xff]
  %v27 = vld [vmem:[%s0 + $0x8] sm:$0xff]
  %v28 = vld [vmem:[%s0 + $0x10] sm:$0xff]
  %v29 = vld [vmem:[%s0 + $0x18] sm:$0xff]
  %v30 = vld [vmem:[%s0 + $0x20] sm:$0xff]
  %v31 = vld [vmem:[%s0 + $0x28] sm:$0xff]
  %v32 = vld [vmem:[%s0 + $0x30] sm:$0xff]
  %v33 = vld [vmem:[%s0 + $0x38] sm:$0xff]
  %v34 = vld [vmem:[%s0 + $0x40] sm:$0xff]
  %v35 = vld [vmem:[%s0 + $0x48] sm:$0xff]
  %v36 = vld [vmem:[%s0 + $0x50] sm:$0xff]
  %v37 = vld [vmem:[%s0 + $0x58] sm:$0xff]
  %v38 = vld [vmem:[%s0 + $0x60] sm:$0xff]
  %v39 = vld [vmem:[%s0 + $0x68] sm:$0xff]
  %v40 = vld [vmem:[%s0 + $0x70] sm:$0xff]
  %v41 = vld [vmem:[%s0 + $0x78] sm:$0xff]
  %v42 = vld [vmem:[%s0 + $0x80] sm:$0xff]
  %v43 = vld [vmem:[%s0 + $0x88] sm:$0xff]
  %v44 = vld [vmem:[%s0 + $0x90] sm:$0xff]
  %v45 = vld [vmem:[%s0 + $0x98] sm:$0xff]
  %v46 = vld [vmem:[%s0 + $0xa0] sm:$0xff]
  %v47 = vld [vmem:[%s0 + $0xa8] sm:$0xff]
  %v48 = vld [vmem:[%s0 + $0xb0] sm:$0xff]
  %v49 = vld [vmem:[%s0 + $0xb8] sm:$0xff]
  %v50 = vld [vmem:[%s0 + $0xc0] sm:$0xff]
  %v51 = vld [vmem:[%s0 + $0xc8] sm:$0xff]
  %v52 = vld [vmem:[%s0 + $0xd0] sm:$0xff]
  %v53 = vld [vmem:[%s0 + $0xd8] sm:$0xff]
  %v54 = vld [vmem:[%s0 + $0xe0] sm:$0xff]
  %v55 = vld [vmem:[%s0 + $0xe8] sm:$0xff]
  %v56 = vld [vmem:[%s0 + $0xf0] sm:$0xff]
  %v57 = vld [vmem:[%s0 + $0xf8] sm:$0xff]
  %v58 = vcvt.s32.f32 %v26
  %v59 = vcvt.s32.f32 %v27
  %v60 = vcvt.s32.f32 %v28
  %v61 = vcvt.s32.f32 %v29
  %v62 = vcvt.s32.f32 %v30
  %v63 = vcvt.s32.f32 %v31
  %v64 = vcvt.s32.f32 %v32
  %v65 = vcvt.s32.f32 %v33
  %v66 = vcvt.s32.f32 %v34
  %v67 = vcvt.s32.f32 %v35
  %v68 = vcvt.s32.f32 %v36
  %v69 = vcvt.s32.f32 %v37
  %v70 = vcvt.s32.f32 %v38
  %v71 = vcvt.s32.f32 %v39
  %v72 = vcvt.s32.f32 %v40
  %v73 = vcvt.s32.f32 %v41
  %v74 = vcvt.s32.f32 %v42
  %v75 = vcvt.s32.f32 %v43
  %v76 = vcvt.s32.f32 %v44
  %v77 = vcvt.s32.f32 %v45
  %v78 = vcvt.s32.f32 %v46
  %v79 = vcvt.s32.f32 %v47
  %v80 = vcvt.s32.f32 %v48
  %v81 = vcvt.s32.f32 %v49
  %v82 = vcvt.s32.f32 %v50
  %v83 = vcvt.s32.f32 %v51
  %v84 = vcvt.s32.f32 %v52
  %v85 = vcvt.s32.f32 %v53
  %v86 = vcvt.s32.f32 %v54
  %v87 = vcvt.s32.f32 %v55
  %v88 = vcvt.s32.f32 %v56
  %v89 = vcvt.s32.f32 %v57
  %v90 = vld [vmem:[%s1] sm:$0xff]
  %v91 = vld [vmem:[%s1 + $0x8] sm:$0xff]
  %v92 = vld [vmem:[%s1 + $0x10] sm:$0xff]
  %v93 = vld [vmem:[%s1 + $0x18] sm:$0xff]
  %v94 = vld [vmem:[%s1 + $0x20] sm:$0xff]
  %v95 = vld [vmem:[%s1 + $0x28] sm:$0xff]
  %v96 = vld [vmem:[%s1 + $0x30] sm:$0xff]
  %v97 = vld [vmem:[%s1 + $0x38] sm:$0xff]
  %v98 = vld [vmem:[%s1 + $0x40] sm:$0xff]
  %v99 = vld [vmem:[%s1 + $0x48] sm:$0xff]
  %v100 = vld [vmem:[%s1 + $0x50] sm:$0x1f]
  %v101 = vld [vmem:[%s1 + $0x58] sm:$0x1f]
  %v102 = vld [vmem:[%s1 + $0x60] sm:$0x1f]
  %v103 = vld [vmem:[%s1 + $0x68] sm:$0x1f]
  %v104 = vld [vmem:[%s1 + $0x70] sm:$0x1f]
  %vm105 = vcmask 171008
  %v107 = vsel %vm105, %v58, 0
  %v110 = vsel %vm105, %v59, 0
  %v113 = vsel %vm105, %v60, 0
  %v116 = vsel %vm105, %v61, 0
  %v119 = vsel %vm105, %v62, 0
  %v122 = vsel %vm105, %v63, 0
  %v125 = vsel %vm105, %v64, 0
  %v128 = vsel %vm105, %v65, 0
  %v131 = vsel %vm105, %v66, 0
  %v134 = vsel %vm105, %v67, 0
  %v137 = vsel %vm105, %v68, 0
  %v140 = vsel %vm105, %v69, 0
  %v143 = vsel %vm105, %v70, 0
  %v146 = vsel %vm105, %v71, 0
  %v149 = vsel %vm105, %v72, 0
  %v152 = vsel %vm105, %v73, 0
  %v155 = vsel %vm105, %v74, 0
  %v158 = vsel %vm105, %v75, 0
  %v161 = vsel %vm105, %v76, 0
  %v164 = vsel %vm105, %v77, 0
  %v167 = vsel %vm105, %v78, 0
  %v170 = vsel %vm105, %v79, 0
  %v173 = vsel %vm105, %v80, 0
  %v176 = vsel %vm105, %v81, 0
  %v179 = vsel %vm105, %v82, 0
  %v182 = vsel %vm105, %v83, 0
  %v185 = vsel %vm105, %v84, 0
  %v188 = vsel %vm105, %v85, 0
  %v191 = vsel %vm105, %v86, 0
  %v194 = vsel %vm105, %v87, 0
  %v197 = vsel %vm105, %v88, 0
  %v200 = vsel %vm105, %v89, 0
  %vm202 = vcmask 1044480
  %v204 = vsel %vm202, %v100, 0
  %v207 = vsel %vm202, %v101, 0
  %v210 = vsel %vm202, %v102, 0
  %v213 = vsel %vm202, %v103, 0
  %v216 = vsel %vm202, %v104, 0
  %218 = vmatprep.subr.mxu0 0.0
  %219 = vmatpush1.msra.mxu0 0.0
  %220 = vmatprep.subr.mxu0 0.0
  %221 = vmatpush1.msra.mxu0 0.0
  %222 = vmatprep.subr.mxu0 0.0
  %223 = vmatpush1.msra.mxu0 0.0
  %224 = vmatprep.subr.mxu0 0.0
  %225 = vmatpush1.msra.mxu0 0.0
  %226 = vmatprep.subr.mxu0 0.0
  %227 = vmatpush1.msra.mxu0 0.0
  %228 = vmatprep.subr.mxu0 0.0
  %229 = vmatpush1.msra.mxu0 0.0
  %230 = vmatprep.subr.mxu0 0.0
  %231 = vmatpush1.msra.mxu0 0.0
  %232 = vmatprep.subr.mxu0 0.0
  %233 = vmatpush1.msra.mxu0 0.0
  %234 = vmatprep.subr.mxu0 0.0
  %235 = vmatpush1.msra.mxu0 0.0
  %236 = vmatprep.subr.mxu0 0.0
  %237 = vmatpush1.msra.mxu0 0.0
  %238 = vmatprep.subr.mxu0 0.0
  %239 = vmatpush1.msra.mxu0 0.0
  %240 = vmatprep.subr.mxu0 0.0
  %241 = vmatpush1.msra.mxu0 0.0
  %242 = vmatprep.subr.mxu0 0.0
  %243 = vmatpush1.msra.mxu0 0.0
  %244 = vmatprep.subr.mxu0 %v207
  %245 = vmatpush1.msra.mxu0 %v204
  %246 = vmatprep.subr.mxu0 %v96
  %247 = vmatpush1.msra.mxu0 %v95
  %248 = vmatprep.subr.mxu0 %v91
  %249 = vmatpush1.msra.mxu0 %v90
  %250 = vmatprep.subr.mxu0 0.0
  %251 = vmatpush2.msra.mxu0 0.0
  %252 = vmatprep.subr.mxu0 0.0
  %253 = vmatpush2.msra.mxu0 0.0
  %254 = vmatprep.subr.mxu0 0.0
  %255 = vmatpush2.msra.mxu0 0.0
  %256 = vmatprep.subr.mxu0 0.0
  %257 = vmatpush2.msra.mxu0 0.0
  %258 = vmatprep.subr.mxu0 0.0
  %259 = vmatpush2.msra.mxu0 0.0
  %260 = vmatprep.subr.mxu0 0.0
  %261 = vmatpush2.msra.mxu0 0.0
  %262 = vmatprep.subr.mxu0 0.0
  %263 = vmatpush2.msra.mxu0 0.0
  %264 = vmatprep.subr.mxu0 0.0
  %265 = vmatpush2.msra.mxu0 0.0
  %266 = vmatprep.subr.mxu0 0.0
  %267 = vmatpush2.msra.mxu0 0.0
  %268 = vmatprep.subr.mxu0 0.0
  %269 = vmatpush2.msra.mxu0 0.0
  %270 = vmatprep.subr.mxu0 0.0
  %271 = vmatpush2.msra.mxu0 0.0
  %272 = vmatprep.subr.mxu0 0.0
  %273 = vmatpush2.msra.mxu0 0.0
  %274 = vmatprep.subr.mxu0 0.0
  %275 = vmatpush2.msra.mxu0 0.0
  %276 = vmatprep.subr.mxu0 0.0
  %277 = vmatpush2.msra.mxu0 0.0
  %278 = vmatprep.subr.mxu0 0.0
  %279 = vmatpush2.msra.mxu0 0.0
  %280 = vmatprep.subr.mxu0 0.0
  %281 = vmatpush2.msra.mxu0 0.0
  %282 = vmatprep.mubr.f32.mxu0 0.0
  %283 = vmatmul.mubr.f32.gmra.mxu0 %v107
  %v284 = vpop.f32.mrf.mxu0
  %v285 = vadd.f32 0.0, %v284
  %v286 = vpop.f32.mrf.mxu0
  %v287 = vadd.f32 0.0, %v286
  %288 = vmatprep.mubr.f32.mxu0 0.0
  %289 = vmatmul.mubr.f32.gmra.mxu0 %v110
  %v290 = vpop.f32.mrf.mxu0
  %v291 = vadd.f32 0.0, %v290
  %v292 = vpop.f32.mrf.mxu0
  %v293 = vadd.f32 0.0, %v292
  %294 = vmatprep.mubr.f32.mxu0 0.0
  %295 = vmatmul.mubr.f32.gmra.mxu0 %v113
  %v296 = vpop.f32.mrf.mxu0
  %v297 = vadd.f32 0.0, %v296
  %v298 = vpop.f32.mrf.mxu0
  %v299 = vadd.f32 0.0, %v298
  %300 = vmatprep.mubr.f32.mxu0 0.0
  %301 = vmatmul.mubr.f32.gmra.mxu0 %v116
  %v302 = vpop.f32.mrf.mxu0
  %v303 = vadd.f32 0.0, %v302
  %v304 = vpop.f32.mrf.mxu0
  %v305 = vadd.f32 0.0, %v304
  %306 = vmatprep.mubr.f32.mxu0 0.0
  %307 = vmatmul.mubr.f32.gmra.mxu0 %v119
  %v308 = vpop.f32.mrf.mxu0
  %v309 = vadd.f32 0.0, %v308
  %v310 = vpop.f32.mrf.mxu0
  %v311 = vadd.f32 0.0, %v310
  %312 = vmatprep.mubr.f32.mxu0 0.0
  %313 = vmatmul.mubr.f32.gmra.mxu0 %v122
  %v314 = vpop.f32.mrf.mxu0
  %v315 = vadd.f32 0.0, %v314
  %v316 = vpop.f32.mrf.mxu0
  %v317 = vadd.f32 0.0, %v316
  %318 = vmatprep.mubr.f32.mxu0 0.0
  %319 = vmatmul.mubr.f32.gmra.mxu0 %v125
  %v320 = vpop.f32.mrf.mxu0
  %v321 = vadd.f32 0.0, %v320
  %v322 = vpop.f32.mrf.mxu0
  %v323 = vadd.f32 0.0, %v322
  %324 = vmatprep.mubr.f32.mxu0 0.0
  %325 = vmatmul.mubr.f32.gmra.mxu0 %v128
  %v326 = vpop.f32.mrf.mxu0
  %v327 = vadd.f32 0.0, %v326
  %v328 = vpop.f32.mrf.mxu0
  %v329 = vadd.f32 0.0, %v328
  %330 = vmatprep.mubr.f32.mxu0 0.0
  %331 = vmatmul.mubr.f32.gmra.mxu0 %v131
  %v332 = vpop.f32.mrf.mxu0
  %v333 = vadd.f32 0.0, %v332
  %v334 = vpop.f32.mrf.mxu0
  %v335 = vadd.f32 0.0, %v334
  %336 = vmatprep.mubr.f32.mxu0 0.0
  %337 = vmatmul.mubr.f32.gmra.mxu0 %v134
  %v338 = vpop.f32.mrf.mxu0
  %v339 = vadd.f32 0.0, %v338
  %v340 = vpop.f32.mrf.mxu0
  %v341 = vadd.f32 0.0, %v340
  %342 = vmatprep.mubr.f32.mxu0 0.0
  %343 = vmatmul.mubr.f32.gmra.mxu0 %v137
  %v344 = vpop.f32.mrf.mxu0
  %v345 = vadd.f32 0.0, %v344
  %v346 = vpop.f32.mrf.mxu0
  %v347 = vadd.f32 0.0, %v346
  %348 = vmatprep.mubr.f32.mxu0 0.0
  %349 = vmatmul.mubr.f32.gmra.mxu0 %v140
  %v350 = vpop.f32.mrf.mxu0
  %v351 = vadd.f32 0.0, %v350
  %v352 = vpop.f32.mrf.mxu0
  %v353 = vadd.f32 0.0, %v352
  %354 = vmatprep.mubr.f32.mxu0 0.0
  %355 = vmatmul.mubr.f32.gmra.mxu0 %v143
  %v356 = vpop.f32.mrf.mxu0
  %v357 = vadd.f32 0.0, %v356
  %v358 = vpop.f32.mrf.mxu0
  %v359 = vadd.f32 0.0, %v358
  %360 = vmatprep.mubr.f32.mxu0 0.0
  %361 = vmatmul.mubr.f32.gmra.mxu0 %v146
  %v362 = vpop.f32.mrf.mxu0
  %v363 = vadd.f32 0.0, %v362
  %v364 = vpop.f32.mrf.mxu0
  %v365 = vadd.f32 0.0, %v364
  %366 = vmatprep.mubr.f32.mxu0 0.0
  %367 = vmatmul.mubr.f32.gmra.mxu0 %v149
  %v368 = vpop.f32.mrf.mxu0
  %v369 = vadd.f32 0.0, %v368
  %v370 = vpop.f32.mrf.mxu0
  %v371 = vadd.f32 0.0, %v370
  %372 = vmatprep.mubr.f32.mxu0 0.0
  %373 = vmatmul.mubr.f32.gmra.mxu0 %v152
  %v374 = vpop.f32.mrf.mxu0
  %v375 = vadd.f32 0.0, %v374
  %v376 = vpop.f32.mrf.mxu0
  %v377 = vadd.f32 0.0, %v376
  %378 = vmatprep.mubr.f32.mxu0 0.0
  %379 = vmatmul.mubr.f32.gmra.mxu0 %v155
  %v380 = vpop.f32.mrf.mxu0
  %v381 = vadd.f32 0.0, %v380
  %v382 = vpop.f32.mrf.mxu0
  %v383 = vadd.f32 0.0, %v382
  %384 = vmatprep.mubr.f32.mxu0 0.0
  %385 = vmatmul.mubr.f32.gmra.mxu0 %v158
  %v386 = vpop.f32.mrf.mxu0
  %v387 = vadd.f32 0.0, %v386
  %v388 = vpop.f32.mrf.mxu0
  %v389 = vadd.f32 0.0, %v388
  %390 = vmatprep.mubr.f32.mxu0 0.0
  %391 = vmatmul.mubr.f32.gmra.mxu0 %v161
  %v392 = vpop.f32.mrf.mxu0
  %v393 = vadd.f32 0.0, %v392
  %v394 = vpop.f32.mrf.mxu0
  %v395 = vadd.f32 0.0, %v394
  %396 = vmatprep.mubr.f32.mxu0 0.0
  %397 = vmatmul.mubr.f32.gmra.mxu0 %v164
  %v398 = vpop.f32.mrf.mxu0
  %v399 = vadd.f32 0.0, %v398
  %v400 = vpop.f32.mrf.mxu0
  %v401 = vadd.f32 0.0, %v400
  %402 = vmatprep.mubr.f32.mxu0 0.0
  %403 = vmatmul.mubr.f32.gmra.mxu0 %v167
  %v404 = vpop.f32.mrf.mxu0
  %v405 = vadd.f32 0.0, %v404
  %v406 = vpop.f32.mrf.mxu0
  %v407 = vadd.f32 0.0, %v406
  %408 = vmatprep.mubr.f32.mxu0 0.0
  %409 = vmatmul.mubr.f32.gmra.mxu0 %v170
  %v410 = vpop.f32.mrf.mxu0
  %v411 = vadd.f32 0.0, %v410
  %v412 = vpop.f32.mrf.mxu0
  %v413 = vadd.f32 0.0, %v412
  %414 = vmatprep.mubr.f32.mxu0 0.0
  %415 = vmatmul.mubr.f32.gmra.mxu0 %v173
  %v416 = vpop.f32.mrf.mxu0
  %v417 = vadd.f32 0.0, %v416
  %v418 = vpop.f32.mrf.mxu0
  %v419 = vadd.f32 0.0, %v418
  %420 = vmatprep.mubr.f32.mxu0 0.0
  %421 = vmatmul.mubr.f32.gmra.mxu0 %v176
  %v422 = vpop.f32.mrf.mxu0
  %v423 = vadd.f32 0.0, %v422
  %v424 = vpop.f32.mrf.mxu0
  %v425 = vadd.f32 0.0, %v424
  %426 = vmatprep.mubr.f32.mxu0 0.0
  %427 = vmatmul.mubr.f32.gmra.mxu0 %v179
  %v428 = vpop.f32.mrf.mxu0
  %v429 = vadd.f32 0.0, %v428
  %v430 = vpop.f32.mrf.mxu0
  %v431 = vadd.f32 0.0, %v430
  %432 = vmatprep.mubr.f32.mxu0 0.0
  %433 = vmatmul.mubr.f32.gmra.mxu0 %v182
  %v434 = vpop.f32.mrf.mxu0
  %v435 = vadd.f32 0.0, %v434
  %v436 = vpop.f32.mrf.mxu0
  %v437 = vadd.f32 0.0, %v436
  %438 = vmatprep.mubr.f32.mxu0 0.0
  %439 = vmatmul.mubr.f32.gmra.mxu0 %v185
  %v440 = vpop.f32.mrf.mxu0
  %v441 = vadd.f32 0.0, %v440
  %v442 = vpop.f32.mrf.mxu0
  %v443 = vadd.f32 0.0, %v442
  %444 = vmatprep.mubr.f32.mxu0 0.0
  %445 = vmatmul.mubr.f32.gmra.mxu0 %v188
  %v446 = vpop.f32.mrf.mxu0
  %v447 = vadd.f32 0.0, %v446
  %v448 = vpop.f32.mrf.mxu0
  %v449 = vadd.f32 0.0, %v448
  %450 = vmatprep.mubr.f32.mxu0 0.0
  %451 = vmatmul.mubr.f32.gmra.mxu0 %v191
  %v452 = vpop.f32.mrf.mxu0
  %v453 = vadd.f32 0.0, %v452
  %v454 = vpop.f32.mrf.mxu0
  %v455 = vadd.f32 0.0, %v454
  %456 = vmatprep.mubr.f32.mxu0 0.0
  %457 = vmatmul.mubr.f32.gmra.mxu0 %v194
  %v458 = vpop.f32.mrf.mxu0
  %v459 = vadd.f32 0.0, %v458
  %v460 = vpop.f32.mrf.mxu0
  %v461 = vadd.f32 0.0, %v460
  %462 = vmatprep.mubr.f32.mxu0 0.0
  %463 = vmatmul.mubr.f32.gmra.mxu0 %v197
  %v464 = vpop.f32.mrf.mxu0
  %v465 = vadd.f32 0.0, %v464
  %v466 = vpop.f32.mrf.mxu0
  %v467 = vadd.f32 0.0, %v466
  %468 = vmatprep.mubr.f32.mxu0 0.0
  %469 = vmatmul.mubr.f32.gmra.mxu0 %v200
  %v470 = vpop.f32.mrf.mxu0
  %v471 = vadd.f32 0.0, %v470
  %v472 = vpop.f32.mrf.mxu0
  %v473 = vadd.f32 0.0, %v472
  %474 = vdwg.mxu0
  %475 = vmatprep.subr.mxu0 0.0
  %476 = vmatpush1.msra.mxu0 0.0
  %477 = vmatprep.subr.mxu0 0.0
  %478 = vmatpush1.msra.mxu0 0.0
  %479 = vmatprep.subr.mxu0 0.0
  %480 = vmatpush1.msra.mxu0 0.0
  %481 = vmatprep.subr.mxu0 0.0
  %482 = vmatpush1.msra.mxu0 0.0
  %483 = vmatprep.subr.mxu0 0.0
  %484 = vmatpush1.msra.mxu0 0.0
  %485 = vmatprep.subr.mxu0 0.0
  %486 = vmatpush1.msra.mxu0 0.0
  %487 = vmatprep.subr.mxu0 0.0
  %488 = vmatpush1.msra.mxu0 0.0
  %489 = vmatprep.subr.mxu0 0.0
  %490 = vmatpush1.msra.mxu0 0.0
  %491 = vmatprep.subr.mxu0 0.0
  %492 = vmatpush1.msra.mxu0 0.0
  %493 = vmatprep.subr.mxu0 0.0
  %494 = vmatpush1.msra.mxu0 0.0
  %495 = vmatprep.subr.mxu0 0.0
  %496 = vmatpush1.msra.mxu0 0.0
  %497 = vmatprep.subr.mxu0 0.0
  %498 = vmatpush1.msra.mxu0 0.0
  %499 = vmatprep.subr.mxu0 0.0
  %500 = vmatpush1.msra.mxu0 0.0
  %501 = vmatprep.subr.mxu0 %v213
  %502 = vmatpush1.msra.mxu0 %v210
  %503 = vmatprep.subr.mxu0 %v98
  %504 = vmatpush1.msra.mxu0 %v97
  %505 = vmatprep.subr.mxu0 %v93
  %506 = vmatpush1.msra.mxu0 %v92
  %507 = vmatprep.subr.mxu0 0.0
  %508 = vmatpush2.msra.mxu0 0.0
  %509 = vmatprep.subr.mxu0 0.0
  %510 = vmatpush2.msra.mxu0 0.0
  %511 = vmatprep.subr.mxu0 0.0
  %512 = vmatpush2.msra.mxu0 0.0
  %513 = vmatprep.subr.mxu0 0.0
  %514 = vmatpush2.msra.mxu0 0.0
  %515 = vmatprep.subr.mxu0 0.0
  %516 = vmatpush2.msra.mxu0 0.0
  %517 = vmatprep.subr.mxu0 0.0
  %518 = vmatpush2.msra.mxu0 0.0
  %519 = vmatprep.subr.mxu0 0.0
  %520 = vmatpush2.msra.mxu0 0.0
  %521 = vmatprep.subr.mxu0 0.0
  %522 = vmatpush2.msra.mxu0 0.0
  %523 = vmatprep.subr.mxu0 0.0
  %524 = vmatpush2.msra.mxu0 0.0
  %525 = vmatprep.subr.mxu0 0.0
  %526 = vmatpush2.msra.mxu0 0.0
  %527 = vmatprep.subr.mxu0 0.0
  %528 = vmatpush2.msra.mxu0 0.0
  %529 = vmatprep.subr.mxu0 0.0
  %530 = vmatpush2.msra.mxu0 0.0
  %531 = vmatprep.subr.mxu0 0.0
  %532 = vmatpush2.msra.mxu0 0.0
  %533 = vmatprep.subr.mxu0 0.0
  %534 = vmatpush2.msra.mxu0 0.0
  %535 = vmatprep.subr.mxu0 0.0
  %536 = vmatpush2.msra.mxu0 0.0
  %537 = vmatprep.subr.mxu0 0.0
  %538 = vmatpush2.msra.mxu0 0.0
  %539 = vmatprep.mubr.f32.mxu0 0.0
  %540 = vmatmul.mubr.f32.gmra.mxu0 %v107
  %v541 = vpop.f32.mrf.mxu0
  %v542 = vadd.f32 0.0, %v541
  %v543 = vpop.f32.mrf.mxu0
  %v544 = vadd.f32 0.0, %v543
  %545 = vmatprep.mubr.f32.mxu0 0.0
  %546 = vmatmul.mubr.f32.gmra.mxu0 %v110
  %v547 = vpop.f32.mrf.mxu0
  %v548 = vadd.f32 0.0, %v547
  %v549 = vpop.f32.mrf.mxu0
  %v550 = vadd.f32 0.0, %v549
  %551 = vmatprep.mubr.f32.mxu0 0.0
  %552 = vmatmul.mubr.f32.gmra.mxu0 %v113
  %v553 = vpop.f32.mrf.mxu0
  %v554 = vadd.f32 0.0, %v553
  %v555 = vpop.f32.mrf.mxu0
  %v556 = vadd.f32 0.0, %v555
  %557 = vmatprep.mubr.f32.mxu0 0.0
  %558 = vmatmul.mubr.f32.gmra.mxu0 %v116
  %v559 = vpop.f32.mrf.mxu0
  %v560 = vadd.f32 0.0, %v559
  %v561 = vpop.f32.mrf.mxu0
  %v562 = vadd.f32 0.0, %v561
  %563 = vmatprep.mubr.f32.mxu0 0.0
  %564 = vmatmul.mubr.f32.gmra.mxu0 %v119
  %v565 = vpop.f32.mrf.mxu0
  %v566 = vadd.f32 0.0, %v565
  %v567 = vpop.f32.mrf.mxu0
  %v568 = vadd.f32 0.0, %v567
  %569 = vmatprep.mubr.f32.mxu0 0.0
  %570 = vmatmul.mubr.f32.gmra.mxu0 %v122
  %v571 = vpop.f32.mrf.mxu0
  %v572 = vadd.f32 0.0, %v571
  %v573 = vpop.f32.mrf.mxu0
  %v574 = vadd.f32 0.0, %v573
  %575 = vmatprep.mubr.f32.mxu0 0.0
  %576 = vmatmul.mubr.f32.gmra.mxu0 %v125
  %v577 = vpop.f32.mrf.mxu0
  %v578 = vadd.f32 0.0, %v577
  %v579 = vpop.f32.mrf.mxu0
  %v580 = vadd.f32 0.0, %v579
  %581 = vmatprep.mubr.f32.mxu0 0.0
  %582 = vmatmul.mubr.f32.gmra.mxu0 %v128
  %v583 = vpop.f32.mrf.mxu0
  %v584 = vadd.f32 0.0, %v583
  %v585 = vpop.f32.mrf.mxu0
  %v586 = vadd.f32 0.0, %v585
  %587 = vmatprep.mubr.f32.mxu0 0.0
  %588 = vmatmul.mubr.f32.gmra.mxu0 %v131
  %v589 = vpop.f32.mrf.mxu0
  %v590 = vadd.f32 0.0, %v589
  %v591 = vpop.f32.mrf.mxu0
  %v592 = vadd.f32 0.0, %v591
  %593 = vmatprep.mubr.f32.mxu0 0.0
  %594 = vmatmul.mubr.f32.gmra.mxu0 %v134
  %v595 = vpop.f32.mrf.mxu0
  %v596 = vadd.f32 0.0, %v595
  %v597 = vpop.f32.mrf.mxu0
  %v598 = vadd.f32 0.0, %v597
  %599 = vmatprep.mubr.f32.mxu0 0.0
  %600 = vmatmul.mubr.f32.gmra.mxu0 %v137
  %v601 = vpop.f32.mrf.mxu0
  %v602 = vadd.f32 0.0, %v601
  %v603 = vpop.f32.mrf.mxu0
  %v604 = vadd.f32 0.0, %v603
  %605 = vmatprep.mubr.f32.mxu0 0.0
  %606 = vmatmul.mubr.f32.gmra.mxu0 %v140
  %v607 = vpop.f32.mrf.mxu0
  %v608 = vadd.f32 0.0, %v607
  %v609 = vpop.f32.mrf.mxu0
  %v610 = vadd.f32 0.0, %v609
  %611 = vmatprep.mubr.f32.mxu0 0.0
  %612 = vmatmul.mubr.f32.gmra.mxu0 %v143
  %v613 = vpop.f32.mrf.mxu0
  %v614 = vadd.f32 0.0, %v613
  %v615 = vpop.f32.mrf.mxu0
  %v616 = vadd.f32 0.0, %v615
  %617 = vmatprep.mubr.f32.mxu0 0.0
  %618 = vmatmul.mubr.f32.gmra.mxu0 %v146
  %v619 = vpop.f32.mrf.mxu0
  %v620 = vadd.f32 0.0, %v619
  %v621 = vpop.f32.mrf.mxu0
  %v622 = vadd.f32 0.0, %v621
  %623 = vmatprep.mubr.f32.mxu0 0.0
  %624 = vmatmul.mubr.f32.gmra.mxu0 %v149
  %v625 = vpop.f32.mrf.mxu0
  %v626 = vadd.f32 0.0, %v625
  %v627 = vpop.f32.mrf.mxu0
  %v628 = vadd.f32 0.0, %v627
  %629 = vmatprep.mubr.f32.mxu0 0.0
  %630 = vmatmul.mubr.f32.gmra.mxu0 %v152
  %v631 = vpop.f32.mrf.mxu0
  %v632 = vadd.f32 0.0, %v631
  %v633 = vpop.f32.mrf.mxu0
  %v634 = vadd.f32 0.0, %v633
  %635 = vmatprep.mubr.f32.mxu0 0.0
  %636 = vmatmul.mubr.f32.gmra.mxu0 %v155
  %v637 = vpop.f32.mrf.mxu0
  %v638 = vadd.f32 0.0, %v637
  %v639 = vpop.f32.mrf.mxu0
  %v640 = vadd.f32 0.0, %v639
  %641 = vmatprep.mubr.f32.mxu0 0.0
  %642 = vmatmul.mubr.f32.gmra.mxu0 %v158
  %v643 = vpop.f32.mrf.mxu0
  %v644 = vadd.f32 0.0, %v643
  %v645 = vpop.f32.mrf.mxu0
  %v646 = vadd.f32 0.0, %v645
  %647 = vmatprep.mubr.f32.mxu0 0.0
  %648 = vmatmul.mubr.f32.gmra.mxu0 %v161
  %v649 = vpop.f32.mrf.mxu0
  %v650 = vadd.f32 0.0, %v649
  %v651 = vpop.f32.mrf.mxu0
  %v652 = vadd.f32 0.0, %v651
  %653 = vmatprep.mubr.f32.mxu0 0.0
  %654 = vmatmul.mubr.f32.gmra.mxu0 %v164
  %v655 = vpop.f32.mrf.mxu0
  %v656 = vadd.f32 0.0, %v655
  %v657 = vpop.f32.mrf.mxu0
  %v658 = vadd.f32 0.0, %v657
  %659 = vmatprep.mubr.f32.mxu0 0.0
  %660 = vmatmul.mubr.f32.gmra.mxu0 %v167
  %v661 = vpop.f32.mrf.mxu0
  %v662 = vadd.f32 0.0, %v661
  %v663 = vpop.f32.mrf.mxu0
  %v664 = vadd.f32 0.0, %v663
  %665 = vmatprep.mubr.f32.mxu0 0.0
  %666 = vmatmul.mubr.f32.gmra.mxu0 %v170
  %v667 = vpop.f32.mrf.mxu0
  %v668 = vadd.f32 0.0, %v667
  %v669 = vpop.f32.mrf.mxu0
  %v670 = vadd.f32 0.0, %v669
  %671 = vmatprep.mubr.f32.mxu0 0.0
  %672 = vmatmul.mubr.f32.gmra.mxu0 %v173
  %v673 = vpop.f32.mrf.mxu0
  %v674 = vadd.f32 0.0, %v673
  %v675 = vpop.f32.mrf.mxu0
  %v676 = vadd.f32 0.0, %v675
  %677 = vmatprep.mubr.f32.mxu0 0.0
  %678 = vmatmul.mubr.f32.gmra.mxu0 %v176
  %v679 = vpop.f32.mrf.mxu0
  %v680 = vadd.f32 0.0, %v679
  %v681 = vpop.f32.mrf.mxu0
  %v682 = vadd.f32 0.0, %v681
  %683 = vmatprep.mubr.f32.mxu0 0.0
  %684 = vmatmul.mubr.f32.gmra.mxu0 %v179
  %v685 = vpop.f32.mrf.mxu0
  %v686 = vadd.f32 0.0, %v685
  %v687 = vpop.f32.mrf.mxu0
  %v688 = vadd.f32 0.0, %v687
  %689 = vmatprep.mubr.f32.mxu0 0.0
  %690 = vmatmul.mubr.f32.gmra.mxu0 %v182
  %v691 = vpop.f32.mrf.mxu0
  %v692 = vadd.f32 0.0, %v691
  %v693 = vpop.f32.mrf.mxu0
  %v694 = vadd.f32 0.0, %v693
  %695 = vmatprep.mubr.f32.mxu0 0.0
  %696 = vmatmul.mubr.f32.gmra.mxu0 %v185
  %v697 = vpop.f32.mrf.mxu0
  %v698 = vadd.f32 0.0, %v697
  %v699 = vpop.f32.mrf.mxu0
  %v700 = vadd.f32 0.0, %v699
  %701 = vmatprep.mubr.f32.mxu0 0.0
  %702 = vmatmul.mubr.f32.gmra.mxu0 %v188
  %v703 = vpop.f32.mrf.mxu0
  %v704 = vadd.f32 0.0, %v703
  %v705 = vpop.f32.mrf.mxu0
  %v706 = vadd.f32 0.0, %v705
  %707 = vmatprep.mubr.f32.mxu0 0.0
  %708 = vmatmul.mubr.f32.gmra.mxu0 %v191
  %v709 = vpop.f32.mrf.mxu0
  %v710 = vadd.f32 0.0, %v709
  %v711 = vpop.f32.mrf.mxu0
  %v712 = vadd.f32 0.0, %v711
  %713 = vmatprep.mubr.f32.mxu0 0.0
  %714 = vmatmul.mubr.f32.gmra.mxu0 %v194
  %v715 = vpop.f32.mrf.mxu0
  %v716 = vadd.f32 0.0, %v715
  %v717 = vpop.f32.mrf.mxu0
  %v718 = vadd.f32 0.0, %v717
  %719 = vmatprep.mubr.f32.mxu0 0.0
  %720 = vmatmul.mubr.f32.gmra.mxu0 %v197
  %v721 = vpop.f32.mrf.mxu0
  %v722 = vadd.f32 0.0, %v721
  %v723 = vpop.f32.mrf.mxu0
  %v724 = vadd.f32 0.0, %v723
  %725 = vmatprep.mubr.f32.mxu0 0.0
  %726 = vmatmul.mubr.f32.gmra.mxu0 %v200
  %v727 = vpop.f32.mrf.mxu0
  %v728 = vadd.f32 0.0, %v727
  %v729 = vpop.f32.mrf.mxu0
  %v730 = vadd.f32 0.0, %v729
  %731 = vdwg.mxu0
  %732 = vmatprep.subr.mxu0 0.0
  %733 = vmatpush1.msra.mxu0 0.0
  %734 = vmatprep.subr.mxu0 0.0
  %735 = vmatpush1.msra.mxu0 0.0
  %736 = vmatprep.subr.mxu0 0.0
  %737 = vmatpush1.msra.mxu0 0.0
  %738 = vmatprep.subr.mxu0 0.0
  %739 = vmatpush1.msra.mxu0 0.0
  %740 = vmatprep.subr.mxu0 0.0
  %741 = vmatpush1.msra.mxu0 0.0
  %742 = vmatprep.subr.mxu0 0.0
  %743 = vmatpush1.msra.mxu0 0.0
  %744 = vmatprep.subr.mxu0 0.0
  %745 = vmatpush1.msra.mxu0 0.0
  %746 = vmatprep.subr.mxu0 0.0
  %747 = vmatpush1.msra.mxu0 0.0
  %748 = vmatprep.subr.mxu0 0.0
  %749 = vmatpush1.msra.mxu0 0.0
  %750 = vmatprep.subr.mxu0 0.0
  %751 = vmatpush1.msra.mxu0 0.0
  %752 = vmatprep.subr.mxu0 0.0
  %753 = vmatpush1.msra.mxu0 0.0
  %754 = vmatprep.subr.mxu0 0.0
  %755 = vmatpush1.msra.mxu0 0.0
  %756 = vmatprep.subr.mxu0 0.0
  %757 = vmatpush1.msra.mxu0 0.0
  %758 = vmatprep.subr.mxu0 0.0
  %759 = vmatpush1.msra.mxu0 %v216
  %760 = vmatprep.subr.mxu0 0.0
  %761 = vmatpush1.msra.mxu0 %v99
  %762 = vmatprep.subr.mxu0 0.0
  %763 = vmatpush1.msra.mxu0 %v94
  %764 = vmatprep.subr.mxu0 0.0
  %765 = vmatpush2.msra.mxu0 0.0
  %766 = vmatprep.subr.mxu0 0.0
  %767 = vmatpush2.msra.mxu0 0.0
  %768 = vmatprep.subr.mxu0 0.0
  %769 = vmatpush2.msra.mxu0 0.0
  %770 = vmatprep.subr.mxu0 0.0
  %771 = vmatpush2.msra.mxu0 0.0
  %772 = vmatprep.subr.mxu0 0.0
  %773 = vmatpush2.msra.mxu0 0.0
  %774 = vmatprep.subr.mxu0 0.0
  %775 = vmatpush2.msra.mxu0 0.0
  %776 = vmatprep.subr.mxu0 0.0
  %777 = vmatpush2.msra.mxu0 0.0
  %778 = vmatprep.subr.mxu0 0.0
  %779 = vmatpush2.msra.mxu0 0.0
  %780 = vmatprep.subr.mxu0 0.0
  %781 = vmatpush2.msra.mxu0 0.0
  %782 = vmatprep.subr.mxu0 0.0
  %783 = vmatpush2.msra.mxu0 0.0
  %784 = vmatprep.subr.mxu0 0.0
  %785 = vmatpush2.msra.mxu0 0.0
  %786 = vmatprep.subr.mxu0 0.0
  %787 = vmatpush2.msra.mxu0 0.0
  %788 = vmatprep.subr.mxu0 0.0
  %789 = vmatpush2.msra.mxu0 0.0
  %790 = vmatprep.subr.mxu0 0.0
  %791 = vmatpush2.msra.mxu0 0.0
  %792 = vmatprep.subr.mxu0 0.0
  %793 = vmatpush2.msra.mxu0 0.0
  %794 = vmatprep.subr.mxu0 0.0
  %795 = vmatpush2.msra.mxu0 0.0
  %796 = vmatprep.mubr.f32.mxu0 0.0
  %797 = vmatmul.mubr.f32.gmra.mxu0 %v107
  %v798 = vpop.f32.mrf.mxu0
  %v799 = vadd.f32 0.0, %v798
  %v800 = vpop.f32.mrf.mxu0
  %801 = vmatprep.mubr.f32.mxu0 0.0
  %802 = vmatmul.mubr.f32.gmra.mxu0 %v110
  %v803 = vpop.f32.mrf.mxu0
  %v804 = vadd.f32 0.0, %v803
  %v805 = vpop.f32.mrf.mxu0
  %806 = vmatprep.mubr.f32.mxu0 0.0
  %807 = vmatmul.mubr.f32.gmra.mxu0 %v113
  %v808 = vpop.f32.mrf.mxu0
  %v809 = vadd.f32 0.0, %v808
  %v810 = vpop.f32.mrf.mxu0
  %811 = vmatprep.mubr.f32.mxu0 0.0
  %812 = vmatmul.mubr.f32.gmra.mxu0 %v116
  %v813 = vpop.f32.mrf.mxu0
  %v814 = vadd.f32 0.0, %v813
  %v815 = vpop.f32.mrf.mxu0
  %816 = vmatprep.mubr.f32.mxu0 0.0
  %817 = vmatmul.mubr.f32.gmra.mxu0 %v119
  %v818 = vpop.f32.mrf.mxu0
  %v819 = vadd.f32 0.0, %v818
  %v820 = vpop.f32.mrf.mxu0
  %821 = vmatprep.mubr.f32.mxu0 0.0
  %822 = vmatmul.mubr.f32.gmra.mxu0 %v122
  %v823 = vpop.f32.mrf.mxu0
  %v824 = vadd.f32 0.0, %v823
  %v825 = vpop.f32.mrf.mxu0
  %826 = vmatprep.mubr.f32.mxu0 0.0
  %827 = vmatmul.mubr.f32.gmra.mxu0 %v125
  %v828 = vpop.f32.mrf.mxu0
  %v829 = vadd.f32 0.0, %v828
  %v830 = vpop.f32.mrf.mxu0
  %831 = vmatprep.mubr.f32.mxu0 0.0
  %832 = vmatmul.mubr.f32.gmra.mxu0 %v128
  %v833 = vpop.f32.mrf.mxu0
  %v834 = vadd.f32 0.0, %v833
  %v835 = vpop.f32.mrf.mxu0
  %836 = vmatprep.mubr.f32.mxu0 0.0
  %837 = vmatmul.mubr.f32.gmra.mxu0 %v131
  %v838 = vpop.f32.mrf.mxu0
  %v839 = vadd.f32 0.0, %v838
  %v840 = vpop.f32.mrf.mxu0
  %841 = vmatprep.mubr.f32.mxu0 0.0
  %842 = vmatmul.mubr.f32.gmra.mxu0 %v134
  %v843 = vpop.f32.mrf.mxu0
  %v844 = vadd.f32 0.0, %v843
  %v845 = vpop.f32.mrf.mxu0
  %846 = vmatprep.mubr.f32.mxu0 0.0
  %847 = vmatmul.mubr.f32.gmra.mxu0 %v137
  %v848 = vpop.f32.mrf.mxu0
  %v849 = vadd.f32 0.0, %v848
  %v850 = vpop.f32.mrf.mxu0
  %851 = vmatprep.mubr.f32.mxu0 0.0
  %852 = vmatmul.mubr.f32.gmra.mxu0 %v140
  %v853 = vpop.f32.mrf.mxu0
  %v854 = vadd.f32 0.0, %v853
  %v855 = vpop.f32.mrf.mxu0
  %856 = vmatprep.mubr.f32.mxu0 0.0
  %857 = vmatmul.mubr.f32.gmra.mxu0 %v143
  %v858 = vpop.f32.mrf.mxu0
  %v859 = vadd.f32 0.0, %v858
  %v860 = vpop.f32.mrf.mxu0
  %861 = vmatprep.mubr.f32.mxu0 0.0
  %862 = vmatmul.mubr.f32.gmra.mxu0 %v146
  %v863 = vpop.f32.mrf.mxu0
  %v864 = vadd.f32 0.0, %v863
  %v865 = vpop.f32.mrf.mxu0
  %866 = vmatprep.mubr.f32.mxu0 0.0
  %867 = vmatmul.mubr.f32.gmra.mxu0 %v149
  %v868 = vpop.f32.mrf.mxu0
  %v869 = vadd.f32 0.0, %v868
  %v870 = vpop.f32.mrf.mxu0
  %871 = vmatprep.mubr.f32.mxu0 0.0
  %872 = vmatmul.mubr.f32.gmra.mxu0 %v152
  %v873 = vpop.f32.mrf.mxu0
  %v874 = vadd.f32 0.0, %v873
  %v875 = vpop.f32.mrf.mxu0
  %876 = vmatprep.mubr.f32.mxu0 0.0
  %877 = vmatmul.mubr.f32.gmra.mxu0 %v155
  %v878 = vpop.f32.mrf.mxu0
  %v879 = vadd.f32 0.0, %v878
  %v880 = vpop.f32.mrf.mxu0
  %881 = vmatprep.mubr.f32.mxu0 0.0
  %882 = vmatmul.mubr.f32.gmra.mxu0 %v158
  %v883 = vpop.f32.mrf.mxu0
  %v884 = vadd.f32 0.0, %v883
  %v885 = vpop.f32.mrf.mxu0
  %886 = vmatprep.mubr.f32.mxu0 0.0
  %887 = vmatmul.mubr.f32.gmra.mxu0 %v161
  %v888 = vpop.f32.mrf.mxu0
  %v889 = vadd.f32 0.0, %v888
  %v890 = vpop.f32.mrf.mxu0
  %891 = vmatprep.mubr.f32.mxu0 0.0
  %892 = vmatmul.mubr.f32.gmra.mxu0 %v164
  %v893 = vpop.f32.mrf.mxu0
  %v894 = vadd.f32 0.0, %v893
  %v895 = vpop.f32.mrf.mxu0
  %896 = vmatprep.mubr.f32.mxu0 0.0
  %897 = vmatmul.mubr.f32.gmra.mxu0 %v167
  %v898 = vpop.f32.mrf.mxu0
  %v899 = vadd.f32 0.0, %v898
  %v900 = vpop.f32.mrf.mxu0
  %901 = vmatprep.mubr.f32.mxu0 0.0
  %902 = vmatmul.mubr.f32.gmra.mxu0 %v170
  %v903 = vpop.f32.mrf.mxu0
  %v904 = vadd.f32 0.0, %v903
  %v905 = vpop.f32.mrf.mxu0
  %906 = vmatprep.mubr.f32.mxu0 0.0
  %907 = vmatmul.mubr.f32.gmra.mxu0 %v173
  %v908 = vpop.f32.mrf.mxu0
  %v909 = vadd.f32 0.0, %v908
  %v910 = vpop.f32.mrf.mxu0
  %911 = vmatprep.mubr.f32.mxu0 0.0
  %912 = vmatmul.mubr.f32.gmra.mxu0 %v176
  %v913 = vpop.f32.mrf.mxu0
  %v914 = vadd.f32 0.0, %v913
  %v915 = vpop.f32.mrf.mxu0
  %916 = vmatprep.mubr.f32.mxu0 0.0
  %917 = vmatmul.mubr.f32.gmra.mxu0 %v179
  %v918 = vpop.f32.mrf.mxu0
  %v919 = vadd.f32 0.0, %v918
  %v920 = vpop.f32.mrf.mxu0
  %921 = vmatprep.mubr.f32.mxu0 0.0
  %922 = vmatmul.mubr.f32.gmra.mxu0 %v182
  %v923 = vpop.f32.mrf.mxu0
  %v924 = vadd.f32 0.0, %v923
  %v925 = vpop.f32.mrf.mxu0
  %926 = vmatprep.mubr.f32.mxu0 0.0
  %927 = vmatmul.mubr.f32.gmra.mxu0 %v185
  %v928 = vpop.f32.mrf.mxu0
  %v929 = vadd.f32 0.0, %v928
  %v930 = vpop.f32.mrf.mxu0
  %931 = vmatprep.mubr.f32.mxu0 0.0
  %932 = vmatmul.mubr.f32.gmra.mxu0 %v188
  %v933 = vpop.f32.mrf.mxu0
  %v934 = vadd.f32 0.0, %v933
  %v935 = vpop.f32.mrf.mxu0
  %936 = vmatprep.mubr.f32.mxu0 0.0
  %937 = vmatmul.mubr.f32.gmra.mxu0 %v191
  %v938 = vpop.f32.mrf.mxu0
  %v939 = vadd.f32 0.0, %v938
  %v940 = vpop.f32.mrf.mxu0
  %941 = vmatprep.mubr.f32.mxu0 0.0
  %942 = vmatmul.mubr.f32.gmra.mxu0 %v194
  %v943 = vpop.f32.mrf.mxu0
  %v944 = vadd.f32 0.0, %v943
  %v945 = vpop.f32.mrf.mxu0
  %946 = vmatprep.mubr.f32.mxu0 0.0
  %947 = vmatmul.mubr.f32.gmra.mxu0 %v197
  %v948 = vpop.f32.mrf.mxu0
  %v949 = vadd.f32 0.0, %v948
  %v950 = vpop.f32.mrf.mxu0
  %951 = vmatprep.mubr.f32.mxu0 0.0
  %952 = vmatmul.mubr.f32.gmra.mxu0 %v200
  %v953 = vpop.f32.mrf.mxu0
  %v954 = vadd.f32 0.0, %v953
  %v955 = vpop.f32.mrf.mxu0
  %956 = vdwg.mxu0
  %v957 = vld [vmem:[%s2] sm:$0x1f]
  %v959 = vlaneseq
  %v960 = vshrl.u32 %v959, 7
  %v961 = vsub.s32 0, %v960
  %v962 = vrot.slane %v957, %v961
  %v963 = vlaneseq
  %v964 = vshrl.u32 %v963, 7
  %v965 = vsub.s32 1, %v964
  %v966 = vrot.slane %v957, %v965
  %v967 = vlaneseq
  %v968 = vshrl.u32 %v967, 7
  %v969 = vsub.s32 2, %v968
  %v970 = vrot.slane %v957, %v969
  %v971 = vlaneseq
  %v972 = vshrl.u32 %v971, 7
  %v973 = vsub.s32 3, %v972
  %v974 = vrot.slane %v957, %v973
  %v975 = vlaneseq
  %v976 = vshrl.u32 %v975, 7
  %v977 = vsub.s32 4, %v976
  %v978 = vrot.slane %v957, %v977
  %v984 = vsub.f32 %v285, %v962
  %v985 = vsub.f32 %v287, %v966
  %v986 = vsub.f32 %v542, %v970
  %v987 = vsub.f32 %v544, %v974
  %v988 = vsub.f32 %v799, %v978
  %v989 = vsub.f32 %v291, %v962
  %v990 = vsub.f32 %v293, %v966
  %v991 = vsub.f32 %v548, %v970
  %v992 = vsub.f32 %v550, %v974
  %v993 = vsub.f32 %v804, %v978
  %v994 = vsub.f32 %v297, %v962
  %v995 = vsub.f32 %v299, %v966
  %v996 = vsub.f32 %v554, %v970
  %v997 = vsub.f32 %v556, %v974
  %v998 = vsub.f32 %v809, %v978
  %v999 = vsub.f32 %v303, %v962
  %v1000 = vsub.f32 %v305, %v966
  %v1001 = vsub.f32 %v560, %v970
  %v1002 = vsub.f32 %v562, %v974
  %v1003 = vsub.f32 %v814, %v978
  %v1004 = vsub.f32 %v309, %v962
  %v1005 = vsub.f32 %v311, %v966
  %v1006 = vsub.f32 %v566, %v970
  %v1007 = vsub.f32 %v568, %v974
  %v1008 = vsub.f32 %v819, %v978
  %v1009 = vsub.f32 %v315, %v962
  %v1010 = vsub.f32 %v317, %v966
  %v1011 = vsub.f32 %v572, %v970
  %v1012 = vsub.f32 %v574, %v974
  %v1013 = vsub.f32 %v824, %v978
  %v1014 = vsub.f32 %v321, %v962
  %v1015 = vsub.f32 %v323, %v966
  %v1016 = vsub.f32 %v578, %v970
  %v1017 = vsub.f32 %v580, %v974
  %v1018 = vsub.f32 %v829, %v978
  %v1019 = vsub.f32 %v327, %v962
  %v1020 = vsub.f32 %v329, %v966
  %v1021 = vsub.f32 %v584, %v970
  %v1022 = vsub.f32 %v586, %v974
  %v1023 = vsub.f32 %v834, %v978
  %v1024 = vsub.f32 %v333, %v962
  %v1025 = vsub.f32 %v335, %v966
  %v1026 = vsub.f32 %v590, %v970
  %v1027 = vsub.f32 %v592, %v974
  %v1028 = vsub.f32 %v839, %v978
  %v1029 = vsub.f32 %v339, %v962
  %v1030 = vsub.f32 %v341, %v966
  %v1031 = vsub.f32 %v596, %v970
  %v1032 = vsub.f32 %v598, %v974
  %v1033 = vsub.f32 %v844, %v978
  %v1034 = vsub.f32 %v345, %v962
  %v1035 = vsub.f32 %v347, %v966
  %v1036 = vsub.f32 %v602, %v970
  %v1037 = vsub.f32 %v604, %v974
  %v1038 = vsub.f32 %v849, %v978
  %v1039 = vsub.f32 %v351, %v962
  %v1040 = vsub.f32 %v353, %v966
  %v1041 = vsub.f32 %v608, %v970
  %v1042 = vsub.f32 %v610, %v974
  %v1043 = vsub.f32 %v854, %v978
  %v1044 = vsub.f32 %v357, %v962
  %v1045 = vsub.f32 %v359, %v966
  %v1046 = vsub.f32 %v614, %v970
  %v1047 = vsub.f32 %v616, %v974
  %v1048 = vsub.f32 %v859, %v978
  %v1049 = vsub.f32 %v363, %v962
  %v1050 = vsub.f32 %v365, %v966
  %v1051 = vsub.f32 %v620, %v970
  %v1052 = vsub.f32 %v622, %v974
  %v1053 = vsub.f32 %v864, %v978
  %v1054 = vsub.f32 %v369, %v962
  %v1055 = vsub.f32 %v371, %v966
  %v1056 = vsub.f32 %v626, %v970
  %v1057 = vsub.f32 %v628, %v974
  %v1058 = vsub.f32 %v869, %v978
  %v1059 = vsub.f32 %v375, %v962
  %v1060 = vsub.f32 %v377, %v966
  %v1061 = vsub.f32 %v632, %v970
  %v1062 = vsub.f32 %v634, %v974
  %v1063 = vsub.f32 %v874, %v978
  %v1064 = vsub.f32 %v381, %v962
  %v1065 = vsub.f32 %v383, %v966
  %v1066 = vsub.f32 %v638, %v970
  %v1067 = vsub.f32 %v640, %v974
  %v1068 = vsub.f32 %v879, %v978
  %v1069 = vsub.f32 %v387, %v962
  %v1070 = vsub.f32 %v389, %v966
  %v1071 = vsub.f32 %v644, %v970
  %v1072 = vsub.f32 %v646, %v974
  %v1073 = vsub.f32 %v884, %v978
  %v1074 = vsub.f32 %v393, %v962
  %v1075 = vsub.f32 %v395, %v966
  %v1076 = vsub.f32 %v650, %v970
  %v1077 = vsub.f32 %v652, %v974
  %v1078 = vsub.f32 %v889, %v978
  %v1079 = vsub.f32 %v399, %v962
  %v1080 = vsub.f32 %v401, %v966
  %v1081 = vsub.f32 %v656, %v970
  %v1082 = vsub.f32 %v658, %v974
  %v1083 = vsub.f32 %v894, %v978
  %v1084 = vsub.f32 %v405, %v962
  %v1085 = vsub.f32 %v407, %v966
  %v1086 = vsub.f32 %v662, %v970
  %v1087 = vsub.f32 %v664, %v974
  %v1088 = vsub.f32 %v899, %v978
  %v1089 = vsub.f32 %v411, %v962
  %v1090 = vsub.f32 %v413, %v966
  %v1091 = vsub.f32 %v668, %v970
  %v1092 = vsub.f32 %v670, %v974
  %v1093 = vsub.f32 %v904, %v978
  %v1094 = vsub.f32 %v417, %v962
  %v1095 = vsub.f32 %v419, %v966
  %v1096 = vsub.f32 %v674, %v970
  %v1097 = vsub.f32 %v676, %v974
  %v1098 = vsub.f32 %v909, %v978
  %v1099 = vsub.f32 %v423, %v962
  %v1100 = vsub.f32 %v425, %v966
  %v1101 = vsub.f32 %v680, %v970
  %v1102 = vsub.f32 %v682, %v974
  %v1103 = vsub.f32 %v914, %v978
  %v1104 = vsub.f32 %v429, %v962
  %v1105 = vsub.f32 %v431, %v966
  %v1106 = vsub.f32 %v686, %v970
  %v1107 = vsub.f32 %v688, %v974
  %v1108 = vsub.f32 %v919, %v978
  %v1109 = vsub.f32 %v435, %v962
  %v1110 = vsub.f32 %v437, %v966
  %v1111 = vsub.f32 %v692, %v970
  %v1112 = vsub.f32 %v694, %v974
  %v1113 = vsub.f32 %v924, %v978
  %v1114 = vsub.f32 %v441, %v962
  %v1115 = vsub.f32 %v443, %v966
  %v1116 = vsub.f32 %v698, %v970
  %v1117 = vsub.f32 %v700, %v974
  %v1118 = vsub.f32 %v929, %v978
  %v1119 = vsub.f32 %v447, %v962
  %v1120 = vsub.f32 %v449, %v966
  %v1121 = vsub.f32 %v704, %v970
  %v1122 = vsub.f32 %v706, %v974
  %v1123 = vsub.f32 %v934, %v978
  %v1124 = vsub.f32 %v453, %v962
  %v1125 = vsub.f32 %v455, %v966
  %v1126 = vsub.f32 %v710, %v970
  %v1127 = vsub.f32 %v712, %v974
  %v1128 = vsub.f32 %v939, %v978
  %v1129 = vsub.f32 %v459, %v962
  %v1130 = vsub.f32 %v461, %v966
  %v1131 = vsub.f32 %v716, %v970
  %v1132 = vsub.f32 %v718, %v974
  %v1133 = vsub.f32 %v944, %v978
  %v1134 = vsub.f32 %v465, %v962
  %v1135 = vsub.f32 %v467, %v966
  %v1136 = vsub.f32 %v722, %v970
  %v1137 = vsub.f32 %v724, %v974
  %v1138 = vsub.f32 %v949, %v978
  %v1139 = vsub.f32 %v471, %v962
  %v1140 = vsub.f32 %v473, %v966
  %v1141 = vsub.f32 %v728, %v970
  %v1142 = vsub.f32 %v730, %v974
  %v1143 = vsub.f32 %v954, %v978
  %v1144 = vand.u32 2147483647, %v984
  %v1145 = vand.u32 2147483647, %v985
  %v1146 = vand.u32 2147483647, %v986
  %v1147 = vand.u32 2147483647, %v987
  %v1148 = vand.u32 2147483647, %v988
  %v1149 = vand.u32 2147483647, %v989
  %v1150 = vand.u32 2147483647, %v990
  %v1151 = vand.u32 2147483647, %v991
  %v1152 = vand.u32 2147483647, %v992
  %v1153 = vand.u32 2147483647, %v993
  %v1154 = vand.u32 2147483647, %v994
  %v1155 = vand.u32 2147483647, %v995
  %v1156 = vand.u32 2147483647, %v996
  %v1157 = vand.u32 2147483647, %v997
  %v1158 = vand.u32 2147483647, %v998
  %v1159 = vand.u32 2147483647, %v999
  %v1160 = vand.u32 2147483647, %v1000
  %v1161 = vand.u32 2147483647, %v1001
  %v1162 = vand.u32 2147483647, %v1002
  %v1163 = vand.u32 2147483647, %v1003
  %v1164 = vand.u32 2147483647, %v1004
  %v1165 = vand.u32 2147483647, %v1005
  %v1166 = vand.u32 2147483647, %v1006
  %v1167 = vand.u32 2147483647, %v1007
  %v1168 = vand.u32 2147483647, %v1008
  %v1169 = vand.u32 2147483647, %v1009
  %v1170 = vand.u32 2147483647, %v1010
  %v1171 = vand.u32 2147483647, %v1011
  %v1172 = vand.u32 2147483647, %v1012
  %v1173 = vand.u32 2147483647, %v1013
  %v1174 = vand.u32 2147483647, %v1014
  %v1175 = vand.u32 2147483647, %v1015
  %v1176 = vand.u32 2147483647, %v1016
  %v1177 = vand.u32 2147483647, %v1017
  %v1178 = vand.u32 2147483647, %v1018
  %v1179 = vand.u32 2147483647, %v1019
  %v1180 = vand.u32 2147483647, %v1020
  %v1181 = vand.u32 2147483647, %v1021
  %v1182 = vand.u32 2147483647, %v1022
  %v1183 = vand.u32 2147483647, %v1023
  %v1184 = vand.u32 2147483647, %v1024
  %v1185 = vand.u32 2147483647, %v1025
  %v1186 = vand.u32 2147483647, %v1026
  %v1187 = vand.u32 2147483647, %v1027
  %v1188 = vand.u32 2147483647, %v1028
  %v1189 = vand.u32 2147483647, %v1029
  %v1190 = vand.u32 2147483647, %v1030
  %v1191 = vand.u32 2147483647, %v1031
  %v1192 = vand.u32 2147483647, %v1032
  %v1193 = vand.u32 2147483647, %v1033
  %v1194 = vand.u32 2147483647, %v1034
  %v1195 = vand.u32 2147483647, %v1035
  %v1196 = vand.u32 2147483647, %v1036
  %v1197 = vand.u32 2147483647, %v1037
  %v1198 = vand.u32 2147483647, %v1038
  %v1199 = vand.u32 2147483647, %v1039
  %v1200 = vand.u32 2147483647, %v1040
  %v1201 = vand.u32 2147483647, %v1041
  %v1202 = vand.u32 2147483647, %v1042
  %v1203 = vand.u32 2147483647, %v1043
  %v1204 = vand.u32 2147483647, %v1044
  %v1205 = vand.u32 2147483647, %v1045
  %v1206 = vand.u32 2147483647, %v1046
  %v1207 = vand.u32 2147483647, %v1047
  %v1208 = vand.u32 2147483647, %v1048
  %v1209 = vand.u32 2147483647, %v1049
  %v1210 = vand.u32 2147483647, %v1050
  %v1211 = vand.u32 2147483647, %v1051
  %v1212 = vand.u32 2147483647, %v1052
  %v1213 = vand.u32 2147483647, %v1053
  %v1214 = vand.u32 2147483647, %v1054
  %v1215 = vand.u32 2147483647, %v1055
  %v1216 = vand.u32 2147483647, %v1056
  %v1217 = vand.u32 2147483647, %v1057
  %v1218 = vand.u32 2147483647, %v1058
  %v1219 = vand.u32 2147483647, %v1059
  %v1220 = vand.u32 2147483647, %v1060
  %v1221 = vand.u32 2147483647, %v1061
  %v1222 = vand.u32 2147483647, %v1062
  %v1223 = vand.u32 2147483647, %v1063
  %v1224 = vand.u32 2147483647, %v1064
  %v1225 = vand.u32 2147483647, %v1065
  %v1226 = vand.u32 2147483647, %v1066
  %v1227 = vand.u32 2147483647, %v1067
  %v1228 = vand.u32 2147483647, %v1068
  %v1229 = vand.u32 2147483647, %v1069
  %v1230 = vand.u32 2147483647, %v1070
  %v1231 = vand.u32 2147483647, %v1071
  %v1232 = vand.u32 2147483647, %v1072
  %v1233 = vand.u32 2147483647, %v1073
  %v1234 = vand.u32 2147483647, %v1074
  %v1235 = vand.u32 2147483647, %v1075
  %v1236 = vand.u32 2147483647, %v1076
  %v1237 = vand.u32 2147483647, %v1077
  %v1238 = vand.u32 2147483647, %v1078
  %v1239 = vand.u32 2147483647, %v1079
  %v1240 = vand.u32 2147483647, %v1080
  %v1241 = vand.u32 2147483647, %v1081
  %v1242 = vand.u32 2147483647, %v1082
  %v1243 = vand.u32 2147483647, %v1083
  %v1244 = vand.u32 2147483647, %v1084
  %v1245 = vand.u32 2147483647, %v1085
  %v1246 = vand.u32 2147483647, %v1086
  %v1247 = vand.u32 2147483647, %v1087
  %v1248 = vand.u32 2147483647, %v1088
  %v1249 = vand.u32 2147483647, %v1089
  %v1250 = vand.u32 2147483647, %v1090
  %v1251 = vand.u32 2147483647, %v1091
  %v1252 = vand.u32 2147483647, %v1092
  %v1253 = vand.u32 2147483647, %v1093
  %v1254 = vand.u32 2147483647, %v1094
  %v1255 = vand.u32 2147483647, %v1095
  %v1256 = vand.u32 2147483647, %v1096
  %v1257 = vand.u32 2147483647, %v1097
  %v1258 = vand.u32 2147483647, %v1098
  %v1259 = vand.u32 2147483647, %v1099
  %v1260 = vand.u32 2147483647, %v1100
  %v1261 = vand.u32 2147483647, %v1101
  %v1262 = vand.u32 2147483647, %v1102
  %v1263 = vand.u32 2147483647, %v1103
  %v1264 = vand.u32 2147483647, %v1104
  %v1265 = vand.u32 2147483647, %v1105
  %v1266 = vand.u32 2147483647, %v1106
  %v1267 = vand.u32 2147483647, %v1107
  %v1268 = vand.u32 2147483647, %v1108
  %v1269 = vand.u32 2147483647, %v1109
  %v1270 = vand.u32 2147483647, %v1110
  %v1271 = vand.u32 2147483647, %v1111
  %v1272 = vand.u32 2147483647, %v1112
  %v1273 = vand.u32 2147483647, %v1113
  %v1274 = vand.u32 2147483647, %v1114
  %v1275 = vand.u32 2147483647, %v1115
  %v1276 = vand.u32 2147483647, %v1116
  %v1277 = vand.u32 2147483647, %v1117
  %v1278 = vand.u32 2147483647, %v1118
  %v1279 = vand.u32 2147483647, %v1119
  %v1280 = vand.u32 2147483647, %v1120
  %v1281 = vand.u32 2147483647, %v1121
  %v1282 = vand.u32 2147483647, %v1122
  %v1283 = vand.u32 2147483647, %v1123
  %v1284 = vand.u32 2147483647, %v1124
  %v1285 = vand.u32 2147483647, %v1125
  %v1286 = vand.u32 2147483647, %v1126
  %v1287 = vand.u32 2147483647, %v1127
  %v1288 = vand.u32 2147483647, %v1128
  %v1289 = vand.u32 2147483647, %v1129
  %v1290 = vand.u32 2147483647, %v1130
  %v1291 = vand.u32 2147483647, %v1131
  %v1292 = vand.u32 2147483647, %v1132
  %v1293 = vand.u32 2147483647, %v1133
  %v1294 = vand.u32 2147483647, %v1134
  %v1295 = vand.u32 2147483647, %v1135
  %v1296 = vand.u32 2147483647, %v1136
  %v1297 = vand.u32 2147483647, %v1137
  %v1298 = vand.u32 2147483647, %v1138
  %v1299 = vand.u32 2147483647, %v1139
  %v1300 = vand.u32 2147483647, %v1140
  %v1301 = vand.u32 2147483647, %v1141
  %v1302 = vand.u32 2147483647, %v1142
  %v1303 = vand.u32 2147483647, %v1143
  %vm1304 = vcmp.lt.f32.partialorder %v1144, 0.5
  %vm1305 = vcmp.lt.f32.partialorder %v1145, 0.5
  %vm1306 = vcmp.lt.f32.partialorder %v1146, 0.5
  %vm1307 = vcmp.lt.f32.partialorder %v1147, 0.5
  %vm1308 = vcmp.lt.f32.partialorder %v1148, 0.5
  %vm1309 = vcmp.lt.f32.partialorder %v1149, 0.5
  %vm1310 = vcmp.lt.f32.partialorder %v1150, 0.5
  %vm1311 = vcmp.lt.f32.partialorder %v1151, 0.5
  %vm1312 = vcmp.lt.f32.partialorder %v1152, 0.5
  %vm1313 = vcmp.lt.f32.partialorder %v1153, 0.5
  %vm1314 = vcmp.lt.f32.partialorder %v1154, 0.5
  %vm1315 = vcmp.lt.f32.partialorder %v1155, 0.5
  %vm1316 = vcmp.lt.f32.partialorder %v1156, 0.5
  %vm1317 = vcmp.lt.f32.partialorder %v1157, 0.5
  %vm1318 = vcmp.lt.f32.partialorder %v1158, 0.5
  %vm1319 = vcmp.lt.f32.partialorder %v1159, 0.5
  %vm1320 = vcmp.lt.f32.partialorder %v1160, 0.5
  %vm1321 = vcmp.lt.f32.partialorder %v1161, 0.5
  %vm1322 = vcmp.lt.f32.partialorder %v1162, 0.5
  %vm1323 = vcmp.lt.f32.partialorder %v1163, 0.5
  %vm1324 = vcmp.lt.f32.partialorder %v1164, 0.5
  %vm1325 = vcmp.lt.f32.partialorder %v1165, 0.5
  %vm1326 = vcmp.lt.f32.partialorder %v1166, 0.5
  %vm1327 = vcmp.lt.f32.partialorder %v1167, 0.5
  %vm1328 = vcmp.lt.f32.partialorder %v1168, 0.5
  %vm1329 = vcmp.lt.f32.partialorder %v1169, 0.5
  %vm1330 = vcmp.lt.f32.partialorder %v1170, 0.5
  %vm1331 = vcmp.lt.f32.partialorder %v1171, 0.5
  %vm1332 = vcmp.lt.f32.partialorder %v1172, 0.5
  %vm1333 = vcmp.lt.f32.partialorder %v1173, 0.5
  %vm1334 = vcmp.lt.f32.partialorder %v1174, 0.5
  %vm1335 = vcmp.lt.f32.partialorder %v1175, 0.5
  %vm1336 = vcmp.lt.f32.partialorder %v1176, 0.5
  %vm1337 = vcmp.lt.f32.partialorder %v1177, 0.5
  %vm1338 = vcmp.lt.f32.partialorder %v1178, 0.5
  %vm1339 = vcmp.lt.f32.partialorder %v1179, 0.5
  %vm1340 = vcmp.lt.f32.partialorder %v1180, 0.5
  %vm1341 = vcmp.lt.f32.partialorder %v1181, 0.5
  %vm1342 = vcmp.lt.f32.partialorder %v1182, 0.5
  %vm1343 = vcmp.lt.f32.partialorder %v1183, 0.5
  %vm1344 = vcmp.lt.f32.partialorder %v1184, 0.5
  %vm1345 = vcmp.lt.f32.partialorder %v1185, 0.5
  %vm1346 = vcmp.lt.f32.partialorder %v1186, 0.5
  %vm1347 = vcmp.lt.f32.partialorder %v1187, 0.5
  %vm1348 = vcmp.lt.f32.partialorder %v1188, 0.5
  %vm1349 = vcmp.lt.f32.partialorder %v1189, 0.5
  %vm1350 = vcmp.lt.f32.partialorder %v1190, 0.5
  %vm1351 = vcmp.lt.f32.partialorder %v1191, 0.5
  %vm1352 = vcmp.lt.f32.partialorder %v1192, 0.5
  %vm1353 = vcmp.lt.f32.partialorder %v1193, 0.5
  %vm1354 = vcmp.lt.f32.partialorder %v1194, 0.5
  %vm1355 = vcmp.lt.f32.partialorder %v1195, 0.5
  %vm1356 = vcmp.lt.f32.partialorder %v1196, 0.5
  %vm1357 = vcmp.lt.f32.partialorder %v1197, 0.5
  %vm1358 = vcmp.lt.f32.partialorder %v1198, 0.5
  %vm1359 = vcmp.lt.f32.partialorder %v1199, 0.5
  %vm1360 = vcmp.lt.f32.partialorder %v1200, 0.5
  %vm1361 = vcmp.lt.f32.partialorder %v1201, 0.5
  %vm1362 = vcmp.lt.f32.partialorder %v1202, 0.5
  %vm1363 = vcmp.lt.f32.partialorder %v1203, 0.5
  %vm1364 = vcmp.lt.f32.partialorder %v1204, 0.5
  %vm1365 = vcmp.lt.f32.partialorder %v1205, 0.5
  %vm1366 = vcmp.lt.f32.partialorder %v1206, 0.5
  %vm1367 = vcmp.lt.f32.partialorder %v1207, 0.5
  %vm1368 = vcmp.lt.f32.partialorder %v1208, 0.5
  %vm1369 = vcmp.lt.f32.partialorder %v1209, 0.5
  %vm1370 = vcmp.lt.f32.partialorder %v1210, 0.5
  %vm1371 = vcmp.lt.f32.partialorder %v1211, 0.5
  %vm1372 = vcmp.lt.f32.partialorder %v1212, 0.5
  %vm1373 = vcmp.lt.f32.partialorder %v1213, 0.5
  %vm1374 = vcmp.lt.f32.partialorder %v1214, 0.5
  %vm1375 = vcmp.lt.f32.partialorder %v1215, 0.5
  %vm1376 = vcmp.lt.f32.partialorder %v1216, 0.5
  %vm1377 = vcmp.lt.f32.partialorder %v1217, 0.5
  %vm1378 = vcmp.lt.f32.partialorder %v1218, 0.5
  %vm1379 = vcmp.lt.f32.partialorder %v1219, 0.5
  %vm1380 = vcmp.lt.f32.partialorder %v1220, 0.5
  %vm1381 = vcmp.lt.f32.partialorder %v1221, 0.5
  %vm1382 = vcmp.lt.f32.partialorder %v1222, 0.5
  %vm1383 = vcmp.lt.f32.partialorder %v1223, 0.5
  %vm1384 = vcmp.lt.f32.partialorder %v1224, 0.5
  %vm1385 = vcmp.lt.f32.partialorder %v1225, 0.5
  %vm1386 = vcmp.lt.f32.partialorder %v1226, 0.5
  %vm1387 = vcmp.lt.f32.partialorder %v1227, 0.5
  %vm1388 = vcmp.lt.f32.partialorder %v1228, 0.5
  %vm1389 = vcmp.lt.f32.partialorder %v1229, 0.5
  %vm1390 = vcmp.lt.f32.partialorder %v1230, 0.5
  %vm1391 = vcmp.lt.f32.partialorder %v1231, 0.5
  %vm1392 = vcmp.lt.f32.partialorder %v1232, 0.5
  %vm1393 = vcmp.lt.f32.partialorder %v1233, 0.5
  %vm1394 = vcmp.lt.f32.partialorder %v1234, 0.5
  %vm1395 = vcmp.lt.f32.partialorder %v1235, 0.5
  %vm1396 = vcmp.lt.f32.partialorder %v1236, 0.5
  %vm1397 = vcmp.lt.f32.partialorder %v1237, 0.5
  %vm1398 = vcmp.lt.f32.partialorder %v1238, 0.5
  %vm1399 = vcmp.lt.f32.partialorder %v1239, 0.5
  %vm1400 = vcmp.lt.f32.partialorder %v1240, 0.5
  %vm1401 = vcmp.lt.f32.partialorder %v1241, 0.5
  %vm1402 = vcmp.lt.f32.partialorder %v1242, 0.5
  %vm1403 = vcmp.lt.f32.partialorder %v1243, 0.5
  %vm1404 = vcmp.lt.f32.partialorder %v1244, 0.5
  %vm1405 = vcmp.lt.f32.partialorder %v1245, 0.5
  %vm1406 = vcmp.lt.f32.partialorder %v1246, 0.5
  %vm1407 = vcmp.lt.f32.partialorder %v1247, 0.5
  %vm1408 = vcmp.lt.f32.partialorder %v1248, 0.5
  %vm1409 = vcmp.lt.f32.partialorder %v1249, 0.5
  %vm1410 = vcmp.lt.f32.partialorder %v1250, 0.5
  %vm1411 = vcmp.lt.f32.partialorder %v1251, 0.5
  %vm1412 = vcmp.lt.f32.partialorder %v1252, 0.5
  %vm1413 = vcmp.lt.f32.partialorder %v1253, 0.5
  %vm1414 = vcmp.lt.f32.partialorder %v1254, 0.5
  %vm1415 = vcmp.lt.f32.partialorder %v1255, 0.5
  %vm1416 = vcmp.lt.f32.partialorder %v1256, 0.5
  %vm1417 = vcmp.lt.f32.partialorder %v1257, 0.5
  %vm1418 = vcmp.lt.f32.partialorder %v1258, 0.5
  %vm1419 = vcmp.lt.f32.partialorder %v1259, 0.5
  %vm1420 = vcmp.lt.f32.partialorder %v1260, 0.5
  %vm1421 = vcmp.lt.f32.partialorder %v1261, 0.5
  %vm1422 = vcmp.lt.f32.partialorder %v1262, 0.5
  %vm1423 = vcmp.lt.f32.partialorder %v1263, 0.5
  %vm1424 = vcmp.lt.f32.partialorder %v1264, 0.5
  %vm1425 = vcmp.lt.f32.partialorder %v1265, 0.5
  %vm1426 = vcmp.lt.f32.partialorder %v1266, 0.5
  %vm1427 = vcmp.lt.f32.partialorder %v1267, 0.5
  %vm1428 = vcmp.lt.f32.partialorder %v1268, 0.5
  %vm1429 = vcmp.lt.f32.partialorder %v1269, 0.5
  %vm1430 = vcmp.lt.f32.partialorder %v1270, 0.5
  %vm1431 = vcmp.lt.f32.partialorder %v1271, 0.5
  %vm1432 = vcmp.lt.f32.partialorder %v1272, 0.5
  %vm1433 = vcmp.lt.f32.partialorder %v1273, 0.5
  %vm1434 = vcmp.lt.f32.partialorder %v1274, 0.5
  %vm1435 = vcmp.lt.f32.partialorder %v1275, 0.5
  %vm1436 = vcmp.lt.f32.partialorder %v1276, 0.5
  %vm1437 = vcmp.lt.f32.partialorder %v1277, 0.5
  %vm1438 = vcmp.lt.f32.partialorder %v1278, 0.5
  %vm1439 = vcmp.lt.f32.partialorder %v1279, 0.5
  %vm1440 = vcmp.lt.f32.partialorder %v1280, 0.5
  %vm1441 = vcmp.lt.f32.partialorder %v1281, 0.5
  %vm1442 = vcmp.lt.f32.partialorder %v1282, 0.5
  %vm1443 = vcmp.lt.f32.partialorder %v1283, 0.5
  %vm1444 = vcmp.lt.f32.partialorder %v1284, 0.5
  %vm1445 = vcmp.lt.f32.partialorder %v1285, 0.5
  %vm1446 = vcmp.lt.f32.partialorder %v1286, 0.5
  %vm1447 = vcmp.lt.f32.partialorder %v1287, 0.5
  %vm1448 = vcmp.lt.f32.partialorder %v1288, 0.5
  %vm1449 = vcmp.lt.f32.partialorder %v1289, 0.5
  %vm1450 = vcmp.lt.f32.partialorder %v1290, 0.5
  %vm1451 = vcmp.lt.f32.partialorder %v1291, 0.5
  %vm1452 = vcmp.lt.f32.partialorder %v1292, 0.5
  %vm1453 = vcmp.lt.f32.partialorder %v1293, 0.5
  %vm1454 = vcmp.lt.f32.partialorder %v1294, 0.5
  %vm1455 = vcmp.lt.f32.partialorder %v1295, 0.5
  %vm1456 = vcmp.lt.f32.partialorder %v1296, 0.5
  %vm1457 = vcmp.lt.f32.partialorder %v1297, 0.5
  %vm1458 = vcmp.lt.f32.partialorder %v1298, 0.5
  %vm1459 = vcmp.lt.f32.partialorder %v1299, 0.5
  %vm1460 = vcmp.lt.f32.partialorder %v1300, 0.5
  %vm1461 = vcmp.lt.f32.partialorder %v1301, 0.5
  %vm1462 = vcmp.lt.f32.partialorder %v1302, 0.5
  %vm1463 = vcmp.lt.f32.partialorder %v1303, 0.5
  %v1464 = vsel %vm1304, 1, 0
  %v1465 = vsel %vm1305, 1, 0
  %v1466 = vsel %vm1306, 1, 0
  %v1467 = vsel %vm1307, 1, 0
  %v1468 = vsel %vm1308, 1, 0
  %v1469 = vsel %vm1309, 1, 0
  %v1470 = vsel %vm1310, 1, 0
  %v1471 = vsel %vm1311, 1, 0
  %v1472 = vsel %vm1312, 1, 0
  %v1473 = vsel %vm1313, 1, 0
  %v1474 = vsel %vm1314, 1, 0
  %v1475 = vsel %vm1315, 1, 0
  %v1476 = vsel %vm1316, 1, 0
  %v1477 = vsel %vm1317, 1, 0
  %v1478 = vsel %vm1318, 1, 0
  %v1479 = vsel %vm1319, 1, 0
  %v1480 = vsel %vm1320, 1, 0
  %v1481 = vsel %vm1321, 1, 0
  %v1482 = vsel %vm1322, 1, 0
  %v1483 = vsel %vm1323, 1, 0
  %v1484 = vsel %vm1324, 1, 0
  %v1485 = vsel %vm1325, 1, 0
  %v1486 = vsel %vm1326, 1, 0
  %v1487 = vsel %vm1327, 1, 0
  %v1488 = vsel %vm1328, 1, 0
  %v1489 = vsel %vm1329, 1, 0
  %v1490 = vsel %vm1330, 1, 0
  %v1491 = vsel %vm1331, 1, 0
  %v1492 = vsel %vm1332, 1, 0
  %v1493 = vsel %vm1333, 1, 0
  %v1494 = vsel %vm1334, 1, 0
  %v1495 = vsel %vm1335, 1, 0
  %v1496 = vsel %vm1336, 1, 0
  %v1497 = vsel %vm1337, 1, 0
  %v1498 = vsel %vm1338, 1, 0
  %v1499 = vsel %vm1339, 1, 0
  %v1500 = vsel %vm1340, 1, 0
  %v1501 = vsel %vm1341, 1, 0
  %v1502 = vsel %vm1342, 1, 0
  %v1503 = vsel %vm1343, 1, 0
  %v1504 = vsel %vm1344, 1, 0
  %v1505 = vsel %vm1345, 1, 0
  %v1506 = vsel %vm1346, 1, 0
  %v1507 = vsel %vm1347, 1, 0
  %v1508 = vsel %vm1348, 1, 0
  %v1509 = vsel %vm1349, 1, 0
  %v1510 = vsel %vm1350, 1, 0
  %v1511 = vsel %vm1351, 1, 0
  %v1512 = vsel %vm1352, 1, 0
  %v1513 = vsel %vm1353, 1, 0
  %v1514 = vsel %vm1354, 1, 0
  %v1515 = vsel %vm1355, 1, 0
  %v1516 = vsel %vm1356, 1, 0
  %v1517 = vsel %vm1357, 1, 0
  %v1518 = vsel %vm1358, 1, 0
  %v1519 = vsel %vm1359, 1, 0
  %v1520 = vsel %vm1360, 1, 0
  %v1521 = vsel %vm1361, 1, 0
  %v1522 = vsel %vm1362, 1, 0
  %v1523 = vsel %vm1363, 1, 0
  %v1524 = vsel %vm1364, 1, 0
  %v1525 = vsel %vm1365, 1, 0
  %v1526 = vsel %vm1366, 1, 0
  %v1527 = vsel %vm1367, 1, 0
  %v1528 = vsel %vm1368, 1, 0
  %v1529 = vsel %vm1369, 1, 0
  %v1530 = vsel %vm1370, 1, 0
  %v1531 = vsel %vm1371, 1, 0
  %v1532 = vsel %vm1372, 1, 0
  %v1533 = vsel %vm1373, 1, 0
  %v1534 = vsel %vm1374, 1, 0
  %v1535 = vsel %vm1375, 1, 0
  %v1536 = vsel %vm1376, 1, 0
  %v1537 = vsel %vm1377, 1, 0
  %v1538 = vsel %vm1378, 1, 0
  %v1539 = vsel %vm1379, 1, 0
  %v1540 = vsel %vm1380, 1, 0
  %v1541 = vsel %vm1381, 1, 0
  %v1542 = vsel %vm1382, 1, 0
  %v1543 = vsel %vm1383, 1, 0
  %v1544 = vsel %vm1384, 1, 0
  %v1545 = vsel %vm1385, 1, 0
  %v1546 = vsel %vm1386, 1, 0
  %v1547 = vsel %vm1387, 1, 0
  %v1548 = vsel %vm1388, 1, 0
  %v1549 = vsel %vm1389, 1, 0
  %v1550 = vsel %vm1390, 1, 0
  %v1551 = vsel %vm1391, 1, 0
  %v1552 = vsel %vm1392, 1, 0
  %v1553 = vsel %vm1393, 1, 0
  %v1554 = vsel %vm1394, 1, 0
  %v1555 = vsel %vm1395, 1, 0
  %v1556 = vsel %vm1396, 1, 0
  %v1557 = vsel %vm1397, 1, 0
  %v1558 = vsel %vm1398, 1, 0
  %v1559 = vsel %vm1399, 1, 0
  %v1560 = vsel %vm1400, 1, 0
  %v1561 = vsel %vm1401, 1, 0
  %v1562 = vsel %vm1402, 1, 0
  %v1563 = vsel %vm1403, 1, 0
  %v1564 = vsel %vm1404, 1, 0
  %v1565 = vsel %vm1405, 1, 0
  %v1566 = vsel %vm1406, 1, 0
  %v1567 = vsel %vm1407, 1, 0
  %v1568 = vsel %vm1408, 1, 0
  %v1569 = vsel %vm1409, 1, 0
  %v1570 = vsel %vm1410, 1, 0
  %v1571 = vsel %vm1411, 1, 0
  %v1572 = vsel %vm1412, 1, 0
  %v1573 = vsel %vm1413, 1, 0
  %v1574 = vsel %vm1414, 1, 0
  %v1575 = vsel %vm1415, 1, 0
  %v1576 = vsel %vm1416, 1, 0
  %v1577 = vsel %vm1417, 1, 0
  %v1578 = vsel %vm1418, 1, 0
  %v1579 = vsel %vm1419, 1, 0
  %v1580 = vsel %vm1420, 1, 0
  %v1581 = vsel %vm1421, 1, 0
  %v1582 = vsel %vm1422, 1, 0
  %v1583 = vsel %vm1423, 1, 0
  %v1584 = vsel %vm1424, 1, 0
  %v1585 = vsel %vm1425, 1, 0
  %v1586 = vsel %vm1426, 1, 0
  %v1587 = vsel %vm1427, 1, 0
  %v1588 = vsel %vm1428, 1, 0
  %v1589 = vsel %vm1429, 1, 0
  %v1590 = vsel %vm1430, 1, 0
  %v1591 = vsel %vm1431, 1, 0
  %v1592 = vsel %vm1432, 1, 0
  %v1593 = vsel %vm1433, 1, 0
  %v1594 = vsel %vm1434, 1, 0
  %v1595 = vsel %vm1435, 1, 0
  %v1596 = vsel %vm1436, 1, 0
  %v1597 = vsel %vm1437, 1, 0
  %v1598 = vsel %vm1438, 1, 0
  %v1599 = vsel %vm1439, 1, 0
  %v1600 = vsel %vm1440, 1, 0
  %v1601 = vsel %vm1441, 1, 0
  %v1602 = vsel %vm1442, 1, 0
  %v1603 = vsel %vm1443, 1, 0
  %v1604 = vsel %vm1444, 1, 0
  %v1605 = vsel %vm1445, 1, 0
  %v1606 = vsel %vm1446, 1, 0
  %v1607 = vsel %vm1447, 1, 0
  %v1608 = vsel %vm1448, 1, 0
  %v1609 = vsel %vm1449, 1, 0
  %v1610 = vsel %vm1450, 1, 0
  %v1611 = vsel %vm1451, 1, 0
  %v1612 = vsel %vm1452, 1, 0
  %v1613 = vsel %vm1453, 1, 0
  %v1614 = vsel %vm1454, 1, 0
  %v1615 = vsel %vm1455, 1, 0
  %v1616 = vsel %vm1456, 1, 0
  %v1617 = vsel %vm1457, 1, 0
  %v1618 = vsel %vm1458, 1, 0
  %v1619 = vsel %vm1459, 1, 0
  %v1620 = vsel %vm1460, 1, 0
  %v1621 = vsel %vm1461, 1, 0
  %v1622 = vsel %vm1462, 1, 0
  %v1623 = vsel %vm1463, 1, 0
  %v1624 = vcvt.s32.f32 %v1464
  %v1625 = vcvt.s32.f32 %v1465
  %v1626 = vcvt.s32.f32 %v1466
  %v1627 = vcvt.s32.f32 %v1467
  %v1628 = vcvt.s32.f32 %v1468
  %v1629 = vcvt.s32.f32 %v1469
  %v1630 = vcvt.s32.f32 %v1470
  %v1631 = vcvt.s32.f32 %v1471
  %v1632 = vcvt.s32.f32 %v1472
  %v1633 = vcvt.s32.f32 %v1473
  %v1634 = vcvt.s32.f32 %v1474
  %v1635 = vcvt.s32.f32 %v1475
  %v1636 = vcvt.s32.f32 %v1476
  %v1637 = vcvt.s32.f32 %v1477
  %v1638 = vcvt.s32.f32 %v1478
  %v1639 = vcvt.s32.f32 %v1479
  %v1640 = vcvt.s32.f32 %v1480
  %v1641 = vcvt.s32.f32 %v1481
  %v1642 = vcvt.s32.f32 %v1482
  %v1643 = vcvt.s32.f32 %v1483
  %v1644 = vcvt.s32.f32 %v1484
  %v1645 = vcvt.s32.f32 %v1485
  %v1646 = vcvt.s32.f32 %v1486
  %v1647 = vcvt.s32.f32 %v1487
  %v1648 = vcvt.s32.f32 %v1488
  %v1649 = vcvt.s32.f32 %v1489
  %v1650 = vcvt.s32.f32 %v1490
  %v1651 = vcvt.s32.f32 %v1491
  %v1652 = vcvt.s32.f32 %v1492
  %v1653 = vcvt.s32.f32 %v1493
  %v1654 = vcvt.s32.f32 %v1494
  %v1655 = vcvt.s32.f32 %v1495
  %v1656 = vcvt.s32.f32 %v1496
  %v1657 = vcvt.s32.f32 %v1497
  %v1658 = vcvt.s32.f32 %v1498
  %v1659 = vcvt.s32.f32 %v1499
  %v1660 = vcvt.s32.f32 %v1500
  %v1661 = vcvt.s32.f32 %v1501
  %v1662 = vcvt.s32.f32 %v1502
  %v1663 = vcvt.s32.f32 %v1503
  %v1664 = vcvt.s32.f32 %v1504
  %v1665 = vcvt.s32.f32 %v1505
  %v1666 = vcvt.s32.f32 %v1506
  %v1667 = vcvt.s32.f32 %v1507
  %v1668 = vcvt.s32.f32 %v1508
  %v1669 = vcvt.s32.f32 %v1509
  %v1670 = vcvt.s32.f32 %v1510
  %v1671 = vcvt.s32.f32 %v1511
  %v1672 = vcvt.s32.f32 %v1512
  %v1673 = vcvt.s32.f32 %v1513
  %v1674 = vcvt.s32.f32 %v1514
  %v1675 = vcvt.s32.f32 %v1515
  %v1676 = vcvt.s32.f32 %v1516
  %v1677 = vcvt.s32.f32 %v1517
  %v1678 = vcvt.s32.f32 %v1518
  %v1679 = vcvt.s32.f32 %v1519
  %v1680 = vcvt.s32.f32 %v1520
  %v1681 = vcvt.s32.f32 %v1521
  %v1682 = vcvt.s32.f32 %v1522
  %v1683 = vcvt.s32.f32 %v1523
  %v1684 = vcvt.s32.f32 %v1524
  %v1685 = vcvt.s32.f32 %v1525
  %v1686 = vcvt.s32.f32 %v1526
  %v1687 = vcvt.s32.f32 %v1527
  %v1688 = vcvt.s32.f32 %v1528
  %v1689 = vcvt.s32.f32 %v1529
  %v1690 = vcvt.s32.f32 %v1530
  %v1691 = vcvt.s32.f32 %v1531
  %v1692 = vcvt.s32.f32 %v1532
  %v1693 = vcvt.s32.f32 %v1533
  %v1694 = vcvt.s32.f32 %v1534
  %v1695 = vcvt.s32.f32 %v1535
  %v1696 = vcvt.s32.f32 %v1536
  %v1697 = vcvt.s32.f32 %v1537
  %v1698 = vcvt.s32.f32 %v1538
  %v1699 = vcvt.s32.f32 %v1539
  %v1700 = vcvt.s32.f32 %v1540
  %v1701 = vcvt.s32.f32 %v1541
  %v1702 = vcvt.s32.f32 %v1542
  %v1703 = vcvt.s32.f32 %v1543
  %v1704 = vcvt.s32.f32 %v1544
  %v1705 = vcvt.s32.f32 %v1545
  %v1706 = vcvt.s32.f32 %v1546
  %v1707 = vcvt.s32.f32 %v1547
  %v1708 = vcvt.s32.f32 %v1548
  %v1709 = vcvt.s32.f32 %v1549
  %v1710 = vcvt.s32.f32 %v1550
  %v1711 = vcvt.s32.f32 %v1551
  %v1712 = vcvt.s32.f32 %v1552
  %v1713 = vcvt.s32.f32 %v1553
  %v1714 = vcvt.s32.f32 %v1554
  %v1715 = vcvt.s32.f32 %v1555
  %v1716 = vcvt.s32.f32 %v1556
  %v1717 = vcvt.s32.f32 %v1557
  %v1718 = vcvt.s32.f32 %v1558
  %v1719 = vcvt.s32.f32 %v1559
  %v1720 = vcvt.s32.f32 %v1560
  %v1721 = vcvt.s32.f32 %v1561
  %v1722 = vcvt.s32.f32 %v1562
  %v1723 = vcvt.s32.f32 %v1563
  %v1724 = vcvt.s32.f32 %v1564
  %v1725 = vcvt.s32.f32 %v1565
  %v1726 = vcvt.s32.f32 %v1566
  %v1727 = vcvt.s32.f32 %v1567
  %v1728 = vcvt.s32.f32 %v1568
  %v1729 = vcvt.s32.f32 %v1569
  %v1730 = vcvt.s32.f32 %v1570
  %v1731 = vcvt.s32.f32 %v1571
  %v1732 = vcvt.s32.f32 %v1572
  %v1733 = vcvt.s32.f32 %v1573
  %v1734 = vcvt.s32.f32 %v1574
  %v1735 = vcvt.s32.f32 %v1575
  %v1736 = vcvt.s32.f32 %v1576
  %v1737 = vcvt.s32.f32 %v1577
  %v1738 = vcvt.s32.f32 %v1578
  %v1739 = vcvt.s32.f32 %v1579
  %v1740 = vcvt.s32.f32 %v1580
  %v1741 = vcvt.s32.f32 %v1581
  %v1742 = vcvt.s32.f32 %v1582
  %v1743 = vcvt.s32.f32 %v1583
  %v1744 = vcvt.s32.f32 %v1584
  %v1745 = vcvt.s32.f32 %v1585
  %v1746 = vcvt.s32.f32 %v1586
  %v1747 = vcvt.s32.f32 %v1587
  %v1748 = vcvt.s32.f32 %v1588
  %v1749 = vcvt.s32.f32 %v1589
  %v1750 = vcvt.s32.f32 %v1590
  %v1751 = vcvt.s32.f32 %v1591
  %v1752 = vcvt.s32.f32 %v1592
  %v1753 = vcvt.s32.f32 %v1593
  %v1754 = vcvt.s32.f32 %v1594
  %v1755 = vcvt.s32.f32 %v1595
  %v1756 = vcvt.s32.f32 %v1596
  %v1757 = vcvt.s32.f32 %v1597
  %v1758 = vcvt.s32.f32 %v1598
  %v1759 = vcvt.s32.f32 %v1599
  %v1760 = vcvt.s32.f32 %v1600
  %v1761 = vcvt.s32.f32 %v1601
  %v1762 = vcvt.s32.f32 %v1602
  %v1763 = vcvt.s32.f32 %v1603
  %v1764 = vcvt.s32.f32 %v1604
  %v1765 = vcvt.s32.f32 %v1605
  %v1766 = vcvt.s32.f32 %v1606
  %v1767 = vcvt.s32.f32 %v1607
  %v1768 = vcvt.s32.f32 %v1608
  %v1769 = vcvt.s32.f32 %v1609
  %v1770 = vcvt.s32.f32 %v1610
  %v1771 = vcvt.s32.f32 %v1611
  %v1772 = vcvt.s32.f32 %v1612
  %v1773 = vcvt.s32.f32 %v1613
  %v1774 = vcvt.s32.f32 %v1614
  %v1775 = vcvt.s32.f32 %v1615
  %v1776 = vcvt.s32.f32 %v1616
  %v1777 = vcvt.s32.f32 %v1617
  %v1778 = vcvt.s32.f32 %v1618
  %v1779 = vcvt.s32.f32 %v1619
  %v1780 = vcvt.s32.f32 %v1620
  %v1781 = vcvt.s32.f32 %v1621
  %v1782 = vcvt.s32.f32 %v1622
  %v1783 = vcvt.s32.f32 %v1623
  %v1784 = vld [vmem:[%s3] sm:$0xff]
  %v1785 = vld [vmem:[%s3 + $0x8] sm:$0xff]
  %v1786 = vld [vmem:[%s3 + $0x10] sm:$0xff]
  %v1787 = vld [vmem:[%s3 + $0x18] sm:$0xff]
  %v1788 = vld [vmem:[%s3 + $0x20] sm:$0xff]
  %v1789 = vld [vmem:[%s3 + $0x28] sm:$0xff]
  %v1790 = vld [vmem:[%s3 + $0x30] sm:$0xff]
  %v1791 = vld [vmem:[%s3 + $0x38] sm:$0xff]
  %v1792 = vld [vmem:[%s3 + $0x40] sm:$0xff]
  %v1793 = vld [vmem:[%s3 + $0x48] sm:$0xff]
  %v1794 = vld [vmem:[%s3 + $0x50] sm:$0xff]
  %v1795 = vld [vmem:[%s3 + $0x58] sm:$0xff]
  %v1796 = vld [vmem:[%s3 + $0x60] sm:$0xff]
  %v1797 = vld [vmem:[%s3 + $0x68] sm:$0xff]
  %v1798 = vld [vmem:[%s3 + $0x70] sm:$0xff]
  %v1799 = vld [vmem:[%s3 + $0x78] sm:$0xff]
  %v1800 = vld [vmem:[%s3 + $0x80] sm:$0xff]
  %v1801 = vld [vmem:[%s3 + $0x88] sm:$0xff]
  %v1802 = vld [vmem:[%s3 + $0x90] sm:$0xff]
  %v1803 = vld [vmem:[%s3 + $0x98] sm:$0xff]
  %v1804 = vld [vmem:[%s3 + $0xa0] sm:$0xff]
  %v1805 = vld [vmem:[%s3 + $0xa8] sm:$0xff]
  %v1806 = vld [vmem:[%s3 + $0xb0] sm:$0xff]
  %v1807 = vld [vmem:[%s3 + $0xb8] sm:$0xff]
  %v1808 = vld [vmem:[%s3 + $0xc0] sm:$0xff]
  %v1809 = vld [vmem:[%s3 + $0xc8] sm:$0xff]
  %v1810 = vld [vmem:[%s3 + $0xd0] sm:$0xff]
  %v1811 = vld [vmem:[%s3 + $0xd8] sm:$0xff]
  %v1812 = vld [vmem:[%s3 + $0xe0] sm:$0xff]
  %v1813 = vld [vmem:[%s3 + $0xe8] sm:$0xff]
  %v1814 = vld [vmem:[%s3 + $0xf0] sm:$0xff]
  %v1815 = vld [vmem:[%s3 + $0xf8] sm:$0xff]
  %v1816 = vld [vmem:[%s3 + $0x100] sm:$0xff]
  %v1817 = vld [vmem:[%s3 + $0x108] sm:$0xff]
  %v1818 = vld [vmem:[%s3 + $0x110] sm:$0xff]
  %v1819 = vld [vmem:[%s3 + $0x118] sm:$0xff]
  %v1820 = vld [vmem:[%s3 + $0x120] sm:$0xff]
  %v1821 = vld [vmem:[%s3 + $0x128] sm:$0xff]
  %v1822 = vld [vmem:[%s3 + $0x130] sm:$0xff]
  %v1823 = vld [vmem:[%s3 + $0x138] sm:$0xff]
  %v1824 = vld [vmem:[%s3 + $0x140] sm:$0xff]
  %v1825 = vld [vmem:[%s3 + $0x148] sm:$0xff]
  %v1826 = vld [vmem:[%s3 + $0x150] sm:$0xff]
  %v1827 = vld [vmem:[%s3 + $0x158] sm:$0xff]
  %v1828 = vld [vmem:[%s3 + $0x160] sm:$0xff]
  %v1829 = vld [vmem:[%s3 + $0x168] sm:$0xff]
  %v1830 = vld [vmem:[%s3 + $0x170] sm:$0xff]
  %v1831 = vld [vmem:[%s3 + $0x178] sm:$0xff]
  %v1832 = vld [vmem:[%s3 + $0x180] sm:$0xff]
  %v1833 = vld [vmem:[%s3 + $0x188] sm:$0xff]
  %v1834 = vld [vmem:[%s3 + $0x190] sm:$0xff]
  %v1835 = vld [vmem:[%s3 + $0x198] sm:$0xff]
  %v1836 = vld [vmem:[%s3 + $0x1a0] sm:$0xff]
  %v1837 = vld [vmem:[%s3 + $0x1a8] sm:$0xff]
  %v1838 = vld [vmem:[%s3 + $0x1b0] sm:$0xff]
  %v1839 = vld [vmem:[%s3 + $0x1b8] sm:$0xff]
  %v1840 = vld [vmem:[%s3 + $0x1c0] sm:$0xff]
  %v1841 = vld [vmem:[%s3 + $0x1c8] sm:$0xff]
  %v1842 = vld [vmem:[%s3 + $0x1d0] sm:$0xff]
  %v1843 = vld [vmem:[%s3 + $0x1d8] sm:$0xff]
  %v1844 = vld [vmem:[%s3 + $0x1e0] sm:$0xff]
  %v1845 = vld [vmem:[%s3 + $0x1e8] sm:$0xff]
  %v1846 = vld [vmem:[%s3 + $0x1f0] sm:$0xff]
  %v1847 = vld [vmem:[%s3 + $0x1f8] sm:$0xff]
  %v1848 = vld [vmem:[%s3 + $0x200] sm:$0xff]
  %v1849 = vld [vmem:[%s3 + $0x208] sm:$0xff]
  %v1850 = vld [vmem:[%s3 + $0x210] sm:$0xff]
  %v1851 = vld [vmem:[%s3 + $0x218] sm:$0xff]
  %v1852 = vld [vmem:[%s3 + $0x220] sm:$0xff]
  %v1853 = vld [vmem:[%s3 + $0x228] sm:$0xff]
  %v1854 = vld [vmem:[%s3 + $0x230] sm:$0xff]
  %v1855 = vld [vmem:[%s3 + $0x238] sm:$0xff]
  %v1856 = vld [vmem:[%s3 + $0x240] sm:$0xff]
  %v1857 = vld [vmem:[%s3 + $0x248] sm:$0xff]
  %v1858 = vld [vmem:[%s3 + $0x250] sm:$0xff]
  %v1859 = vld [vmem:[%s3 + $0x258] sm:$0xff]
  %v1860 = vld [vmem:[%s3 + $0x260] sm:$0xff]
  %v1861 = vld [vmem:[%s3 + $0x268] sm:$0xff]
  %v1862 = vld [vmem:[%s3 + $0x270] sm:$0xff]
  %v1863 = vld [vmem:[%s3 + $0x278] sm:$0xff]
  %v1864 = vld [vmem:[%s3 + $0x280] sm:$0xff]
  %v1865 = vld [vmem:[%s3 + $0x288] sm:$0xff]
  %v1866 = vld [vmem:[%s3 + $0x290] sm:$0xff]
  %v1867 = vld [vmem:[%s3 + $0x298] sm:$0xff]
  %v1868 = vld [vmem:[%s3 + $0x2a0] sm:$0xff]
  %v1869 = vld [vmem:[%s3 + $0x2a8] sm:$0xff]
  %v1870 = vld [vmem:[%s3 + $0x2b0] sm:$0xff]
  %v1871 = vld [vmem:[%s3 + $0x2b8] sm:$0xff]
  %v1872 = vld [vmem:[%s3 + $0x2c0] sm:$0xff]
  %v1873 = vld [vmem:[%s3 + $0x2c8] sm:$0xff]
  %v1874 = vld [vmem:[%s3 + $0x2d0] sm:$0xff]
  %v1875 = vld [vmem:[%s3 + $0x2d8] sm:$0xff]
  %v1876 = vld [vmem:[%s3 + $0x2e0] sm:$0xff]
  %v1877 = vld [vmem:[%s3 + $0x2e8] sm:$0xff]
  %v1878 = vld [vmem:[%s3 + $0x2f0] sm:$0xff]
  %v1879 = vld [vmem:[%s3 + $0x2f8] sm:$0xff]
  %v1880 = vld [vmem:[%s3 + $0x300] sm:$0xff]
  %v1881 = vld [vmem:[%s3 + $0x308] sm:$0xff]
  %v1882 = vld [vmem:[%s3 + $0x310] sm:$0xff]
  %v1883 = vld [vmem:[%s3 + $0x318] sm:$0xff]
  %v1884 = vld [vmem:[%s3 + $0x320] sm:$0xff]
  %v1885 = vld [vmem:[%s3 + $0x328] sm:$0xff]
  %v1886 = vld [vmem:[%s3 + $0x330] sm:$0xff]
  %v1887 = vld [vmem:[%s3 + $0x338] sm:$0xff]
  %v1888 = vld [vmem:[%s3 + $0x340] sm:$0xff]
  %v1889 = vld [vmem:[%s3 + $0x348] sm:$0xff]
  %v1890 = vld [vmem:[%s3 + $0x350] sm:$0xff]
  %v1891 = vld [vmem:[%s3 + $0x358] sm:$0xff]
  %v1892 = vld [vmem:[%s3 + $0x360] sm:$0xff]
  %v1893 = vld [vmem:[%s3 + $0x368] sm:$0xff]
  %v1894 = vld [vmem:[%s3 + $0x370] sm:$0xff]
  %v1895 = vld [vmem:[%s3 + $0x378] sm:$0xff]
  %v1896 = vld [vmem:[%s3 + $0x380] sm:$0xff]
  %v1897 = vld [vmem:[%s3 + $0x388] sm:$0xff]
  %v1898 = vld [vmem:[%s3 + $0x390] sm:$0xff]
  %v1899 = vld [vmem:[%s3 + $0x398] sm:$0xff]
  %v1900 = vld [vmem:[%s3 + $0x3a0] sm:$0xff]
  %v1901 = vld [vmem:[%s3 + $0x3a8] sm:$0xff]
  %v1902 = vld [vmem:[%s3 + $0x3b0] sm:$0xff]
  %v1903 = vld [vmem:[%s3 + $0x3b8] sm:$0xff]
  %v1904 = vld [vmem:[%s3 + $0x3c0] sm:$0xff]
  %v1905 = vld [vmem:[%s3 + $0x3c8] sm:$0xff]
  %v1906 = vld [vmem:[%s3 + $0x3d0] sm:$0xff]
  %v1907 = vld [vmem:[%s3 + $0x3d8] sm:$0xff]
  %v1908 = vld [vmem:[%s3 + $0x3e0] sm:$0xff]
  %v1909 = vld [vmem:[%s3 + $0x3e8] sm:$0xff]
  %v1910 = vld [vmem:[%s3 + $0x3f0] sm:$0xff]
  %v1911 = vld [vmem:[%s3 + $0x3f8] sm:$0xff]
  %v1912 = vld [vmem:[%s3 + $0x400] sm:$0xff]
  %v1913 = vld [vmem:[%s3 + $0x408] sm:$0xff]
  %v1914 = vld [vmem:[%s3 + $0x410] sm:$0xff]
  %v1915 = vld [vmem:[%s3 + $0x418] sm:$0xff]
  %v1916 = vld [vmem:[%s3 + $0x420] sm:$0xff]
  %v1917 = vld [vmem:[%s3 + $0x428] sm:$0xff]
  %v1918 = vld [vmem:[%s3 + $0x430] sm:$0xff]
  %v1919 = vld [vmem:[%s3 + $0x438] sm:$0xff]
  %v1920 = vld [vmem:[%s3 + $0x440] sm:$0xff]
  %v1921 = vld [vmem:[%s3 + $0x448] sm:$0xff]
  %v1922 = vld [vmem:[%s3 + $0x450] sm:$0xff]
  %v1923 = vld [vmem:[%s3 + $0x458] sm:$0xff]
  %v1924 = vld [vmem:[%s3 + $0x460] sm:$0xff]
  %v1925 = vld [vmem:[%s3 + $0x468] sm:$0xff]
  %v1926 = vld [vmem:[%s3 + $0x470] sm:$0xff]
  %v1927 = vld [vmem:[%s3 + $0x478] sm:$0xff]
  %v1928 = vld [vmem:[%s3 + $0x480] sm:$0xff]
  %v1929 = vld [vmem:[%s3 + $0x488] sm:$0xff]
  %v1930 = vld [vmem:[%s3 + $0x490] sm:$0xff]
  %v1931 = vld [vmem:[%s3 + $0x498] sm:$0xff]
  %v1932 = vld [vmem:[%s3 + $0x4a0] sm:$0xff]
  %v1933 = vld [vmem:[%s3 + $0x4a8] sm:$0xff]
  %v1934 = vld [vmem:[%s3 + $0x4b0] sm:$0xff]
  %v1935 = vld [vmem:[%s3 + $0x4b8] sm:$0xff]
  %v1936 = vld [vmem:[%s3 + $0x4c0] sm:$0xff]
  %v1937 = vld [vmem:[%s3 + $0x4c8] sm:$0xff]
  %v1938 = vld [vmem:[%s3 + $0x4d0] sm:$0xff]
  %v1939 = vld [vmem:[%s3 + $0x4d8] sm:$0xff]
  %v1940 = vld [vmem:[%s3 + $0x4e0] sm:$0xff]
  %v1941 = vld [vmem:[%s3 + $0x4e8] sm:$0xff]
  %v1942 = vld [vmem:[%s3 + $0x4f0] sm:$0xff]
  %v1943 = vld [vmem:[%s3 + $0x4f8] sm:$0xff]
  %v1944 = vld [vmem:[%s3 + $0x500] sm:$0xff]
  %v1945 = vld [vmem:[%s3 + $0x508] sm:$0xff]
  %v1946 = vld [vmem:[%s3 + $0x510] sm:$0xff]
  %v1947 = vld [vmem:[%s3 + $0x518] sm:$0xff]
  %v1948 = vld [vmem:[%s3 + $0x520] sm:$0xff]
  %v1949 = vld [vmem:[%s3 + $0x528] sm:$0xff]
  %v1950 = vld [vmem:[%s3 + $0x530] sm:$0xff]
  %v1951 = vld [vmem:[%s3 + $0x538] sm:$0xff]
  %v1952 = vld [vmem:[%s3 + $0x540] sm:$0xff]
  %v1953 = vld [vmem:[%s3 + $0x548] sm:$0xff]
  %v1954 = vld [vmem:[%s3 + $0x550] sm:$0xff]
  %v1955 = vld [vmem:[%s3 + $0x558] sm:$0xff]
  %v1956 = vld [vmem:[%s3 + $0x560] sm:$0xff]
  %v1957 = vld [vmem:[%s3 + $0x568] sm:$0xff]
  %v1958 = vld [vmem:[%s3 + $0x570] sm:$0xff]
  %v1959 = vld [vmem:[%s3 + $0x578] sm:$0xff]
  %v1960 = vld [vmem:[%s3 + $0x580] sm:$0xff]
  %v1961 = vld [vmem:[%s3 + $0x588] sm:$0xff]
  %v1962 = vld [vmem:[%s3 + $0x590] sm:$0xff]
  %v1963 = vld [vmem:[%s3 + $0x598] sm:$0xff]
  %v1964 = vld [vmem:[%s3 + $0x5a0] sm:$0xff]
  %v1965 = vld [vmem:[%s3 + $0x5a8] sm:$0xff]
  %v1966 = vld [vmem:[%s3 + $0x5b0] sm:$0xff]
  %v1967 = vld [vmem:[%s3 + $0x5b8] sm:$0xff]
  %v1968 = vld [vmem:[%s3 + $0x5c0] sm:$0xff]
  %v1969 = vld [vmem:[%s3 + $0x5c8] sm:$0xff]
  %v1970 = vld [vmem:[%s3 + $0x5d0] sm:$0xff]
  %v1971 = vld [vmem:[%s3 + $0x5d8] sm:$0xff]
  %v1972 = vld [vmem:[%s3 + $0x5e0] sm:$0xff]
  %v1973 = vld [vmem:[%s3 + $0x5e8] sm:$0xff]
  %v1974 = vld [vmem:[%s3 + $0x5f0] sm:$0xff]
  %v1975 = vld [vmem:[%s3 + $0x5f8] sm:$0xff]
  %v1976 = vld [vmem:[%s3 + $0x600] sm:$0xff]
  %v1977 = vld [vmem:[%s3 + $0x608] sm:$0xff]
  %v1978 = vld [vmem:[%s3 + $0x610] sm:$0xff]
  %v1979 = vld [vmem:[%s3 + $0x618] sm:$0xff]
  %v1980 = vld [vmem:[%s3 + $0x620] sm:$0xff]
  %v1981 = vld [vmem:[%s3 + $0x628] sm:$0xff]
  %v1982 = vld [vmem:[%s3 + $0x630] sm:$0xff]
  %v1983 = vld [vmem:[%s3 + $0x638] sm:$0xff]
  %v1984 = vld [vmem:[%s3 + $0x640] sm:$0xff]
  %v1985 = vld [vmem:[%s3 + $0x648] sm:$0xff]
  %v1986 = vld [vmem:[%s3 + $0x650] sm:$0xff]
  %v1987 = vld [vmem:[%s3 + $0x658] sm:$0xff]
  %v1988 = vld [vmem:[%s3 + $0x660] sm:$0xff]
  %v1989 = vld [vmem:[%s3 + $0x668] sm:$0xff]
  %v1990 = vld [vmem:[%s3 + $0x670] sm:$0xff]
  %v1991 = vld [vmem:[%s3 + $0x678] sm:$0xff]
  %v1992 = vld [vmem:[%s3 + $0x680] sm:$0xff]
  %v1993 = vld [vmem:[%s3 + $0x688] sm:$0xff]
  %v1994 = vld [vmem:[%s3 + $0x690] sm:$0xff]
  %v1995 = vld [vmem:[%s3 + $0x698] sm:$0xff]
  %v1996 = vld [vmem:[%s3 + $0x6a0] sm:$0xff]
  %v1997 = vld [vmem:[%s3 + $0x6a8] sm:$0xff]
  %v1998 = vld [vmem:[%s3 + $0x6b0] sm:$0xff]
  %v1999 = vld [vmem:[%s3 + $0x6b8] sm:$0xff]
  %v2000 = vld [vmem:[%s3 + $0x6c0] sm:$0xff]
  %v2001 = vld [vmem:[%s3 + $0x6c8] sm:$0xff]
  %v2002 = vld [vmem:[%s3 + $0x6d0] sm:$0xff]
  %v2003 = vld [vmem:[%s3 + $0x6d8] sm:$0xff]
  %v2004 = vld [vmem:[%s3 + $0x6e0] sm:$0xff]
  %v2005 = vld [vmem:[%s3 + $0x6e8] sm:$0xff]
  %v2006 = vld [vmem:[%s3 + $0x6f0] sm:$0xff]
  %v2007 = vld [vmem:[%s3 + $0x6f8] sm:$0xff]
  %v2008 = vld [vmem:[%s3 + $0x700] sm:$0xff]
  %v2009 = vld [vmem:[%s3 + $0x708] sm:$0xff]
  %v2010 = vld [vmem:[%s3 + $0x710] sm:$0xff]
  %v2011 = vld [vmem:[%s3 + $0x718] sm:$0xff]
  %v2012 = vld [vmem:[%s3 + $0x720] sm:$0xff]
  %v2013 = vld [vmem:[%s3 + $0x728] sm:$0xff]
  %v2014 = vld [vmem:[%s3 + $0x730] sm:$0xff]
  %v2015 = vld [vmem:[%s3 + $0x738] sm:$0xff]
  %v2016 = vld [vmem:[%s3 + $0x740] sm:$0xff]
  %v2017 = vld [vmem:[%s3 + $0x748] sm:$0xff]
  %v2018 = vld [vmem:[%s3 + $0x750] sm:$0xff]
  %v2019 = vld [vmem:[%s3 + $0x758] sm:$0xff]
  %v2020 = vld [vmem:[%s3 + $0x760] sm:$0xff]
  %v2021 = vld [vmem:[%s3 + $0x768] sm:$0xff]
  %v2022 = vld [vmem:[%s3 + $0x770] sm:$0xff]
  %v2023 = vld [vmem:[%s3 + $0x778] sm:$0xff]
  %v2024 = vld [vmem:[%s3 + $0x780] sm:$0xff]
  %v2025 = vld [vmem:[%s3 + $0x788] sm:$0xff]
  %v2026 = vld [vmem:[%s3 + $0x790] sm:$0xff]
  %v2027 = vld [vmem:[%s3 + $0x798] sm:$0xff]
  %v2028 = vld [vmem:[%s3 + $0x7a0] sm:$0xff]
  %v2029 = vld [vmem:[%s3 + $0x7a8] sm:$0xff]
  %v2030 = vld [vmem:[%s3 + $0x7b0] sm:$0xff]
  %v2031 = vld [vmem:[%s3 + $0x7b8] sm:$0xff]
  %v2032 = vld [vmem:[%s3 + $0x7c0] sm:$0xff]
  %v2033 = vld [vmem:[%s3 + $0x7c8] sm:$0xff]
  %v2034 = vld [vmem:[%s3 + $0x7d0] sm:$0xff]
  %v2035 = vld [vmem:[%s3 + $0x7d8] sm:$0xff]
  %v2036 = vld [vmem:[%s3 + $0x7e0] sm:$0xff]
  %v2037 = vld [vmem:[%s3 + $0x7e8] sm:$0xff]
  %v2038 = vld [vmem:[%s3 + $0x7f0] sm:$0xff]
  %v2039 = vld [vmem:[%s3 + $0x7f8] sm:$0xff]
  %v2040 = vld [vmem:[%s3 + $0x800] sm:$0xff]
  %v2041 = vld [vmem:[%s3 + $0x808] sm:$0xff]
  %v2042 = vld [vmem:[%s3 + $0x810] sm:$0xff]
  %v2043 = vld [vmem:[%s3 + $0x818] sm:$0xff]
  %v2044 = vld [vmem:[%s3 + $0x820] sm:$0xff]
  %v2045 = vld [vmem:[%s3 + $0x828] sm:$0xff]
  %v2046 = vld [vmem:[%s3 + $0x830] sm:$0xff]
  %v2047 = vld [vmem:[%s3 + $0x838] sm:$0xff]
  %v2048 = vld [vmem:[%s3 + $0x840] sm:$0xff]
  %v2049 = vld [vmem:[%s3 + $0x848] sm:$0xff]
  %v2050 = vld [vmem:[%s3 + $0x850] sm:$0xff]
  %v2051 = vld [vmem:[%s3 + $0x858] sm:$0xff]
  %v2052 = vld [vmem:[%s3 + $0x860] sm:$0xff]
  %v2053 = vld [vmem:[%s3 + $0x868] sm:$0xff]
  %v2054 = vld [vmem:[%s3 + $0x870] sm:$0xff]
  %v2055 = vld [vmem:[%s3 + $0x878] sm:$0xff]
  %v2056 = vld [vmem:[%s3 + $0x880] sm:$0xff]
  %v2057 = vld [vmem:[%s3 + $0x888] sm:$0xff]
  %v2058 = vld [vmem:[%s3 + $0x890] sm:$0xff]
  %v2059 = vld [vmem:[%s3 + $0x898] sm:$0xff]
  %v2060 = vld [vmem:[%s3 + $0x8a0] sm:$0xff]
  %v2061 = vld [vmem:[%s3 + $0x8a8] sm:$0xff]
  %v2062 = vld [vmem:[%s3 + $0x8b0] sm:$0xff]
  %v2063 = vld [vmem:[%s3 + $0x8b8] sm:$0xff]
  %v2064 = vld [vmem:[%s3 + $0x8c0] sm:$0xff]
  %v2065 = vld [vmem:[%s3 + $0x8c8] sm:$0xff]
  %v2066 = vld [vmem:[%s3 + $0x8d0] sm:$0xff]
  %v2067 = vld [vmem:[%s3 + $0x8d8] sm:$0xff]
  %v2068 = vld [vmem:[%s3 + $0x8e0] sm:$0xff]
  %v2069 = vld [vmem:[%s3 + $0x8e8] sm:$0xff]
  %v2070 = vld [vmem:[%s3 + $0x8f0] sm:$0xff]
  %v2071 = vld [vmem:[%s3 + $0x8f8] sm:$0xff]
  %v2072 = vld [vmem:[%s3 + $0x900] sm:$0xff]
  %v2073 = vld [vmem:[%s3 + $0x908] sm:$0xff]
  %v2074 = vld [vmem:[%s3 + $0x910] sm:$0xff]
  %v2075 = vld [vmem:[%s3 + $0x918] sm:$0xff]
  %v2076 = vld [vmem:[%s3 + $0x920] sm:$0xff]
  %v2077 = vld [vmem:[%s3 + $0x928] sm:$0xff]
  %v2078 = vld [vmem:[%s3 + $0x930] sm:$0xff]
  %v2079 = vld [vmem:[%s3 + $0x938] sm:$0xff]
  %v2080 = vld [vmem:[%s3 + $0x940] sm:$0xff]
  %v2081 = vld [vmem:[%s3 + $0x948] sm:$0xff]
  %v2082 = vld [vmem:[%s3 + $0x950] sm:$0xff]
  %v2083 = vld [vmem:[%s3 + $0x958] sm:$0xff]
  %v2084 = vld [vmem:[%s3 + $0x960] sm:$0xff]
  %v2085 = vld [vmem:[%s3 + $0x968] sm:$0xff]
  %v2086 = vld [vmem:[%s3 + $0x970] sm:$0xff]
  %v2087 = vld [vmem:[%s3 + $0x978] sm:$0xff]
  %v2088 = vld [vmem:[%s3 + $0x980] sm:$0xff]
  %v2089 = vld [vmem:[%s3 + $0x988] sm:$0xff]
  %v2090 = vld [vmem:[%s3 + $0x990] sm:$0xff]
  %v2091 = vld [vmem:[%s3 + $0x998] sm:$0xff]
  %v2092 = vld [vmem:[%s3 + $0x9a0] sm:$0xff]
  %v2093 = vld [vmem:[%s3 + $0x9a8] sm:$0xff]
  %v2094 = vld [vmem:[%s3 + $0x9b0] sm:$0xff]
  %v2095 = vld [vmem:[%s3 + $0x9b8] sm:$0xff]
  %v2096 = vld [vmem:[%s3 + $0x9c0] sm:$0xff]
  %v2097 = vld [vmem:[%s3 + $0x9c8] sm:$0xff]
  %v2098 = vld [vmem:[%s3 + $0x9d0] sm:$0xff]
  %v2099 = vld [vmem:[%s3 + $0x9d8] sm:$0xff]
  %v2100 = vld [vmem:[%s3 + $0x9e0] sm:$0xff]
  %v2101 = vld [vmem:[%s3 + $0x9e8] sm:$0xff]
  %v2102 = vld [vmem:[%s3 + $0x9f0] sm:$0xff]
  %v2103 = vld [vmem:[%s3 + $0x9f8] sm:$0xff]
  %v2104 = vld [vmem:[%s3 + $0xa00] sm:$0xff]
  %v2105 = vld [vmem:[%s3 + $0xa08] sm:$0xff]
  %v2106 = vld [vmem:[%s3 + $0xa10] sm:$0xff]
  %v2107 = vld [vmem:[%s3 + $0xa18] sm:$0xff]
  %v2108 = vld [vmem:[%s3 + $0xa20] sm:$0xff]
  %v2109 = vld [vmem:[%s3 + $0xa28] sm:$0xff]
  %v2110 = vld [vmem:[%s3 + $0xa30] sm:$0xff]
  %v2111 = vld [vmem:[%s3 + $0xa38] sm:$0xff]
  %v2112 = vld [vmem:[%s3 + $0xa40] sm:$0xff]
  %v2113 = vld [vmem:[%s3 + $0xa48] sm:$0xff]
  %v2114 = vld [vmem:[%s3 + $0xa50] sm:$0xff]
  %v2115 = vld [vmem:[%s3 + $0xa58] sm:$0xff]
  %v2116 = vld [vmem:[%s3 + $0xa60] sm:$0xff]
  %v2117 = vld [vmem:[%s3 + $0xa68] sm:$0xff]
  %v2118 = vld [vmem:[%s3 + $0xa70] sm:$0xff]
  %v2119 = vld [vmem:[%s3 + $0xa78] sm:$0xff]
  %v2120 = vld [vmem:[%s3 + $0xa80] sm:$0xff]
  %v2121 = vld [vmem:[%s3 + $0xa88] sm:$0xff]
  %v2122 = vld [vmem:[%s3 + $0xa90] sm:$0xff]
  %v2123 = vld [vmem:[%s3 + $0xa98] sm:$0xff]
  %v2124 = vld [vmem:[%s3 + $0xaa0] sm:$0xff]
  %v2125 = vld [vmem:[%s3 + $0xaa8] sm:$0xff]
  %v2126 = vld [vmem:[%s3 + $0xab0] sm:$0xff]
  %v2127 = vld [vmem:[%s3 + $0xab8] sm:$0xff]
  %v2128 = vld [vmem:[%s3 + $0xac0] sm:$0xff]
  %v2129 = vld [vmem:[%s3 + $0xac8] sm:$0xff]
  %v2130 = vld [vmem:[%s3 + $0xad0] sm:$0xff]
  %v2131 = vld [vmem:[%s3 + $0xad8] sm:$0xff]
  %v2132 = vld [vmem:[%s3 + $0xae0] sm:$0xff]
  %v2133 = vld [vmem:[%s3 + $0xae8] sm:$0xff]
  %v2134 = vld [vmem:[%s3 + $0xaf0] sm:$0xff]
  %v2135 = vld [vmem:[%s3 + $0xaf8] sm:$0xff]
  %v2136 = vld [vmem:[%s3 + $0xb00] sm:$0xff]
  %v2137 = vld [vmem:[%s3 + $0xb08] sm:$0xff]
  %v2138 = vld [vmem:[%s3 + $0xb10] sm:$0xff]
  %v2139 = vld [vmem:[%s3 + $0xb18] sm:$0xff]
  %v2140 = vld [vmem:[%s3 + $0xb20] sm:$0xff]
  %v2141 = vld [vmem:[%s3 + $0xb28] sm:$0xff]
  %v2142 = vld [vmem:[%s3 + $0xb30] sm:$0xff]
  %v2143 = vld [vmem:[%s3 + $0xb38] sm:$0xff]
  %v2144 = vld [vmem:[%s3 + $0xb40] sm:$0xff]
  %v2145 = vld [vmem:[%s3 + $0xb48] sm:$0xff]
  %v2146 = vld [vmem:[%s3 + $0xb50] sm:$0xff]
  %v2147 = vld [vmem:[%s3 + $0xb58] sm:$0xff]
  %v2148 = vld [vmem:[%s3 + $0xb60] sm:$0xff]
  %v2149 = vld [vmem:[%s3 + $0xb68] sm:$0xff]
  %v2150 = vld [vmem:[%s3 + $0xb70] sm:$0xff]
  %v2151 = vld [vmem:[%s3 + $0xb78] sm:$0xff]
  %v2152 = vld [vmem:[%s3 + $0xb80] sm:$0xff]
  %v2153 = vld [vmem:[%s3 + $0xb88] sm:$0xff]
  %v2154 = vld [vmem:[%s3 + $0xb90] sm:$0xff]
  %v2155 = vld [vmem:[%s3 + $0xb98] sm:$0xff]
  %v2156 = vld [vmem:[%s3 + $0xba0] sm:$0xff]
  %v2157 = vld [vmem:[%s3 + $0xba8] sm:$0xff]
  %v2158 = vld [vmem:[%s3 + $0xbb0] sm:$0xff]
  %v2159 = vld [vmem:[%s3 + $0xbb8] sm:$0xff]
  %v2160 = vld [vmem:[%s3 + $0xbc0] sm:$0xff]
  %v2161 = vld [vmem:[%s3 + $0xbc8] sm:$0xff]
  %v2162 = vld [vmem:[%s3 + $0xbd0] sm:$0xff]
  %v2163 = vld [vmem:[%s3 + $0xbd8] sm:$0xff]
  %v2164 = vld [vmem:[%s3 + $0xbe0] sm:$0xff]
  %v2165 = vld [vmem:[%s3 + $0xbe8] sm:$0xff]
  %v2166 = vld [vmem:[%s3 + $0xbf0] sm:$0xff]
  %v2167 = vld [vmem:[%s3 + $0xbf8] sm:$0xff]
  %v2168 = vld [vmem:[%s3 + $0xc00] sm:$0xff]
  %v2169 = vld [vmem:[%s3 + $0xc08] sm:$0xff]
  %v2170 = vld [vmem:[%s3 + $0xc10] sm:$0xff]
  %v2171 = vld [vmem:[%s3 + $0xc18] sm:$0xff]
  %v2172 = vld [vmem:[%s3 + $0xc20] sm:$0xff]
  %v2173 = vld [vmem:[%s3 + $0xc28] sm:$0xff]
  %v2174 = vld [vmem:[%s3 + $0xc30] sm:$0x3f]
  %v2175 = vld [vmem:[%s3 + $0xc38] sm:$0x3f]
  %v2176 = vld [vmem:[%s3 + $0xc40] sm:$0x3f]
  %v2177 = vld [vmem:[%s3 + $0xc48] sm:$0x3f]
  %v2178 = vld [vmem:[%s3 + $0xc50] sm:$0x3f]
  %vm2179 = vcmask 965632
  %v2181 = vsel %vm2179, %v1628, 0
  %v2184 = vsel %vm2179, %v1633, 0
  %v2187 = vsel %vm2179, %v1638, 0
  %v2190 = vsel %vm2179, %v1643, 0
  %v2193 = vsel %vm2179, %v1648, 0
  %v2196 = vsel %vm2179, %v1653, 0
  %v2199 = vsel %vm2179, %v1658, 0
  %v2202 = vsel %vm2179, %v1663, 0
  %v2205 = vsel %vm2179, %v1668, 0
  %v2208 = vsel %vm2179, %v1673, 0
  %v2211 = vsel %vm2179, %v1678, 0
  %v2214 = vsel %vm2179, %v1683, 0
  %v2217 = vsel %vm2179, %v1688, 0
  %v2220 = vsel %vm2179, %v1693, 0
  %v2223 = vsel %vm2179, %v1698, 0
  %v2226 = vsel %vm2179, %v1703, 0
  %v2229 = vsel %vm2179, %v1708, 0
  %v2232 = vsel %vm2179, %v1713, 0
  %v2235 = vsel %vm2179, %v1718, 0
  %v2238 = vsel %vm2179, %v1723, 0
  %v2241 = vsel %vm2179, %v1728, 0
  %v2244 = vsel %vm2179, %v1733, 0
  %v2247 = vsel %vm2179, %v1738, 0
  %v2250 = vsel %vm2179, %v1743, 0
  %v2253 = vsel %vm2179, %v1748, 0
  %v2256 = vsel %vm2179, %v1753, 0
  %v2259 = vsel %vm2179, %v1758, 0
  %v2262 = vsel %vm2179, %v1763, 0
  %v2265 = vsel %vm2179, %v1768, 0
  %v2268 = vsel %vm2179, %v1773, 0
  %v2271 = vsel %vm2179, %v1778, 0
  %v2274 = vsel %vm2179, %v1783, 0
  %vm2276 = vcmask 1045504
  %v2278 = vsel %vm2276, %v2174, 0
  %v2281 = vsel %vm2276, %v2175, 0
  %v2284 = vsel %vm2276, %v2176, 0
  %v2287 = vsel %vm2276, %v2177, 0
  %v2290 = vsel %vm2276, %v2178, 0
  %2292 = vmatprep.subr.mxu0 %v1860
  %2293 = vmatpush1.msra.mxu0 %v1859
  %2294 = vmatprep.subr.mxu0 %v1855
  %2295 = vmatpush1.msra.mxu0 %v1854
  %2296 = vmatprep.subr.mxu0 %v1850
  %2297 = vmatpush1.msra.mxu0 %v1849
  %2298 = vmatprep.subr.mxu0 %v1845
  %2299 = vmatpush1.msra.mxu0 %v1844
  %2300 = vmatprep.subr.mxu0 %v1840
  %2301 = vmatpush1.msra.mxu0 %v1839
  %2302 = vmatprep.subr.mxu0 %v1835
  %2303 = vmatpush1.msra.mxu0 %v1834
  %2304 = vmatprep.subr.mxu0 %v1830
  %2305 = vmatpush1.msra.mxu0 %v1829
  %2306 = vmatprep.subr.mxu0 %v1825
  %2307 = vmatpush1.msra.mxu0 %v1824
  %2308 = vmatprep.subr.mxu0 %v1820
  %2309 = vmatpush1.msra.mxu0 %v1819
  %2310 = vmatprep.subr.mxu0 %v1815
  %2311 = vmatpush1.msra.mxu0 %v1814
  %2312 = vmatprep.subr.mxu0 %v1810
  %2313 = vmatpush1.msra.mxu0 %v1809
  %2314 = vmatprep.subr.mxu0 %v1805
  %2315 = vmatpush1.msra.mxu0 %v1804
  %2316 = vmatprep.subr.mxu0 %v1800
  %2317 = vmatpush1.msra.mxu0 %v1799
  %2318 = vmatprep.subr.mxu0 %v1795
  %2319 = vmatpush1.msra.mxu0 %v1794
  %2320 = vmatprep.subr.mxu0 %v1790
  %2321 = vmatpush1.msra.mxu0 %v1789
  %2322 = vmatprep.subr.mxu0 %v1785
  %2323 = vmatpush1.msra.mxu0 %v1784
  %2324 = vmatprep.subr.mxu0 %v1940
  %2325 = vmatpush2.msra.mxu0 %v1939
  %2326 = vmatprep.subr.mxu0 %v1935
  %2327 = vmatpush2.msra.mxu0 %v1934
  %2328 = vmatprep.subr.mxu0 %v1930
  %2329 = vmatpush2.msra.mxu0 %v1929
  %2330 = vmatprep.subr.mxu0 %v1925
  %2331 = vmatpush2.msra.mxu0 %v1924
  %2332 = vmatprep.subr.mxu0 %v1920
  %2333 = vmatpush2.msra.mxu0 %v1919
  %2334 = vmatprep.subr.mxu0 %v1915
  %2335 = vmatpush2.msra.mxu0 %v1914
  %2336 = vmatprep.subr.mxu0 %v1910
  %2337 = vmatpush2.msra.mxu0 %v1909
  %2338 = vmatprep.subr.mxu0 %v1905
  %2339 = vmatpush2.msra.mxu0 %v1904
  %2340 = vmatprep.subr.mxu0 %v1900
  %2341 = vmatpush2.msra.mxu0 %v1899
  %2342 = vmatprep.subr.mxu0 %v1895
  %2343 = vmatpush2.msra.mxu0 %v1894
  %2344 = vmatprep.subr.mxu0 %v1890
  %2345 = vmatpush2.msra.mxu0 %v1889
  %2346 = vmatprep.subr.mxu0 %v1885
  %2347 = vmatpush2.msra.mxu0 %v1884
  %2348 = vmatprep.subr.mxu0 %v1880
  %2349 = vmatpush2.msra.mxu0 %v1879
  %2350 = vmatprep.subr.mxu0 %v1875
  %2351 = vmatpush2.msra.mxu0 %v1874
  %2352 = vmatprep.subr.mxu0 %v1870
  %2353 = vmatpush2.msra.mxu0 %v1869
  %2354 = vmatprep.subr.mxu0 %v1865
  %2355 = vmatpush2.msra.mxu0 %v1864
  %2356 = vmatprep.mubr.f32.mxu0 %v1625
  %2357 = vmatmul.mubr.f32.gmra.mxu0 %v1624
  %v2358 = vpop.f32.mrf.mxu0
  %v2359 = vadd.f32 0.0, %v2358
  %v2360 = vpop.f32.mrf.mxu0
  %v2361 = vadd.f32 0.0, %v2360
  %2362 = vmatprep.mubr.f32.mxu0 %v1630
  %2363 = vmatmul.mubr.f32.gmra.mxu0 %v1629
  %v2364 = vpop.f32.mrf.mxu0
  %v2365 = vadd.f32 0.0, %v2364
  %v2366 = vpop.f32.mrf.mxu0
  %v2367 = vadd.f32 0.0, %v2366
  %2368 = vmatprep.mubr.f32.mxu0 %v1635
  %2369 = vmatmul.mubr.f32.gmra.mxu0 %v1634
  %v2370 = vpop.f32.mrf.mxu0
  %v2371 = vadd.f32 0.0, %v2370
  %v2372 = vpop.f32.mrf.mxu0
  %v2373 = vadd.f32 0.0, %v2372
  %2374 = vmatprep.mubr.f32.mxu0 %v1640
  %2375 = vmatmul.mubr.f32.gmra.mxu0 %v1639
  %v2376 = vpop.f32.mrf.mxu0
  %v2377 = vadd.f32 0.0, %v2376
  %v2378 = vpop.f32.mrf.mxu0
  %v2379 = vadd.f32 0.0, %v2378
  %2380 = vmatprep.mubr.f32.mxu0 %v1645
  %2381 = vmatmul.mubr.f32.gmra.mxu0 %v1644
  %v2382 = vpop.f32.mrf.mxu0
  %v2383 = vadd.f32 0.0, %v2382
  %v2384 = vpop.f32.mrf.mxu0
  %v2385 = vadd.f32 0.0, %v2384
  %2386 = vmatprep.mubr.f32.mxu0 %v1650
  %2387 = vmatmul.mubr.f32.gmra.mxu0 %v1649
  %v2388 = vpop.f32.mrf.mxu0
  %v2389 = vadd.f32 0.0, %v2388
  %v2390 = vpop.f32.mrf.mxu0
  %v2391 = vadd.f32 0.0, %v2390
  %2392 = vmatprep.mubr.f32.mxu0 %v1655
  %2393 = vmatmul.mubr.f32.gmra.mxu0 %v1654
  %v2394 = vpop.f32.mrf.mxu0
  %v2395 = vadd.f32 0.0, %v2394
  %v2396 = vpop.f32.mrf.mxu0
  %v2397 = vadd.f32 0.0, %v2396
  %2398 = vmatprep.mubr.f32.mxu0 %v1660
  %2399 = vmatmul.mubr.f32.gmra.mxu0 %v1659
  %v2400 = vpop.f32.mrf.mxu0
  %v2401 = vadd.f32 0.0, %v2400
  %v2402 = vpop.f32.mrf.mxu0
  %v2403 = vadd.f32 0.0, %v2402
  %2404 = vmatprep.mubr.f32.mxu0 %v1665
  %2405 = vmatmul.mubr.f32.gmra.mxu0 %v1664
  %v2406 = vpop.f32.mrf.mxu0
  %v2407 = vadd.f32 0.0, %v2406
  %v2408 = vpop.f32.mrf.mxu0
  %v2409 = vadd.f32 0.0, %v2408
  %2410 = vmatprep.mubr.f32.mxu0 %v1670
  %2411 = vmatmul.mubr.f32.gmra.mxu0 %v1669
  %v2412 = vpop.f32.mrf.mxu0
  %v2413 = vadd.f32 0.0, %v2412
  %v2414 = vpop.f32.mrf.mxu0
  %v2415 = vadd.f32 0.0, %v2414
  %2416 = vmatprep.mubr.f32.mxu0 %v1675
  %2417 = vmatmul.mubr.f32.gmra.mxu0 %v1674
  %v2418 = vpop.f32.mrf.mxu0
  %v2419 = vadd.f32 0.0, %v2418
  %v2420 = vpop.f32.mrf.mxu0
  %v2421 = vadd.f32 0.0, %v2420
  %2422 = vmatprep.mubr.f32.mxu0 %v1680
  %2423 = vmatmul.mubr.f32.gmra.mxu0 %v1679
  %v2424 = vpop.f32.mrf.mxu0
  %v2425 = vadd.f32 0.0, %v2424
  %v2426 = vpop.f32.mrf.mxu0
  %v2427 = vadd.f32 0.0, %v2426
  %2428 = vmatprep.mubr.f32.mxu0 %v1685
  %2429 = vmatmul.mubr.f32.gmra.mxu0 %v1684
  %v2430 = vpop.f32.mrf.mxu0
  %v2431 = vadd.f32 0.0, %v2430
  %v2432 = vpop.f32.mrf.mxu0
  %v2433 = vadd.f32 0.0, %v2432
  %2434 = vmatprep.mubr.f32.mxu0 %v1690
  %2435 = vmatmul.mubr.f32.gmra.mxu0 %v1689
  %v2436 = vpop.f32.mrf.mxu0
  %v2437 = vadd.f32 0.0, %v2436
  %v2438 = vpop.f32.mrf.mxu0
  %v2439 = vadd.f32 0.0, %v2438
  %2440 = vmatprep.mubr.f32.mxu0 %v1695
  %2441 = vmatmul.mubr.f32.gmra.mxu0 %v1694
  %v2442 = vpop.f32.mrf.mxu0
  %v2443 = vadd.f32 0.0, %v2442
  %v2444 = vpop.f32.mrf.mxu0
  %v2445 = vadd.f32 0.0, %v2444
  %2446 = vmatprep.mubr.f32.mxu0 %v1700
  %2447 = vmatmul.mubr.f32.gmra.mxu0 %v1699
  %v2448 = vpop.f32.mrf.mxu0
  %v2449 = vadd.f32 0.0, %v2448
  %v2450 = vpop.f32.mrf.mxu0
  %v2451 = vadd.f32 0.0, %v2450
  %2452 = vmatprep.mubr.f32.mxu0 %v1705
  %2453 = vmatmul.mubr.f32.gmra.mxu0 %v1704
  %v2454 = vpop.f32.mrf.mxu0
  %v2455 = vadd.f32 0.0, %v2454
  %v2456 = vpop.f32.mrf.mxu0
  %v2457 = vadd.f32 0.0, %v2456
  %2458 = vmatprep.mubr.f32.mxu0 %v1710
  %2459 = vmatmul.mubr.f32.gmra.mxu0 %v1709
  %v2460 = vpop.f32.mrf.mxu0
  %v2461 = vadd.f32 0.0, %v2460
  %v2462 = vpop.f32.mrf.mxu0
  %v2463 = vadd.f32 0.0, %v2462
  %2464 = vmatprep.mubr.f32.mxu0 %v1715
  %2465 = vmatmul.mubr.f32.gmra.mxu0 %v1714
  %v2466 = vpop.f32.mrf.mxu0
  %v2467 = vadd.f32 0.0, %v2466
  %v2468 = vpop.f32.mrf.mxu0
  %v2469 = vadd.f32 0.0, %v2468
  %2470 = vmatprep.mubr.f32.mxu0 %v1720
  %2471 = vmatmul.mubr.f32.gmra.mxu0 %v1719
  %v2472 = vpop.f32.mrf.mxu0
  %v2473 = vadd.f32 0.0, %v2472
  %v2474 = vpop.f32.mrf.mxu0
  %v2475 = vadd.f32 0.0, %v2474
  %2476 = vmatprep.mubr.f32.mxu0 %v1725
  %2477 = vmatmul.mubr.f32.gmra.mxu0 %v1724
  %v2478 = vpop.f32.mrf.mxu0
  %v2479 = vadd.f32 0.0, %v2478
  %v2480 = vpop.f32.mrf.mxu0
  %v2481 = vadd.f32 0.0, %v2480
  %2482 = vmatprep.mubr.f32.mxu0 %v1730
  %2483 = vmatmul.mubr.f32.gmra.mxu0 %v1729
  %v2484 = vpop.f32.mrf.mxu0
  %v2485 = vadd.f32 0.0, %v2484
  %v2486 = vpop.f32.mrf.mxu0
  %v2487 = vadd.f32 0.0, %v2486
  %2488 = vmatprep.mubr.f32.mxu0 %v1735
  %2489 = vmatmul.mubr.f32.gmra.mxu0 %v1734
  %v2490 = vpop.f32.mrf.mxu0
  %v2491 = vadd.f32 0.0, %v2490
  %v2492 = vpop.f32.mrf.mxu0
  %v2493 = vadd.f32 0.0, %v2492
  %2494 = vmatprep.mubr.f32.mxu0 %v1740
  %2495 = vmatmul.mubr.f32.gmra.mxu0 %v1739
  %v2496 = vpop.f32.mrf.mxu0
  %v2497 = vadd.f32 0.0, %v2496
  %v2498 = vpop.f32.mrf.mxu0
  %v2499 = vadd.f32 0.0, %v2498
  %2500 = vmatprep.mubr.f32.mxu0 %v1745
  %2501 = vmatmul.mubr.f32.gmra.mxu0 %v1744
  %v2502 = vpop.f32.mrf.mxu0
  %v2503 = vadd.f32 0.0, %v2502
  %v2504 = vpop.f32.mrf.mxu0
  %v2505 = vadd.f32 0.0, %v2504
  %2506 = vmatprep.mubr.f32.mxu0 %v1750
  %2507 = vmatmul.mubr.f32.gmra.mxu0 %v1749
  %v2508 = vpop.f32.mrf.mxu0
  %v2509 = vadd.f32 0.0, %v2508
  %v2510 = vpop.f32.mrf.mxu0
  %v2511 = vadd.f32 0.0, %v2510
  %2512 = vmatprep.mubr.f32.mxu0 %v1755
  %2513 = vmatmul.mubr.f32.gmra.mxu0 %v1754
  %v2514 = vpop.f32.mrf.mxu0
  %v2515 = vadd.f32 0.0, %v2514
  %v2516 = vpop.f32.mrf.mxu0
  %v2517 = vadd.f32 0.0, %v2516
  %2518 = vmatprep.mubr.f32.mxu0 %v1760
  %2519 = vmatmul.mubr.f32.gmra.mxu0 %v1759
  %v2520 = vpop.f32.mrf.mxu0
  %v2521 = vadd.f32 0.0, %v2520
  %v2522 = vpop.f32.mrf.mxu0
  %v2523 = vadd.f32 0.0, %v2522
  %2524 = vmatprep.mubr.f32.mxu0 %v1765
  %2525 = vmatmul.mubr.f32.gmra.mxu0 %v1764
  %v2526 = vpop.f32.mrf.mxu0
  %v2527 = vadd.f32 0.0, %v2526
  %v2528 = vpop.f32.mrf.mxu0
  %v2529 = vadd.f32 0.0, %v2528
  %2530 = vmatprep.mubr.f32.mxu0 %v1770
  %2531 = vmatmul.mubr.f32.gmra.mxu0 %v1769
  %v2532 = vpop.f32.mrf.mxu0
  %v2533 = vadd.f32 0.0, %v2532
  %v2534 = vpop.f32.mrf.mxu0
  %v2535 = vadd.f32 0.0, %v2534
  %2536 = vmatprep.mubr.f32.mxu0 %v1775
  %2537 = vmatmul.mubr.f32.gmra.mxu0 %v1774
  %v2538 = vpop.f32.mrf.mxu0
  %v2539 = vadd.f32 0.0, %v2538
  %v2540 = vpop.f32.mrf.mxu0
  %v2541 = vadd.f32 0.0, %v2540
  %2542 = vmatprep.mubr.f32.mxu0 %v1780
  %2543 = vmatmul.mubr.f32.gmra.mxu0 %v1779
  %v2544 = vpop.f32.mrf.mxu0
  %v2545 = vadd.f32 0.0, %v2544
  %v2546 = vpop.f32.mrf.mxu0
  %v2547 = vadd.f32 0.0, %v2546
  %2548 = vdwg.mxu0
  %2549 = vmatprep.subr.mxu0 %v2020
  %2550 = vmatpush1.msra.mxu0 %v2019
  %2551 = vmatprep.subr.mxu0 %v2015
  %2552 = vmatpush1.msra.mxu0 %v2014
  %2553 = vmatprep.subr.mxu0 %v2010
  %2554 = vmatpush1.msra.mxu0 %v2009
  %2555 = vmatprep.subr.mxu0 %v2005
  %2556 = vmatpush1.msra.mxu0 %v2004
  %2557 = vmatprep.subr.mxu0 %v2000
  %2558 = vmatpush1.msra.mxu0 %v1999
  %2559 = vmatprep.subr.mxu0 %v1995
  %2560 = vmatpush1.msra.mxu0 %v1994
  %2561 = vmatprep.subr.mxu0 %v1990
  %2562 = vmatpush1.msra.mxu0 %v1989
  %2563 = vmatprep.subr.mxu0 %v1985
  %2564 = vmatpush1.msra.mxu0 %v1984
  %2565 = vmatprep.subr.mxu0 %v1980
  %2566 = vmatpush1.msra.mxu0 %v1979
  %2567 = vmatprep.subr.mxu0 %v1975
  %2568 = vmatpush1.msra.mxu0 %v1974
  %2569 = vmatprep.subr.mxu0 %v1970
  %2570 = vmatpush1.msra.mxu0 %v1969
  %2571 = vmatprep.subr.mxu0 %v1965
  %2572 = vmatpush1.msra.mxu0 %v1964
  %2573 = vmatprep.subr.mxu0 %v1960
  %2574 = vmatpush1.msra.mxu0 %v1959
  %2575 = vmatprep.subr.mxu0 %v1955
  %2576 = vmatpush1.msra.mxu0 %v1954
  %2577 = vmatprep.subr.mxu0 %v1950
  %2578 = vmatpush1.msra.mxu0 %v1949
  %2579 = vmatprep.subr.mxu0 %v1945
  %2580 = vmatpush1.msra.mxu0 %v1944
  %2581 = vmatprep.subr.mxu0 %v2100
  %2582 = vmatpush2.msra.mxu0 %v2099
  %2583 = vmatprep.subr.mxu0 %v2095
  %2584 = vmatpush2.msra.mxu0 %v2094
  %2585 = vmatprep.subr.mxu0 %v2090
  %2586 = vmatpush2.msra.mxu0 %v2089
  %2587 = vmatprep.subr.mxu0 %v2085
  %2588 = vmatpush2.msra.mxu0 %v2084
  %2589 = vmatprep.subr.mxu0 %v2080
  %2590 = vmatpush2.msra.mxu0 %v2079
  %2591 = vmatprep.subr.mxu0 %v2075
  %2592 = vmatpush2.msra.mxu0 %v2074
  %2593 = vmatprep.subr.mxu0 %v2070
  %2594 = vmatpush2.msra.mxu0 %v2069
  %2595 = vmatprep.subr.mxu0 %v2065
  %2596 = vmatpush2.msra.mxu0 %v2064
  %2597 = vmatprep.subr.mxu0 %v2060
  %2598 = vmatpush2.msra.mxu0 %v2059
  %2599 = vmatprep.subr.mxu0 %v2055
  %2600 = vmatpush2.msra.mxu0 %v2054
  %2601 = vmatprep.subr.mxu0 %v2050
  %2602 = vmatpush2.msra.mxu0 %v2049
  %2603 = vmatprep.subr.mxu0 %v2045
  %2604 = vmatpush2.msra.mxu0 %v2044
  %2605 = vmatprep.subr.mxu0 %v2040
  %2606 = vmatpush2.msra.mxu0 %v2039
  %2607 = vmatprep.subr.mxu0 %v2035
  %2608 = vmatpush2.msra.mxu0 %v2034
  %2609 = vmatprep.subr.mxu0 %v2030
  %2610 = vmatpush2.msra.mxu0 %v2029
  %2611 = vmatprep.subr.mxu0 %v2025
  %2612 = vmatpush2.msra.mxu0 %v2024
  %2613 = vmatprep.mubr.f32.mxu0 %v1627
  %2614 = vmatmul.mubr.f32.gmra.mxu0 %v1626
  %v2615 = vpop.f32.mrf.mxu0
  %v2616 = vadd.f32 %v2359, %v2615
  %v2617 = vpop.f32.mrf.mxu0
  %v2618 = vadd.f32 %v2361, %v2617
  %2619 = vmatprep.mubr.f32.mxu0 %v1632
  %2620 = vmatmul.mubr.f32.gmra.mxu0 %v1631
  %v2621 = vpop.f32.mrf.mxu0
  %v2622 = vadd.f32 %v2365, %v2621
  %v2623 = vpop.f32.mrf.mxu0
  %v2624 = vadd.f32 %v2367, %v2623
  %2625 = vmatprep.mubr.f32.mxu0 %v1637
  %2626 = vmatmul.mubr.f32.gmra.mxu0 %v1636
  %v2627 = vpop.f32.mrf.mxu0
  %v2628 = vadd.f32 %v2371, %v2627
  %v2629 = vpop.f32.mrf.mxu0
  %v2630 = vadd.f32 %v2373, %v2629
  %2631 = vmatprep.mubr.f32.mxu0 %v1642
  %2632 = vmatmul.mubr.f32.gmra.mxu0 %v1641
  %v2633 = vpop.f32.mrf.mxu0
  %v2634 = vadd.f32 %v2377, %v2633
  %v2635 = vpop.f32.mrf.mxu0
  %v2636 = vadd.f32 %v2379, %v2635
  %2637 = vmatprep.mubr.f32.mxu0 %v1647
  %2638 = vmatmul.mubr.f32.gmra.mxu0 %v1646
  %v2639 = vpop.f32.mrf.mxu0
  %v2640 = vadd.f32 %v2383, %v2639
  %v2641 = vpop.f32.mrf.mxu0
  %v2642 = vadd.f32 %v2385, %v2641
  %2643 = vmatprep.mubr.f32.mxu0 %v1652
  %2644 = vmatmul.mubr.f32.gmra.mxu0 %v1651
  %v2645 = vpop.f32.mrf.mxu0
  %v2646 = vadd.f32 %v2389, %v2645
  %v2647 = vpop.f32.mrf.mxu0
  %v2648 = vadd.f32 %v2391, %v2647
  %2649 = vmatprep.mubr.f32.mxu0 %v1657
  %2650 = vmatmul.mubr.f32.gmra.mxu0 %v1656
  %v2651 = vpop.f32.mrf.mxu0
  %v2652 = vadd.f32 %v2395, %v2651
  %v2653 = vpop.f32.mrf.mxu0
  %v2654 = vadd.f32 %v2397, %v2653
  %2655 = vmatprep.mubr.f32.mxu0 %v1662
  %2656 = vmatmul.mubr.f32.gmra.mxu0 %v1661
  %v2657 = vpop.f32.mrf.mxu0
  %v2658 = vadd.f32 %v2401, %v2657
  %v2659 = vpop.f32.mrf.mxu0
  %v2660 = vadd.f32 %v2403, %v2659
  %2661 = vmatprep.mubr.f32.mxu0 %v1667
  %2662 = vmatmul.mubr.f32.gmra.mxu0 %v1666
  %v2663 = vpop.f32.mrf.mxu0
  %v2664 = vadd.f32 %v2407, %v2663
  %v2665 = vpop.f32.mrf.mxu0
  %v2666 = vadd.f32 %v2409, %v2665
  %2667 = vmatprep.mubr.f32.mxu0 %v1672
  %2668 = vmatmul.mubr.f32.gmra.mxu0 %v1671
  %v2669 = vpop.f32.mrf.mxu0
  %v2670 = vadd.f32 %v2413, %v2669
  %v2671 = vpop.f32.mrf.mxu0
  %v2672 = vadd.f32 %v2415, %v2671
  %2673 = vmatprep.mubr.f32.mxu0 %v1677
  %2674 = vmatmul.mubr.f32.gmra.mxu0 %v1676
  %v2675 = vpop.f32.mrf.mxu0
  %v2676 = vadd.f32 %v2419, %v2675
  %v2677 = vpop.f32.mrf.mxu0
  %v2678 = vadd.f32 %v2421, %v2677
  %2679 = vmatprep.mubr.f32.mxu0 %v1682
  %2680 = vmatmul.mubr.f32.gmra.mxu0 %v1681
  %v2681 = vpop.f32.mrf.mxu0
  %v2682 = vadd.f32 %v2425, %v2681
  %v2683 = vpop.f32.mrf.mxu0
  %v2684 = vadd.f32 %v2427, %v2683
  %2685 = vmatprep.mubr.f32.mxu0 %v1687
  %2686 = vmatmul.mubr.f32.gmra.mxu0 %v1686
  %v2687 = vpop.f32.mrf.mxu0
  %v2688 = vadd.f32 %v2431, %v2687
  %v2689 = vpop.f32.mrf.mxu0
  %v2690 = vadd.f32 %v2433, %v2689
  %2691 = vmatprep.mubr.f32.mxu0 %v1692
  %2692 = vmatmul.mubr.f32.gmra.mxu0 %v1691
  %v2693 = vpop.f32.mrf.mxu0
  %v2694 = vadd.f32 %v2437, %v2693
  %v2695 = vpop.f32.mrf.mxu0
  %v2696 = vadd.f32 %v2439, %v2695
  %2697 = vmatprep.mubr.f32.mxu0 %v1697
  %2698 = vmatmul.mubr.f32.gmra.mxu0 %v1696
  %v2699 = vpop.f32.mrf.mxu0
  %v2700 = vadd.f32 %v2443, %v2699
  %v2701 = vpop.f32.mrf.mxu0
  %v2702 = vadd.f32 %v2445, %v2701
  %2703 = vmatprep.mubr.f32.mxu0 %v1702
  %2704 = vmatmul.mubr.f32.gmra.mxu0 %v1701
  %v2705 = vpop.f32.mrf.mxu0
  %v2706 = vadd.f32 %v2449, %v2705
  %v2707 = vpop.f32.mrf.mxu0
  %v2708 = vadd.f32 %v2451, %v2707
  %2709 = vmatprep.mubr.f32.mxu0 %v1707
  %2710 = vmatmul.mubr.f32.gmra.mxu0 %v1706
  %v2711 = vpop.f32.mrf.mxu0
  %v2712 = vadd.f32 %v2455, %v2711
  %v2713 = vpop.f32.mrf.mxu0
  %v2714 = vadd.f32 %v2457, %v2713
  %2715 = vmatprep.mubr.f32.mxu0 %v1712
  %2716 = vmatmul.mubr.f32.gmra.mxu0 %v1711
  %v2717 = vpop.f32.mrf.mxu0
  %v2718 = vadd.f32 %v2461, %v2717
  %v2719 = vpop.f32.mrf.mxu0
  %v2720 = vadd.f32 %v2463, %v2719
  %2721 = vmatprep.mubr.f32.mxu0 %v1717
  %2722 = vmatmul.mubr.f32.gmra.mxu0 %v1716
  %v2723 = vpop.f32.mrf.mxu0
  %v2724 = vadd.f32 %v2467, %v2723
  %v2725 = vpop.f32.mrf.mxu0
  %v2726 = vadd.f32 %v2469, %v2725
  %2727 = vmatprep.mubr.f32.mxu0 %v1722
  %2728 = vmatmul.mubr.f32.gmra.mxu0 %v1721
  %v2729 = vpop.f32.mrf.mxu0
  %v2730 = vadd.f32 %v2473, %v2729
  %v2731 = vpop.f32.mrf.mxu0
  %v2732 = vadd.f32 %v2475, %v2731
  %2733 = vmatprep.mubr.f32.mxu0 %v1727
  %2734 = vmatmul.mubr.f32.gmra.mxu0 %v1726
  %v2735 = vpop.f32.mrf.mxu0
  %v2736 = vadd.f32 %v2479, %v2735
  %v2737 = vpop.f32.mrf.mxu0
  %v2738 = vadd.f32 %v2481, %v2737
  %2739 = vmatprep.mubr.f32.mxu0 %v1732
  %2740 = vmatmul.mubr.f32.gmra.mxu0 %v1731
  %v2741 = vpop.f32.mrf.mxu0
  %v2742 = vadd.f32 %v2485, %v2741
  %v2743 = vpop.f32.mrf.mxu0
  %v2744 = vadd.f32 %v2487, %v2743
  %2745 = vmatprep.mubr.f32.mxu0 %v1737
  %2746 = vmatmul.mubr.f32.gmra.mxu0 %v1736
  %v2747 = vpop.f32.mrf.mxu0
  %v2748 = vadd.f32 %v2491, %v2747
  %v2749 = vpop.f32.mrf.mxu0
  %v2750 = vadd.f32 %v2493, %v2749
  %2751 = vmatprep.mubr.f32.mxu0 %v1742
  %2752 = vmatmul.mubr.f32.gmra.mxu0 %v1741
  %v2753 = vpop.f32.mrf.mxu0
  %v2754 = vadd.f32 %v2497, %v2753
  %v2755 = vpop.f32.mrf.mxu0
  %v2756 = vadd.f32 %v2499, %v2755
  %2757 = vmatprep.mubr.f32.mxu0 %v1747
  %2758 = vmatmul.mubr.f32.gmra.mxu0 %v1746
  %v2759 = vpop.f32.mrf.mxu0
  %v2760 = vadd.f32 %v2503, %v2759
  %v2761 = vpop.f32.mrf.mxu0
  %v2762 = vadd.f32 %v2505, %v2761
  %2763 = vmatprep.mubr.f32.mxu0 %v1752
  %2764 = vmatmul.mubr.f32.gmra.mxu0 %v1751
  %v2765 = vpop.f32.mrf.mxu0
  %v2766 = vadd.f32 %v2509, %v2765
  %v2767 = vpop.f32.mrf.mxu0
  %v2768 = vadd.f32 %v2511, %v2767
  %2769 = vmatprep.mubr.f32.mxu0 %v1757
  %2770 = vmatmul.mubr.f32.gmra.mxu0 %v1756
  %v2771 = vpop.f32.mrf.mxu0
  %v2772 = vadd.f32 %v2515, %v2771
  %v2773 = vpop.f32.mrf.mxu0
  %v2774 = vadd.f32 %v2517, %v2773
  %2775 = vmatprep.mubr.f32.mxu0 %v1762
  %2776 = vmatmul.mubr.f32.gmra.mxu0 %v1761
  %v2777 = vpop.f32.mrf.mxu0
  %v2778 = vadd.f32 %v2521, %v2777
  %v2779 = vpop.f32.mrf.mxu0
  %v2780 = vadd.f32 %v2523, %v2779
  %2781 = vmatprep.mubr.f32.mxu0 %v1767
  %2782 = vmatmul.mubr.f32.gmra.mxu0 %v1766
  %v2783 = vpop.f32.mrf.mxu0
  %v2784 = vadd.f32 %v2527, %v2783
  %v2785 = vpop.f32.mrf.mxu0
  %v2786 = vadd.f32 %v2529, %v2785
  %2787 = vmatprep.mubr.f32.mxu0 %v1772
  %2788 = vmatmul.mubr.f32.gmra.mxu0 %v1771
  %v2789 = vpop.f32.mrf.mxu0
  %v2790 = vadd.f32 %v2533, %v2789
  %v2791 = vpop.f32.mrf.mxu0
  %v2792 = vadd.f32 %v2535, %v2791
  %2793 = vmatprep.mubr.f32.mxu0 %v1777
  %2794 = vmatmul.mubr.f32.gmra.mxu0 %v1776
  %v2795 = vpop.f32.mrf.mxu0
  %v2796 = vadd.f32 %v2539, %v2795
  %v2797 = vpop.f32.mrf.mxu0
  %v2798 = vadd.f32 %v2541, %v2797
  %2799 = vmatprep.mubr.f32.mxu0 %v1782
  %2800 = vmatmul.mubr.f32.gmra.mxu0 %v1781
  %v2801 = vpop.f32.mrf.mxu0
  %v2802 = vadd.f32 %v2545, %v2801
  %v2803 = vpop.f32.mrf.mxu0
  %v2804 = vadd.f32 %v2547, %v2803
  %2805 = vdwg.mxu0
  %2806 = vmatprep.subr.mxu0 0.0
  %2807 = vmatpush1.msra.mxu0 0.0
  %2808 = vmatprep.subr.mxu0 %v2281
  %2809 = vmatpush1.msra.mxu0 %v2278
  %2810 = vmatprep.subr.mxu0 %v2170
  %2811 = vmatpush1.msra.mxu0 %v2169
  %2812 = vmatprep.subr.mxu0 %v2165
  %2813 = vmatpush1.msra.mxu0 %v2164
  %2814 = vmatprep.subr.mxu0 %v2160
  %2815 = vmatpush1.msra.mxu0 %v2159
  %2816 = vmatprep.subr.mxu0 %v2155
  %2817 = vmatpush1.msra.mxu0 %v2154
  %2818 = vmatprep.subr.mxu0 %v2150
  %2819 = vmatpush1.msra.mxu0 %v2149
  %2820 = vmatprep.subr.mxu0 %v2145
  %2821 = vmatpush1.msra.mxu0 %v2144
  %2822 = vmatprep.subr.mxu0 %v2140
  %2823 = vmatpush1.msra.mxu0 %v2139
  %2824 = vmatprep.subr.mxu0 %v2135
  %2825 = vmatpush1.msra.mxu0 %v2134
  %2826 = vmatprep.subr.mxu0 %v2130
  %2827 = vmatpush1.msra.mxu0 %v2129
  %2828 = vmatprep.subr.mxu0 %v2125
  %2829 = vmatpush1.msra.mxu0 %v2124
  %2830 = vmatprep.subr.mxu0 %v2120
  %2831 = vmatpush1.msra.mxu0 %v2119
  %2832 = vmatprep.subr.mxu0 %v2115
  %2833 = vmatpush1.msra.mxu0 %v2114
  %2834 = vmatprep.subr.mxu0 %v2110
  %2835 = vmatpush1.msra.mxu0 %v2109
  %2836 = vmatprep.subr.mxu0 %v2105
  %2837 = vmatpush1.msra.mxu0 %v2104
  %2838 = vmatprep.subr.mxu0 0.0
  %2839 = vmatpush2.msra.mxu0 0.0
  %2840 = vmatprep.subr.mxu0 0.0
  %2841 = vmatpush2.msra.mxu0 0.0
  %2842 = vmatprep.subr.mxu0 0.0
  %2843 = vmatpush2.msra.mxu0 0.0
  %2844 = vmatprep.subr.mxu0 0.0
  %2845 = vmatpush2.msra.mxu0 0.0
  %2846 = vmatprep.subr.mxu0 0.0
  %2847 = vmatpush2.msra.mxu0 0.0
  %2848 = vmatprep.subr.mxu0 0.0
  %2849 = vmatpush2.msra.mxu0 0.0
  %2850 = vmatprep.subr.mxu0 0.0
  %2851 = vmatpush2.msra.mxu0 0.0
  %2852 = vmatprep.subr.mxu0 0.0
  %2853 = vmatpush2.msra.mxu0 0.0
  %2854 = vmatprep.subr.mxu0 0.0
  %2855 = vmatpush2.msra.mxu0 0.0
  %2856 = vmatprep.subr.mxu0 0.0
  %2857 = vmatpush2.msra.mxu0 0.0
  %2858 = vmatprep.subr.mxu0 0.0
  %2859 = vmatpush2.msra.mxu0 0.0
  %2860 = vmatprep.subr.mxu0 0.0
  %2861 = vmatpush2.msra.mxu0 0.0
  %2862 = vmatprep.subr.mxu0 0.0
  %2863 = vmatpush2.msra.mxu0 0.0
  %2864 = vmatprep.subr.mxu0 0.0
  %2865 = vmatpush2.msra.mxu0 0.0
  %2866 = vmatprep.subr.mxu0 0.0
  %2867 = vmatpush2.msra.mxu0 0.0
  %2868 = vmatprep.subr.mxu0 0.0
  %2869 = vmatpush2.msra.mxu0 0.0
  %2870 = vmatprep.mubr.f32.mxu0 0.0
  %2871 = vmatmul.mubr.f32.gmra.mxu0 %v2181
  %v2872 = vpop.f32.mrf.mxu0
  %v2873 = vadd.f32 %v2616, %v2872
  %v2874 = vpop.f32.mrf.mxu0
  %v2875 = vadd.f32 %v2618, %v2874
  %2876 = vmatprep.mubr.f32.mxu0 0.0
  %2877 = vmatmul.mubr.f32.gmra.mxu0 %v2184
  %v2878 = vpop.f32.mrf.mxu0
  %v2879 = vadd.f32 %v2622, %v2878
  %v2880 = vpop.f32.mrf.mxu0
  %v2881 = vadd.f32 %v2624, %v2880
  %2882 = vmatprep.mubr.f32.mxu0 0.0
  %2883 = vmatmul.mubr.f32.gmra.mxu0 %v2187
  %v2884 = vpop.f32.mrf.mxu0
  %v2885 = vadd.f32 %v2628, %v2884
  %v2886 = vpop.f32.mrf.mxu0
  %v2887 = vadd.f32 %v2630, %v2886
  %2888 = vmatprep.mubr.f32.mxu0 0.0
  %2889 = vmatmul.mubr.f32.gmra.mxu0 %v2190
  %v2890 = vpop.f32.mrf.mxu0
  %v2891 = vadd.f32 %v2634, %v2890
  %v2892 = vpop.f32.mrf.mxu0
  %v2893 = vadd.f32 %v2636, %v2892
  %2894 = vmatprep.mubr.f32.mxu0 0.0
  %2895 = vmatmul.mubr.f32.gmra.mxu0 %v2193
  %v2896 = vpop.f32.mrf.mxu0
  %v2897 = vadd.f32 %v2640, %v2896
  %v2898 = vpop.f32.mrf.mxu0
  %v2899 = vadd.f32 %v2642, %v2898
  %2900 = vmatprep.mubr.f32.mxu0 0.0
  %2901 = vmatmul.mubr.f32.gmra.mxu0 %v2196
  %v2902 = vpop.f32.mrf.mxu0
  %v2903 = vadd.f32 %v2646, %v2902
  %v2904 = vpop.f32.mrf.mxu0
  %v2905 = vadd.f32 %v2648, %v2904
  %2906 = vmatprep.mubr.f32.mxu0 0.0
  %2907 = vmatmul.mubr.f32.gmra.mxu0 %v2199
  %v2908 = vpop.f32.mrf.mxu0
  %v2909 = vadd.f32 %v2652, %v2908
  %v2910 = vpop.f32.mrf.mxu0
  %v2911 = vadd.f32 %v2654, %v2910
  %2912 = vmatprep.mubr.f32.mxu0 0.0
  %2913 = vmatmul.mubr.f32.gmra.mxu0 %v2202
  %v2914 = vpop.f32.mrf.mxu0
  %v2915 = vadd.f32 %v2658, %v2914
  %v2916 = vpop.f32.mrf.mxu0
  %v2917 = vadd.f32 %v2660, %v2916
  %2918 = vmatprep.mubr.f32.mxu0 0.0
  %2919 = vmatmul.mubr.f32.gmra.mxu0 %v2205
  %v2920 = vpop.f32.mrf.mxu0
  %v2921 = vadd.f32 %v2664, %v2920
  %v2922 = vpop.f32.mrf.mxu0
  %v2923 = vadd.f32 %v2666, %v2922
  %2924 = vmatprep.mubr.f32.mxu0 0.0
  %2925 = vmatmul.mubr.f32.gmra.mxu0 %v2208
  %v2926 = vpop.f32.mrf.mxu0
  %v2927 = vadd.f32 %v2670, %v2926
  %v2928 = vpop.f32.mrf.mxu0
  %v2929 = vadd.f32 %v2672, %v2928
  %2930 = vmatprep.mubr.f32.mxu0 0.0
  %2931 = vmatmul.mubr.f32.gmra.mxu0 %v2211
  %v2932 = vpop.f32.mrf.mxu0
  %v2933 = vadd.f32 %v2676, %v2932
  %v2934 = vpop.f32.mrf.mxu0
  %v2935 = vadd.f32 %v2678, %v2934
  %2936 = vmatprep.mubr.f32.mxu0 0.0
  %2937 = vmatmul.mubr.f32.gmra.mxu0 %v2214
  %v2938 = vpop.f32.mrf.mxu0
  %v2939 = vadd.f32 %v2682, %v2938
  %v2940 = vpop.f32.mrf.mxu0
  %v2941 = vadd.f32 %v2684, %v2940
  %2942 = vmatprep.mubr.f32.mxu0 0.0
  %2943 = vmatmul.mubr.f32.gmra.mxu0 %v2217
  %v2944 = vpop.f32.mrf.mxu0
  %v2945 = vadd.f32 %v2688, %v2944
  %v2946 = vpop.f32.mrf.mxu0
  %v2947 = vadd.f32 %v2690, %v2946
  %2948 = vmatprep.mubr.f32.mxu0 0.0
  %2949 = vmatmul.mubr.f32.gmra.mxu0 %v2220
  %v2950 = vpop.f32.mrf.mxu0
  %v2951 = vadd.f32 %v2694, %v2950
  %v2952 = vpop.f32.mrf.mxu0
  %v2953 = vadd.f32 %v2696, %v2952
  %2954 = vmatprep.mubr.f32.mxu0 0.0
  %2955 = vmatmul.mubr.f32.gmra.mxu0 %v2223
  %v2956 = vpop.f32.mrf.mxu0
  %v2957 = vadd.f32 %v2700, %v2956
  %v2958 = vpop.f32.mrf.mxu0
  %v2959 = vadd.f32 %v2702, %v2958
  %2960 = vmatprep.mubr.f32.mxu0 0.0
  %2961 = vmatmul.mubr.f32.gmra.mxu0 %v2226
  %v2962 = vpop.f32.mrf.mxu0
  %v2963 = vadd.f32 %v2706, %v2962
  %v2964 = vpop.f32.mrf.mxu0
  %v2965 = vadd.f32 %v2708, %v2964
  %2966 = vmatprep.mubr.f32.mxu0 0.0
  %2967 = vmatmul.mubr.f32.gmra.mxu0 %v2229
  %v2968 = vpop.f32.mrf.mxu0
  %v2969 = vadd.f32 %v2712, %v2968
  %v2970 = vpop.f32.mrf.mxu0
  %v2971 = vadd.f32 %v2714, %v2970
  %2972 = vmatprep.mubr.f32.mxu0 0.0
  %2973 = vmatmul.mubr.f32.gmra.mxu0 %v2232
  %v2974 = vpop.f32.mrf.mxu0
  %v2975 = vadd.f32 %v2718, %v2974
  %v2976 = vpop.f32.mrf.mxu0
  %v2977 = vadd.f32 %v2720, %v2976
  %2978 = vmatprep.mubr.f32.mxu0 0.0
  %2979 = vmatmul.mubr.f32.gmra.mxu0 %v2235
  %v2980 = vpop.f32.mrf.mxu0
  %v2981 = vadd.f32 %v2724, %v2980
  %v2982 = vpop.f32.mrf.mxu0
  %v2983 = vadd.f32 %v2726, %v2982
  %2984 = vmatprep.mubr.f32.mxu0 0.0
  %2985 = vmatmul.mubr.f32.gmra.mxu0 %v2238
  %v2986 = vpop.f32.mrf.mxu0
  %v2987 = vadd.f32 %v2730, %v2986
  %v2988 = vpop.f32.mrf.mxu0
  %v2989 = vadd.f32 %v2732, %v2988
  %2990 = vmatprep.mubr.f32.mxu0 0.0
  %2991 = vmatmul.mubr.f32.gmra.mxu0 %v2241
  %v2992 = vpop.f32.mrf.mxu0
  %v2993 = vadd.f32 %v2736, %v2992
  %v2994 = vpop.f32.mrf.mxu0
  %v2995 = vadd.f32 %v2738, %v2994
  %2996 = vmatprep.mubr.f32.mxu0 0.0
  %2997 = vmatmul.mubr.f32.gmra.mxu0 %v2244
  %v2998 = vpop.f32.mrf.mxu0
  %v2999 = vadd.f32 %v2742, %v2998
  %v3000 = vpop.f32.mrf.mxu0
  %v3001 = vadd.f32 %v2744, %v3000
  %3002 = vmatprep.mubr.f32.mxu0 0.0
  %3003 = vmatmul.mubr.f32.gmra.mxu0 %v2247
  %v3004 = vpop.f32.mrf.mxu0
  %v3005 = vadd.f32 %v2748, %v3004
  %v3006 = vpop.f32.mrf.mxu0
  %v3007 = vadd.f32 %v2750, %v3006
  %3008 = vmatprep.mubr.f32.mxu0 0.0
  %3009 = vmatmul.mubr.f32.gmra.mxu0 %v2250
  %v3010 = vpop.f32.mrf.mxu0
  %v3011 = vadd.f32 %v2754, %v3010
  %v3012 = vpop.f32.mrf.mxu0
  %v3013 = vadd.f32 %v2756, %v3012
  %3014 = vmatprep.mubr.f32.mxu0 0.0
  %3015 = vmatmul.mubr.f32.gmra.mxu0 %v2253
  %v3016 = vpop.f32.mrf.mxu0
  %v3017 = vadd.f32 %v2760, %v3016
  %v3018 = vpop.f32.mrf.mxu0
  %v3019 = vadd.f32 %v2762, %v3018
  %3020 = vmatprep.mubr.f32.mxu0 0.0
  %3021 = vmatmul.mubr.f32.gmra.mxu0 %v2256
  %v3022 = vpop.f32.mrf.mxu0
  %v3023 = vadd.f32 %v2766, %v3022
  %v3024 = vpop.f32.mrf.mxu0
  %v3025 = vadd.f32 %v2768, %v3024
  %3026 = vmatprep.mubr.f32.mxu0 0.0
  %3027 = vmatmul.mubr.f32.gmra.mxu0 %v2259
  %v3028 = vpop.f32.mrf.mxu0
  %v3029 = vadd.f32 %v2772, %v3028
  %v3030 = vpop.f32.mrf.mxu0
  %v3031 = vadd.f32 %v2774, %v3030
  %3032 = vmatprep.mubr.f32.mxu0 0.0
  %3033 = vmatmul.mubr.f32.gmra.mxu0 %v2262
  %v3034 = vpop.f32.mrf.mxu0
  %v3035 = vadd.f32 %v2778, %v3034
  %v3036 = vpop.f32.mrf.mxu0
  %v3037 = vadd.f32 %v2780, %v3036
  %3038 = vmatprep.mubr.f32.mxu0 0.0
  %3039 = vmatmul.mubr.f32.gmra.mxu0 %v2265
  %v3040 = vpop.f32.mrf.mxu0
  %v3041 = vadd.f32 %v2784, %v3040
  %v3042 = vpop.f32.mrf.mxu0
  %v3043 = vadd.f32 %v2786, %v3042
  %3044 = vmatprep.mubr.f32.mxu0 0.0
  %3045 = vmatmul.mubr.f32.gmra.mxu0 %v2268
  %v3046 = vpop.f32.mrf.mxu0
  %v3047 = vadd.f32 %v2790, %v3046
  %v3048 = vpop.f32.mrf.mxu0
  %v3049 = vadd.f32 %v2792, %v3048
  %3050 = vmatprep.mubr.f32.mxu0 0.0
  %3051 = vmatmul.mubr.f32.gmra.mxu0 %v2271
  %v3052 = vpop.f32.mrf.mxu0
  %v3053 = vadd.f32 %v2796, %v3052
  %v3054 = vpop.f32.mrf.mxu0
  %v3055 = vadd.f32 %v2798, %v3054
  %3056 = vmatprep.mubr.f32.mxu0 0.0
  %3057 = vmatmul.mubr.f32.gmra.mxu0 %v2274
  %v3058 = vpop.f32.mrf.mxu0
  %v3059 = vadd.f32 %v2802, %v3058
  %v3060 = vpop.f32.mrf.mxu0
  %v3061 = vadd.f32 %v2804, %v3060
  %3062 = vdwg.mxu0
  %3063 = vmatprep.subr.mxu0 %v1862
  %3064 = vmatpush1.msra.mxu0 %v1861
  %3065 = vmatprep.subr.mxu0 %v1857
  %3066 = vmatpush1.msra.mxu0 %v1856
  %3067 = vmatprep.subr.mxu0 %v1852
  %3068 = vmatpush1.msra.mxu0 %v1851
  %3069 = vmatprep.subr.mxu0 %v1847
  %3070 = vmatpush1.msra.mxu0 %v1846
  %3071 = vmatprep.subr.mxu0 %v1842
  %3072 = vmatpush1.msra.mxu0 %v1841
  %3073 = vmatprep.subr.mxu0 %v1837
  %3074 = vmatpush1.msra.mxu0 %v1836
  %3075 = vmatprep.subr.mxu0 %v1832
  %3076 = vmatpush1.msra.mxu0 %v1831
  %3077 = vmatprep.subr.mxu0 %v1827
  %3078 = vmatpush1.msra.mxu0 %v1826
  %3079 = vmatprep.subr.mxu0 %v1822
  %3080 = vmatpush1.msra.mxu0 %v1821
  %3081 = vmatprep.subr.mxu0 %v1817
  %3082 = vmatpush1.msra.mxu0 %v1816
  %3083 = vmatprep.subr.mxu0 %v1812
  %3084 = vmatpush1.msra.mxu0 %v1811
  %3085 = vmatprep.subr.mxu0 %v1807
  %3086 = vmatpush1.msra.mxu0 %v1806
  %3087 = vmatprep.subr.mxu0 %v1802
  %3088 = vmatpush1.msra.mxu0 %v1801
  %3089 = vmatprep.subr.mxu0 %v1797
  %3090 = vmatpush1.msra.mxu0 %v1796
  %3091 = vmatprep.subr.mxu0 %v1792
  %3092 = vmatpush1.msra.mxu0 %v1791
  %3093 = vmatprep.subr.mxu0 %v1787
  %3094 = vmatpush1.msra.mxu0 %v1786
  %3095 = vmatprep.subr.mxu0 %v1942
  %3096 = vmatpush2.msra.mxu0 %v1941
  %3097 = vmatprep.subr.mxu0 %v1937
  %3098 = vmatpush2.msra.mxu0 %v1936
  %3099 = vmatprep.subr.mxu0 %v1932
  %3100 = vmatpush2.msra.mxu0 %v1931
  %3101 = vmatprep.subr.mxu0 %v1927
  %3102 = vmatpush2.msra.mxu0 %v1926
  %3103 = vmatprep.subr.mxu0 %v1922
  %3104 = vmatpush2.msra.mxu0 %v1921
  %3105 = vmatprep.subr.mxu0 %v1917
  %3106 = vmatpush2.msra.mxu0 %v1916
  %3107 = vmatprep.subr.mxu0 %v1912
  %3108 = vmatpush2.msra.mxu0 %v1911
  %3109 = vmatprep.subr.mxu0 %v1907
  %3110 = vmatpush2.msra.mxu0 %v1906
  %3111 = vmatprep.subr.mxu0 %v1902
  %3112 = vmatpush2.msra.mxu0 %v1901
  %3113 = vmatprep.subr.mxu0 %v1897
  %3114 = vmatpush2.msra.mxu0 %v1896
  %3115 = vmatprep.subr.mxu0 %v1892
  %3116 = vmatpush2.msra.mxu0 %v1891
  %3117 = vmatprep.subr.mxu0 %v1887
  %3118 = vmatpush2.msra.mxu0 %v1886
  %3119 = vmatprep.subr.mxu0 %v1882
  %3120 = vmatpush2.msra.mxu0 %v1881
  %3121 = vmatprep.subr.mxu0 %v1877
  %3122 = vmatpush2.msra.mxu0 %v1876
  %3123 = vmatprep.subr.mxu0 %v1872
  %3124 = vmatpush2.msra.mxu0 %v1871
  %3125 = vmatprep.subr.mxu0 %v1867
  %3126 = vmatpush2.msra.mxu0 %v1866
  %3127 = vmatprep.mubr.f32.mxu0 %v1625
  %3128 = vmatmul.mubr.f32.gmra.mxu0 %v1624
  %v3129 = vpop.f32.mrf.mxu0
  %v3130 = vadd.f32 0.0, %v3129
  %v3131 = vpop.f32.mrf.mxu0
  %v3132 = vadd.f32 0.0, %v3131
  %3133 = vmatprep.mubr.f32.mxu0 %v1630
  %3134 = vmatmul.mubr.f32.gmra.mxu0 %v1629
  %v3135 = vpop.f32.mrf.mxu0
  %v3136 = vadd.f32 0.0, %v3135
  %v3137 = vpop.f32.mrf.mxu0
  %v3138 = vadd.f32 0.0, %v3137
  %3139 = vmatprep.mubr.f32.mxu0 %v1635
  %3140 = vmatmul.mubr.f32.gmra.mxu0 %v1634
  %v3141 = vpop.f32.mrf.mxu0
  %v3142 = vadd.f32 0.0, %v3141
  %v3143 = vpop.f32.mrf.mxu0
  %v3144 = vadd.f32 0.0, %v3143
  %3145 = vmatprep.mubr.f32.mxu0 %v1640
  %3146 = vmatmul.mubr.f32.gmra.mxu0 %v1639
  %v3147 = vpop.f32.mrf.mxu0
  %v3148 = vadd.f32 0.0, %v3147
  %v3149 = vpop.f32.mrf.mxu0
  %v3150 = vadd.f32 0.0, %v3149
  %3151 = vmatprep.mubr.f32.mxu0 %v1645
  %3152 = vmatmul.mubr.f32.gmra.mxu0 %v1644
  %v3153 = vpop.f32.mrf.mxu0
  %v3154 = vadd.f32 0.0, %v3153
  %v3155 = vpop.f32.mrf.mxu0
  %v3156 = vadd.f32 0.0, %v3155
  %3157 = vmatprep.mubr.f32.mxu0 %v1650
  %3158 = vmatmul.mubr.f32.gmra.mxu0 %v1649
  %v3159 = vpop.f32.mrf.mxu0
  %v3160 = vadd.f32 0.0, %v3159
  %v3161 = vpop.f32.mrf.mxu0
  %v3162 = vadd.f32 0.0, %v3161
  %3163 = vmatprep.mubr.f32.mxu0 %v1655
  %3164 = vmatmul.mubr.f32.gmra.mxu0 %v1654
  %v3165 = vpop.f32.mrf.mxu0
  %v3166 = vadd.f32 0.0, %v3165
  %v3167 = vpop.f32.mrf.mxu0
  %v3168 = vadd.f32 0.0, %v3167
  %3169 = vmatprep.mubr.f32.mxu0 %v1660
  %3170 = vmatmul.mubr.f32.gmra.mxu0 %v1659
  %v3171 = vpop.f32.mrf.mxu0
  %v3172 = vadd.f32 0.0, %v3171
  %v3173 = vpop.f32.mrf.mxu0
  %v3174 = vadd.f32 0.0, %v3173
  %3175 = vmatprep.mubr.f32.mxu0 %v1665
  %3176 = vmatmul.mubr.f32.gmra.mxu0 %v1664
  %v3177 = vpop.f32.mrf.mxu0
  %v3178 = vadd.f32 0.0, %v3177
  %v3179 = vpop.f32.mrf.mxu0
  %v3180 = vadd.f32 0.0, %v3179
  %3181 = vmatprep.mubr.f32.mxu0 %v1670
  %3182 = vmatmul.mubr.f32.gmra.mxu0 %v1669
  %v3183 = vpop.f32.mrf.mxu0
  %v3184 = vadd.f32 0.0, %v3183
  %v3185 = vpop.f32.mrf.mxu0
  %v3186 = vadd.f32 0.0, %v3185
  %3187 = vmatprep.mubr.f32.mxu0 %v1675
  %3188 = vmatmul.mubr.f32.gmra.mxu0 %v1674
  %v3189 = vpop.f32.mrf.mxu0
  %v3190 = vadd.f32 0.0, %v3189
  %v3191 = vpop.f32.mrf.mxu0
  %v3192 = vadd.f32 0.0, %v3191
  %3193 = vmatprep.mubr.f32.mxu0 %v1680
  %3194 = vmatmul.mubr.f32.gmra.mxu0 %v1679
  %v3195 = vpop.f32.mrf.mxu0
  %v3196 = vadd.f32 0.0, %v3195
  %v3197 = vpop.f32.mrf.mxu0
  %v3198 = vadd.f32 0.0, %v3197
  %3199 = vmatprep.mubr.f32.mxu0 %v1685
  %3200 = vmatmul.mubr.f32.gmra.mxu0 %v1684
  %v3201 = vpop.f32.mrf.mxu0
  %v3202 = vadd.f32 0.0, %v3201
  %v3203 = vpop.f32.mrf.mxu0
  %v3204 = vadd.f32 0.0, %v3203
  %3205 = vmatprep.mubr.f32.mxu0 %v1690
  %3206 = vmatmul.mubr.f32.gmra.mxu0 %v1689
  %v3207 = vpop.f32.mrf.mxu0
  %v3208 = vadd.f32 0.0, %v3207
  %v3209 = vpop.f32.mrf.mxu0
  %v3210 = vadd.f32 0.0, %v3209
  %3211 = vmatprep.mubr.f32.mxu0 %v1695
  %3212 = vmatmul.mubr.f32.gmra.mxu0 %v1694
  %v3213 = vpop.f32.mrf.mxu0
  %v3214 = vadd.f32 0.0, %v3213
  %v3215 = vpop.f32.mrf.mxu0
  %v3216 = vadd.f32 0.0, %v3215
  %3217 = vmatprep.mubr.f32.mxu0 %v1700
  %3218 = vmatmul.mubr.f32.gmra.mxu0 %v1699
  %v3219 = vpop.f32.mrf.mxu0
  %v3220 = vadd.f32 0.0, %v3219
  %v3221 = vpop.f32.mrf.mxu0
  %v3222 = vadd.f32 0.0, %v3221
  %3223 = vmatprep.mubr.f32.mxu0 %v1705
  %3224 = vmatmul.mubr.f32.gmra.mxu0 %v1704
  %v3225 = vpop.f32.mrf.mxu0
  %v3226 = vadd.f32 0.0, %v3225
  %v3227 = vpop.f32.mrf.mxu0
  %v3228 = vadd.f32 0.0, %v3227
  %3229 = vmatprep.mubr.f32.mxu0 %v1710
  %3230 = vmatmul.mubr.f32.gmra.mxu0 %v1709
  %v3231 = vpop.f32.mrf.mxu0
  %v3232 = vadd.f32 0.0, %v3231
  %v3233 = vpop.f32.mrf.mxu0
  %v3234 = vadd.f32 0.0, %v3233
  %3235 = vmatprep.mubr.f32.mxu0 %v1715
  %3236 = vmatmul.mubr.f32.gmra.mxu0 %v1714
  %v3237 = vpop.f32.mrf.mxu0
  %v3238 = vadd.f32 0.0, %v3237
  %v3239 = vpop.f32.mrf.mxu0
  %v3240 = vadd.f32 0.0, %v3239
  %3241 = vmatprep.mubr.f32.mxu0 %v1720
  %3242 = vmatmul.mubr.f32.gmra.mxu0 %v1719
  %v3243 = vpop.f32.mrf.mxu0
  %v3244 = vadd.f32 0.0, %v3243
  %v3245 = vpop.f32.mrf.mxu0
  %v3246 = vadd.f32 0.0, %v3245
  %3247 = vmatprep.mubr.f32.mxu0 %v1725
  %3248 = vmatmul.mubr.f32.gmra.mxu0 %v1724
  %v3249 = vpop.f32.mrf.mxu0
  %v3250 = vadd.f32 0.0, %v3249
  %v3251 = vpop.f32.mrf.mxu0
  %v3252 = vadd.f32 0.0, %v3251
  %3253 = vmatprep.mubr.f32.mxu0 %v1730
  %3254 = vmatmul.mubr.f32.gmra.mxu0 %v1729
  %v3255 = vpop.f32.mrf.mxu0
  %v3256 = vadd.f32 0.0, %v3255
  %v3257 = vpop.f32.mrf.mxu0
  %v3258 = vadd.f32 0.0, %v3257
  %3259 = vmatprep.mubr.f32.mxu0 %v1735
  %3260 = vmatmul.mubr.f32.gmra.mxu0 %v1734
  %v3261 = vpop.f32.mrf.mxu0
  %v3262 = vadd.f32 0.0, %v3261
  %v3263 = vpop.f32.mrf.mxu0
  %v3264 = vadd.f32 0.0, %v3263
  %3265 = vmatprep.mubr.f32.mxu0 %v1740
  %3266 = vmatmul.mubr.f32.gmra.mxu0 %v1739
  %v3267 = vpop.f32.mrf.mxu0
  %v3268 = vadd.f32 0.0, %v3267
  %v3269 = vpop.f32.mrf.mxu0
  %v3270 = vadd.f32 0.0, %v3269
  %3271 = vmatprep.mubr.f32.mxu0 %v1745
  %3272 = vmatmul.mubr.f32.gmra.mxu0 %v1744
  %v3273 = vpop.f32.mrf.mxu0
  %v3274 = vadd.f32 0.0, %v3273
  %v3275 = vpop.f32.mrf.mxu0
  %v3276 = vadd.f32 0.0, %v3275
  %3277 = vmatprep.mubr.f32.mxu0 %v1750
  %3278 = vmatmul.mubr.f32.gmra.mxu0 %v1749
  %v3279 = vpop.f32.mrf.mxu0
  %v3280 = vadd.f32 0.0, %v3279
  %v3281 = vpop.f32.mrf.mxu0
  %v3282 = vadd.f32 0.0, %v3281
  %3283 = vmatprep.mubr.f32.mxu0 %v1755
  %3284 = vmatmul.mubr.f32.gmra.mxu0 %v1754
  %v3285 = vpop.f32.mrf.mxu0
  %v3286 = vadd.f32 0.0, %v3285
  %v3287 = vpop.f32.mrf.mxu0
  %v3288 = vadd.f32 0.0, %v3287
  %3289 = vmatprep.mubr.f32.mxu0 %v1760
  %3290 = vmatmul.mubr.f32.gmra.mxu0 %v1759
  %v3291 = vpop.f32.mrf.mxu0
  %v3292 = vadd.f32 0.0, %v3291
  %v3293 = vpop.f32.mrf.mxu0
  %v3294 = vadd.f32 0.0, %v3293
  %3295 = vmatprep.mubr.f32.mxu0 %v1765
  %3296 = vmatmul.mubr.f32.gmra.mxu0 %v1764
  %v3297 = vpop.f32.mrf.mxu0
  %v3298 = vadd.f32 0.0, %v3297
  %v3299 = vpop.f32.mrf.mxu0
  %v3300 = vadd.f32 0.0, %v3299
  %3301 = vmatprep.mubr.f32.mxu0 %v1770
  %3302 = vmatmul.mubr.f32.gmra.mxu0 %v1769
  %v3303 = vpop.f32.mrf.mxu0
  %v3304 = vadd.f32 0.0, %v3303
  %v3305 = vpop.f32.mrf.mxu0
  %v3306 = vadd.f32 0.0, %v3305
  %3307 = vmatprep.mubr.f32.mxu0 %v1775
  %3308 = vmatmul.mubr.f32.gmra.mxu0 %v1774
  %v3309 = vpop.f32.mrf.mxu0
  %v3310 = vadd.f32 0.0, %v3309
  %v3311 = vpop.f32.mrf.mxu0
  %v3312 = vadd.f32 0.0, %v3311
  %3313 = vmatprep.mubr.f32.mxu0 %v1780
  %3314 = vmatmul.mubr.f32.gmra.mxu0 %v1779
  %v3315 = vpop.f32.mrf.mxu0
  %v3316 = vadd.f32 0.0, %v3315
  %v3317 = vpop.f32.mrf.mxu0
  %v3318 = vadd.f32 0.0, %v3317
  %3319 = vdwg.mxu0
  %3320 = vmatprep.subr.mxu0 %v2022
  %3321 = vmatpush1.msra.mxu0 %v2021
  %3322 = vmatprep.subr.mxu0 %v2017
  %3323 = vmatpush1.msra.mxu0 %v2016
  %3324 = vmatprep.subr.mxu0 %v2012
  %3325 = vmatpush1.msra.mxu0 %v2011
  %3326 = vmatprep.subr.mxu0 %v2007
  %3327 = vmatpush1.msra.mxu0 %v2006
  %3328 = vmatprep.subr.mxu0 %v2002
  %3329 = vmatpush1.msra.mxu0 %v2001
  %3330 = vmatprep.subr.mxu0 %v1997
  %3331 = vmatpush1.msra.mxu0 %v1996
  %3332 = vmatprep.subr.mxu0 %v1992
  %3333 = vmatpush1.msra.mxu0 %v1991
  %3334 = vmatprep.subr.mxu0 %v1987
  %3335 = vmatpush1.msra.mxu0 %v1986
  %3336 = vmatprep.subr.mxu0 %v1982
  %3337 = vmatpush1.msra.mxu0 %v1981
  %3338 = vmatprep.subr.mxu0 %v1977
  %3339 = vmatpush1.msra.mxu0 %v1976
  %3340 = vmatprep.subr.mxu0 %v1972
  %3341 = vmatpush1.msra.mxu0 %v1971
  %3342 = vmatprep.subr.mxu0 %v1967
  %3343 = vmatpush1.msra.mxu0 %v1966
  %3344 = vmatprep.subr.mxu0 %v1962
  %3345 = vmatpush1.msra.mxu0 %v1961
  %3346 = vmatprep.subr.mxu0 %v1957
  %3347 = vmatpush1.msra.mxu0 %v1956
  %3348 = vmatprep.subr.mxu0 %v1952
  %3349 = vmatpush1.msra.mxu0 %v1951
  %3350 = vmatprep.subr.mxu0 %v1947
  %3351 = vmatpush1.msra.mxu0 %v1946
  %3352 = vmatprep.subr.mxu0 %v2102
  %3353 = vmatpush2.msra.mxu0 %v2101
  %3354 = vmatprep.subr.mxu0 %v2097
  %3355 = vmatpush2.msra.mxu0 %v2096
  %3356 = vmatprep.subr.mxu0 %v2092
  %3357 = vmatpush2.msra.mxu0 %v2091
  %3358 = vmatprep.subr.mxu0 %v2087
  %3359 = vmatpush2.msra.mxu0 %v2086
  %3360 = vmatprep.subr.mxu0 %v2082
  %3361 = vmatpush2.msra.mxu0 %v2081
  %3362 = vmatprep.subr.mxu0 %v2077
  %3363 = vmatpush2.msra.mxu0 %v2076
  %3364 = vmatprep.subr.mxu0 %v2072
  %3365 = vmatpush2.msra.mxu0 %v2071
  %3366 = vmatprep.subr.mxu0 %v2067
  %3367 = vmatpush2.msra.mxu0 %v2066
  %3368 = vmatprep.subr.mxu0 %v2062
  %3369 = vmatpush2.msra.mxu0 %v2061
  %3370 = vmatprep.subr.mxu0 %v2057
  %3371 = vmatpush2.msra.mxu0 %v2056
  %3372 = vmatprep.subr.mxu0 %v2052
  %3373 = vmatpush2.msra.mxu0 %v2051
  %3374 = vmatprep.subr.mxu0 %v2047
  %3375 = vmatpush2.msra.mxu0 %v2046
  %3376 = vmatprep.subr.mxu0 %v2042
  %3377 = vmatpush2.msra.mxu0 %v2041
  %3378 = vmatprep.subr.mxu0 %v2037
  %3379 = vmatpush2.msra.mxu0 %v2036
  %3380 = vmatprep.subr.mxu0 %v2032
  %3381 = vmatpush2.msra.mxu0 %v2031
  %3382 = vmatprep.subr.mxu0 %v2027
  %3383 = vmatpush2.msra.mxu0 %v2026
  %3384 = vmatprep.mubr.f32.mxu0 %v1627
  %3385 = vmatmul.mubr.f32.gmra.mxu0 %v1626
  %v3386 = vpop.f32.mrf.mxu0
  %v3387 = vadd.f32 %v3130, %v3386
  %v3388 = vpop.f32.mrf.mxu0
  %v3389 = vadd.f32 %v3132, %v3388
  %3390 = vmatprep.mubr.f32.mxu0 %v1632
  %3391 = vmatmul.mubr.f32.gmra.mxu0 %v1631
  %v3392 = vpop.f32.mrf.mxu0
  %v3393 = vadd.f32 %v3136, %v3392
  %v3394 = vpop.f32.mrf.mxu0
  %v3395 = vadd.f32 %v3138, %v3394
  %3396 = vmatprep.mubr.f32.mxu0 %v1637
  %3397 = vmatmul.mubr.f32.gmra.mxu0 %v1636
  %v3398 = vpop.f32.mrf.mxu0
  %v3399 = vadd.f32 %v3142, %v3398
  %v3400 = vpop.f32.mrf.mxu0
  %v3401 = vadd.f32 %v3144, %v3400
  %3402 = vmatprep.mubr.f32.mxu0 %v1642
  %3403 = vmatmul.mubr.f32.gmra.mxu0 %v1641
  %v3404 = vpop.f32.mrf.mxu0
  %v3405 = vadd.f32 %v3148, %v3404
  %v3406 = vpop.f32.mrf.mxu0
  %v3407 = vadd.f32 %v3150, %v3406
  %3408 = vmatprep.mubr.f32.mxu0 %v1647
  %3409 = vmatmul.mubr.f32.gmra.mxu0 %v1646
  %v3410 = vpop.f32.mrf.mxu0
  %v3411 = vadd.f32 %v3154, %v3410
  %v3412 = vpop.f32.mrf.mxu0
  %v3413 = vadd.f32 %v3156, %v3412
  %3414 = vmatprep.mubr.f32.mxu0 %v1652
  %3415 = vmatmul.mubr.f32.gmra.mxu0 %v1651
  %v3416 = vpop.f32.mrf.mxu0
  %v3417 = vadd.f32 %v3160, %v3416
  %v3418 = vpop.f32.mrf.mxu0
  %v3419 = vadd.f32 %v3162, %v3418
  %3420 = vmatprep.mubr.f32.mxu0 %v1657
  %3421 = vmatmul.mubr.f32.gmra.mxu0 %v1656
  %v3422 = vpop.f32.mrf.mxu0
  %v3423 = vadd.f32 %v3166, %v3422
  %v3424 = vpop.f32.mrf.mxu0
  %v3425 = vadd.f32 %v3168, %v3424
  %3426 = vmatprep.mubr.f32.mxu0 %v1662
  %3427 = vmatmul.mubr.f32.gmra.mxu0 %v1661
  %v3428 = vpop.f32.mrf.mxu0
  %v3429 = vadd.f32 %v3172, %v3428
  %v3430 = vpop.f32.mrf.mxu0
  %v3431 = vadd.f32 %v3174, %v3430
  %3432 = vmatprep.mubr.f32.mxu0 %v1667
  %3433 = vmatmul.mubr.f32.gmra.mxu0 %v1666
  %v3434 = vpop.f32.mrf.mxu0
  %v3435 = vadd.f32 %v3178, %v3434
  %v3436 = vpop.f32.mrf.mxu0
  %v3437 = vadd.f32 %v3180, %v3436
  %3438 = vmatprep.mubr.f32.mxu0 %v1672
  %3439 = vmatmul.mubr.f32.gmra.mxu0 %v1671
  %v3440 = vpop.f32.mrf.mxu0
  %v3441 = vadd.f32 %v3184, %v3440
  %v3442 = vpop.f32.mrf.mxu0
  %v3443 = vadd.f32 %v3186, %v3442
  %3444 = vmatprep.mubr.f32.mxu0 %v1677
  %3445 = vmatmul.mubr.f32.gmra.mxu0 %v1676
  %v3446 = vpop.f32.mrf.mxu0
  %v3447 = vadd.f32 %v3190, %v3446
  %v3448 = vpop.f32.mrf.mxu0
  %v3449 = vadd.f32 %v3192, %v3448
  %3450 = vmatprep.mubr.f32.mxu0 %v1682
  %3451 = vmatmul.mubr.f32.gmra.mxu0 %v1681
  %v3452 = vpop.f32.mrf.mxu0
  %v3453 = vadd.f32 %v3196, %v3452
  %v3454 = vpop.f32.mrf.mxu0
  %v3455 = vadd.f32 %v3198, %v3454
  %3456 = vmatprep.mubr.f32.mxu0 %v1687
  %3457 = vmatmul.mubr.f32.gmra.mxu0 %v1686
  %v3458 = vpop.f32.mrf.mxu0
  %v3459 = vadd.f32 %v3202, %v3458
  %v3460 = vpop.f32.mrf.mxu0
  %v3461 = vadd.f32 %v3204, %v3460
  %3462 = vmatprep.mubr.f32.mxu0 %v1692
  %3463 = vmatmul.mubr.f32.gmra.mxu0 %v1691
  %v3464 = vpop.f32.mrf.mxu0
  %v3465 = vadd.f32 %v3208, %v3464
  %v3466 = vpop.f32.mrf.mxu0
  %v3467 = vadd.f32 %v3210, %v3466
  %3468 = vmatprep.mubr.f32.mxu0 %v1697
  %3469 = vmatmul.mubr.f32.gmra.mxu0 %v1696
  %v3470 = vpop.f32.mrf.mxu0
  %v3471 = vadd.f32 %v3214, %v3470
  %v3472 = vpop.f32.mrf.mxu0
  %v3473 = vadd.f32 %v3216, %v3472
  %3474 = vmatprep.mubr.f32.mxu0 %v1702
  %3475 = vmatmul.mubr.f32.gmra.mxu0 %v1701
  %v3476 = vpop.f32.mrf.mxu0
  %v3477 = vadd.f32 %v3220, %v3476
  %v3478 = vpop.f32.mrf.mxu0
  %v3479 = vadd.f32 %v3222, %v3478
  %3480 = vmatprep.mubr.f32.mxu0 %v1707
  %3481 = vmatmul.mubr.f32.gmra.mxu0 %v1706
  %v3482 = vpop.f32.mrf.mxu0
  %v3483 = vadd.f32 %v3226, %v3482
  %v3484 = vpop.f32.mrf.mxu0
  %v3485 = vadd.f32 %v3228, %v3484
  %3486 = vmatprep.mubr.f32.mxu0 %v1712
  %3487 = vmatmul.mubr.f32.gmra.mxu0 %v1711
  %v3488 = vpop.f32.mrf.mxu0
  %v3489 = vadd.f32 %v3232, %v3488
  %v3490 = vpop.f32.mrf.mxu0
  %v3491 = vadd.f32 %v3234, %v3490
  %3492 = vmatprep.mubr.f32.mxu0 %v1717
  %3493 = vmatmul.mubr.f32.gmra.mxu0 %v1716
  %v3494 = vpop.f32.mrf.mxu0
  %v3495 = vadd.f32 %v3238, %v3494
  %v3496 = vpop.f32.mrf.mxu0
  %v3497 = vadd.f32 %v3240, %v3496
  %3498 = vmatprep.mubr.f32.mxu0 %v1722
  %3499 = vmatmul.mubr.f32.gmra.mxu0 %v1721
  %v3500 = vpop.f32.mrf.mxu0
  %v3501 = vadd.f32 %v3244, %v3500
  %v3502 = vpop.f32.mrf.mxu0
  %v3503 = vadd.f32 %v3246, %v3502
  %3504 = vmatprep.mubr.f32.mxu0 %v1727
  %3505 = vmatmul.mubr.f32.gmra.mxu0 %v1726
  %v3506 = vpop.f32.mrf.mxu0
  %v3507 = vadd.f32 %v3250, %v3506
  %v3508 = vpop.f32.mrf.mxu0
  %v3509 = vadd.f32 %v3252, %v3508
  %3510 = vmatprep.mubr.f32.mxu0 %v1732
  %3511 = vmatmul.mubr.f32.gmra.mxu0 %v1731
  %v3512 = vpop.f32.mrf.mxu0
  %v3513 = vadd.f32 %v3256, %v3512
  %v3514 = vpop.f32.mrf.mxu0
  %v3515 = vadd.f32 %v3258, %v3514
  %3516 = vmatprep.mubr.f32.mxu0 %v1737
  %3517 = vmatmul.mubr.f32.gmra.mxu0 %v1736
  %v3518 = vpop.f32.mrf.mxu0
  %v3519 = vadd.f32 %v3262, %v3518
  %v3520 = vpop.f32.mrf.mxu0
  %v3521 = vadd.f32 %v3264, %v3520
  %3522 = vmatprep.mubr.f32.mxu0 %v1742
  %3523 = vmatmul.mubr.f32.gmra.mxu0 %v1741
  %v3524 = vpop.f32.mrf.mxu0
  %v3525 = vadd.f32 %v3268, %v3524
  %v3526 = vpop.f32.mrf.mxu0
  %v3527 = vadd.f32 %v3270, %v3526
  %3528 = vmatprep.mubr.f32.mxu0 %v1747
  %3529 = vmatmul.mubr.f32.gmra.mxu0 %v1746
  %v3530 = vpop.f32.mrf.mxu0
  %v3531 = vadd.f32 %v3274, %v3530
  %v3532 = vpop.f32.mrf.mxu0
  %v3533 = vadd.f32 %v3276, %v3532
  %3534 = vmatprep.mubr.f32.mxu0 %v1752
  %3535 = vmatmul.mubr.f32.gmra.mxu0 %v1751
  %v3536 = vpop.f32.mrf.mxu0
  %v3537 = vadd.f32 %v3280, %v3536
  %v3538 = vpop.f32.mrf.mxu0
  %v3539 = vadd.f32 %v3282, %v3538
  %3540 = vmatprep.mubr.f32.mxu0 %v1757
  %3541 = vmatmul.mubr.f32.gmra.mxu0 %v1756
  %v3542 = vpop.f32.mrf.mxu0
  %v3543 = vadd.f32 %v3286, %v3542
  %v3544 = vpop.f32.mrf.mxu0
  %v3545 = vadd.f32 %v3288, %v3544
  %3546 = vmatprep.mubr.f32.mxu0 %v1762
  %3547 = vmatmul.mubr.f32.gmra.mxu0 %v1761
  %v3548 = vpop.f32.mrf.mxu0
  %v3549 = vadd.f32 %v3292, %v3548
  %v3550 = vpop.f32.mrf.mxu0
  %v3551 = vadd.f32 %v3294, %v3550
  %3552 = vmatprep.mubr.f32.mxu0 %v1767
  %3553 = vmatmul.mubr.f32.gmra.mxu0 %v1766
  %v3554 = vpop.f32.mrf.mxu0
  %v3555 = vadd.f32 %v3298, %v3554
  %v3556 = vpop.f32.mrf.mxu0
  %v3557 = vadd.f32 %v3300, %v3556
  %3558 = vmatprep.mubr.f32.mxu0 %v1772
  %3559 = vmatmul.mubr.f32.gmra.mxu0 %v1771
  %v3560 = vpop.f32.mrf.mxu0
  %v3561 = vadd.f32 %v3304, %v3560
  %v3562 = vpop.f32.mrf.mxu0
  %v3563 = vadd.f32 %v3306, %v3562
  %3564 = vmatprep.mubr.f32.mxu0 %v1777
  %3565 = vmatmul.mubr.f32.gmra.mxu0 %v1776
  %v3566 = vpop.f32.mrf.mxu0
  %v3567 = vadd.f32 %v3310, %v3566
  %v3568 = vpop.f32.mrf.mxu0
  %v3569 = vadd.f32 %v3312, %v3568
  %3570 = vmatprep.mubr.f32.mxu0 %v1782
  %3571 = vmatmul.mubr.f32.gmra.mxu0 %v1781
  %v3572 = vpop.f32.mrf.mxu0
  %v3573 = vadd.f32 %v3316, %v3572
  %v3574 = vpop.f32.mrf.mxu0
  %v3575 = vadd.f32 %v3318, %v3574
  %3576 = vdwg.mxu0
  %3577 = vmatprep.subr.mxu0 0.0
  %3578 = vmatpush1.msra.mxu0 0.0
  %3579 = vmatprep.subr.mxu0 %v2287
  %3580 = vmatpush1.msra.mxu0 %v2284
  %3581 = vmatprep.subr.mxu0 %v2172
  %3582 = vmatpush1.msra.mxu0 %v2171
  %3583 = vmatprep.subr.mxu0 %v2167
  %3584 = vmatpush1.msra.mxu0 %v2166
  %3585 = vmatprep.subr.mxu0 %v2162
  %3586 = vmatpush1.msra.mxu0 %v2161
  %3587 = vmatprep.subr.mxu0 %v2157
  %3588 = vmatpush1.msra.mxu0 %v2156
  %3589 = vmatprep.subr.mxu0 %v2152
  %3590 = vmatpush1.msra.mxu0 %v2151
  %3591 = vmatprep.subr.mxu0 %v2147
  %3592 = vmatpush1.msra.mxu0 %v2146
  %3593 = vmatprep.subr.mxu0 %v2142
  %3594 = vmatpush1.msra.mxu0 %v2141
  %3595 = vmatprep.subr.mxu0 %v2137
  %3596 = vmatpush1.msra.mxu0 %v2136
  %3597 = vmatprep.subr.mxu0 %v2132
  %3598 = vmatpush1.msra.mxu0 %v2131
  %3599 = vmatprep.subr.mxu0 %v2127
  %3600 = vmatpush1.msra.mxu0 %v2126
  %3601 = vmatprep.subr.mxu0 %v2122
  %3602 = vmatpush1.msra.mxu0 %v2121
  %3603 = vmatprep.subr.mxu0 %v2117
  %3604 = vmatpush1.msra.mxu0 %v2116
  %3605 = vmatprep.subr.mxu0 %v2112
  %3606 = vmatpush1.msra.mxu0 %v2111
  %3607 = vmatprep.subr.mxu0 %v2107
  %3608 = vmatpush1.msra.mxu0 %v2106
  %3609 = vmatprep.subr.mxu0 0.0
  %3610 = vmatpush2.msra.mxu0 0.0
  %3611 = vmatprep.subr.mxu0 0.0
  %3612 = vmatpush2.msra.mxu0 0.0
  %3613 = vmatprep.subr.mxu0 0.0
  %3614 = vmatpush2.msra.mxu0 0.0
  %3615 = vmatprep.subr.mxu0 0.0
  %3616 = vmatpush2.msra.mxu0 0.0
  %3617 = vmatprep.subr.mxu0 0.0
  %3618 = vmatpush2.msra.mxu0 0.0
  %3619 = vmatprep.subr.mxu0 0.0
  %3620 = vmatpush2.msra.mxu0 0.0
  %3621 = vmatprep.subr.mxu0 0.0
  %3622 = vmatpush2.msra.mxu0 0.0
  %3623 = vmatprep.subr.mxu0 0.0
  %3624 = vmatpush2.msra.mxu0 0.0
  %3625 = vmatprep.subr.mxu0 0.0
  %3626 = vmatpush2.msra.mxu0 0.0
  %3627 = vmatprep.subr.mxu0 0.0
  %3628 = vmatpush2.msra.mxu0 0.0
  %3629 = vmatprep.subr.mxu0 0.0
  %3630 = vmatpush2.msra.mxu0 0.0
  %3631 = vmatprep.subr.mxu0 0.0
  %3632 = vmatpush2.msra.mxu0 0.0
  %3633 = vmatprep.subr.mxu0 0.0
  %3634 = vmatpush2.msra.mxu0 0.0
  %3635 = vmatprep.subr.mxu0 0.0
  %3636 = vmatpush2.msra.mxu0 0.0
  %3637 = vmatprep.subr.mxu0 0.0
  %3638 = vmatpush2.msra.mxu0 0.0
  %3639 = vmatprep.subr.mxu0 0.0
  %3640 = vmatpush2.msra.mxu0 0.0
  %3641 = vmatprep.mubr.f32.mxu0 0.0
  %3642 = vmatmul.mubr.f32.gmra.mxu0 %v2181
  %v3643 = vpop.f32.mrf.mxu0
  %v3644 = vadd.f32 %v3387, %v3643
  %v3645 = vpop.f32.mrf.mxu0
  %v3646 = vadd.f32 %v3389, %v3645
  %3647 = vmatprep.mubr.f32.mxu0 0.0
  %3648 = vmatmul.mubr.f32.gmra.mxu0 %v2184
  %v3649 = vpop.f32.mrf.mxu0
  %v3650 = vadd.f32 %v3393, %v3649
  %v3651 = vpop.f32.mrf.mxu0
  %v3652 = vadd.f32 %v3395, %v3651
  %3653 = vmatprep.mubr.f32.mxu0 0.0
  %3654 = vmatmul.mubr.f32.gmra.mxu0 %v2187
  %v3655 = vpop.f32.mrf.mxu0
  %v3656 = vadd.f32 %v3399, %v3655
  %v3657 = vpop.f32.mrf.mxu0
  %v3658 = vadd.f32 %v3401, %v3657
  %3659 = vmatprep.mubr.f32.mxu0 0.0
  %3660 = vmatmul.mubr.f32.gmra.mxu0 %v2190
  %v3661 = vpop.f32.mrf.mxu0
  %v3662 = vadd.f32 %v3405, %v3661
  %v3663 = vpop.f32.mrf.mxu0
  %v3664 = vadd.f32 %v3407, %v3663
  %3665 = vmatprep.mubr.f32.mxu0 0.0
  %3666 = vmatmul.mubr.f32.gmra.mxu0 %v2193
  %v3667 = vpop.f32.mrf.mxu0
  %v3668 = vadd.f32 %v3411, %v3667
  %v3669 = vpop.f32.mrf.mxu0
  %v3670 = vadd.f32 %v3413, %v3669
  %3671 = vmatprep.mubr.f32.mxu0 0.0
  %3672 = vmatmul.mubr.f32.gmra.mxu0 %v2196
  %v3673 = vpop.f32.mrf.mxu0
  %v3674 = vadd.f32 %v3417, %v3673
  %v3675 = vpop.f32.mrf.mxu0
  %v3676 = vadd.f32 %v3419, %v3675
  %3677 = vmatprep.mubr.f32.mxu0 0.0
  %3678 = vmatmul.mubr.f32.gmra.mxu0 %v2199
  %v3679 = vpop.f32.mrf.mxu0
  %v3680 = vadd.f32 %v3423, %v3679
  %v3681 = vpop.f32.mrf.mxu0
  %v3682 = vadd.f32 %v3425, %v3681
  %3683 = vmatprep.mubr.f32.mxu0 0.0
  %3684 = vmatmul.mubr.f32.gmra.mxu0 %v2202
  %v3685 = vpop.f32.mrf.mxu0
  %v3686 = vadd.f32 %v3429, %v3685
  %v3687 = vpop.f32.mrf.mxu0
  %v3688 = vadd.f32 %v3431, %v3687
  %3689 = vmatprep.mubr.f32.mxu0 0.0
  %3690 = vmatmul.mubr.f32.gmra.mxu0 %v2205
  %v3691 = vpop.f32.mrf.mxu0
  %v3692 = vadd.f32 %v3435, %v3691
  %v3693 = vpop.f32.mrf.mxu0
  %v3694 = vadd.f32 %v3437, %v3693
  %3695 = vmatprep.mubr.f32.mxu0 0.0
  %3696 = vmatmul.mubr.f32.gmra.mxu0 %v2208
  %v3697 = vpop.f32.mrf.mxu0
  %v3698 = vadd.f32 %v3441, %v3697
  %v3699 = vpop.f32.mrf.mxu0
  %v3700 = vadd.f32 %v3443, %v3699
  %3701 = vmatprep.mubr.f32.mxu0 0.0
  %3702 = vmatmul.mubr.f32.gmra.mxu0 %v2211
  %v3703 = vpop.f32.mrf.mxu0
  %v3704 = vadd.f32 %v3447, %v3703
  %v3705 = vpop.f32.mrf.mxu0
  %v3706 = vadd.f32 %v3449, %v3705
  %3707 = vmatprep.mubr.f32.mxu0 0.0
  %3708 = vmatmul.mubr.f32.gmra.mxu0 %v2214
  %v3709 = vpop.f32.mrf.mxu0
  %v3710 = vadd.f32 %v3453, %v3709
  %v3711 = vpop.f32.mrf.mxu0
  %v3712 = vadd.f32 %v3455, %v3711
  %3713 = vmatprep.mubr.f32.mxu0 0.0
  %3714 = vmatmul.mubr.f32.gmra.mxu0 %v2217
  %v3715 = vpop.f32.mrf.mxu0
  %v3716 = vadd.f32 %v3459, %v3715
  %v3717 = vpop.f32.mrf.mxu0
  %v3718 = vadd.f32 %v3461, %v3717
  %3719 = vmatprep.mubr.f32.mxu0 0.0
  %3720 = vmatmul.mubr.f32.gmra.mxu0 %v2220
  %v3721 = vpop.f32.mrf.mxu0
  %v3722 = vadd.f32 %v3465, %v3721
  %v3723 = vpop.f32.mrf.mxu0
  %v3724 = vadd.f32 %v3467, %v3723
  %3725 = vmatprep.mubr.f32.mxu0 0.0
  %3726 = vmatmul.mubr.f32.gmra.mxu0 %v2223
  %v3727 = vpop.f32.mrf.mxu0
  %v3728 = vadd.f32 %v3471, %v3727
  %v3729 = vpop.f32.mrf.mxu0
  %v3730 = vadd.f32 %v3473, %v3729
  %3731 = vmatprep.mubr.f32.mxu0 0.0
  %3732 = vmatmul.mubr.f32.gmra.mxu0 %v2226
  %v3733 = vpop.f32.mrf.mxu0
  %v3734 = vadd.f32 %v3477, %v3733
  %v3735 = vpop.f32.mrf.mxu0
  %v3736 = vadd.f32 %v3479, %v3735
  %3737 = vmatprep.mubr.f32.mxu0 0.0
  %3738 = vmatmul.mubr.f32.gmra.mxu0 %v2229
  %v3739 = vpop.f32.mrf.mxu0
  %v3740 = vadd.f32 %v3483, %v3739
  %v3741 = vpop.f32.mrf.mxu0
  %v3742 = vadd.f32 %v3485, %v3741
  %3743 = vmatprep.mubr.f32.mxu0 0.0
  %3744 = vmatmul.mubr.f32.gmra.mxu0 %v2232
  %v3745 = vpop.f32.mrf.mxu0
  %v3746 = vadd.f32 %v3489, %v3745
  %v3747 = vpop.f32.mrf.mxu0
  %v3748 = vadd.f32 %v3491, %v3747
  %3749 = vmatprep.mubr.f32.mxu0 0.0
  %3750 = vmatmul.mubr.f32.gmra.mxu0 %v2235
  %v3751 = vpop.f32.mrf.mxu0
  %v3752 = vadd.f32 %v3495, %v3751
  %v3753 = vpop.f32.mrf.mxu0
  %v3754 = vadd.f32 %v3497, %v3753
  %3755 = vmatprep.mubr.f32.mxu0 0.0
  %3756 = vmatmul.mubr.f32.gmra.mxu0 %v2238
  %v3757 = vpop.f32.mrf.mxu0
  %v3758 = vadd.f32 %v3501, %v3757
  %v3759 = vpop.f32.mrf.mxu0
  %v3760 = vadd.f32 %v3503, %v3759
  %3761 = vmatprep.mubr.f32.mxu0 0.0
  %3762 = vmatmul.mubr.f32.gmra.mxu0 %v2241
  %v3763 = vpop.f32.mrf.mxu0
  %v3764 = vadd.f32 %v3507, %v3763
  %v3765 = vpop.f32.mrf.mxu0
  %v3766 = vadd.f32 %v3509, %v3765
  %3767 = vmatprep.mubr.f32.mxu0 0.0
  %3768 = vmatmul.mubr.f32.gmra.mxu0 %v2244
  %v3769 = vpop.f32.mrf.mxu0
  %v3770 = vadd.f32 %v3513, %v3769
  %v3771 = vpop.f32.mrf.mxu0
  %v3772 = vadd.f32 %v3515, %v3771
  %3773 = vmatprep.mubr.f32.mxu0 0.0
  %3774 = vmatmul.mubr.f32.gmra.mxu0 %v2247
  %v3775 = vpop.f32.mrf.mxu0
  %v3776 = vadd.f32 %v3519, %v3775
  %v3777 = vpop.f32.mrf.mxu0
  %v3778 = vadd.f32 %v3521, %v3777
  %3779 = vmatprep.mubr.f32.mxu0 0.0
  %3780 = vmatmul.mubr.f32.gmra.mxu0 %v2250
  %v3781 = vpop.f32.mrf.mxu0
  %v3782 = vadd.f32 %v3525, %v3781
  %v3783 = vpop.f32.mrf.mxu0
  %v3784 = vadd.f32 %v3527, %v3783
  %3785 = vmatprep.mubr.f32.mxu0 0.0
  %3786 = vmatmul.mubr.f32.gmra.mxu0 %v2253
  %v3787 = vpop.f32.mrf.mxu0
  %v3788 = vadd.f32 %v3531, %v3787
  %v3789 = vpop.f32.mrf.mxu0
  %v3790 = vadd.f32 %v3533, %v3789
  %3791 = vmatprep.mubr.f32.mxu0 0.0
  %3792 = vmatmul.mubr.f32.gmra.mxu0 %v2256
  %v3793 = vpop.f32.mrf.mxu0
  %v3794 = vadd.f32 %v3537, %v3793
  %v3795 = vpop.f32.mrf.mxu0
  %v3796 = vadd.f32 %v3539, %v3795
  %3797 = vmatprep.mubr.f32.mxu0 0.0
  %3798 = vmatmul.mubr.f32.gmra.mxu0 %v2259
  %v3799 = vpop.f32.mrf.mxu0
  %v3800 = vadd.f32 %v3543, %v3799
  %v3801 = vpop.f32.mrf.mxu0
  %v3802 = vadd.f32 %v3545, %v3801
  %3803 = vmatprep.mubr.f32.mxu0 0.0
  %3804 = vmatmul.mubr.f32.gmra.mxu0 %v2262
  %v3805 = vpop.f32.mrf.mxu0
  %v3806 = vadd.f32 %v3549, %v3805
  %v3807 = vpop.f32.mrf.mxu0
  %v3808 = vadd.f32 %v3551, %v3807
  %3809 = vmatprep.mubr.f32.mxu0 0.0
  %3810 = vmatmul.mubr.f32.gmra.mxu0 %v2265
  %v3811 = vpop.f32.mrf.mxu0
  %v3812 = vadd.f32 %v3555, %v3811
  %v3813 = vpop.f32.mrf.mxu0
  %v3814 = vadd.f32 %v3557, %v3813
  %3815 = vmatprep.mubr.f32.mxu0 0.0
  %3816 = vmatmul.mubr.f32.gmra.mxu0 %v2268
  %v3817 = vpop.f32.mrf.mxu0
  %v3818 = vadd.f32 %v3561, %v3817
  %v3819 = vpop.f32.mrf.mxu0
  %v3820 = vadd.f32 %v3563, %v3819
  %3821 = vmatprep.mubr.f32.mxu0 0.0
  %3822 = vmatmul.mubr.f32.gmra.mxu0 %v2271
  %v3823 = vpop.f32.mrf.mxu0
  %v3824 = vadd.f32 %v3567, %v3823
  %v3825 = vpop.f32.mrf.mxu0
  %v3826 = vadd.f32 %v3569, %v3825
  %3827 = vmatprep.mubr.f32.mxu0 0.0
  %3828 = vmatmul.mubr.f32.gmra.mxu0 %v2274
  %v3829 = vpop.f32.mrf.mxu0
  %v3830 = vadd.f32 %v3573, %v3829
  %v3831 = vpop.f32.mrf.mxu0
  %v3832 = vadd.f32 %v3575, %v3831
  %3833 = vdwg.mxu0
  %3834 = vmatprep.subr.mxu0 0.0
  %3835 = vmatpush1.msra.mxu0 %v1863
  %3836 = vmatprep.subr.mxu0 0.0
  %3837 = vmatpush1.msra.mxu0 %v1858
  %3838 = vmatprep.subr.mxu0 0.0
  %3839 = vmatpush1.msra.mxu0 %v1853
  %3840 = vmatprep.subr.mxu0 0.0
  %3841 = vmatpush1.msra.mxu0 %v1848
  %3842 = vmatprep.subr.mxu0 0.0
  %3843 = vmatpush1.msra.mxu0 %v1843
  %3844 = vmatprep.subr.mxu0 0.0
  %3845 = vmatpush1.msra.mxu0 %v1838
  %3846 = vmatprep.subr.mxu0 0.0
  %3847 = vmatpush1.msra.mxu0 %v1833
  %3848 = vmatprep.subr.mxu0 0.0
  %3849 = vmatpush1.msra.mxu0 %v1828
  %3850 = vmatprep.subr.mxu0 0.0
  %3851 = vmatpush1.msra.mxu0 %v1823
  %3852 = vmatprep.subr.mxu0 0.0
  %3853 = vmatpush1.msra.mxu0 %v1818
  %3854 = vmatprep.subr.mxu0 0.0
  %3855 = vmatpush1.msra.mxu0 %v1813
  %3856 = vmatprep.subr.mxu0 0.0
  %3857 = vmatpush1.msra.mxu0 %v1808
  %3858 = vmatprep.subr.mxu0 0.0
  %3859 = vmatpush1.msra.mxu0 %v1803
  %3860 = vmatprep.subr.mxu0 0.0
  %3861 = vmatpush1.msra.mxu0 %v1798
  %3862 = vmatprep.subr.mxu0 0.0
  %3863 = vmatpush1.msra.mxu0 %v1793
  %3864 = vmatprep.subr.mxu0 0.0
  %3865 = vmatpush1.msra.mxu0 %v1788
  %3866 = vmatprep.subr.mxu0 0.0
  %3867 = vmatpush2.msra.mxu0 %v1943
  %3868 = vmatprep.subr.mxu0 0.0
  %3869 = vmatpush2.msra.mxu0 %v1938
  %3870 = vmatprep.subr.mxu0 0.0
  %3871 = vmatpush2.msra.mxu0 %v1933
  %3872 = vmatprep.subr.mxu0 0.0
  %3873 = vmatpush2.msra.mxu0 %v1928
  %3874 = vmatprep.subr.mxu0 0.0
  %3875 = vmatpush2.msra.mxu0 %v1923
  %3876 = vmatprep.subr.mxu0 0.0
  %3877 = vmatpush2.msra.mxu0 %v1918
  %3878 = vmatprep.subr.mxu0 0.0
  %3879 = vmatpush2.msra.mxu0 %v1913
  %3880 = vmatprep.subr.mxu0 0.0
  %3881 = vmatpush2.msra.mxu0 %v1908
  %3882 = vmatprep.subr.mxu0 0.0
  %3883 = vmatpush2.msra.mxu0 %v1903
  %3884 = vmatprep.subr.mxu0 0.0
  %3885 = vmatpush2.msra.mxu0 %v1898
  %3886 = vmatprep.subr.mxu0 0.0
  %3887 = vmatpush2.msra.mxu0 %v1893
  %3888 = vmatprep.subr.mxu0 0.0
  %3889 = vmatpush2.msra.mxu0 %v1888
  %3890 = vmatprep.subr.mxu0 0.0
  %3891 = vmatpush2.msra.mxu0 %v1883
  %3892 = vmatprep.subr.mxu0 0.0
  %3893 = vmatpush2.msra.mxu0 %v1878
  %3894 = vmatprep.subr.mxu0 0.0
  %3895 = vmatpush2.msra.mxu0 %v1873
  %3896 = vmatprep.subr.mxu0 0.0
  %3897 = vmatpush2.msra.mxu0 %v1868
  %3898 = vmatprep.mubr.f32.mxu0 %v1625
  %3899 = vmatmul.mubr.f32.gmra.mxu0 %v1624
  %v3900 = vpop.f32.mrf.mxu0
  %v3901 = vadd.f32 0.0, %v3900
  %v3902 = vpop.f32.mrf.mxu0
  %3903 = vmatprep.mubr.f32.mxu0 %v1630
  %3904 = vmatmul.mubr.f32.gmra.mxu0 %v1629
  %v3905 = vpop.f32.mrf.mxu0
  %v3906 = vadd.f32 0.0, %v3905
  %v3907 = vpop.f32.mrf.mxu0
  %3908 = vmatprep.mubr.f32.mxu0 %v1635
  %3909 = vmatmul.mubr.f32.gmra.mxu0 %v1634
  %v3910 = vpop.f32.mrf.mxu0
  %v3911 = vadd.f32 0.0, %v3910
  %v3912 = vpop.f32.mrf.mxu0
  %3913 = vmatprep.mubr.f32.mxu0 %v1640
  %3914 = vmatmul.mubr.f32.gmra.mxu0 %v1639
  %v3915 = vpop.f32.mrf.mxu0
  %v3916 = vadd.f32 0.0, %v3915
  %v3917 = vpop.f32.mrf.mxu0
  %3918 = vmatprep.mubr.f32.mxu0 %v1645
  %3919 = vmatmul.mubr.f32.gmra.mxu0 %v1644
  %v3920 = vpop.f32.mrf.mxu0
  %v3921 = vadd.f32 0.0, %v3920
  %v3922 = vpop.f32.mrf.mxu0
  %3923 = vmatprep.mubr.f32.mxu0 %v1650
  %3924 = vmatmul.mubr.f32.gmra.mxu0 %v1649
  %v3925 = vpop.f32.mrf.mxu0
  %v3926 = vadd.f32 0.0, %v3925
  %v3927 = vpop.f32.mrf.mxu0
  %3928 = vmatprep.mubr.f32.mxu0 %v1655
  %3929 = vmatmul.mubr.f32.gmra.mxu0 %v1654
  %v3930 = vpop.f32.mrf.mxu0
  %v3931 = vadd.f32 0.0, %v3930
  %v3932 = vpop.f32.mrf.mxu0
  %3933 = vmatprep.mubr.f32.mxu0 %v1660
  %3934 = vmatmul.mubr.f32.gmra.mxu0 %v1659
  %v3935 = vpop.f32.mrf.mxu0
  %v3936 = vadd.f32 0.0, %v3935
  %v3937 = vpop.f32.mrf.mxu0
  %3938 = vmatprep.mubr.f32.mxu0 %v1665
  %3939 = vmatmul.mubr.f32.gmra.mxu0 %v1664
  %v3940 = vpop.f32.mrf.mxu0
  %v3941 = vadd.f32 0.0, %v3940
  %v3942 = vpop.f32.mrf.mxu0
  %3943 = vmatprep.mubr.f32.mxu0 %v1670
  %3944 = vmatmul.mubr.f32.gmra.mxu0 %v1669
  %v3945 = vpop.f32.mrf.mxu0
  %v3946 = vadd.f32 0.0, %v3945
  %v3947 = vpop.f32.mrf.mxu0
  %3948 = vmatprep.mubr.f32.mxu0 %v1675
  %3949 = vmatmul.mubr.f32.gmra.mxu0 %v1674
  %v3950 = vpop.f32.mrf.mxu0
  %v3951 = vadd.f32 0.0, %v3950
  %v3952 = vpop.f32.mrf.mxu0
  %3953 = vmatprep.mubr.f32.mxu0 %v1680
  %3954 = vmatmul.mubr.f32.gmra.mxu0 %v1679
  %v3955 = vpop.f32.mrf.mxu0
  %v3956 = vadd.f32 0.0, %v3955
  %v3957 = vpop.f32.mrf.mxu0
  %3958 = vmatprep.mubr.f32.mxu0 %v1685
  %3959 = vmatmul.mubr.f32.gmra.mxu0 %v1684
  %v3960 = vpop.f32.mrf.mxu0
  %v3961 = vadd.f32 0.0, %v3960
  %v3962 = vpop.f32.mrf.mxu0
  %3963 = vmatprep.mubr.f32.mxu0 %v1690
  %3964 = vmatmul.mubr.f32.gmra.mxu0 %v1689
  %v3965 = vpop.f32.mrf.mxu0
  %v3966 = vadd.f32 0.0, %v3965
  %v3967 = vpop.f32.mrf.mxu0
  %3968 = vmatprep.mubr.f32.mxu0 %v1695
  %3969 = vmatmul.mubr.f32.gmra.mxu0 %v1694
  %v3970 = vpop.f32.mrf.mxu0
  %v3971 = vadd.f32 0.0, %v3970
  %v3972 = vpop.f32.mrf.mxu0
  %3973 = vmatprep.mubr.f32.mxu0 %v1700
  %3974 = vmatmul.mubr.f32.gmra.mxu0 %v1699
  %v3975 = vpop.f32.mrf.mxu0
  %v3976 = vadd.f32 0.0, %v3975
  %v3977 = vpop.f32.mrf.mxu0
  %3978 = vmatprep.mubr.f32.mxu0 %v1705
  %3979 = vmatmul.mubr.f32.gmra.mxu0 %v1704
  %v3980 = vpop.f32.mrf.mxu0
  %v3981 = vadd.f32 0.0, %v3980
  %v3982 = vpop.f32.mrf.mxu0
  %3983 = vmatprep.mubr.f32.mxu0 %v1710
  %3984 = vmatmul.mubr.f32.gmra.mxu0 %v1709
  %v3985 = vpop.f32.mrf.mxu0
  %v3986 = vadd.f32 0.0, %v3985
  %v3987 = vpop.f32.mrf.mxu0
  %3988 = vmatprep.mubr.f32.mxu0 %v1715
  %3989 = vmatmul.mubr.f32.gmra.mxu0 %v1714
  %v3990 = vpop.f32.mrf.mxu0
  %v3991 = vadd.f32 0.0, %v3990
  %v3992 = vpop.f32.mrf.mxu0
  %3993 = vmatprep.mubr.f32.mxu0 %v1720
  %3994 = vmatmul.mubr.f32.gmra.mxu0 %v1719
  %v3995 = vpop.f32.mrf.mxu0
  %v3996 = vadd.f32 0.0, %v3995
  %v3997 = vpop.f32.mrf.mxu0
  %3998 = vmatprep.mubr.f32.mxu0 %v1725
  %3999 = vmatmul.mubr.f32.gmra.mxu0 %v1724
  %v4000 = vpop.f32.mrf.mxu0
  %v4001 = vadd.f32 0.0, %v4000
  %v4002 = vpop.f32.mrf.mxu0
  %4003 = vmatprep.mubr.f32.mxu0 %v1730
  %4004 = vmatmul.mubr.f32.gmra.mxu0 %v1729
  %v4005 = vpop.f32.mrf.mxu0
  %v4006 = vadd.f32 0.0, %v4005
  %v4007 = vpop.f32.mrf.mxu0
  %4008 = vmatprep.mubr.f32.mxu0 %v1735
  %4009 = vmatmul.mubr.f32.gmra.mxu0 %v1734
  %v4010 = vpop.f32.mrf.mxu0
  %v4011 = vadd.f32 0.0, %v4010
  %v4012 = vpop.f32.mrf.mxu0
  %4013 = vmatprep.mubr.f32.mxu0 %v1740
  %4014 = vmatmul.mubr.f32.gmra.mxu0 %v1739
  %v4015 = vpop.f32.mrf.mxu0
  %v4016 = vadd.f32 0.0, %v4015
  %v4017 = vpop.f32.mrf.mxu0
  %4018 = vmatprep.mubr.f32.mxu0 %v1745
  %4019 = vmatmul.mubr.f32.gmra.mxu0 %v1744
  %v4020 = vpop.f32.mrf.mxu0
  %v4021 = vadd.f32 0.0, %v4020
  %v4022 = vpop.f32.mrf.mxu0
  %4023 = vmatprep.mubr.f32.mxu0 %v1750
  %4024 = vmatmul.mubr.f32.gmra.mxu0 %v1749
  %v4025 = vpop.f32.mrf.mxu0
  %v4026 = vadd.f32 0.0, %v4025
  %v4027 = vpop.f32.mrf.mxu0
  %4028 = vmatprep.mubr.f32.mxu0 %v1755
  %4029 = vmatmul.mubr.f32.gmra.mxu0 %v1754
  %v4030 = vpop.f32.mrf.mxu0
  %v4031 = vadd.f32 0.0, %v4030
  %v4032 = vpop.f32.mrf.mxu0
  %4033 = vmatprep.mubr.f32.mxu0 %v1760
  %4034 = vmatmul.mubr.f32.gmra.mxu0 %v1759
  %v4035 = vpop.f32.mrf.mxu0
  %v4036 = vadd.f32 0.0, %v4035
  %v4037 = vpop.f32.mrf.mxu0
  %4038 = vmatprep.mubr.f32.mxu0 %v1765
  %4039 = vmatmul.mubr.f32.gmra.mxu0 %v1764
  %v4040 = vpop.f32.mrf.mxu0
  %v4041 = vadd.f32 0.0, %v4040
  %v4042 = vpop.f32.mrf.mxu0
  %4043 = vmatprep.mubr.f32.mxu0 %v1770
  %4044 = vmatmul.mubr.f32.gmra.mxu0 %v1769
  %v4045 = vpop.f32.mrf.mxu0
  %v4046 = vadd.f32 0.0, %v4045
  %v4047 = vpop.f32.mrf.mxu0
  %4048 = vmatprep.mubr.f32.mxu0 %v1775
  %4049 = vmatmul.mubr.f32.gmra.mxu0 %v1774
  %v4050 = vpop.f32.mrf.mxu0
  %v4051 = vadd.f32 0.0, %v4050
  %v4052 = vpop.f32.mrf.mxu0
  %4053 = vmatprep.mubr.f32.mxu0 %v1780
  %4054 = vmatmul.mubr.f32.gmra.mxu0 %v1779
  %v4055 = vpop.f32.mrf.mxu0
  %v4056 = vadd.f32 0.0, %v4055
  %v4057 = vpop.f32.mrf.mxu0
  %4058 = vdwg.mxu0
  %4059 = vmatprep.subr.mxu0 0.0
  %4060 = vmatpush1.msra.mxu0 %v2023
  %4061 = vmatprep.subr.mxu0 0.0
  %4062 = vmatpush1.msra.mxu0 %v2018
  %4063 = vmatprep.subr.mxu0 0.0
  %4064 = vmatpush1.msra.mxu0 %v2013
  %4065 = vmatprep.subr.mxu0 0.0
  %4066 = vmatpush1.msra.mxu0 %v2008
  %4067 = vmatprep.subr.mxu0 0.0
  %4068 = vmatpush1.msra.mxu0 %v2003
  %4069 = vmatprep.subr.mxu0 0.0
  %4070 = vmatpush1.msra.mxu0 %v1998
  %4071 = vmatprep.subr.mxu0 0.0
  %4072 = vmatpush1.msra.mxu0 %v1993
  %4073 = vmatprep.subr.mxu0 0.0
  %4074 = vmatpush1.msra.mxu0 %v1988
  %4075 = vmatprep.subr.mxu0 0.0
  %4076 = vmatpush1.msra.mxu0 %v1983
  %4077 = vmatprep.subr.mxu0 0.0
  %4078 = vmatpush1.msra.mxu0 %v1978
  %4079 = vmatprep.subr.mxu0 0.0
  %4080 = vmatpush1.msra.mxu0 %v1973
  %4081 = vmatprep.subr.mxu0 0.0
  %4082 = vmatpush1.msra.mxu0 %v1968
  %4083 = vmatprep.subr.mxu0 0.0
  %4084 = vmatpush1.msra.mxu0 %v1963
  %4085 = vmatprep.subr.mxu0 0.0
  %4086 = vmatpush1.msra.mxu0 %v1958
  %4087 = vmatprep.subr.mxu0 0.0
  %4088 = vmatpush1.msra.mxu0 %v1953
  %4089 = vmatprep.subr.mxu0 0.0
  %4090 = vmatpush1.msra.mxu0 %v1948
  %4091 = vmatprep.subr.mxu0 0.0
  %4092 = vmatpush2.msra.mxu0 %v2103
  %4093 = vmatprep.subr.mxu0 0.0
  %4094 = vmatpush2.msra.mxu0 %v2098
  %4095 = vmatprep.subr.mxu0 0.0
  %4096 = vmatpush2.msra.mxu0 %v2093
  %4097 = vmatprep.subr.mxu0 0.0
  %4098 = vmatpush2.msra.mxu0 %v2088
  %4099 = vmatprep.subr.mxu0 0.0
  %4100 = vmatpush2.msra.mxu0 %v2083
  %4101 = vmatprep.subr.mxu0 0.0
  %4102 = vmatpush2.msra.mxu0 %v2078
  %4103 = vmatprep.subr.mxu0 0.0
  %4104 = vmatpush2.msra.mxu0 %v2073
  %4105 = vmatprep.subr.mxu0 0.0
  %4106 = vmatpush2.msra.mxu0 %v2068
  %4107 = vmatprep.subr.mxu0 0.0
  %4108 = vmatpush2.msra.mxu0 %v2063
  %4109 = vmatprep.subr.mxu0 0.0
  %4110 = vmatpush2.msra.mxu0 %v2058
  %4111 = vmatprep.subr.mxu0 0.0
  %4112 = vmatpush2.msra.mxu0 %v2053
  %4113 = vmatprep.subr.mxu0 0.0
  %4114 = vmatpush2.msra.mxu0 %v2048
  %4115 = vmatprep.subr.mxu0 0.0
  %4116 = vmatpush2.msra.mxu0 %v2043
  %4117 = vmatprep.subr.mxu0 0.0
  %4118 = vmatpush2.msra.mxu0 %v2038
  %4119 = vmatprep.subr.mxu0 0.0
  %4120 = vmatpush2.msra.mxu0 %v2033
  %4121 = vmatprep.subr.mxu0 0.0
  %4122 = vmatpush2.msra.mxu0 %v2028
  %4123 = vmatprep.mubr.f32.mxu0 %v1627
  %4124 = vmatmul.mubr.f32.gmra.mxu0 %v1626
  %v4125 = vpop.f32.mrf.mxu0
  %v4126 = vadd.f32 %v3901, %v4125
  %v4127 = vpop.f32.mrf.mxu0
  %4128 = vmatprep.mubr.f32.mxu0 %v1632
  %4129 = vmatmul.mubr.f32.gmra.mxu0 %v1631
  %v4130 = vpop.f32.mrf.mxu0
  %v4131 = vadd.f32 %v3906, %v4130
  %v4132 = vpop.f32.mrf.mxu0
  %4133 = vmatprep.mubr.f32.mxu0 %v1637
  %4134 = vmatmul.mubr.f32.gmra.mxu0 %v1636
  %v4135 = vpop.f32.mrf.mxu0
  %v4136 = vadd.f32 %v3911, %v4135
  %v4137 = vpop.f32.mrf.mxu0
  %4138 = vmatprep.mubr.f32.mxu0 %v1642
  %4139 = vmatmul.mubr.f32.gmra.mxu0 %v1641
  %v4140 = vpop.f32.mrf.mxu0
  %v4141 = vadd.f32 %v3916, %v4140
  %v4142 = vpop.f32.mrf.mxu0
  %4143 = vmatprep.mubr.f32.mxu0 %v1647
  %4144 = vmatmul.mubr.f32.gmra.mxu0 %v1646
  %v4145 = vpop.f32.mrf.mxu0
  %v4146 = vadd.f32 %v3921, %v4145
  %v4147 = vpop.f32.mrf.mxu0
  %4148 = vmatprep.mubr.f32.mxu0 %v1652
  %4149 = vmatmul.mubr.f32.gmra.mxu0 %v1651
  %v4150 = vpop.f32.mrf.mxu0
  %v4151 = vadd.f32 %v3926, %v4150
  %v4152 = vpop.f32.mrf.mxu0
  %4153 = vmatprep.mubr.f32.mxu0 %v1657
  %4154 = vmatmul.mubr.f32.gmra.mxu0 %v1656
  %v4155 = vpop.f32.mrf.mxu0
  %v4156 = vadd.f32 %v3931, %v4155
  %v4157 = vpop.f32.mrf.mxu0
  %4158 = vmatprep.mubr.f32.mxu0 %v1662
  %4159 = vmatmul.mubr.f32.gmra.mxu0 %v1661
  %v4160 = vpop.f32.mrf.mxu0
  %v4161 = vadd.f32 %v3936, %v4160
  %v4162 = vpop.f32.mrf.mxu0
  %4163 = vmatprep.mubr.f32.mxu0 %v1667
  %4164 = vmatmul.mubr.f32.gmra.mxu0 %v1666
  %v4165 = vpop.f32.mrf.mxu0
  %v4166 = vadd.f32 %v3941, %v4165
  %v4167 = vpop.f32.mrf.mxu0
  %4168 = vmatprep.mubr.f32.mxu0 %v1672
  %4169 = vmatmul.mubr.f32.gmra.mxu0 %v1671
  %v4170 = vpop.f32.mrf.mxu0
  %v4171 = vadd.f32 %v3946, %v4170
  %v4172 = vpop.f32.mrf.mxu0
  %4173 = vmatprep.mubr.f32.mxu0 %v1677
  %4174 = vmatmul.mubr.f32.gmra.mxu0 %v1676
  %v4175 = vpop.f32.mrf.mxu0
  %v4176 = vadd.f32 %v3951, %v4175
  %v4177 = vpop.f32.mrf.mxu0
  %4178 = vmatprep.mubr.f32.mxu0 %v1682
  %4179 = vmatmul.mubr.f32.gmra.mxu0 %v1681
  %v4180 = vpop.f32.mrf.mxu0
  %v4181 = vadd.f32 %v3956, %v4180
  %v4182 = vpop.f32.mrf.mxu0
  %4183 = vmatprep.mubr.f32.mxu0 %v1687
  %4184 = vmatmul.mubr.f32.gmra.mxu0 %v1686
  %v4185 = vpop.f32.mrf.mxu0
  %v4186 = vadd.f32 %v3961, %v4185
  %v4187 = vpop.f32.mrf.mxu0
  %4188 = vmatprep.mubr.f32.mxu0 %v1692
  %4189 = vmatmul.mubr.f32.gmra.mxu0 %v1691
  %v4190 = vpop.f32.mrf.mxu0
  %v4191 = vadd.f32 %v3966, %v4190
  %v4192 = vpop.f32.mrf.mxu0
  %4193 = vmatprep.mubr.f32.mxu0 %v1697
  %4194 = vmatmul.mubr.f32.gmra.mxu0 %v1696
  %v4195 = vpop.f32.mrf.mxu0
  %v4196 = vadd.f32 %v3971, %v4195
  %v4197 = vpop.f32.mrf.mxu0
  %4198 = vmatprep.mubr.f32.mxu0 %v1702
  %4199 = vmatmul.mubr.f32.gmra.mxu0 %v1701
  %v4200 = vpop.f32.mrf.mxu0
  %v4201 = vadd.f32 %v3976, %v4200
  %v4202 = vpop.f32.mrf.mxu0
  %4203 = vmatprep.mubr.f32.mxu0 %v1707
  %4204 = vmatmul.mubr.f32.gmra.mxu0 %v1706
  %v4205 = vpop.f32.mrf.mxu0
  %v4206 = vadd.f32 %v3981, %v4205
  %v4207 = vpop.f32.mrf.mxu0
  %4208 = vmatprep.mubr.f32.mxu0 %v1712
  %4209 = vmatmul.mubr.f32.gmra.mxu0 %v1711
  %v4210 = vpop.f32.mrf.mxu0
  %v4211 = vadd.f32 %v3986, %v4210
  %v4212 = vpop.f32.mrf.mxu0
  %4213 = vmatprep.mubr.f32.mxu0 %v1717
  %4214 = vmatmul.mubr.f32.gmra.mxu0 %v1716
  %v4215 = vpop.f32.mrf.mxu0
  %v4216 = vadd.f32 %v3991, %v4215
  %v4217 = vpop.f32.mrf.mxu0
  %4218 = vmatprep.mubr.f32.mxu0 %v1722
  %4219 = vmatmul.mubr.f32.gmra.mxu0 %v1721
  %v4220 = vpop.f32.mrf.mxu0
  %v4221 = vadd.f32 %v3996, %v4220
  %v4222 = vpop.f32.mrf.mxu0
  %4223 = vmatprep.mubr.f32.mxu0 %v1727
  %4224 = vmatmul.mubr.f32.gmra.mxu0 %v1726
  %v4225 = vpop.f32.mrf.mxu0
  %v4226 = vadd.f32 %v4001, %v4225
  %v4227 = vpop.f32.mrf.mxu0
  %4228 = vmatprep.mubr.f32.mxu0 %v1732
  %4229 = vmatmul.mubr.f32.gmra.mxu0 %v1731
  %v4230 = vpop.f32.mrf.mxu0
  %v4231 = vadd.f32 %v4006, %v4230
  %v4232 = vpop.f32.mrf.mxu0
  %4233 = vmatprep.mubr.f32.mxu0 %v1737
  %4234 = vmatmul.mubr.f32.gmra.mxu0 %v1736
  %v4235 = vpop.f32.mrf.mxu0
  %v4236 = vadd.f32 %v4011, %v4235
  %v4237 = vpop.f32.mrf.mxu0
  %4238 = vmatprep.mubr.f32.mxu0 %v1742
  %4239 = vmatmul.mubr.f32.gmra.mxu0 %v1741
  %v4240 = vpop.f32.mrf.mxu0
  %v4241 = vadd.f32 %v4016, %v4240
  %v4242 = vpop.f32.mrf.mxu0
  %4243 = vmatprep.mubr.f32.mxu0 %v1747
  %4244 = vmatmul.mubr.f32.gmra.mxu0 %v1746
  %v4245 = vpop.f32.mrf.mxu0
  %v4246 = vadd.f32 %v4021, %v4245
  %v4247 = vpop.f32.mrf.mxu0
  %4248 = vmatprep.mubr.f32.mxu0 %v1752
  %4249 = vmatmul.mubr.f32.gmra.mxu0 %v1751
  %v4250 = vpop.f32.mrf.mxu0
  %v4251 = vadd.f32 %v4026, %v4250
  %v4252 = vpop.f32.mrf.mxu0
  %4253 = vmatprep.mubr.f32.mxu0 %v1757
  %4254 = vmatmul.mubr.f32.gmra.mxu0 %v1756
  %v4255 = vpop.f32.mrf.mxu0
  %v4256 = vadd.f32 %v4031, %v4255
  %v4257 = vpop.f32.mrf.mxu0
  %4258 = vmatprep.mubr.f32.mxu0 %v1762
  %4259 = vmatmul.mubr.f32.gmra.mxu0 %v1761
  %v4260 = vpop.f32.mrf.mxu0
  %v4261 = vadd.f32 %v4036, %v4260
  %v4262 = vpop.f32.mrf.mxu0
  %4263 = vmatprep.mubr.f32.mxu0 %v1767
  %4264 = vmatmul.mubr.f32.gmra.mxu0 %v1766
  %v4265 = vpop.f32.mrf.mxu0
  %v4266 = vadd.f32 %v4041, %v4265
  %v4267 = vpop.f32.mrf.mxu0
  %4268 = vmatprep.mubr.f32.mxu0 %v1772
  %4269 = vmatmul.mubr.f32.gmra.mxu0 %v1771
  %v4270 = vpop.f32.mrf.mxu0
  %v4271 = vadd.f32 %v4046, %v4270
  %v4272 = vpop.f32.mrf.mxu0
  %4273 = vmatprep.mubr.f32.mxu0 %v1777
  %4274 = vmatmul.mubr.f32.gmra.mxu0 %v1776
  %v4275 = vpop.f32.mrf.mxu0
  %v4276 = vadd.f32 %v4051, %v4275
  %v4277 = vpop.f32.mrf.mxu0
  %4278 = vmatprep.mubr.f32.mxu0 %v1782
  %4279 = vmatmul.mubr.f32.gmra.mxu0 %v1781
  %v4280 = vpop.f32.mrf.mxu0
  %v4281 = vadd.f32 %v4056, %v4280
  %v4282 = vpop.f32.mrf.mxu0
  %4283 = vdwg.mxu0
  %4284 = vmatprep.subr.mxu0 0.0
  %4285 = vmatpush1.msra.mxu0 0.0
  %4286 = vmatprep.subr.mxu0 0.0
  %4287 = vmatpush1.msra.mxu0 %v2290
  %4288 = vmatprep.subr.mxu0 0.0
  %4289 = vmatpush1.msra.mxu0 %v2173
  %4290 = vmatprep.subr.mxu0 0.0
  %4291 = vmatpush1.msra.mxu0 %v2168
  %4292 = vmatprep.subr.mxu0 0.0
  %4293 = vmatpush1.msra.mxu0 %v2163
  %4294 = vmatprep.subr.mxu0 0.0
  %4295 = vmatpush1.msra.mxu0 %v2158
  %4296 = vmatprep.subr.mxu0 0.0
  %4297 = vmatpush1.msra.mxu0 %v2153
  %4298 = vmatprep.subr.mxu0 0.0
  %4299 = vmatpush1.msra.mxu0 %v2148
  %4300 = vmatprep.subr.mxu0 0.0
  %4301 = vmatpush1.msra.mxu0 %v2143
  %4302 = vmatprep.subr.mxu0 0.0
  %4303 = vmatpush1.msra.mxu0 %v2138
  %4304 = vmatprep.subr.mxu0 0.0
  %4305 = vmatpush1.msra.mxu0 %v2133
  %4306 = vmatprep.subr.mxu0 0.0
  %4307 = vmatpush1.msra.mxu0 %v2128
  %4308 = vmatprep.subr.mxu0 0.0
  %4309 = vmatpush1.msra.mxu0 %v2123
  %4310 = vmatprep.subr.mxu0 0.0
  %4311 = vmatpush1.msra.mxu0 %v2118
  %4312 = vmatprep.subr.mxu0 0.0
  %4313 = vmatpush1.msra.mxu0 %v2113
  %4314 = vmatprep.subr.mxu0 0.0
  %4315 = vmatpush1.msra.mxu0 %v2108
  %4316 = vmatprep.subr.mxu0 0.0
  %4317 = vmatpush2.msra.mxu0 0.0
  %4318 = vmatprep.subr.mxu0 0.0
  %4319 = vmatpush2.msra.mxu0 0.0
  %4320 = vmatprep.subr.mxu0 0.0
  %4321 = vmatpush2.msra.mxu0 0.0
  %4322 = vmatprep.subr.mxu0 0.0
  %4323 = vmatpush2.msra.mxu0 0.0
  %4324 = vmatprep.subr.mxu0 0.0
  %4325 = vmatpush2.msra.mxu0 0.0
  %4326 = vmatprep.subr.mxu0 0.0
  %4327 = vmatpush2.msra.mxu0 0.0
  %4328 = vmatprep.subr.mxu0 0.0
  %4329 = vmatpush2.msra.mxu0 0.0
  %4330 = vmatprep.subr.mxu0 0.0
  %4331 = vmatpush2.msra.mxu0 0.0
  %4332 = vmatprep.subr.mxu0 0.0
  %4333 = vmatpush2.msra.mxu0 0.0
  %4334 = vmatprep.subr.mxu0 0.0
  %4335 = vmatpush2.msra.mxu0 0.0
  %4336 = vmatprep.subr.mxu0 0.0
  %4337 = vmatpush2.msra.mxu0 0.0
  %4338 = vmatprep.subr.mxu0 0.0
  %4339 = vmatpush2.msra.mxu0 0.0
  %4340 = vmatprep.subr.mxu0 0.0
  %4341 = vmatpush2.msra.mxu0 0.0
  %4342 = vmatprep.subr.mxu0 0.0
  %4343 = vmatpush2.msra.mxu0 0.0
  %4344 = vmatprep.subr.mxu0 0.0
  %4345 = vmatpush2.msra.mxu0 0.0
  %4346 = vmatprep.subr.mxu0 0.0
  %4347 = vmatpush2.msra.mxu0 0.0
  %4348 = vmatprep.mubr.f32.mxu0 0.0
  %4349 = vmatmul.mubr.f32.gmra.mxu0 %v2181
  %v4350 = vpop.f32.mrf.mxu0
  %v4351 = vadd.f32 %v4126, %v4350
  %v4352 = vpop.f32.mrf.mxu0
  %4353 = vmatprep.mubr.f32.mxu0 0.0
  %4354 = vmatmul.mubr.f32.gmra.mxu0 %v2184
  %v4355 = vpop.f32.mrf.mxu0
  %v4356 = vadd.f32 %v4131, %v4355
  %v4357 = vpop.f32.mrf.mxu0
  %4358 = vmatprep.mubr.f32.mxu0 0.0
  %4359 = vmatmul.mubr.f32.gmra.mxu0 %v2187
  %v4360 = vpop.f32.mrf.mxu0
  %v4361 = vadd.f32 %v4136, %v4360
  %v4362 = vpop.f32.mrf.mxu0
  %4363 = vmatprep.mubr.f32.mxu0 0.0
  %4364 = vmatmul.mubr.f32.gmra.mxu0 %v2190
  %v4365 = vpop.f32.mrf.mxu0
  %v4366 = vadd.f32 %v4141, %v4365
  %v4367 = vpop.f32.mrf.mxu0
  %4368 = vmatprep.mubr.f32.mxu0 0.0
  %4369 = vmatmul.mubr.f32.gmra.mxu0 %v2193
  %v4370 = vpop.f32.mrf.mxu0
  %v4371 = vadd.f32 %v4146, %v4370
  %v4372 = vpop.f32.mrf.mxu0
  %4373 = vmatprep.mubr.f32.mxu0 0.0
  %4374 = vmatmul.mubr.f32.gmra.mxu0 %v2196
  %v4375 = vpop.f32.mrf.mxu0
  %v4376 = vadd.f32 %v4151, %v4375
  %v4377 = vpop.f32.mrf.mxu0
  %4378 = vmatprep.mubr.f32.mxu0 0.0
  %4379 = vmatmul.mubr.f32.gmra.mxu0 %v2199
  %v4380 = vpop.f32.mrf.mxu0
  %v4381 = vadd.f32 %v4156, %v4380
  %v4382 = vpop.f32.mrf.mxu0
  %4383 = vmatprep.mubr.f32.mxu0 0.0
  %4384 = vmatmul.mubr.f32.gmra.mxu0 %v2202
  %v4385 = vpop.f32.mrf.mxu0
  %v4386 = vadd.f32 %v4161, %v4385
  %v4387 = vpop.f32.mrf.mxu0
  %4388 = vmatprep.mubr.f32.mxu0 0.0
  %4389 = vmatmul.mubr.f32.gmra.mxu0 %v2205
  %v4390 = vpop.f32.mrf.mxu0
  %v4391 = vadd.f32 %v4166, %v4390
  %v4392 = vpop.f32.mrf.mxu0
  %4393 = vmatprep.mubr.f32.mxu0 0.0
  %4394 = vmatmul.mubr.f32.gmra.mxu0 %v2208
  %v4395 = vpop.f32.mrf.mxu0
  %v4396 = vadd.f32 %v4171, %v4395
  %v4397 = vpop.f32.mrf.mxu0
  %4398 = vmatprep.mubr.f32.mxu0 0.0
  %4399 = vmatmul.mubr.f32.gmra.mxu0 %v2211
  %v4400 = vpop.f32.mrf.mxu0
  %v4401 = vadd.f32 %v4176, %v4400
  %v4402 = vpop.f32.mrf.mxu0
  %4403 = vmatprep.mubr.f32.mxu0 0.0
  %4404 = vmatmul.mubr.f32.gmra.mxu0 %v2214
  %v4405 = vpop.f32.mrf.mxu0
  %v4406 = vadd.f32 %v4181, %v4405
  %v4407 = vpop.f32.mrf.mxu0
  %4408 = vmatprep.mubr.f32.mxu0 0.0
  %4409 = vmatmul.mubr.f32.gmra.mxu0 %v2217
  %v4410 = vpop.f32.mrf.mxu0
  %v4411 = vadd.f32 %v4186, %v4410
  %v4412 = vpop.f32.mrf.mxu0
  %4413 = vmatprep.mubr.f32.mxu0 0.0
  %4414 = vmatmul.mubr.f32.gmra.mxu0 %v2220
  %v4415 = vpop.f32.mrf.mxu0
  %v4416 = vadd.f32 %v4191, %v4415
  %v4417 = vpop.f32.mrf.mxu0
  %4418 = vmatprep.mubr.f32.mxu0 0.0
  %4419 = vmatmul.mubr.f32.gmra.mxu0 %v2223
  %v4420 = vpop.f32.mrf.mxu0
  %v4421 = vadd.f32 %v4196, %v4420
  %v4422 = vpop.f32.mrf.mxu0
  %4423 = vmatprep.mubr.f32.mxu0 0.0
  %4424 = vmatmul.mubr.f32.gmra.mxu0 %v2226
  %v4425 = vpop.f32.mrf.mxu0
  %v4426 = vadd.f32 %v4201, %v4425
  %v4427 = vpop.f32.mrf.mxu0
  %4428 = vmatprep.mubr.f32.mxu0 0.0
  %4429 = vmatmul.mubr.f32.gmra.mxu0 %v2229
  %v4430 = vpop.f32.mrf.mxu0
  %v4431 = vadd.f32 %v4206, %v4430
  %v4432 = vpop.f32.mrf.mxu0
  %4433 = vmatprep.mubr.f32.mxu0 0.0
  %4434 = vmatmul.mubr.f32.gmra.mxu0 %v2232
  %v4435 = vpop.f32.mrf.mxu0
  %v4436 = vadd.f32 %v4211, %v4435
  %v4437 = vpop.f32.mrf.mxu0
  %4438 = vmatprep.mubr.f32.mxu0 0.0
  %4439 = vmatmul.mubr.f32.gmra.mxu0 %v2235
  %v4440 = vpop.f32.mrf.mxu0
  %v4441 = vadd.f32 %v4216, %v4440
  %v4442 = vpop.f32.mrf.mxu0
  %4443 = vmatprep.mubr.f32.mxu0 0.0
  %4444 = vmatmul.mubr.f32.gmra.mxu0 %v2238
  %v4445 = vpop.f32.mrf.mxu0
  %v4446 = vadd.f32 %v4221, %v4445
  %v4447 = vpop.f32.mrf.mxu0
  %4448 = vmatprep.mubr.f32.mxu0 0.0
  %4449 = vmatmul.mubr.f32.gmra.mxu0 %v2241
  %v4450 = vpop.f32.mrf.mxu0
  %v4451 = vadd.f32 %v4226, %v4450
  %v4452 = vpop.f32.mrf.mxu0
  %4453 = vmatprep.mubr.f32.mxu0 0.0
  %4454 = vmatmul.mubr.f32.gmra.mxu0 %v2244
  %v4455 = vpop.f32.mrf.mxu0
  %v4456 = vadd.f32 %v4231, %v4455
  %v4457 = vpop.f32.mrf.mxu0
  %4458 = vmatprep.mubr.f32.mxu0 0.0
  %4459 = vmatmul.mubr.f32.gmra.mxu0 %v2247
  %v4460 = vpop.f32.mrf.mxu0
  %v4461 = vadd.f32 %v4236, %v4460
  %v4462 = vpop.f32.mrf.mxu0
  %4463 = vmatprep.mubr.f32.mxu0 0.0
  %4464 = vmatmul.mubr.f32.gmra.mxu0 %v2250
  %v4465 = vpop.f32.mrf.mxu0
  %v4466 = vadd.f32 %v4241, %v4465
  %v4467 = vpop.f32.mrf.mxu0
  %4468 = vmatprep.mubr.f32.mxu0 0.0
  %4469 = vmatmul.mubr.f32.gmra.mxu0 %v2253
  %v4470 = vpop.f32.mrf.mxu0
  %v4471 = vadd.f32 %v4246, %v4470
  %v4472 = vpop.f32.mrf.mxu0
  %4473 = vmatprep.mubr.f32.mxu0 0.0
  %4474 = vmatmul.mubr.f32.gmra.mxu0 %v2256
  %v4475 = vpop.f32.mrf.mxu0
  %v4476 = vadd.f32 %v4251, %v4475
  %v4477 = vpop.f32.mrf.mxu0
  %4478 = vmatprep.mubr.f32.mxu0 0.0
  %4479 = vmatmul.mubr.f32.gmra.mxu0 %v2259
  %v4480 = vpop.f32.mrf.mxu0
  %v4481 = vadd.f32 %v4256, %v4480
  %v4482 = vpop.f32.mrf.mxu0
  %4483 = vmatprep.mubr.f32.mxu0 0.0
  %4484 = vmatmul.mubr.f32.gmra.mxu0 %v2262
  %v4485 = vpop.f32.mrf.mxu0
  %v4486 = vadd.f32 %v4261, %v4485
  %v4487 = vpop.f32.mrf.mxu0
  %4488 = vmatprep.mubr.f32.mxu0 0.0
  %4489 = vmatmul.mubr.f32.gmra.mxu0 %v2265
  %v4490 = vpop.f32.mrf.mxu0
  %v4491 = vadd.f32 %v4266, %v4490
  %v4492 = vpop.f32.mrf.mxu0
  %4493 = vmatprep.mubr.f32.mxu0 0.0
  %4494 = vmatmul.mubr.f32.gmra.mxu0 %v2268
  %v4495 = vpop.f32.mrf.mxu0
  %v4496 = vadd.f32 %v4271, %v4495
  %v4497 = vpop.f32.mrf.mxu0
  %4498 = vmatprep.mubr.f32.mxu0 0.0
  %4499 = vmatmul.mubr.f32.gmra.mxu0 %v2271
  %v4500 = vpop.f32.mrf.mxu0
  %v4501 = vadd.f32 %v4276, %v4500
  %v4502 = vpop.f32.mrf.mxu0
  %4503 = vmatprep.mubr.f32.mxu0 0.0
  %4504 = vmatmul.mubr.f32.gmra.mxu0 %v2274
  %v4505 = vpop.f32.mrf.mxu0
  %v4506 = vadd.f32 %v4281, %v4505
  %v4507 = vpop.f32.mrf.mxu0
  %4508 = vdwg.mxu0
  %4541 = vrot.lane.b32.xlu0 %v2873, 96
  %v4542 = vpop.permute.xlu0 %4541
  %4543 = vrot.lane.b32.xlu0 %v2879, 96
  %v4544 = vpop.permute.xlu0 %4543
  %4545 = vrot.lane.b32.xlu0 %v2885, 96
  %v4546 = vpop.permute.xlu0 %4545
  %4547 = vrot.lane.b32.xlu0 %v2891, 96
  %v4548 = vpop.permute.xlu0 %4547
  %4549 = vrot.lane.b32.xlu0 %v2897, 96
  %v4550 = vpop.permute.xlu0 %4549
  %4551 = vrot.lane.b32.xlu0 %v2903, 96
  %v4552 = vpop.permute.xlu0 %4551
  %4553 = vrot.lane.b32.xlu0 %v2909, 96
  %v4554 = vpop.permute.xlu0 %4553
  %4555 = vrot.lane.b32.xlu0 %v2915, 96
  %v4556 = vpop.permute.xlu0 %4555
  %4557 = vrot.lane.b32.xlu0 %v2921, 96
  %v4558 = vpop.permute.xlu0 %4557
  %4559 = vrot.lane.b32.xlu0 %v2927, 96
  %v4560 = vpop.permute.xlu0 %4559
  %4561 = vrot.lane.b32.xlu0 %v2933, 96
  %v4562 = vpop.permute.xlu0 %4561
  %4563 = vrot.lane.b32.xlu0 %v2939, 96
  %v4564 = vpop.permute.xlu0 %4563
  %4565 = vrot.lane.b32.xlu0 %v2945, 96
  %v4566 = vpop.permute.xlu0 %4565
  %4567 = vrot.lane.b32.xlu0 %v2951, 96
  %v4568 = vpop.permute.xlu0 %4567
  %4569 = vrot.lane.b32.xlu0 %v2957, 96
  %v4570 = vpop.permute.xlu0 %4569
  %4571 = vrot.lane.b32.xlu0 %v2963, 96
  %v4572 = vpop.permute.xlu0 %4571
  %4573 = vrot.lane.b32.xlu0 %v2969, 96
  %v4574 = vpop.permute.xlu0 %4573
  %4575 = vrot.lane.b32.xlu0 %v2975, 96
  %v4576 = vpop.permute.xlu0 %4575
  %4577 = vrot.lane.b32.xlu0 %v2981, 96
  %v4578 = vpop.permute.xlu0 %4577
  %4579 = vrot.lane.b32.xlu0 %v2987, 96
  %v4580 = vpop.permute.xlu0 %4579
  %4581 = vrot.lane.b32.xlu0 %v2993, 96
  %v4582 = vpop.permute.xlu0 %4581
  %4583 = vrot.lane.b32.xlu0 %v2999, 96
  %v4584 = vpop.permute.xlu0 %4583
  %4585 = vrot.lane.b32.xlu0 %v3005, 96
  %v4586 = vpop.permute.xlu0 %4585
  %4587 = vrot.lane.b32.xlu0 %v3011, 96
  %v4588 = vpop.permute.xlu0 %4587
  %4589 = vrot.lane.b32.xlu0 %v3017, 96
  %v4590 = vpop.permute.xlu0 %4589
  %4591 = vrot.lane.b32.xlu0 %v3023, 96
  %v4592 = vpop.permute.xlu0 %4591
  %4593 = vrot.lane.b32.xlu0 %v3029, 96
  %v4594 = vpop.permute.xlu0 %4593
  %4595 = vrot.lane.b32.xlu0 %v3035, 96
  %v4596 = vpop.permute.xlu0 %4595
  %4597 = vrot.lane.b32.xlu0 %v3041, 96
  %v4598 = vpop.permute.xlu0 %4597
  %4599 = vrot.lane.b32.xlu0 %v3047, 96
  %v4600 = vpop.permute.xlu0 %4599
  %4601 = vrot.lane.b32.xlu0 %v3053, 96
  %v4602 = vpop.permute.xlu0 %4601
  %4603 = vrot.lane.b32.xlu0 %v3059, 96
  %v4604 = vpop.permute.xlu0 %4603
  %v4637 = vmax.f32 %v2873, %v4542
  %v4638 = vmax.f32 %v2879, %v4544
  %v4639 = vmax.f32 %v2885, %v4546
  %v4640 = vmax.f32 %v2891, %v4548
  %v4641 = vmax.f32 %v2897, %v4550
  %v4642 = vmax.f32 %v2903, %v4552
  %v4643 = vmax.f32 %v2909, %v4554
  %v4644 = vmax.f32 %v2915, %v4556
  %v4645 = vmax.f32 %v2921, %v4558
  %v4646 = vmax.f32 %v2927, %v4560
  %v4647 = vmax.f32 %v2933, %v4562
  %v4648 = vmax.f32 %v2939, %v4564
  %v4649 = vmax.f32 %v2945, %v4566
  %v4650 = vmax.f32 %v2951, %v4568
  %v4651 = vmax.f32 %v2957, %v4570
  %v4652 = vmax.f32 %v2963, %v4572
  %v4653 = vmax.f32 %v2969, %v4574
  %v4654 = vmax.f32 %v2975, %v4576
  %v4655 = vmax.f32 %v2981, %v4578
  %v4656 = vmax.f32 %v2987, %v4580
  %v4657 = vmax.f32 %v2993, %v4582
  %v4658 = vmax.f32 %v2999, %v4584
  %v4659 = vmax.f32 %v3005, %v4586
  %v4660 = vmax.f32 %v3011, %v4588
  %v4661 = vmax.f32 %v3017, %v4590
  %v4662 = vmax.f32 %v3023, %v4592
  %v4663 = vmax.f32 %v3029, %v4594
  %v4664 = vmax.f32 %v3035, %v4596
  %v4665 = vmax.f32 %v3041, %v4598
  %v4666 = vmax.f32 %v3047, %v4600
  %v4667 = vmax.f32 %v3053, %v4602
  %v4668 = vmax.f32 %v3059, %v4604
  %4669 = vrot.lane.b32.xlu0 %v2873, 64
  %v4670 = vpop.permute.xlu0 %4669
  %4671 = vrot.lane.b32.xlu0 %v2879, 64
  %v4672 = vpop.permute.xlu0 %4671
  %4673 = vrot.lane.b32.xlu0 %v2885, 64
  %v4674 = vpop.permute.xlu0 %4673
  %4675 = vrot.lane.b32.xlu0 %v2891, 64
  %v4676 = vpop.permute.xlu0 %4675
  %4677 = vrot.lane.b32.xlu0 %v2897, 64
  %v4678 = vpop.permute.xlu0 %4677
  %4679 = vrot.lane.b32.xlu0 %v2903, 64
  %v4680 = vpop.permute.xlu0 %4679
  %4681 = vrot.lane.b32.xlu0 %v2909, 64
  %v4682 = vpop.permute.xlu0 %4681
  %4683 = vrot.lane.b32.xlu0 %v2915, 64
  %v4684 = vpop.permute.xlu0 %4683
  %4685 = vrot.lane.b32.xlu0 %v2921, 64
  %v4686 = vpop.permute.xlu0 %4685
  %4687 = vrot.lane.b32.xlu0 %v2927, 64
  %v4688 = vpop.permute.xlu0 %4687
  %4689 = vrot.lane.b32.xlu0 %v2933, 64
  %v4690 = vpop.permute.xlu0 %4689
  %4691 = vrot.lane.b32.xlu0 %v2939, 64
  %v4692 = vpop.permute.xlu0 %4691
  %4693 = vrot.lane.b32.xlu0 %v2945, 64
  %v4694 = vpop.permute.xlu0 %4693
  %4695 = vrot.lane.b32.xlu0 %v2951, 64
  %v4696 = vpop.permute.xlu0 %4695
  %4697 = vrot.lane.b32.xlu0 %v2957, 64
  %v4698 = vpop.permute.xlu0 %4697
  %4699 = vrot.lane.b32.xlu0 %v2963, 64
  %v4700 = vpop.permute.xlu0 %4699
  %4701 = vrot.lane.b32.xlu0 %v2969, 64
  %v4702 = vpop.permute.xlu0 %4701
  %4703 = vrot.lane.b32.xlu0 %v2975, 64
  %v4704 = vpop.permute.xlu0 %4703
  %4705 = vrot.lane.b32.xlu0 %v2981, 64
  %v4706 = vpop.permute.xlu0 %4705
  %4707 = vrot.lane.b32.xlu0 %v2987, 64
  %v4708 = vpop.permute.xlu0 %4707
  %4709 = vrot.lane.b32.xlu0 %v2993, 64
  %v4710 = vpop.permute.xlu0 %4709
  %4711 = vrot.lane.b32.xlu0 %v2999, 64
  %v4712 = vpop.permute.xlu0 %4711
  %4713 = vrot.lane.b32.xlu0 %v3005, 64
  %v4714 = vpop.permute.xlu0 %4713
  %4715 = vrot.lane.b32.xlu0 %v3011, 64
  %v4716 = vpop.permute.xlu0 %4715
  %4717 = vrot.lane.b32.xlu0 %v3017, 64
  %v4718 = vpop.permute.xlu0 %4717
  %4719 = vrot.lane.b32.xlu0 %v3023, 64
  %v4720 = vpop.permute.xlu0 %4719
  %4721 = vrot.lane.b32.xlu0 %v3029, 64
  %v4722 = vpop.permute.xlu0 %4721
  %4723 = vrot.lane.b32.xlu0 %v3035, 64
  %v4724 = vpop.permute.xlu0 %4723
  %4725 = vrot.lane.b32.xlu0 %v3041, 64
  %v4726 = vpop.permute.xlu0 %4725
  %4727 = vrot.lane.b32.xlu0 %v3047, 64
  %v4728 = vpop.permute.xlu0 %4727
  %4729 = vrot.lane.b32.xlu0 %v3053, 64
  %v4730 = vpop.permute.xlu0 %4729
  %4731 = vrot.lane.b32.xlu0 %v3059, 64
  %v4732 = vpop.permute.xlu0 %4731
  %v4765 = vmax.f32 %v4637, %v4670
  %v4766 = vmax.f32 %v4638, %v4672
  %v4767 = vmax.f32 %v4639, %v4674
  %v4768 = vmax.f32 %v4640, %v4676
  %v4769 = vmax.f32 %v4641, %v4678
  %v4770 = vmax.f32 %v4642, %v4680
  %v4771 = vmax.f32 %v4643, %v4682
  %v4772 = vmax.f32 %v4644, %v4684
  %v4773 = vmax.f32 %v4645, %v4686
  %v4774 = vmax.f32 %v4646, %v4688
  %v4775 = vmax.f32 %v4647, %v4690
  %v4776 = vmax.f32 %v4648, %v4692
  %v4777 = vmax.f32 %v4649, %v4694
  %v4778 = vmax.f32 %v4650, %v4696
  %v4779 = vmax.f32 %v4651, %v4698
  %v4780 = vmax.f32 %v4652, %v4700
  %v4781 = vmax.f32 %v4653, %v4702
  %v4782 = vmax.f32 %v4654, %v4704
  %v4783 = vmax.f32 %v4655, %v4706
  %v4784 = vmax.f32 %v4656, %v4708
  %v4785 = vmax.f32 %v4657, %v4710
  %v4786 = vmax.f32 %v4658, %v4712
  %v4787 = vmax.f32 %v4659, %v4714
  %v4788 = vmax.f32 %v4660, %v4716
  %v4789 = vmax.f32 %v4661, %v4718
  %v4790 = vmax.f32 %v4662, %v4720
  %v4791 = vmax.f32 %v4663, %v4722
  %v4792 = vmax.f32 %v4664, %v4724
  %v4793 = vmax.f32 %v4665, %v4726
  %v4794 = vmax.f32 %v4666, %v4728
  %v4795 = vmax.f32 %v4667, %v4730
  %v4796 = vmax.f32 %v4668, %v4732
  %4797 = vrot.lane.b32.xlu0 %v2873, 32
  %v4798 = vpop.permute.xlu0 %4797
  %4799 = vrot.lane.b32.xlu0 %v2879, 32
  %v4800 = vpop.permute.xlu0 %4799
  %4801 = vrot.lane.b32.xlu0 %v2885, 32
  %v4802 = vpop.permute.xlu0 %4801
  %4803 = vrot.lane.b32.xlu0 %v2891, 32
  %v4804 = vpop.permute.xlu0 %4803
  %4805 = vrot.lane.b32.xlu0 %v2897, 32
  %v4806 = vpop.permute.xlu0 %4805
  %4807 = vrot.lane.b32.xlu0 %v2903, 32
  %v4808 = vpop.permute.xlu0 %4807
  %4809 = vrot.lane.b32.xlu0 %v2909, 32
  %v4810 = vpop.permute.xlu0 %4809
  %4811 = vrot.lane.b32.xlu0 %v2915, 32
  %v4812 = vpop.permute.xlu0 %4811
  %4813 = vrot.lane.b32.xlu0 %v2921, 32
  %v4814 = vpop.permute.xlu0 %4813
  %4815 = vrot.lane.b32.xlu0 %v2927, 32
  %v4816 = vpop.permute.xlu0 %4815
  %4817 = vrot.lane.b32.xlu0 %v2933, 32
  %v4818 = vpop.permute.xlu0 %4817
  %4819 = vrot.lane.b32.xlu0 %v2939, 32
  %v4820 = vpop.permute.xlu0 %4819
  %4821 = vrot.lane.b32.xlu0 %v2945, 32
  %v4822 = vpop.permute.xlu0 %4821
  %4823 = vrot.lane.b32.xlu0 %v2951, 32
  %v4824 = vpop.permute.xlu0 %4823
  %4825 = vrot.lane.b32.xlu0 %v2957, 32
  %v4826 = vpop.permute.xlu0 %4825
  %4827 = vrot.lane.b32.xlu0 %v2963, 32
  %v4828 = vpop.permute.xlu0 %4827
  %4829 = vrot.lane.b32.xlu0 %v2969, 32
  %v4830 = vpop.permute.xlu0 %4829
  %4831 = vrot.lane.b32.xlu0 %v2975, 32
  %v4832 = vpop.permute.xlu0 %4831
  %4833 = vrot.lane.b32.xlu0 %v2981, 32
  %v4834 = vpop.permute.xlu0 %4833
  %4835 = vrot.lane.b32.xlu0 %v2987, 32
  %v4836 = vpop.permute.xlu0 %4835
  %4837 = vrot.lane.b32.xlu0 %v2993, 32
  %v4838 = vpop.permute.xlu0 %4837
  %4839 = vrot.lane.b32.xlu0 %v2999, 32
  %v4840 = vpop.permute.xlu0 %4839
  %4841 = vrot.lane.b32.xlu0 %v3005, 32
  %v4842 = vpop.permute.xlu0 %4841
  %4843 = vrot.lane.b32.xlu0 %v3011, 32
  %v4844 = vpop.permute.xlu0 %4843
  %4845 = vrot.lane.b32.xlu0 %v3017, 32
  %v4846 = vpop.permute.xlu0 %4845
  %4847 = vrot.lane.b32.xlu0 %v3023, 32
  %v4848 = vpop.permute.xlu0 %4847
  %4849 = vrot.lane.b32.xlu0 %v3029, 32
  %v4850 = vpop.permute.xlu0 %4849
  %4851 = vrot.lane.b32.xlu0 %v3035, 32
  %v4852 = vpop.permute.xlu0 %4851
  %4853 = vrot.lane.b32.xlu0 %v3041, 32
  %v4854 = vpop.permute.xlu0 %4853
  %4855 = vrot.lane.b32.xlu0 %v3047, 32
  %v4856 = vpop.permute.xlu0 %4855
  %4857 = vrot.lane.b32.xlu0 %v3053, 32
  %v4858 = vpop.permute.xlu0 %4857
  %4859 = vrot.lane.b32.xlu0 %v3059, 32
  %v4860 = vpop.permute.xlu0 %4859
  %v4893 = vmax.f32 %v4765, %v4798
  %v4894 = vmax.f32 %v4766, %v4800
  %v4895 = vmax.f32 %v4767, %v4802
  %v4896 = vmax.f32 %v4768, %v4804
  %v4897 = vmax.f32 %v4769, %v4806
  %v4898 = vmax.f32 %v4770, %v4808
  %v4899 = vmax.f32 %v4771, %v4810
  %v4900 = vmax.f32 %v4772, %v4812
  %v4901 = vmax.f32 %v4773, %v4814
  %v4902 = vmax.f32 %v4774, %v4816
  %v4903 = vmax.f32 %v4775, %v4818
  %v4904 = vmax.f32 %v4776, %v4820
  %v4905 = vmax.f32 %v4777, %v4822
  %v4906 = vmax.f32 %v4778, %v4824
  %v4907 = vmax.f32 %v4779, %v4826
  %v4908 = vmax.f32 %v4780, %v4828
  %v4909 = vmax.f32 %v4781, %v4830
  %v4910 = vmax.f32 %v4782, %v4832
  %v4911 = vmax.f32 %v4783, %v4834
  %v4912 = vmax.f32 %v4784, %v4836
  %v4913 = vmax.f32 %v4785, %v4838
  %v4914 = vmax.f32 %v4786, %v4840
  %v4915 = vmax.f32 %v4787, %v4842
  %v4916 = vmax.f32 %v4788, %v4844
  %v4917 = vmax.f32 %v4789, %v4846
  %v4918 = vmax.f32 %v4790, %v4848
  %v4919 = vmax.f32 %v4791, %v4850
  %v4920 = vmax.f32 %v4792, %v4852
  %v4921 = vmax.f32 %v4793, %v4854
  %v4922 = vmax.f32 %v4794, %v4856
  %v4923 = vmax.f32 %v4795, %v4858
  %v4924 = vmax.f32 %v4796, %v4860
  %v4925 = vmax.f32 %v4893, %v2875
  %v4926 = vmax.f32 %v4894, %v2881
  %v4927 = vmax.f32 %v4895, %v2887
  %v4928 = vmax.f32 %v4896, %v2893
  %v4929 = vmax.f32 %v4897, %v2899
  %v4930 = vmax.f32 %v4898, %v2905
  %v4931 = vmax.f32 %v4899, %v2911
  %v4932 = vmax.f32 %v4900, %v2917
  %v4933 = vmax.f32 %v4901, %v2923
  %v4934 = vmax.f32 %v4902, %v2929
  %v4935 = vmax.f32 %v4903, %v2935
  %v4936 = vmax.f32 %v4904, %v2941
  %v4937 = vmax.f32 %v4905, %v2947
  %v4938 = vmax.f32 %v4906, %v2953
  %v4939 = vmax.f32 %v4907, %v2959
  %v4940 = vmax.f32 %v4908, %v2965
  %v4941 = vmax.f32 %v4909, %v2971
  %v4942 = vmax.f32 %v4910, %v2977
  %v4943 = vmax.f32 %v4911, %v2983
  %v4944 = vmax.f32 %v4912, %v2989
  %v4945 = vmax.f32 %v4913, %v2995
  %v4946 = vmax.f32 %v4914, %v3001
  %v4947 = vmax.f32 %v4915, %v3007
  %v4948 = vmax.f32 %v4916, %v3013
  %v4949 = vmax.f32 %v4917, %v3019
  %v4950 = vmax.f32 %v4918, %v3025
  %v4951 = vmax.f32 %v4919, %v3031
  %v4952 = vmax.f32 %v4920, %v3037
  %v4953 = vmax.f32 %v4921, %v3043
  %v4954 = vmax.f32 %v4922, %v3049
  %v4955 = vmax.f32 %v4923, %v3055
  %v4956 = vmax.f32 %v4924, %v3061
  %4989 = vrot.lane.b32.xlu0 %v2875, 96
  %v4990 = vpop.permute.xlu0 %4989
  %4991 = vrot.lane.b32.xlu0 %v2881, 96
  %v4992 = vpop.permute.xlu0 %4991
  %4993 = vrot.lane.b32.xlu0 %v2887, 96
  %v4994 = vpop.permute.xlu0 %4993
  %4995 = vrot.lane.b32.xlu0 %v2893, 96
  %v4996 = vpop.permute.xlu0 %4995
  %4997 = vrot.lane.b32.xlu0 %v2899, 96
  %v4998 = vpop.permute.xlu0 %4997
  %4999 = vrot.lane.b32.xlu0 %v2905, 96
  %v5000 = vpop.permute.xlu0 %4999
  %5001 = vrot.lane.b32.xlu0 %v2911, 96
  %v5002 = vpop.permute.xlu0 %5001
  %5003 = vrot.lane.b32.xlu0 %v2917, 96
  %v5004 = vpop.permute.xlu0 %5003
  %5005 = vrot.lane.b32.xlu0 %v2923, 96
  %v5006 = vpop.permute.xlu0 %5005
  %5007 = vrot.lane.b32.xlu0 %v2929, 96
  %v5008 = vpop.permute.xlu0 %5007
  %5009 = vrot.lane.b32.xlu0 %v2935, 96
  %v5010 = vpop.permute.xlu0 %5009
  %5011 = vrot.lane.b32.xlu0 %v2941, 96
  %v5012 = vpop.permute.xlu0 %5011
  %5013 = vrot.lane.b32.xlu0 %v2947, 96
  %v5014 = vpop.permute.xlu0 %5013
  %5015 = vrot.lane.b32.xlu0 %v2953, 96
  %v5016 = vpop.permute.xlu0 %5015
  %5017 = vrot.lane.b32.xlu0 %v2959, 96
  %v5018 = vpop.permute.xlu0 %5017
  %5019 = vrot.lane.b32.xlu0 %v2965, 96
  %v5020 = vpop.permute.xlu0 %5019
  %5021 = vrot.lane.b32.xlu0 %v2971, 96
  %v5022 = vpop.permute.xlu0 %5021
  %5023 = vrot.lane.b32.xlu0 %v2977, 96
  %v5024 = vpop.permute.xlu0 %5023
  %5025 = vrot.lane.b32.xlu0 %v2983, 96
  %v5026 = vpop.permute.xlu0 %5025
  %5027 = vrot.lane.b32.xlu0 %v2989, 96
  %v5028 = vpop.permute.xlu0 %5027
  %5029 = vrot.lane.b32.xlu0 %v2995, 96
  %v5030 = vpop.permute.xlu0 %5029
  %5031 = vrot.lane.b32.xlu0 %v3001, 96
  %v5032 = vpop.permute.xlu0 %5031
  %5033 = vrot.lane.b32.xlu0 %v3007, 96
  %v5034 = vpop.permute.xlu0 %5033
  %5035 = vrot.lane.b32.xlu0 %v3013, 96
  %v5036 = vpop.permute.xlu0 %5035
  %5037 = vrot.lane.b32.xlu0 %v3019, 96
  %v5038 = vpop.permute.xlu0 %5037
  %5039 = vrot.lane.b32.xlu0 %v3025, 96
  %v5040 = vpop.permute.xlu0 %5039
  %5041 = vrot.lane.b32.xlu0 %v3031, 96
  %v5042 = vpop.permute.xlu0 %5041
  %5043 = vrot.lane.b32.xlu0 %v3037, 96
  %v5044 = vpop.permute.xlu0 %5043
  %5045 = vrot.lane.b32.xlu0 %v3043, 96
  %v5046 = vpop.permute.xlu0 %5045
  %5047 = vrot.lane.b32.xlu0 %v3049, 96
  %v5048 = vpop.permute.xlu0 %5047
  %5049 = vrot.lane.b32.xlu0 %v3055, 96
  %v5050 = vpop.permute.xlu0 %5049
  %5051 = vrot.lane.b32.xlu0 %v3061, 96
  %v5052 = vpop.permute.xlu0 %5051
  %v5085 = vmax.f32 %v4925, %v4990
  %v5086 = vmax.f32 %v4926, %v4992
  %v5087 = vmax.f32 %v4927, %v4994
  %v5088 = vmax.f32 %v4928, %v4996
  %v5089 = vmax.f32 %v4929, %v4998
  %v5090 = vmax.f32 %v4930, %v5000
  %v5091 = vmax.f32 %v4931, %v5002
  %v5092 = vmax.f32 %v4932, %v5004
  %v5093 = vmax.f32 %v4933, %v5006
  %v5094 = vmax.f32 %v4934, %v5008
  %v5095 = vmax.f32 %v4935, %v5010
  %v5096 = vmax.f32 %v4936, %v5012
  %v5097 = vmax.f32 %v4937, %v5014
  %v5098 = vmax.f32 %v4938, %v5016
  %v5099 = vmax.f32 %v4939, %v5018
  %v5100 = vmax.f32 %v4940, %v5020
  %v5101 = vmax.f32 %v4941, %v5022
  %v5102 = vmax.f32 %v4942, %v5024
  %v5103 = vmax.f32 %v4943, %v5026
  %v5104 = vmax.f32 %v4944, %v5028
  %v5105 = vmax.f32 %v4945, %v5030
  %v5106 = vmax.f32 %v4946, %v5032
  %v5107 = vmax.f32 %v4947, %v5034
  %v5108 = vmax.f32 %v4948, %v5036
  %v5109 = vmax.f32 %v4949, %v5038
  %v5110 = vmax.f32 %v4950, %v5040
  %v5111 = vmax.f32 %v4951, %v5042
  %v5112 = vmax.f32 %v4952, %v5044
  %v5113 = vmax.f32 %v4953, %v5046
  %v5114 = vmax.f32 %v4954, %v5048
  %v5115 = vmax.f32 %v4955, %v5050
  %v5116 = vmax.f32 %v4956, %v5052
  %5117 = vrot.lane.b32.xlu0 %v2875, 64
  %v5118 = vpop.permute.xlu0 %5117
  %5119 = vrot.lane.b32.xlu0 %v2881, 64
  %v5120 = vpop.permute.xlu0 %5119
  %5121 = vrot.lane.b32.xlu0 %v2887, 64
  %v5122 = vpop.permute.xlu0 %5121
  %5123 = vrot.lane.b32.xlu0 %v2893, 64
  %v5124 = vpop.permute.xlu0 %5123
  %5125 = vrot.lane.b32.xlu0 %v2899, 64
  %v5126 = vpop.permute.xlu0 %5125
  %5127 = vrot.lane.b32.xlu0 %v2905, 64
  %v5128 = vpop.permute.xlu0 %5127
  %5129 = vrot.lane.b32.xlu0 %v2911, 64
  %v5130 = vpop.permute.xlu0 %5129
  %5131 = vrot.lane.b32.xlu0 %v2917, 64
  %v5132 = vpop.permute.xlu0 %5131
  %5133 = vrot.lane.b32.xlu0 %v2923, 64
  %v5134 = vpop.permute.xlu0 %5133
  %5135 = vrot.lane.b32.xlu0 %v2929, 64
  %v5136 = vpop.permute.xlu0 %5135
  %5137 = vrot.lane.b32.xlu0 %v2935, 64
  %v5138 = vpop.permute.xlu0 %5137
  %5139 = vrot.lane.b32.xlu0 %v2941, 64
  %v5140 = vpop.permute.xlu0 %5139
  %5141 = vrot.lane.b32.xlu0 %v2947, 64
  %v5142 = vpop.permute.xlu0 %5141
  %5143 = vrot.lane.b32.xlu0 %v2953, 64
  %v5144 = vpop.permute.xlu0 %5143
  %5145 = vrot.lane.b32.xlu0 %v2959, 64
  %v5146 = vpop.permute.xlu0 %5145
  %5147 = vrot.lane.b32.xlu0 %v2965, 64
  %v5148 = vpop.permute.xlu0 %5147
  %5149 = vrot.lane.b32.xlu0 %v2971, 64
  %v5150 = vpop.permute.xlu0 %5149
  %5151 = vrot.lane.b32.xlu0 %v2977, 64
  %v5152 = vpop.permute.xlu0 %5151
  %5153 = vrot.lane.b32.xlu0 %v2983, 64
  %v5154 = vpop.permute.xlu0 %5153
  %5155 = vrot.lane.b32.xlu0 %v2989, 64
  %v5156 = vpop.permute.xlu0 %5155
  %5157 = vrot.lane.b32.xlu0 %v2995, 64
  %v5158 = vpop.permute.xlu0 %5157
  %5159 = vrot.lane.b32.xlu0 %v3001, 64
  %v5160 = vpop.permute.xlu0 %5159
  %5161 = vrot.lane.b32.xlu0 %v3007, 64
  %v5162 = vpop.permute.xlu0 %5161
  %5163 = vrot.lane.b32.xlu0 %v3013, 64
  %v5164 = vpop.permute.xlu0 %5163
  %5165 = vrot.lane.b32.xlu0 %v3019, 64
  %v5166 = vpop.permute.xlu0 %5165
  %5167 = vrot.lane.b32.xlu0 %v3025, 64
  %v5168 = vpop.permute.xlu0 %5167
  %5169 = vrot.lane.b32.xlu0 %v3031, 64
  %v5170 = vpop.permute.xlu0 %5169
  %5171 = vrot.lane.b32.xlu0 %v3037, 64
  %v5172 = vpop.permute.xlu0 %5171
  %5173 = vrot.lane.b32.xlu0 %v3043, 64
  %v5174 = vpop.permute.xlu0 %5173
  %5175 = vrot.lane.b32.xlu0 %v3049, 64
  %v5176 = vpop.permute.xlu0 %5175
  %5177 = vrot.lane.b32.xlu0 %v3055, 64
  %v5178 = vpop.permute.xlu0 %5177
  %5179 = vrot.lane.b32.xlu0 %v3061, 64
  %v5180 = vpop.permute.xlu0 %5179
  %v5213 = vmax.f32 %v5085, %v5118
  %v5214 = vmax.f32 %v5086, %v5120
  %v5215 = vmax.f32 %v5087, %v5122
  %v5216 = vmax.f32 %v5088, %v5124
  %v5217 = vmax.f32 %v5089, %v5126
  %v5218 = vmax.f32 %v5090, %v5128
  %v5219 = vmax.f32 %v5091, %v5130
  %v5220 = vmax.f32 %v5092, %v5132
  %v5221 = vmax.f32 %v5093, %v5134
  %v5222 = vmax.f32 %v5094, %v5136
  %v5223 = vmax.f32 %v5095, %v5138
  %v5224 = vmax.f32 %v5096, %v5140
  %v5225 = vmax.f32 %v5097, %v5142
  %v5226 = vmax.f32 %v5098, %v5144
  %v5227 = vmax.f32 %v5099, %v5146
  %v5228 = vmax.f32 %v5100, %v5148
  %v5229 = vmax.f32 %v5101, %v5150
  %v5230 = vmax.f32 %v5102, %v5152
  %v5231 = vmax.f32 %v5103, %v5154
  %v5232 = vmax.f32 %v5104, %v5156
  %v5233 = vmax.f32 %v5105, %v5158
  %v5234 = vmax.f32 %v5106, %v5160
  %v5235 = vmax.f32 %v5107, %v5162
  %v5236 = vmax.f32 %v5108, %v5164
  %v5237 = vmax.f32 %v5109, %v5166
  %v5238 = vmax.f32 %v5110, %v5168
  %v5239 = vmax.f32 %v5111, %v5170
  %v5240 = vmax.f32 %v5112, %v5172
  %v5241 = vmax.f32 %v5113, %v5174
  %v5242 = vmax.f32 %v5114, %v5176
  %v5243 = vmax.f32 %v5115, %v5178
  %v5244 = vmax.f32 %v5116, %v5180
  %5245 = vrot.lane.b32.xlu0 %v2875, 32
  %v5246 = vpop.permute.xlu0 %5245
  %5247 = vrot.lane.b32.xlu0 %v2881, 32
  %v5248 = vpop.permute.xlu0 %5247
  %5249 = vrot.lane.b32.xlu0 %v2887, 32
  %v5250 = vpop.permute.xlu0 %5249
  %5251 = vrot.lane.b32.xlu0 %v2893, 32
  %v5252 = vpop.permute.xlu0 %5251
  %5253 = vrot.lane.b32.xlu0 %v2899, 32
  %v5254 = vpop.permute.xlu0 %5253
  %5255 = vrot.lane.b32.xlu0 %v2905, 32
  %v5256 = vpop.permute.xlu0 %5255
  %5257 = vrot.lane.b32.xlu0 %v2911, 32
  %v5258 = vpop.permute.xlu0 %5257
  %5259 = vrot.lane.b32.xlu0 %v2917, 32
  %v5260 = vpop.permute.xlu0 %5259
  %5261 = vrot.lane.b32.xlu0 %v2923, 32
  %v5262 = vpop.permute.xlu0 %5261
  %5263 = vrot.lane.b32.xlu0 %v2929, 32
  %v5264 = vpop.permute.xlu0 %5263
  %5265 = vrot.lane.b32.xlu0 %v2935, 32
  %v5266 = vpop.permute.xlu0 %5265
  %5267 = vrot.lane.b32.xlu0 %v2941, 32
  %v5268 = vpop.permute.xlu0 %5267
  %5269 = vrot.lane.b32.xlu0 %v2947, 32
  %v5270 = vpop.permute.xlu0 %5269
  %5271 = vrot.lane.b32.xlu0 %v2953, 32
  %v5272 = vpop.permute.xlu0 %5271
  %5273 = vrot.lane.b32.xlu0 %v2959, 32
  %v5274 = vpop.permute.xlu0 %5273
  %5275 = vrot.lane.b32.xlu0 %v2965, 32
  %v5276 = vpop.permute.xlu0 %5275
  %5277 = vrot.lane.b32.xlu0 %v2971, 32
  %v5278 = vpop.permute.xlu0 %5277
  %5279 = vrot.lane.b32.xlu0 %v2977, 32
  %v5280 = vpop.permute.xlu0 %5279
  %5281 = vrot.lane.b32.xlu0 %v2983, 32
  %v5282 = vpop.permute.xlu0 %5281
  %5283 = vrot.lane.b32.xlu0 %v2989, 32
  %v5284 = vpop.permute.xlu0 %5283
  %5285 = vrot.lane.b32.xlu0 %v2995, 32
  %v5286 = vpop.permute.xlu0 %5285
  %5287 = vrot.lane.b32.xlu0 %v3001, 32
  %v5288 = vpop.permute.xlu0 %5287
  %5289 = vrot.lane.b32.xlu0 %v3007, 32
  %v5290 = vpop.permute.xlu0 %5289
  %5291 = vrot.lane.b32.xlu0 %v3013, 32
  %v5292 = vpop.permute.xlu0 %5291
  %5293 = vrot.lane.b32.xlu0 %v3019, 32
  %v5294 = vpop.permute.xlu0 %5293
  %5295 = vrot.lane.b32.xlu0 %v3025, 32
  %v5296 = vpop.permute.xlu0 %5295
  %5297 = vrot.lane.b32.xlu0 %v3031, 32
  %v5298 = vpop.permute.xlu0 %5297
  %5299 = vrot.lane.b32.xlu0 %v3037, 32
  %v5300 = vpop.permute.xlu0 %5299
  %5301 = vrot.lane.b32.xlu0 %v3043, 32
  %v5302 = vpop.permute.xlu0 %5301
  %5303 = vrot.lane.b32.xlu0 %v3049, 32
  %v5304 = vpop.permute.xlu0 %5303
  %5305 = vrot.lane.b32.xlu0 %v3055, 32
  %v5306 = vpop.permute.xlu0 %5305
  %5307 = vrot.lane.b32.xlu0 %v3061, 32
  %v5308 = vpop.permute.xlu0 %5307
  %v5341 = vmax.f32 %v5213, %v5246
  %v5342 = vmax.f32 %v5214, %v5248
  %v5343 = vmax.f32 %v5215, %v5250
  %v5344 = vmax.f32 %v5216, %v5252
  %v5345 = vmax.f32 %v5217, %v5254
  %v5346 = vmax.f32 %v5218, %v5256
  %v5347 = vmax.f32 %v5219, %v5258
  %v5348 = vmax.f32 %v5220, %v5260
  %v5349 = vmax.f32 %v5221, %v5262
  %v5350 = vmax.f32 %v5222, %v5264
  %v5351 = vmax.f32 %v5223, %v5266
  %v5352 = vmax.f32 %v5224, %v5268
  %v5353 = vmax.f32 %v5225, %v5270
  %v5354 = vmax.f32 %v5226, %v5272
  %v5355 = vmax.f32 %v5227, %v5274
  %v5356 = vmax.f32 %v5228, %v5276
  %v5357 = vmax.f32 %v5229, %v5278
  %v5358 = vmax.f32 %v5230, %v5280
  %v5359 = vmax.f32 %v5231, %v5282
  %v5360 = vmax.f32 %v5232, %v5284
  %v5361 = vmax.f32 %v5233, %v5286
  %v5362 = vmax.f32 %v5234, %v5288
  %v5363 = vmax.f32 %v5235, %v5290
  %v5364 = vmax.f32 %v5236, %v5292
  %v5365 = vmax.f32 %v5237, %v5294
  %v5366 = vmax.f32 %v5238, %v5296
  %v5367 = vmax.f32 %v5239, %v5298
  %v5368 = vmax.f32 %v5240, %v5300
  %v5369 = vmax.f32 %v5241, %v5302
  %v5370 = vmax.f32 %v5242, %v5304
  %v5371 = vmax.f32 %v5243, %v5306
  %v5372 = vmax.f32 %v5244, %v5308
  %v5373 = vmax.f32 %v5341, %v3644
  %v5374 = vmax.f32 %v5342, %v3650
  %v5375 = vmax.f32 %v5343, %v3656
  %v5376 = vmax.f32 %v5344, %v3662
  %v5377 = vmax.f32 %v5345, %v3668
  %v5378 = vmax.f32 %v5346, %v3674
  %v5379 = vmax.f32 %v5347, %v3680
  %v5380 = vmax.f32 %v5348, %v3686
  %v5381 = vmax.f32 %v5349, %v3692
  %v5382 = vmax.f32 %v5350, %v3698
  %v5383 = vmax.f32 %v5351, %v3704
  %v5384 = vmax.f32 %v5352, %v3710
  %v5385 = vmax.f32 %v5353, %v3716
  %v5386 = vmax.f32 %v5354, %v3722
  %v5387 = vmax.f32 %v5355, %v3728
  %v5388 = vmax.f32 %v5356, %v3734
  %v5389 = vmax.f32 %v5357, %v3740
  %v5390 = vmax.f32 %v5358, %v3746
  %v5391 = vmax.f32 %v5359, %v3752
  %v5392 = vmax.f32 %v5360, %v3758
  %v5393 = vmax.f32 %v5361, %v3764
  %v5394 = vmax.f32 %v5362, %v3770
  %v5395 = vmax.f32 %v5363, %v3776
  %v5396 = vmax.f32 %v5364, %v3782
  %v5397 = vmax.f32 %v5365, %v3788
  %v5398 = vmax.f32 %v5366, %v3794
  %v5399 = vmax.f32 %v5367, %v3800
  %v5400 = vmax.f32 %v5368, %v3806
  %v5401 = vmax.f32 %v5369, %v3812
  %v5402 = vmax.f32 %v5370, %v3818
  %v5403 = vmax.f32 %v5371, %v3824
  %v5404 = vmax.f32 %v5372, %v3830
  %5437 = vrot.lane.b32.xlu0 %v3644, 96
  %v5438 = vpop.permute.xlu0 %5437
  %5439 = vrot.lane.b32.xlu0 %v3650, 96
  %v5440 = vpop.permute.xlu0 %5439
  %5441 = vrot.lane.b32.xlu0 %v3656, 96
  %v5442 = vpop.permute.xlu0 %5441
  %5443 = vrot.lane.b32.xlu0 %v3662, 96
  %v5444 = vpop.permute.xlu0 %5443
  %5445 = vrot.lane.b32.xlu0 %v3668, 96
  %v5446 = vpop.permute.xlu0 %5445
  %5447 = vrot.lane.b32.xlu0 %v3674, 96
  %v5448 = vpop.permute.xlu0 %5447
  %5449 = vrot.lane.b32.xlu0 %v3680, 96
  %v5450 = vpop.permute.xlu0 %5449
  %5451 = vrot.lane.b32.xlu0 %v3686, 96
  %v5452 = vpop.permute.xlu0 %5451
  %5453 = vrot.lane.b32.xlu0 %v3692, 96
  %v5454 = vpop.permute.xlu0 %5453
  %5455 = vrot.lane.b32.xlu0 %v3698, 96
  %v5456 = vpop.permute.xlu0 %5455
  %5457 = vrot.lane.b32.xlu0 %v3704, 96
  %v5458 = vpop.permute.xlu0 %5457
  %5459 = vrot.lane.b32.xlu0 %v3710, 96
  %v5460 = vpop.permute.xlu0 %5459
  %5461 = vrot.lane.b32.xlu0 %v3716, 96
  %v5462 = vpop.permute.xlu0 %5461
  %5463 = vrot.lane.b32.xlu0 %v3722, 96
  %v5464 = vpop.permute.xlu0 %5463
  %5465 = vrot.lane.b32.xlu0 %v3728, 96
  %v5466 = vpop.permute.xlu0 %5465
  %5467 = vrot.lane.b32.xlu0 %v3734, 96
  %v5468 = vpop.permute.xlu0 %5467
  %5469 = vrot.lane.b32.xlu0 %v3740, 96
  %v5470 = vpop.permute.xlu0 %5469
  %5471 = vrot.lane.b32.xlu0 %v3746, 96
  %v5472 = vpop.permute.xlu0 %5471
  %5473 = vrot.lane.b32.xlu0 %v3752, 96
  %v5474 = vpop.permute.xlu0 %5473
  %5475 = vrot.lane.b32.xlu0 %v3758, 96
  %v5476 = vpop.permute.xlu0 %5475
  %5477 = vrot.lane.b32.xlu0 %v3764, 96
  %v5478 = vpop.permute.xlu0 %5477
  %5479 = vrot.lane.b32.xlu0 %v3770, 96
  %v5480 = vpop.permute.xlu0 %5479
  %5481 = vrot.lane.b32.xlu0 %v3776, 96
  %v5482 = vpop.permute.xlu0 %5481
  %5483 = vrot.lane.b32.xlu0 %v3782, 96
  %v5484 = vpop.permute.xlu0 %5483
  %5485 = vrot.lane.b32.xlu0 %v3788, 96
  %v5486 = vpop.permute.xlu0 %5485
  %5487 = vrot.lane.b32.xlu0 %v3794, 96
  %v5488 = vpop.permute.xlu0 %5487
  %5489 = vrot.lane.b32.xlu0 %v3800, 96
  %v5490 = vpop.permute.xlu0 %5489
  %5491 = vrot.lane.b32.xlu0 %v3806, 96
  %v5492 = vpop.permute.xlu0 %5491
  %5493 = vrot.lane.b32.xlu0 %v3812, 96
  %v5494 = vpop.permute.xlu0 %5493
  %5495 = vrot.lane.b32.xlu0 %v3818, 96
  %v5496 = vpop.permute.xlu0 %5495
  %5497 = vrot.lane.b32.xlu0 %v3824, 96
  %v5498 = vpop.permute.xlu0 %5497
  %5499 = vrot.lane.b32.xlu0 %v3830, 96
  %v5500 = vpop.permute.xlu0 %5499
  %v5533 = vmax.f32 %v5373, %v5438
  %v5534 = vmax.f32 %v5374, %v5440
  %v5535 = vmax.f32 %v5375, %v5442
  %v5536 = vmax.f32 %v5376, %v5444
  %v5537 = vmax.f32 %v5377, %v5446
  %v5538 = vmax.f32 %v5378, %v5448
  %v5539 = vmax.f32 %v5379, %v5450
  %v5540 = vmax.f32 %v5380, %v5452
  %v5541 = vmax.f32 %v5381, %v5454
  %v5542 = vmax.f32 %v5382, %v5456
  %v5543 = vmax.f32 %v5383, %v5458
  %v5544 = vmax.f32 %v5384, %v5460
  %v5545 = vmax.f32 %v5385, %v5462
  %v5546 = vmax.f32 %v5386, %v5464
  %v5547 = vmax.f32 %v5387, %v5466
  %v5548 = vmax.f32 %v5388, %v5468
  %v5549 = vmax.f32 %v5389, %v5470
  %v5550 = vmax.f32 %v5390, %v5472
  %v5551 = vmax.f32 %v5391, %v5474
  %v5552 = vmax.f32 %v5392, %v5476
  %v5553 = vmax.f32 %v5393, %v5478
  %v5554 = vmax.f32 %v5394, %v5480
  %v5555 = vmax.f32 %v5395, %v5482
  %v5556 = vmax.f32 %v5396, %v5484
  %v5557 = vmax.f32 %v5397, %v5486
  %v5558 = vmax.f32 %v5398, %v5488
  %v5559 = vmax.f32 %v5399, %v5490
  %v5560 = vmax.f32 %v5400, %v5492
  %v5561 = vmax.f32 %v5401, %v5494
  %v5562 = vmax.f32 %v5402, %v5496
  %v5563 = vmax.f32 %v5403, %v5498
  %v5564 = vmax.f32 %v5404, %v5500
  %5565 = vrot.lane.b32.xlu0 %v3644, 64
  %v5566 = vpop.permute.xlu0 %5565
  %5567 = vrot.lane.b32.xlu0 %v3650, 64
  %v5568 = vpop.permute.xlu0 %5567
  %5569 = vrot.lane.b32.xlu0 %v3656, 64
  %v5570 = vpop.permute.xlu0 %5569
  %5571 = vrot.lane.b32.xlu0 %v3662, 64
  %v5572 = vpop.permute.xlu0 %5571
  %5573 = vrot.lane.b32.xlu0 %v3668, 64
  %v5574 = vpop.permute.xlu0 %5573
  %5575 = vrot.lane.b32.xlu0 %v3674, 64
  %v5576 = vpop.permute.xlu0 %5575
  %5577 = vrot.lane.b32.xlu0 %v3680, 64
  %v5578 = vpop.permute.xlu0 %5577
  %5579 = vrot.lane.b32.xlu0 %v3686, 64
  %v5580 = vpop.permute.xlu0 %5579
  %5581 = vrot.lane.b32.xlu0 %v3692, 64
  %v5582 = vpop.permute.xlu0 %5581
  %5583 = vrot.lane.b32.xlu0 %v3698, 64
  %v5584 = vpop.permute.xlu0 %5583
  %5585 = vrot.lane.b32.xlu0 %v3704, 64
  %v5586 = vpop.permute.xlu0 %5585
  %5587 = vrot.lane.b32.xlu0 %v3710, 64
  %v5588 = vpop.permute.xlu0 %5587
  %5589 = vrot.lane.b32.xlu0 %v3716, 64
  %v5590 = vpop.permute.xlu0 %5589
  %5591 = vrot.lane.b32.xlu0 %v3722, 64
  %v5592 = vpop.permute.xlu0 %5591
  %5593 = vrot.lane.b32.xlu0 %v3728, 64
  %v5594 = vpop.permute.xlu0 %5593
  %5595 = vrot.lane.b32.xlu0 %v3734, 64
  %v5596 = vpop.permute.xlu0 %5595
  %5597 = vrot.lane.b32.xlu0 %v3740, 64
  %v5598 = vpop.permute.xlu0 %5597
  %5599 = vrot.lane.b32.xlu0 %v3746, 64
  %v5600 = vpop.permute.xlu0 %5599
  %5601 = vrot.lane.b32.xlu0 %v3752, 64
  %v5602 = vpop.permute.xlu0 %5601
  %5603 = vrot.lane.b32.xlu0 %v3758, 64
  %v5604 = vpop.permute.xlu0 %5603
  %5605 = vrot.lane.b32.xlu0 %v3764, 64
  %v5606 = vpop.permute.xlu0 %5605
  %5607 = vrot.lane.b32.xlu0 %v3770, 64
  %v5608 = vpop.permute.xlu0 %5607
  %5609 = vrot.lane.b32.xlu0 %v3776, 64
  %v5610 = vpop.permute.xlu0 %5609
  %5611 = vrot.lane.b32.xlu0 %v3782, 64
  %v5612 = vpop.permute.xlu0 %5611
  %5613 = vrot.lane.b32.xlu0 %v3788, 64
  %v5614 = vpop.permute.xlu0 %5613
  %5615 = vrot.lane.b32.xlu0 %v3794, 64
  %v5616 = vpop.permute.xlu0 %5615
  %5617 = vrot.lane.b32.xlu0 %v3800, 64
  %v5618 = vpop.permute.xlu0 %5617
  %5619 = vrot.lane.b32.xlu0 %v3806, 64
  %v5620 = vpop.permute.xlu0 %5619
  %5621 = vrot.lane.b32.xlu0 %v3812, 64
  %v5622 = vpop.permute.xlu0 %5621
  %5623 = vrot.lane.b32.xlu0 %v3818, 64
  %v5624 = vpop.permute.xlu0 %5623
  %5625 = vrot.lane.b32.xlu0 %v3824, 64
  %v5626 = vpop.permute.xlu0 %5625
  %5627 = vrot.lane.b32.xlu0 %v3830, 64
  %v5628 = vpop.permute.xlu0 %5627
  %v5661 = vmax.f32 %v5533, %v5566
  %v5662 = vmax.f32 %v5534, %v5568
  %v5663 = vmax.f32 %v5535, %v5570
  %v5664 = vmax.f32 %v5536, %v5572
  %v5665 = vmax.f32 %v5537, %v5574
  %v5666 = vmax.f32 %v5538, %v5576
  %v5667 = vmax.f32 %v5539, %v5578
  %v5668 = vmax.f32 %v5540, %v5580
  %v5669 = vmax.f32 %v5541, %v5582
  %v5670 = vmax.f32 %v5542, %v5584
  %v5671 = vmax.f32 %v5543, %v5586
  %v5672 = vmax.f32 %v5544, %v5588
  %v5673 = vmax.f32 %v5545, %v5590
  %v5674 = vmax.f32 %v5546, %v5592
  %v5675 = vmax.f32 %v5547, %v5594
  %v5676 = vmax.f32 %v5548, %v5596
  %v5677 = vmax.f32 %v5549, %v5598
  %v5678 = vmax.f32 %v5550, %v5600
  %v5679 = vmax.f32 %v5551, %v5602
  %v5680 = vmax.f32 %v5552, %v5604
  %v5681 = vmax.f32 %v5553, %v5606
  %v5682 = vmax.f32 %v5554, %v5608
  %v5683 = vmax.f32 %v5555, %v5610
  %v5684 = vmax.f32 %v5556, %v5612
  %v5685 = vmax.f32 %v5557, %v5614
  %v5686 = vmax.f32 %v5558, %v5616
  %v5687 = vmax.f32 %v5559, %v5618
  %v5688 = vmax.f32 %v5560, %v5620
  %v5689 = vmax.f32 %v5561, %v5622
  %v5690 = vmax.f32 %v5562, %v5624
  %v5691 = vmax.f32 %v5563, %v5626
  %v5692 = vmax.f32 %v5564, %v5628
  %5693 = vrot.lane.b32.xlu0 %v3644, 32
  %v5694 = vpop.permute.xlu0 %5693
  %5695 = vrot.lane.b32.xlu0 %v3650, 32
  %v5696 = vpop.permute.xlu0 %5695
  %5697 = vrot.lane.b32.xlu0 %v3656, 32
  %v5698 = vpop.permute.xlu0 %5697
  %5699 = vrot.lane.b32.xlu0 %v3662, 32
  %v5700 = vpop.permute.xlu0 %5699
  %5701 = vrot.lane.b32.xlu0 %v3668, 32
  %v5702 = vpop.permute.xlu0 %5701
  %5703 = vrot.lane.b32.xlu0 %v3674, 32
  %v5704 = vpop.permute.xlu0 %5703
  %5705 = vrot.lane.b32.xlu0 %v3680, 32
  %v5706 = vpop.permute.xlu0 %5705
  %5707 = vrot.lane.b32.xlu0 %v3686, 32
  %v5708 = vpop.permute.xlu0 %5707
  %5709 = vrot.lane.b32.xlu0 %v3692, 32
  %v5710 = vpop.permute.xlu0 %5709
  %5711 = vrot.lane.b32.xlu0 %v3698, 32
  %v5712 = vpop.permute.xlu0 %5711
  %5713 = vrot.lane.b32.xlu0 %v3704, 32
  %v5714 = vpop.permute.xlu0 %5713
  %5715 = vrot.lane.b32.xlu0 %v3710, 32
  %v5716 = vpop.permute.xlu0 %5715
  %5717 = vrot.lane.b32.xlu0 %v3716, 32
  %v5718 = vpop.permute.xlu0 %5717
  %5719 = vrot.lane.b32.xlu0 %v3722, 32
  %v5720 = vpop.permute.xlu0 %5719
  %5721 = vrot.lane.b32.xlu0 %v3728, 32
  %v5722 = vpop.permute.xlu0 %5721
  %5723 = vrot.lane.b32.xlu0 %v3734, 32
  %v5724 = vpop.permute.xlu0 %5723
  %5725 = vrot.lane.b32.xlu0 %v3740, 32
  %v5726 = vpop.permute.xlu0 %5725
  %5727 = vrot.lane.b32.xlu0 %v3746, 32
  %v5728 = vpop.permute.xlu0 %5727
  %5729 = vrot.lane.b32.xlu0 %v3752, 32
  %v5730 = vpop.permute.xlu0 %5729
  %5731 = vrot.lane.b32.xlu0 %v3758, 32
  %v5732 = vpop.permute.xlu0 %5731
  %5733 = vrot.lane.b32.xlu0 %v3764, 32
  %v5734 = vpop.permute.xlu0 %5733
  %5735 = vrot.lane.b32.xlu0 %v3770, 32
  %v5736 = vpop.permute.xlu0 %5735
  %5737 = vrot.lane.b32.xlu0 %v3776, 32
  %v5738 = vpop.permute.xlu0 %5737
  %5739 = vrot.lane.b32.xlu0 %v3782, 32
  %v5740 = vpop.permute.xlu0 %5739
  %5741 = vrot.lane.b32.xlu0 %v3788, 32
  %v5742 = vpop.permute.xlu0 %5741
  %5743 = vrot.lane.b32.xlu0 %v3794, 32
  %v5744 = vpop.permute.xlu0 %5743
  %5745 = vrot.lane.b32.xlu0 %v3800, 32
  %v5746 = vpop.permute.xlu0 %5745
  %5747 = vrot.lane.b32.xlu0 %v3806, 32
  %v5748 = vpop.permute.xlu0 %5747
  %5749 = vrot.lane.b32.xlu0 %v3812, 32
  %v5750 = vpop.permute.xlu0 %5749
  %5751 = vrot.lane.b32.xlu0 %v3818, 32
  %v5752 = vpop.permute.xlu0 %5751
  %5753 = vrot.lane.b32.xlu0 %v3824, 32
  %v5754 = vpop.permute.xlu0 %5753
  %5755 = vrot.lane.b32.xlu0 %v3830, 32
  %v5756 = vpop.permute.xlu0 %5755
  %v5789 = vmax.f32 %v5661, %v5694
  %v5790 = vmax.f32 %v5662, %v5696
  %v5791 = vmax.f32 %v5663, %v5698
  %v5792 = vmax.f32 %v5664, %v5700
  %v5793 = vmax.f32 %v5665, %v5702
  %v5794 = vmax.f32 %v5666, %v5704
  %v5795 = vmax.f32 %v5667, %v5706
  %v5796 = vmax.f32 %v5668, %v5708
  %v5797 = vmax.f32 %v5669, %v5710
  %v5798 = vmax.f32 %v5670, %v5712
  %v5799 = vmax.f32 %v5671, %v5714
  %v5800 = vmax.f32 %v5672, %v5716
  %v5801 = vmax.f32 %v5673, %v5718
  %v5802 = vmax.f32 %v5674, %v5720
  %v5803 = vmax.f32 %v5675, %v5722
  %v5804 = vmax.f32 %v5676, %v5724
  %v5805 = vmax.f32 %v5677, %v5726
  %v5806 = vmax.f32 %v5678, %v5728
  %v5807 = vmax.f32 %v5679, %v5730
  %v5808 = vmax.f32 %v5680, %v5732
  %v5809 = vmax.f32 %v5681, %v5734
  %v5810 = vmax.f32 %v5682, %v5736
  %v5811 = vmax.f32 %v5683, %v5738
  %v5812 = vmax.f32 %v5684, %v5740
  %v5813 = vmax.f32 %v5685, %v5742
  %v5814 = vmax.f32 %v5686, %v5744
  %v5815 = vmax.f32 %v5687, %v5746
  %v5816 = vmax.f32 %v5688, %v5748
  %v5817 = vmax.f32 %v5689, %v5750
  %v5818 = vmax.f32 %v5690, %v5752
  %v5819 = vmax.f32 %v5691, %v5754
  %v5820 = vmax.f32 %v5692, %v5756
  %v5821 = vmax.f32 %v5789, %v3646
  %v5822 = vmax.f32 %v5790, %v3652
  %v5823 = vmax.f32 %v5791, %v3658
  %v5824 = vmax.f32 %v5792, %v3664
  %v5825 = vmax.f32 %v5793, %v3670
  %v5826 = vmax.f32 %v5794, %v3676
  %v5827 = vmax.f32 %v5795, %v3682
  %v5828 = vmax.f32 %v5796, %v3688
  %v5829 = vmax.f32 %v5797, %v3694
  %v5830 = vmax.f32 %v5798, %v3700
  %v5831 = vmax.f32 %v5799, %v3706
  %v5832 = vmax.f32 %v5800, %v3712
  %v5833 = vmax.f32 %v5801, %v3718
  %v5834 = vmax.f32 %v5802, %v3724
  %v5835 = vmax.f32 %v5803, %v3730
  %v5836 = vmax.f32 %v5804, %v3736
  %v5837 = vmax.f32 %v5805, %v3742
  %v5838 = vmax.f32 %v5806, %v3748
  %v5839 = vmax.f32 %v5807, %v3754
  %v5840 = vmax.f32 %v5808, %v3760
  %v5841 = vmax.f32 %v5809, %v3766
  %v5842 = vmax.f32 %v5810, %v3772
  %v5843 = vmax.f32 %v5811, %v3778
  %v5844 = vmax.f32 %v5812, %v3784
  %v5845 = vmax.f32 %v5813, %v3790
  %v5846 = vmax.f32 %v5814, %v3796
  %v5847 = vmax.f32 %v5815, %v3802
  %v5848 = vmax.f32 %v5816, %v3808
  %v5849 = vmax.f32 %v5817, %v3814
  %v5850 = vmax.f32 %v5818, %v3820
  %v5851 = vmax.f32 %v5819, %v3826
  %v5852 = vmax.f32 %v5820, %v3832
  %5885 = vrot.lane.b32.xlu0 %v3646, 96
  %v5886 = vpop.permute.xlu0 %5885
  %5887 = vrot.lane.b32.xlu0 %v3652, 96
  %v5888 = vpop.permute.xlu0 %5887
  %5889 = vrot.lane.b32.xlu0 %v3658, 96
  %v5890 = vpop.permute.xlu0 %5889
  %5891 = vrot.lane.b32.xlu0 %v3664, 96
  %v5892 = vpop.permute.xlu0 %5891
  %5893 = vrot.lane.b32.xlu0 %v3670, 96
  %v5894 = vpop.permute.xlu0 %5893
  %5895 = vrot.lane.b32.xlu0 %v3676, 96
  %v5896 = vpop.permute.xlu0 %5895
  %5897 = vrot.lane.b32.xlu0 %v3682, 96
  %v5898 = vpop.permute.xlu0 %5897
  %5899 = vrot.lane.b32.xlu0 %v3688, 96
  %v5900 = vpop.permute.xlu0 %5899
  %5901 = vrot.lane.b32.xlu0 %v3694, 96
  %v5902 = vpop.permute.xlu0 %5901
  %5903 = vrot.lane.b32.xlu0 %v3700, 96
  %v5904 = vpop.permute.xlu0 %5903
  %5905 = vrot.lane.b32.xlu0 %v3706, 96
  %v5906 = vpop.permute.xlu0 %5905
  %5907 = vrot.lane.b32.xlu0 %v3712, 96
  %v5908 = vpop.permute.xlu0 %5907
  %5909 = vrot.lane.b32.xlu0 %v3718, 96
  %v5910 = vpop.permute.xlu0 %5909
  %5911 = vrot.lane.b32.xlu0 %v3724, 96
  %v5912 = vpop.permute.xlu0 %5911
  %5913 = vrot.lane.b32.xlu0 %v3730, 96
  %v5914 = vpop.permute.xlu0 %5913
  %5915 = vrot.lane.b32.xlu0 %v3736, 96
  %v5916 = vpop.permute.xlu0 %5915
  %5917 = vrot.lane.b32.xlu0 %v3742, 96
  %v5918 = vpop.permute.xlu0 %5917
  %5919 = vrot.lane.b32.xlu0 %v3748, 96
  %v5920 = vpop.permute.xlu0 %5919
  %5921 = vrot.lane.b32.xlu0 %v3754, 96
  %v5922 = vpop.permute.xlu0 %5921
  %5923 = vrot.lane.b32.xlu0 %v3760, 96
  %v5924 = vpop.permute.xlu0 %5923
  %5925 = vrot.lane.b32.xlu0 %v3766, 96
  %v5926 = vpop.permute.xlu0 %5925
  %5927 = vrot.lane.b32.xlu0 %v3772, 96
  %v5928 = vpop.permute.xlu0 %5927
  %5929 = vrot.lane.b32.xlu0 %v3778, 96
  %v5930 = vpop.permute.xlu0 %5929
  %5931 = vrot.lane.b32.xlu0 %v3784, 96
  %v5932 = vpop.permute.xlu0 %5931
  %5933 = vrot.lane.b32.xlu0 %v3790, 96
  %v5934 = vpop.permute.xlu0 %5933
  %5935 = vrot.lane.b32.xlu0 %v3796, 96
  %v5936 = vpop.permute.xlu0 %5935
  %5937 = vrot.lane.b32.xlu0 %v3802, 96
  %v5938 = vpop.permute.xlu0 %5937
  %5939 = vrot.lane.b32.xlu0 %v3808, 96
  %v5940 = vpop.permute.xlu0 %5939
  %5941 = vrot.lane.b32.xlu0 %v3814, 96
  %v5942 = vpop.permute.xlu0 %5941
  %5943 = vrot.lane.b32.xlu0 %v3820, 96
  %v5944 = vpop.permute.xlu0 %5943
  %5945 = vrot.lane.b32.xlu0 %v3826, 96
  %v5946 = vpop.permute.xlu0 %5945
  %5947 = vrot.lane.b32.xlu0 %v3832, 96
  %v5948 = vpop.permute.xlu0 %5947
  %v5981 = vmax.f32 %v5821, %v5886
  %v5982 = vmax.f32 %v5822, %v5888
  %v5983 = vmax.f32 %v5823, %v5890
  %v5984 = vmax.f32 %v5824, %v5892
  %v5985 = vmax.f32 %v5825, %v5894
  %v5986 = vmax.f32 %v5826, %v5896
  %v5987 = vmax.f32 %v5827, %v5898
  %v5988 = vmax.f32 %v5828, %v5900
  %v5989 = vmax.f32 %v5829, %v5902
  %v5990 = vmax.f32 %v5830, %v5904
  %v5991 = vmax.f32 %v5831, %v5906
  %v5992 = vmax.f32 %v5832, %v5908
  %v5993 = vmax.f32 %v5833, %v5910
  %v5994 = vmax.f32 %v5834, %v5912
  %v5995 = vmax.f32 %v5835, %v5914
  %v5996 = vmax.f32 %v5836, %v5916
  %v5997 = vmax.f32 %v5837, %v5918
  %v5998 = vmax.f32 %v5838, %v5920
  %v5999 = vmax.f32 %v5839, %v5922
  %v6000 = vmax.f32 %v5840, %v5924
  %v6001 = vmax.f32 %v5841, %v5926
  %v6002 = vmax.f32 %v5842, %v5928
  %v6003 = vmax.f32 %v5843, %v5930
  %v6004 = vmax.f32 %v5844, %v5932
  %v6005 = vmax.f32 %v5845, %v5934
  %v6006 = vmax.f32 %v5846, %v5936
  %v6007 = vmax.f32 %v5847, %v5938
  %v6008 = vmax.f32 %v5848, %v5940
  %v6009 = vmax.f32 %v5849, %v5942
  %v6010 = vmax.f32 %v5850, %v5944
  %v6011 = vmax.f32 %v5851, %v5946
  %v6012 = vmax.f32 %v5852, %v5948
  %6013 = vrot.lane.b32.xlu0 %v3646, 64
  %v6014 = vpop.permute.xlu0 %6013
  %6015 = vrot.lane.b32.xlu0 %v3652, 64
  %v6016 = vpop.permute.xlu0 %6015
  %6017 = vrot.lane.b32.xlu0 %v3658, 64
  %v6018 = vpop.permute.xlu0 %6017
  %6019 = vrot.lane.b32.xlu0 %v3664, 64
  %v6020 = vpop.permute.xlu0 %6019
  %6021 = vrot.lane.b32.xlu0 %v3670, 64
  %v6022 = vpop.permute.xlu0 %6021
  %6023 = vrot.lane.b32.xlu0 %v3676, 64
  %v6024 = vpop.permute.xlu0 %6023
  %6025 = vrot.lane.b32.xlu0 %v3682, 64
  %v6026 = vpop.permute.xlu0 %6025
  %6027 = vrot.lane.b32.xlu0 %v3688, 64
  %v6028 = vpop.permute.xlu0 %6027
  %6029 = vrot.lane.b32.xlu0 %v3694, 64
  %v6030 = vpop.permute.xlu0 %6029
  %6031 = vrot.lane.b32.xlu0 %v3700, 64
  %v6032 = vpop.permute.xlu0 %6031
  %6033 = vrot.lane.b32.xlu0 %v3706, 64
  %v6034 = vpop.permute.xlu0 %6033
  %6035 = vrot.lane.b32.xlu0 %v3712, 64
  %v6036 = vpop.permute.xlu0 %6035
  %6037 = vrot.lane.b32.xlu0 %v3718, 64
  %v6038 = vpop.permute.xlu0 %6037
  %6039 = vrot.lane.b32.xlu0 %v3724, 64
  %v6040 = vpop.permute.xlu0 %6039
  %6041 = vrot.lane.b32.xlu0 %v3730, 64
  %v6042 = vpop.permute.xlu0 %6041
  %6043 = vrot.lane.b32.xlu0 %v3736, 64
  %v6044 = vpop.permute.xlu0 %6043
  %6045 = vrot.lane.b32.xlu0 %v3742, 64
  %v6046 = vpop.permute.xlu0 %6045
  %6047 = vrot.lane.b32.xlu0 %v3748, 64
  %v6048 = vpop.permute.xlu0 %6047
  %6049 = vrot.lane.b32.xlu0 %v3754, 64
  %v6050 = vpop.permute.xlu0 %6049
  %6051 = vrot.lane.b32.xlu0 %v3760, 64
  %v6052 = vpop.permute.xlu0 %6051
  %6053 = vrot.lane.b32.xlu0 %v3766, 64
  %v6054 = vpop.permute.xlu0 %6053
  %6055 = vrot.lane.b32.xlu0 %v3772, 64
  %v6056 = vpop.permute.xlu0 %6055
  %6057 = vrot.lane.b32.xlu0 %v3778, 64
  %v6058 = vpop.permute.xlu0 %6057
  %6059 = vrot.lane.b32.xlu0 %v3784, 64
  %v6060 = vpop.permute.xlu0 %6059
  %6061 = vrot.lane.b32.xlu0 %v3790, 64
  %v6062 = vpop.permute.xlu0 %6061
  %6063 = vrot.lane.b32.xlu0 %v3796, 64
  %v6064 = vpop.permute.xlu0 %6063
  %6065 = vrot.lane.b32.xlu0 %v3802, 64
  %v6066 = vpop.permute.xlu0 %6065
  %6067 = vrot.lane.b32.xlu0 %v3808, 64
  %v6068 = vpop.permute.xlu0 %6067
  %6069 = vrot.lane.b32.xlu0 %v3814, 64
  %v6070 = vpop.permute.xlu0 %6069
  %6071 = vrot.lane.b32.xlu0 %v3820, 64
  %v6072 = vpop.permute.xlu0 %6071
  %6073 = vrot.lane.b32.xlu0 %v3826, 64
  %v6074 = vpop.permute.xlu0 %6073
  %6075 = vrot.lane.b32.xlu0 %v3832, 64
  %v6076 = vpop.permute.xlu0 %6075
  %v6109 = vmax.f32 %v5981, %v6014
  %v6110 = vmax.f32 %v5982, %v6016
  %v6111 = vmax.f32 %v5983, %v6018
  %v6112 = vmax.f32 %v5984, %v6020
  %v6113 = vmax.f32 %v5985, %v6022
  %v6114 = vmax.f32 %v5986, %v6024
  %v6115 = vmax.f32 %v5987, %v6026
  %v6116 = vmax.f32 %v5988, %v6028
  %v6117 = vmax.f32 %v5989, %v6030
  %v6118 = vmax.f32 %v5990, %v6032
  %v6119 = vmax.f32 %v5991, %v6034
  %v6120 = vmax.f32 %v5992, %v6036
  %v6121 = vmax.f32 %v5993, %v6038
  %v6122 = vmax.f32 %v5994, %v6040
  %v6123 = vmax.f32 %v5995, %v6042
  %v6124 = vmax.f32 %v5996, %v6044
  %v6125 = vmax.f32 %v5997, %v6046
  %v6126 = vmax.f32 %v5998, %v6048
  %v6127 = vmax.f32 %v5999, %v6050
  %v6128 = vmax.f32 %v6000, %v6052
  %v6129 = vmax.f32 %v6001, %v6054
  %v6130 = vmax.f32 %v6002, %v6056
  %v6131 = vmax.f32 %v6003, %v6058
  %v6132 = vmax.f32 %v6004, %v6060
  %v6133 = vmax.f32 %v6005, %v6062
  %v6134 = vmax.f32 %v6006, %v6064
  %v6135 = vmax.f32 %v6007, %v6066
  %v6136 = vmax.f32 %v6008, %v6068
  %v6137 = vmax.f32 %v6009, %v6070
  %v6138 = vmax.f32 %v6010, %v6072
  %v6139 = vmax.f32 %v6011, %v6074
  %v6140 = vmax.f32 %v6012, %v6076
  %6141 = vrot.lane.b32.xlu0 %v3646, 32
  %v6142 = vpop.permute.xlu0 %6141
  %6143 = vrot.lane.b32.xlu0 %v3652, 32
  %v6144 = vpop.permute.xlu0 %6143
  %6145 = vrot.lane.b32.xlu0 %v3658, 32
  %v6146 = vpop.permute.xlu0 %6145
  %6147 = vrot.lane.b32.xlu0 %v3664, 32
  %v6148 = vpop.permute.xlu0 %6147
  %6149 = vrot.lane.b32.xlu0 %v3670, 32
  %v6150 = vpop.permute.xlu0 %6149
  %6151 = vrot.lane.b32.xlu0 %v3676, 32
  %v6152 = vpop.permute.xlu0 %6151
  %6153 = vrot.lane.b32.xlu0 %v3682, 32
  %v6154 = vpop.permute.xlu0 %6153
  %6155 = vrot.lane.b32.xlu0 %v3688, 32
  %v6156 = vpop.permute.xlu0 %6155
  %6157 = vrot.lane.b32.xlu0 %v3694, 32
  %v6158 = vpop.permute.xlu0 %6157
  %6159 = vrot.lane.b32.xlu0 %v3700, 32
  %v6160 = vpop.permute.xlu0 %6159
  %6161 = vrot.lane.b32.xlu0 %v3706, 32
  %v6162 = vpop.permute.xlu0 %6161
  %6163 = vrot.lane.b32.xlu0 %v3712, 32
  %v6164 = vpop.permute.xlu0 %6163
  %6165 = vrot.lane.b32.xlu0 %v3718, 32
  %v6166 = vpop.permute.xlu0 %6165
  %6167 = vrot.lane.b32.xlu0 %v3724, 32
  %v6168 = vpop.permute.xlu0 %6167
  %6169 = vrot.lane.b32.xlu0 %v3730, 32
  %v6170 = vpop.permute.xlu0 %6169
  %6171 = vrot.lane.b32.xlu0 %v3736, 32
  %v6172 = vpop.permute.xlu0 %6171
  %6173 = vrot.lane.b32.xlu0 %v3742, 32
  %v6174 = vpop.permute.xlu0 %6173
  %6175 = vrot.lane.b32.xlu0 %v3748, 32
  %v6176 = vpop.permute.xlu0 %6175
  %6177 = vrot.lane.b32.xlu0 %v3754, 32
  %v6178 = vpop.permute.xlu0 %6177
  %6179 = vrot.lane.b32.xlu0 %v3760, 32
  %v6180 = vpop.permute.xlu0 %6179
  %6181 = vrot.lane.b32.xlu0 %v3766, 32
  %v6182 = vpop.permute.xlu0 %6181
  %6183 = vrot.lane.b32.xlu0 %v3772, 32
  %v6184 = vpop.permute.xlu0 %6183
  %6185 = vrot.lane.b32.xlu0 %v3778, 32
  %v6186 = vpop.permute.xlu0 %6185
  %6187 = vrot.lane.b32.xlu0 %v3784, 32
  %v6188 = vpop.permute.xlu0 %6187
  %6189 = vrot.lane.b32.xlu0 %v3790, 32
  %v6190 = vpop.permute.xlu0 %6189
  %6191 = vrot.lane.b32.xlu0 %v3796, 32
  %v6192 = vpop.permute.xlu0 %6191
  %6193 = vrot.lane.b32.xlu0 %v3802, 32
  %v6194 = vpop.permute.xlu0 %6193
  %6195 = vrot.lane.b32.xlu0 %v3808, 32
  %v6196 = vpop.permute.xlu0 %6195
  %6197 = vrot.lane.b32.xlu0 %v3814, 32
  %v6198 = vpop.permute.xlu0 %6197
  %6199 = vrot.lane.b32.xlu0 %v3820, 32
  %v6200 = vpop.permute.xlu0 %6199
  %6201 = vrot.lane.b32.xlu0 %v3826, 32
  %v6202 = vpop.permute.xlu0 %6201
  %6203 = vrot.lane.b32.xlu0 %v3832, 32
  %v6204 = vpop.permute.xlu0 %6203
  %v6237 = vmax.f32 %v6109, %v6142
  %v6238 = vmax.f32 %v6110, %v6144
  %v6239 = vmax.f32 %v6111, %v6146
  %v6240 = vmax.f32 %v6112, %v6148
  %v6241 = vmax.f32 %v6113, %v6150
  %v6242 = vmax.f32 %v6114, %v6152
  %v6243 = vmax.f32 %v6115, %v6154
  %v6244 = vmax.f32 %v6116, %v6156
  %v6245 = vmax.f32 %v6117, %v6158
  %v6246 = vmax.f32 %v6118, %v6160
  %v6247 = vmax.f32 %v6119, %v6162
  %v6248 = vmax.f32 %v6120, %v6164
  %v6249 = vmax.f32 %v6121, %v6166
  %v6250 = vmax.f32 %v6122, %v6168
  %v6251 = vmax.f32 %v6123, %v6170
  %v6252 = vmax.f32 %v6124, %v6172
  %v6253 = vmax.f32 %v6125, %v6174
  %v6254 = vmax.f32 %v6126, %v6176
  %v6255 = vmax.f32 %v6127, %v6178
  %v6256 = vmax.f32 %v6128, %v6180
  %v6257 = vmax.f32 %v6129, %v6182
  %v6258 = vmax.f32 %v6130, %v6184
  %v6259 = vmax.f32 %v6131, %v6186
  %v6260 = vmax.f32 %v6132, %v6188
  %v6261 = vmax.f32 %v6133, %v6190
  %v6262 = vmax.f32 %v6134, %v6192
  %v6263 = vmax.f32 %v6135, %v6194
  %v6264 = vmax.f32 %v6136, %v6196
  %v6265 = vmax.f32 %v6137, %v6198
  %v6266 = vmax.f32 %v6138, %v6200
  %v6267 = vmax.f32 %v6139, %v6202
  %v6268 = vmax.f32 %v6140, %v6204
  %v6269 = vmax.f32 %v6237, %v4351
  %v6270 = vmax.f32 %v6238, %v4356
  %v6271 = vmax.f32 %v6239, %v4361
  %v6272 = vmax.f32 %v6240, %v4366
  %v6273 = vmax.f32 %v6241, %v4371
  %v6274 = vmax.f32 %v6242, %v4376
  %v6275 = vmax.f32 %v6243, %v4381
  %v6276 = vmax.f32 %v6244, %v4386
  %v6277 = vmax.f32 %v6245, %v4391
  %v6278 = vmax.f32 %v6246, %v4396
  %v6279 = vmax.f32 %v6247, %v4401
  %v6280 = vmax.f32 %v6248, %v4406
  %v6281 = vmax.f32 %v6249, %v4411
  %v6282 = vmax.f32 %v6250, %v4416
  %v6283 = vmax.f32 %v6251, %v4421
  %v6284 = vmax.f32 %v6252, %v4426
  %v6285 = vmax.f32 %v6253, %v4431
  %v6286 = vmax.f32 %v6254, %v4436
  %v6287 = vmax.f32 %v6255, %v4441
  %v6288 = vmax.f32 %v6256, %v4446
  %v6289 = vmax.f32 %v6257, %v4451
  %v6290 = vmax.f32 %v6258, %v4456
  %v6291 = vmax.f32 %v6259, %v4461
  %v6292 = vmax.f32 %v6260, %v4466
  %v6293 = vmax.f32 %v6261, %v4471
  %v6294 = vmax.f32 %v6262, %v4476
  %v6295 = vmax.f32 %v6263, %v4481
  %v6296 = vmax.f32 %v6264, %v4486
  %v6297 = vmax.f32 %v6265, %v4491
  %v6298 = vmax.f32 %v6266, %v4496
  %v6299 = vmax.f32 %v6267, %v4501
  %v6300 = vmax.f32 %v6268, %v4506
  %v6301 = vld [vmem:[%s4] sm:$0x1]
  %v6303 = vlaneseq
  %v6304 = vshrl.u32 %v6303, 7
  %v6305 = vsub.s32 0, %v6304
  %v6306 = vrot.slane %v6301, %v6305
  %v6308 = vadd.f32 %v6269, %v6306
  %v6309 = vadd.f32 %v6270, %v6306
  %v6310 = vadd.f32 %v6271, %v6306
  %v6311 = vadd.f32 %v6272, %v6306
  %v6312 = vadd.f32 %v6273, %v6306
  %v6313 = vadd.f32 %v6274, %v6306
  %v6314 = vadd.f32 %v6275, %v6306
  %v6315 = vadd.f32 %v6276, %v6306
  %v6316 = vadd.f32 %v6277, %v6306
  %v6317 = vadd.f32 %v6278, %v6306
  %v6318 = vadd.f32 %v6279, %v6306
  %v6319 = vadd.f32 %v6280, %v6306
  %v6320 = vadd.f32 %v6281, %v6306
  %v6321 = vadd.f32 %v6282, %v6306
  %v6322 = vadd.f32 %v6283, %v6306
  %v6323 = vadd.f32 %v6284, %v6306
  %v6324 = vadd.f32 %v6285, %v6306
  %v6325 = vadd.f32 %v6286, %v6306
  %v6326 = vadd.f32 %v6287, %v6306
  %v6327 = vadd.f32 %v6288, %v6306
  %v6328 = vadd.f32 %v6289, %v6306
  %v6329 = vadd.f32 %v6290, %v6306
  %v6330 = vadd.f32 %v6291, %v6306
  %v6331 = vadd.f32 %v6292, %v6306
  %v6332 = vadd.f32 %v6293, %v6306
  %v6333 = vadd.f32 %v6294, %v6306
  %v6334 = vadd.f32 %v6295, %v6306
  %v6335 = vadd.f32 %v6296, %v6306
  %v6336 = vadd.f32 %v6297, %v6306
  %v6337 = vadd.f32 %v6298, %v6306
  %v6338 = vadd.f32 %v6299, %v6306
  %v6339 = vadd.f32 %v6300, %v6306
  %v6340 = vmax.f32 %v6308, 0.0
  %v6341 = vmax.f32 %v6309, 0.0
  %v6342 = vmax.f32 %v6310, 0.0
  %v6343 = vmax.f32 %v6311, 0.0
  %v6344 = vmax.f32 %v6312, 0.0
  %v6345 = vmax.f32 %v6313, 0.0
  %v6346 = vmax.f32 %v6314, 0.0
  %v6347 = vmax.f32 %v6315, 0.0
  %v6348 = vmax.f32 %v6316, 0.0
  %v6349 = vmax.f32 %v6317, 0.0
  %v6350 = vmax.f32 %v6318, 0.0
  %v6351 = vmax.f32 %v6319, 0.0
  %v6352 = vmax.f32 %v6320, 0.0
  %v6353 = vmax.f32 %v6321, 0.0
  %v6354 = vmax.f32 %v6322, 0.0
  %v6355 = vmax.f32 %v6323, 0.0
  %v6356 = vmax.f32 %v6324, 0.0
  %v6357 = vmax.f32 %v6325, 0.0
  %v6358 = vmax.f32 %v6326, 0.0
  %v6359 = vmax.f32 %v6327, 0.0
  %v6360 = vmax.f32 %v6328, 0.0
  %v6361 = vmax.f32 %v6329, 0.0
  %v6362 = vmax.f32 %v6330, 0.0
  %v6363 = vmax.f32 %v6331, 0.0
  %v6364 = vmax.f32 %v6332, 0.0
  %v6365 = vmax.f32 %v6333, 0.0
  %v6366 = vmax.f32 %v6334, 0.0
  %v6367 = vmax.f32 %v6335, 0.0
  %v6368 = vmax.f32 %v6336, 0.0
  %v6369 = vmax.f32 %v6337, 0.0
  %v6370 = vmax.f32 %v6338, 0.0
  %v6371 = vmax.f32 %v6339, 0.0
  %v6372 = vld [vmem:[%s5] sm:$0xff]
  %v6373 = vld [vmem:[%s5 + $0x8] sm:$0xff]
  %v6374 = vld [vmem:[%s5 + $0x10] sm:$0xff]
  %v6375 = vld [vmem:[%s5 + $0x18] sm:$0xff]
  %v6376 = vld [vmem:[%s6] sm:$0x1]
  %v6378 = vlaneseq
  %v6379 = vshrl.u32 %v6378, 7
  %v6380 = vsub.s32 0, %v6379
  %v6381 = vrot.slane %v6376, %v6380
  %vm6383 = vcmask 261120
  %v6385 = vsel %vm6383, %v6340, 0
  %v6388 = vsel %vm6383, %v6341, 0
  %v6391 = vsel %vm6383, %v6342, 0
  %v6394 = vsel %vm6383, %v6343, 0
  %v6397 = vsel %vm6383, %v6344, 0
  %v6400 = vsel %vm6383, %v6345, 0
  %v6403 = vsel %vm6383, %v6346, 0
  %v6406 = vsel %vm6383, %v6347, 0
  %v6409 = vsel %vm6383, %v6348, 0
  %v6412 = vsel %vm6383, %v6349, 0
  %v6415 = vsel %vm6383, %v6350, 0
  %v6418 = vsel %vm6383, %v6351, 0
  %v6421 = vsel %vm6383, %v6352, 0
  %v6424 = vsel %vm6383, %v6353, 0
  %v6427 = vsel %vm6383, %v6354, 0
  %v6430 = vsel %vm6383, %v6355, 0
  %v6433 = vsel %vm6383, %v6356, 0
  %v6436 = vsel %vm6383, %v6357, 0
  %v6439 = vsel %vm6383, %v6358, 0
  %v6442 = vsel %vm6383, %v6359, 0
  %v6445 = vsel %vm6383, %v6360, 0
  %v6448 = vsel %vm6383, %v6361, 0
  %v6451 = vsel %vm6383, %v6362, 0
  %v6454 = vsel %vm6383, %v6363, 0
  %v6457 = vsel %vm6383, %v6364, 0
  %v6460 = vsel %vm6383, %v6365, 0
  %v6463 = vsel %vm6383, %v6366, 0
  %v6466 = vsel %vm6383, %v6367, 0
  %v6469 = vsel %vm6383, %v6368, 0
  %v6472 = vsel %vm6383, %v6369, 0
  %v6475 = vsel %vm6383, %v6370, 0
  %v6478 = vsel %vm6383, %v6371, 0
  %6480 = vmatprep.subr.mxu0 0.0
  %6481 = vmatpush1.msra.mxu0 0.0
  %6482 = vmatprep.subr.mxu0 0.0
  %6483 = vmatpush1.msra.mxu0 0.0
  %6484 = vmatprep.subr.mxu0 0.0
  %6485 = vmatpush1.msra.mxu0 0.0
  %6486 = vmatprep.subr.mxu0 0.0
  %6487 = vmatpush1.msra.mxu0 0.0
  %6488 = vmatprep.subr.mxu0 0.0
  %6489 = vmatpush1.msra.mxu0 0.0
  %6490 = vmatprep.subr.mxu0 0.0
  %6491 = vmatpush1.msra.mxu0 0.0
  %6492 = vmatprep.subr.mxu0 0.0
  %6493 = vmatpush1.msra.mxu0 0.0
  %6494 = vmatprep.subr.mxu0 0.0
  %6495 = vmatpush1.msra.mxu0 0.0
  %6496 = vmatprep.subr.mxu0 0.0
  %6497 = vmatpush1.msra.mxu0 0.0
  %6498 = vmatprep.subr.mxu0 0.0
  %6499 = vmatpush1.msra.mxu0 0.0
  %6500 = vmatprep.subr.mxu0 0.0
  %6501 = vmatpush1.msra.mxu0 0.0
  %6502 = vmatprep.subr.mxu0 0.0
  %6503 = vmatpush1.msra.mxu0 0.0
  %6504 = vmatprep.subr.mxu0 0.0
  %6505 = vmatpush1.msra.mxu0 %v6375
  %6506 = vmatprep.subr.mxu0 0.0
  %6507 = vmatpush1.msra.mxu0 %v6374
  %6508 = vmatprep.subr.mxu0 0.0
  %6509 = vmatpush1.msra.mxu0 %v6373
  %6510 = vmatprep.subr.mxu0 0.0
  %6511 = vmatpush1.msra.mxu0 %v6372
  %6512 = vmatprep.subr.mxu0 0.0
  %6513 = vmatpush2.msra.mxu0 0.0
  %6514 = vmatprep.subr.mxu0 0.0
  %6515 = vmatpush2.msra.mxu0 0.0
  %6516 = vmatprep.subr.mxu0 0.0
  %6517 = vmatpush2.msra.mxu0 0.0
  %6518 = vmatprep.subr.mxu0 0.0
  %6519 = vmatpush2.msra.mxu0 0.0
  %6520 = vmatprep.subr.mxu0 0.0
  %6521 = vmatpush2.msra.mxu0 0.0
  %6522 = vmatprep.subr.mxu0 0.0
  %6523 = vmatpush2.msra.mxu0 0.0
  %6524 = vmatprep.subr.mxu0 0.0
  %6525 = vmatpush2.msra.mxu0 0.0
  %6526 = vmatprep.subr.mxu0 0.0
  %6527 = vmatpush2.msra.mxu0 0.0
  %6528 = vmatprep.subr.mxu0 0.0
  %6529 = vmatpush2.msra.mxu0 0.0
  %6530 = vmatprep.subr.mxu0 0.0
  %6531 = vmatpush2.msra.mxu0 0.0
  %6532 = vmatprep.subr.mxu0 0.0
  %6533 = vmatpush2.msra.mxu0 0.0
  %6534 = vmatprep.subr.mxu0 0.0
  %6535 = vmatpush2.msra.mxu0 0.0
  %6536 = vmatprep.subr.mxu0 0.0
  %6537 = vmatpush2.msra.mxu0 0.0
  %6538 = vmatprep.subr.mxu0 0.0
  %6539 = vmatpush2.msra.mxu0 0.0
  %6540 = vmatprep.subr.mxu0 0.0
  %6541 = vmatpush2.msra.mxu0 0.0
  %6542 = vmatprep.subr.mxu0 0.0
  %6543 = vmatpush2.msra.mxu0 0.0
  %6544 = vmatprep.mubr.f32.mxu0 0.0
  %6545 = vmatmul.mubr.f32.gmra.mxu0 %v6385
  %v6546 = vpop.f32.mrf.mxu0
  %v6547 = vadd.f32 %v6381, %v6546
  %v6548 = vpop.f32.mrf.mxu0
  %6549 = vmatprep.mubr.f32.mxu0 0.0
  %6550 = vmatmul.mubr.f32.gmra.mxu0 %v6388
  %v6551 = vpop.f32.mrf.mxu0
  %v6552 = vadd.f32 %v6381, %v6551
  %v6553 = vpop.f32.mrf.mxu0
  %6554 = vmatprep.mubr.f32.mxu0 0.0
  %6555 = vmatmul.mubr.f32.gmra.mxu0 %v6391
  %v6556 = vpop.f32.mrf.mxu0
  %v6557 = vadd.f32 %v6381, %v6556
  %v6558 = vpop.f32.mrf.mxu0
  %6559 = vmatprep.mubr.f32.mxu0 0.0
  %6560 = vmatmul.mubr.f32.gmra.mxu0 %v6394
  %v6561 = vpop.f32.mrf.mxu0
  %v6562 = vadd.f32 %v6381, %v6561
  %v6563 = vpop.f32.mrf.mxu0
  %6564 = vmatprep.mubr.f32.mxu0 0.0
  %6565 = vmatmul.mubr.f32.gmra.mxu0 %v6397
  %v6566 = vpop.f32.mrf.mxu0
  %v6567 = vadd.f32 %v6381, %v6566
  %v6568 = vpop.f32.mrf.mxu0
  %6569 = vmatprep.mubr.f32.mxu0 0.0
  %6570 = vmatmul.mubr.f32.gmra.mxu0 %v6400
  %v6571 = vpop.f32.mrf.mxu0
  %v6572 = vadd.f32 %v6381, %v6571
  %v6573 = vpop.f32.mrf.mxu0
  %6574 = vmatprep.mubr.f32.mxu0 0.0
  %6575 = vmatmul.mubr.f32.gmra.mxu0 %v6403
  %v6576 = vpop.f32.mrf.mxu0
  %v6577 = vadd.f32 %v6381, %v6576
  %v6578 = vpop.f32.mrf.mxu0
  %6579 = vmatprep.mubr.f32.mxu0 0.0
  %6580 = vmatmul.mubr.f32.gmra.mxu0 %v6406
  %v6581 = vpop.f32.mrf.mxu0
  %v6582 = vadd.f32 %v6381, %v6581
  %v6583 = vpop.f32.mrf.mxu0
  %6584 = vmatprep.mubr.f32.mxu0 0.0
  %6585 = vmatmul.mubr.f32.gmra.mxu0 %v6409
  %v6586 = vpop.f32.mrf.mxu0
  %v6587 = vadd.f32 %v6381, %v6586
  %v6588 = vpop.f32.mrf.mxu0
  %6589 = vmatprep.mubr.f32.mxu0 0.0
  %6590 = vmatmul.mubr.f32.gmra.mxu0 %v6412
  %v6591 = vpop.f32.mrf.mxu0
  %v6592 = vadd.f32 %v6381, %v6591
  %v6593 = vpop.f32.mrf.mxu0
  %6594 = vmatprep.mubr.f32.mxu0 0.0
  %6595 = vmatmul.mubr.f32.gmra.mxu0 %v6415
  %v6596 = vpop.f32.mrf.mxu0
  %v6597 = vadd.f32 %v6381, %v6596
  %v6598 = vpop.f32.mrf.mxu0
  %6599 = vmatprep.mubr.f32.mxu0 0.0
  %6600 = vmatmul.mubr.f32.gmra.mxu0 %v6418
  %v6601 = vpop.f32.mrf.mxu0
  %v6602 = vadd.f32 %v6381, %v6601
  %v6603 = vpop.f32.mrf.mxu0
  %6604 = vmatprep.mubr.f32.mxu0 0.0
  %6605 = vmatmul.mubr.f32.gmra.mxu0 %v6421
  %v6606 = vpop.f32.mrf.mxu0
  %v6607 = vadd.f32 %v6381, %v6606
  %v6608 = vpop.f32.mrf.mxu0
  %6609 = vmatprep.mubr.f32.mxu0 0.0
  %6610 = vmatmul.mubr.f32.gmra.mxu0 %v6424
  %v6611 = vpop.f32.mrf.mxu0
  %v6612 = vadd.f32 %v6381, %v6611
  %v6613 = vpop.f32.mrf.mxu0
  %6614 = vmatprep.mubr.f32.mxu0 0.0
  %6615 = vmatmul.mubr.f32.gmra.mxu0 %v6427
  %v6616 = vpop.f32.mrf.mxu0
  %v6617 = vadd.f32 %v6381, %v6616
  %v6618 = vpop.f32.mrf.mxu0
  %6619 = vmatprep.mubr.f32.mxu0 0.0
  %6620 = vmatmul.mubr.f32.gmra.mxu0 %v6430
  %v6621 = vpop.f32.mrf.mxu0
  %v6622 = vadd.f32 %v6381, %v6621
  %v6623 = vpop.f32.mrf.mxu0
  %6624 = vmatprep.mubr.f32.mxu0 0.0
  %6625 = vmatmul.mubr.f32.gmra.mxu0 %v6433
  %v6626 = vpop.f32.mrf.mxu0
  %v6627 = vadd.f32 %v6381, %v6626
  %v6628 = vpop.f32.mrf.mxu0
  %6629 = vmatprep.mubr.f32.mxu0 0.0
  %6630 = vmatmul.mubr.f32.gmra.mxu0 %v6436
  %v6631 = vpop.f32.mrf.mxu0
  %v6632 = vadd.f32 %v6381, %v6631
  %v6633 = vpop.f32.mrf.mxu0
  %6634 = vmatprep.mubr.f32.mxu0 0.0
  %6635 = vmatmul.mubr.f32.gmra.mxu0 %v6439
  %v6636 = vpop.f32.mrf.mxu0
  %v6637 = vadd.f32 %v6381, %v6636
  %v6638 = vpop.f32.mrf.mxu0
  %6639 = vmatprep.mubr.f32.mxu0 0.0
  %6640 = vmatmul.mubr.f32.gmra.mxu0 %v6442
  %v6641 = vpop.f32.mrf.mxu0
  %v6642 = vadd.f32 %v6381, %v6641
  %v6643 = vpop.f32.mrf.mxu0
  %6644 = vmatprep.mubr.f32.mxu0 0.0
  %6645 = vmatmul.mubr.f32.gmra.mxu0 %v6445
  %v6646 = vpop.f32.mrf.mxu0
  %v6647 = vadd.f32 %v6381, %v6646
  %v6648 = vpop.f32.mrf.mxu0
  %6649 = vmatprep.mubr.f32.mxu0 0.0
  %6650 = vmatmul.mubr.f32.gmra.mxu0 %v6448
  %v6651 = vpop.f32.mrf.mxu0
  %v6652 = vadd.f32 %v6381, %v6651
  %v6653 = vpop.f32.mrf.mxu0
  %6654 = vmatprep.mubr.f32.mxu0 0.0
  %6655 = vmatmul.mubr.f32.gmra.mxu0 %v6451
  %v6656 = vpop.f32.mrf.mxu0
  %v6657 = vadd.f32 %v6381, %v6656
  %v6658 = vpop.f32.mrf.mxu0
  %6659 = vmatprep.mubr.f32.mxu0 0.0
  %6660 = vmatmul.mubr.f32.gmra.mxu0 %v6454
  %v6661 = vpop.f32.mrf.mxu0
  %v6662 = vadd.f32 %v6381, %v6661
  %v6663 = vpop.f32.mrf.mxu0
  %6664 = vmatprep.mubr.f32.mxu0 0.0
  %6665 = vmatmul.mubr.f32.gmra.mxu0 %v6457
  %v6666 = vpop.f32.mrf.mxu0
  %v6667 = vadd.f32 %v6381, %v6666
  %v6668 = vpop.f32.mrf.mxu0
  %6669 = vmatprep.mubr.f32.mxu0 0.0
  %6670 = vmatmul.mubr.f32.gmra.mxu0 %v6460
  %v6671 = vpop.f32.mrf.mxu0
  %v6672 = vadd.f32 %v6381, %v6671
  %v6673 = vpop.f32.mrf.mxu0
  %6674 = vmatprep.mubr.f32.mxu0 0.0
  %6675 = vmatmul.mubr.f32.gmra.mxu0 %v6463
  %v6676 = vpop.f32.mrf.mxu0
  %v6677 = vadd.f32 %v6381, %v6676
  %v6678 = vpop.f32.mrf.mxu0
  %6679 = vmatprep.mubr.f32.mxu0 0.0
  %6680 = vmatmul.mubr.f32.gmra.mxu0 %v6466
  %v6681 = vpop.f32.mrf.mxu0
  %v6682 = vadd.f32 %v6381, %v6681
  %v6683 = vpop.f32.mrf.mxu0
  %6684 = vmatprep.mubr.f32.mxu0 0.0
  %6685 = vmatmul.mubr.f32.gmra.mxu0 %v6469
  %v6686 = vpop.f32.mrf.mxu0
  %v6687 = vadd.f32 %v6381, %v6686
  %v6688 = vpop.f32.mrf.mxu0
  %6689 = vmatprep.mubr.f32.mxu0 0.0
  %6690 = vmatmul.mubr.f32.gmra.mxu0 %v6472
  %v6691 = vpop.f32.mrf.mxu0
  %v6692 = vadd.f32 %v6381, %v6691
  %v6693 = vpop.f32.mrf.mxu0
  %6694 = vmatprep.mubr.f32.mxu0 0.0
  %6695 = vmatmul.mubr.f32.gmra.mxu0 %v6475
  %v6696 = vpop.f32.mrf.mxu0
  %v6697 = vadd.f32 %v6381, %v6696
  %v6698 = vpop.f32.mrf.mxu0
  %6699 = vmatprep.mubr.f32.mxu0 0.0
  %6700 = vmatmul.mubr.f32.gmra.mxu0 %v6478
  %v6701 = vpop.f32.mrf.mxu0
  %v6702 = vadd.f32 %v6381, %v6701
  %v6703 = vpop.f32.mrf.mxu0
  %6704 = vdwg.mxu0
  %v6705 = vmax.f32 %v6547, 0.0
  %v6706 = vmax.f32 %v6552, 0.0
  %v6707 = vmax.f32 %v6557, 0.0
  %v6708 = vmax.f32 %v6562, 0.0
  %v6709 = vmax.f32 %v6567, 0.0
  %v6710 = vmax.f32 %v6572, 0.0
  %v6711 = vmax.f32 %v6577, 0.0
  %v6712 = vmax.f32 %v6582, 0.0
  %v6713 = vmax.f32 %v6587, 0.0
  %v6714 = vmax.f32 %v6592, 0.0
  %v6715 = vmax.f32 %v6597, 0.0
  %v6716 = vmax.f32 %v6602, 0.0
  %v6717 = vmax.f32 %v6607, 0.0
  %v6718 = vmax.f32 %v6612, 0.0
  %v6719 = vmax.f32 %v6617, 0.0
  %v6720 = vmax.f32 %v6622, 0.0
  %v6721 = vmax.f32 %v6627, 0.0
  %v6722 = vmax.f32 %v6632, 0.0
  %v6723 = vmax.f32 %v6637, 0.0
  %v6724 = vmax.f32 %v6642, 0.0
  %v6725 = vmax.f32 %v6647, 0.0
  %v6726 = vmax.f32 %v6652, 0.0
  %v6727 = vmax.f32 %v6657, 0.0
  %v6728 = vmax.f32 %v6662, 0.0
  %v6729 = vmax.f32 %v6667, 0.0
  %v6730 = vmax.f32 %v6672, 0.0
  %v6731 = vmax.f32 %v6677, 0.0
  %v6732 = vmax.f32 %v6682, 0.0
  %v6733 = vmax.f32 %v6687, 0.0
  %v6734 = vmax.f32 %v6692, 0.0
  %v6735 = vmax.f32 %v6697, 0.0
  %v6736 = vmax.f32 %v6702, 0.0
  %v6737 = vxor.u32 %v6547, 2147483648
  %v6738 = vxor.u32 %v6552, 2147483648
  %v6739 = vxor.u32 %v6557, 2147483648
  %v6740 = vxor.u32 %v6562, 2147483648
  %v6741 = vxor.u32 %v6567, 2147483648
  %v6742 = vxor.u32 %v6572, 2147483648
  %v6743 = vxor.u32 %v6577, 2147483648
  %v6744 = vxor.u32 %v6582, 2147483648
  %v6745 = vxor.u32 %v6587, 2147483648
  %v6746 = vxor.u32 %v6592, 2147483648
  %v6747 = vxor.u32 %v6597, 2147483648
  %v6748 = vxor.u32 %v6602, 2147483648
  %v6749 = vxor.u32 %v6607, 2147483648
  %v6750 = vxor.u32 %v6612, 2147483648
  %v6751 = vxor.u32 %v6617, 2147483648
  %v6752 = vxor.u32 %v6622, 2147483648
  %v6753 = vxor.u32 %v6627, 2147483648
  %v6754 = vxor.u32 %v6632, 2147483648
  %v6755 = vxor.u32 %v6637, 2147483648
  %v6756 = vxor.u32 %v6642, 2147483648
  %v6757 = vxor.u32 %v6647, 2147483648
  %v6758 = vxor.u32 %v6652, 2147483648
  %v6759 = vxor.u32 %v6657, 2147483648
  %v6760 = vxor.u32 %v6662, 2147483648
  %v6761 = vxor.u32 %v6667, 2147483648
  %v6762 = vxor.u32 %v6672, 2147483648
  %v6763 = vxor.u32 %v6677, 2147483648
  %v6764 = vxor.u32 %v6682, 2147483648
  %v6765 = vxor.u32 %v6687, 2147483648
  %v6766 = vxor.u32 %v6692, 2147483648
  %v6767 = vxor.u32 %v6697, 2147483648
  %v6768 = vxor.u32 %v6702, 2147483648
  %v6769 = vmul.f32 %v6737, 1.442695
  %v6770 = vpow.pop %v6769
  %v6771 = vmul.f32 %v6738, 1.442695
  %v6772 = vpow.pop %v6771
  %v6773 = vmul.f32 %v6739, 1.442695
  %v6774 = vpow.pop %v6773
  %v6775 = vmul.f32 %v6740, 1.442695
  %v6776 = vpow.pop %v6775
  %v6777 = vmul.f32 %v6741, 1.442695
  %v6778 = vpow.pop %v6777
  %v6779 = vmul.f32 %v6742, 1.442695
  %v6780 = vpow.pop %v6779
  %v6781 = vmul.f32 %v6743, 1.442695
  %v6782 = vpow.pop %v6781
  %v6783 = vmul.f32 %v6744, 1.442695
  %v6784 = vpow.pop %v6783
  %v6785 = vmul.f32 %v6745, 1.442695
  %v6786 = vpow.pop %v6785
  %v6787 = vmul.f32 %v6746, 1.442695
  %v6788 = vpow.pop %v6787
  %v6789 = vmul.f32 %v6747, 1.442695
  %v6790 = vpow.pop %v6789
  %v6791 = vmul.f32 %v6748, 1.442695
  %v6792 = vpow.pop %v6791
  %v6793 = vmul.f32 %v6749, 1.442695
  %v6794 = vpow.pop %v6793
  %v6795 = vmul.f32 %v6750, 1.442695
  %v6796 = vpow.pop %v6795
  %v6797 = vmul.f32 %v6751, 1.442695
  %v6798 = vpow.pop %v6797
  %v6799 = vmul.f32 %v6752, 1.442695
  %v6800 = vpow.pop %v6799
  %v6801 = vmul.f32 %v6753, 1.442695
  %v6802 = vpow.pop %v6801
  %v6803 = vmul.f32 %v6754, 1.442695
  %v6804 = vpow.pop %v6803
  %v6805 = vmul.f32 %v6755, 1.442695
  %v6806 = vpow.pop %v6805
  %v6807 = vmul.f32 %v6756, 1.442695
  %v6808 = vpow.pop %v6807
  %v6809 = vmul.f32 %v6757, 1.442695
  %v6810 = vpow.pop %v6809
  %v6811 = vmul.f32 %v6758, 1.442695
  %v6812 = vpow.pop %v6811
  %v6813 = vmul.f32 %v6759, 1.442695
  %v6814 = vpow.pop %v6813
  %v6815 = vmul.f32 %v6760, 1.442695
  %v6816 = vpow.pop %v6815
  %v6817 = vmul.f32 %v6761, 1.442695
  %v6818 = vpow.pop %v6817
  %v6819 = vmul.f32 %v6762, 1.442695
  %v6820 = vpow.pop %v6819
  %v6821 = vmul.f32 %v6763, 1.442695
  %v6822 = vpow.pop %v6821
  %v6823 = vmul.f32 %v6764, 1.442695
  %v6824 = vpow.pop %v6823
  %v6825 = vmul.f32 %v6765, 1.442695
  %v6826 = vpow.pop %v6825
  %v6827 = vmul.f32 %v6766, 1.442695
  %v6828 = vpow.pop %v6827
  %v6829 = vmul.f32 %v6767, 1.442695
  %v6830 = vpow.pop %v6829
  %v6831 = vmul.f32 %v6768, 1.442695
  %v6832 = vpow.pop %v6831
  %v6833 = vadd.f32 %v6770, 1.0
  %v6834 = vadd.f32 %v6772, 1.0
  %v6835 = vadd.f32 %v6774, 1.0
  %v6836 = vadd.f32 %v6776, 1.0
  %v6837 = vadd.f32 %v6778, 1.0
  %v6838 = vadd.f32 %v6780, 1.0
  %v6839 = vadd.f32 %v6782, 1.0
  %v6840 = vadd.f32 %v6784, 1.0
  %v6841 = vadd.f32 %v6786, 1.0
  %v6842 = vadd.f32 %v6788, 1.0
  %v6843 = vadd.f32 %v6790, 1.0
  %v6844 = vadd.f32 %v6792, 1.0
  %v6845 = vadd.f32 %v6794, 1.0
  %v6846 = vadd.f32 %v6796, 1.0
  %v6847 = vadd.f32 %v6798, 1.0
  %v6848 = vadd.f32 %v6800, 1.0
  %v6849 = vadd.f32 %v6802, 1.0
  %v6850 = vadd.f32 %v6804, 1.0
  %v6851 = vadd.f32 %v6806, 1.0
  %v6852 = vadd.f32 %v6808, 1.0
  %v6853 = vadd.f32 %v6810, 1.0
  %v6854 = vadd.f32 %v6812, 1.0
  %v6855 = vadd.f32 %v6814, 1.0
  %v6856 = vadd.f32 %v6816, 1.0
  %v6857 = vadd.f32 %v6818, 1.0
  %v6858 = vadd.f32 %v6820, 1.0
  %v6859 = vadd.f32 %v6822, 1.0
  %v6860 = vadd.f32 %v6824, 1.0
  %v6861 = vadd.f32 %v6826, 1.0
  %v6862 = vadd.f32 %v6828, 1.0
  %v6863 = vadd.f32 %v6830, 1.0
  %v6864 = vadd.f32 %v6832, 1.0
  %v6865 = vrcp.pop %v6833
  %v6866 = vmul.f32 1.0, %v6865
  %v6867 = vrcp.pop %v6834
  %v6868 = vmul.f32 1.0, %v6867
  %v6869 = vrcp.pop %v6835
  %v6870 = vmul.f32 1.0, %v6869
  %v6871 = vrcp.pop %v6836
  %v6872 = vmul.f32 1.0, %v6871
  %v6873 = vrcp.pop %v6837
  %v6874 = vmul.f32 1.0, %v6873
  %v6875 = vrcp.pop %v6838
  %v6876 = vmul.f32 1.0, %v6875
  %v6877 = vrcp.pop %v6839
  %v6878 = vmul.f32 1.0, %v6877
  %v6879 = vrcp.pop %v6840
  %v6880 = vmul.f32 1.0, %v6879
  %v6881 = vrcp.pop %v6841
  %v6882 = vmul.f32 1.0, %v6881
  %v6883 = vrcp.pop %v6842
  %v6884 = vmul.f32 1.0, %v6883
  %v6885 = vrcp.pop %v6843
  %v6886 = vmul.f32 1.0, %v6885
  %v6887 = vrcp.pop %v6844
  %v6888 = vmul.f32 1.0, %v6887
  %v6889 = vrcp.pop %v6845
  %v6890 = vmul.f32 1.0, %v6889
  %v6891 = vrcp.pop %v6846
  %v6892 = vmul.f32 1.0, %v6891
  %v6893 = vrcp.pop %v6847
  %v6894 = vmul.f32 1.0, %v6893
  %v6895 = vrcp.pop %v6848
  %v6896 = vmul.f32 1.0, %v6895
  %v6897 = vrcp.pop %v6849
  %v6898 = vmul.f32 1.0, %v6897
  %v6899 = vrcp.pop %v6850
  %v6900 = vmul.f32 1.0, %v6899
  %v6901 = vrcp.pop %v6851
  %v6902 = vmul.f32 1.0, %v6901
  %v6903 = vrcp.pop %v6852
  %v6904 = vmul.f32 1.0, %v6903
  %v6905 = vrcp.pop %v6853
  %v6906 = vmul.f32 1.0, %v6905
  %v6907 = vrcp.pop %v6854
  %v6908 = vmul.f32 1.0, %v6907
  %v6909 = vrcp.pop %v6855
  %v6910 = vmul.f32 1.0, %v6909
  %v6911 = vrcp.pop %v6856
  %v6912 = vmul.f32 1.0, %v6911
  %v6913 = vrcp.pop %v6857
  %v6914 = vmul.f32 1.0, %v6913
  %v6915 = vrcp.pop %v6858
  %v6916 = vmul.f32 1.0, %v6915
  %v6917 = vrcp.pop %v6859
  %v6918 = vmul.f32 1.0, %v6917
  %v6919 = vrcp.pop %v6860
  %v6920 = vmul.f32 1.0, %v6919
  %v6921 = vrcp.pop %v6861
  %v6922 = vmul.f32 1.0, %v6921
  %v6923 = vrcp.pop %v6862
  %v6924 = vmul.f32 1.0, %v6923
  %v6925 = vrcp.pop %v6863
  %v6926 = vmul.f32 1.0, %v6925
  %v6927 = vrcp.pop %v6864
  %v6928 = vmul.f32 1.0, %v6927
  %6961 = vrot.lane.b32.xlu0 %v6705, 32
  %v6962 = vpop.permute.xlu0 %6961
  %6963 = vrot.lane.b32.xlu0 %v6706, 32
  %v6964 = vpop.permute.xlu0 %6963
  %6965 = vrot.lane.b32.xlu0 %v6707, 32
  %v6966 = vpop.permute.xlu0 %6965
  %6967 = vrot.lane.b32.xlu0 %v6708, 32
  %v6968 = vpop.permute.xlu0 %6967
  %6969 = vrot.lane.b32.xlu0 %v6709, 32
  %v6970 = vpop.permute.xlu0 %6969
  %6971 = vrot.lane.b32.xlu0 %v6710, 32
  %v6972 = vpop.permute.xlu0 %6971
  %6973 = vrot.lane.b32.xlu0 %v6711, 32
  %v6974 = vpop.permute.xlu0 %6973
  %6975 = vrot.lane.b32.xlu0 %v6712, 32
  %v6976 = vpop.permute.xlu0 %6975
  %6977 = vrot.lane.b32.xlu0 %v6713, 32
  %v6978 = vpop.permute.xlu0 %6977
  %6979 = vrot.lane.b32.xlu0 %v6714, 32
  %v6980 = vpop.permute.xlu0 %6979
  %6981 = vrot.lane.b32.xlu0 %v6715, 32
  %v6982 = vpop.permute.xlu0 %6981
  %6983 = vrot.lane.b32.xlu0 %v6716, 32
  %v6984 = vpop.permute.xlu0 %6983
  %6985 = vrot.lane.b32.xlu0 %v6717, 32
  %v6986 = vpop.permute.xlu0 %6985
  %6987 = vrot.lane.b32.xlu0 %v6718, 32
  %v6988 = vpop.permute.xlu0 %6987
  %6989 = vrot.lane.b32.xlu0 %v6719, 32
  %v6990 = vpop.permute.xlu0 %6989
  %6991 = vrot.lane.b32.xlu0 %v6720, 32
  %v6992 = vpop.permute.xlu0 %6991
  %6993 = vrot.lane.b32.xlu0 %v6721, 32
  %v6994 = vpop.permute.xlu0 %6993
  %6995 = vrot.lane.b32.xlu0 %v6722, 32
  %v6996 = vpop.permute.xlu0 %6995
  %6997 = vrot.lane.b32.xlu0 %v6723, 32
  %v6998 = vpop.permute.xlu0 %6997
  %6999 = vrot.lane.b32.xlu0 %v6724, 32
  %v7000 = vpop.permute.xlu0 %6999
  %7001 = vrot.lane.b32.xlu0 %v6725, 32
  %v7002 = vpop.permute.xlu0 %7001
  %7003 = vrot.lane.b32.xlu0 %v6726, 32
  %v7004 = vpop.permute.xlu0 %7003
  %7005 = vrot.lane.b32.xlu0 %v6727, 32
  %v7006 = vpop.permute.xlu0 %7005
  %7007 = vrot.lane.b32.xlu0 %v6728, 32
  %v7008 = vpop.permute.xlu0 %7007
  %7009 = vrot.lane.b32.xlu0 %v6729, 32
  %v7010 = vpop.permute.xlu0 %7009
  %7011 = vrot.lane.b32.xlu0 %v6730, 32
  %v7012 = vpop.permute.xlu0 %7011
  %7013 = vrot.lane.b32.xlu0 %v6731, 32
  %v7014 = vpop.permute.xlu0 %7013
  %7015 = vrot.lane.b32.xlu0 %v6732, 32
  %v7016 = vpop.permute.xlu0 %7015
  %7017 = vrot.lane.b32.xlu0 %v6733, 32
  %v7018 = vpop.permute.xlu0 %7017
  %7019 = vrot.lane.b32.xlu0 %v6734, 32
  %v7020 = vpop.permute.xlu0 %7019
  %7021 = vrot.lane.b32.xlu0 %v6735, 32
  %v7022 = vpop.permute.xlu0 %7021
  %7023 = vrot.lane.b32.xlu0 %v6736, 32
  %v7024 = vpop.permute.xlu0 %7023
  %v7057 = vmul.f32 %v6866, %v6962
  %v7058 = vmul.f32 %v6868, %v6964
  %v7059 = vmul.f32 %v6870, %v6966
  %v7060 = vmul.f32 %v6872, %v6968
  %v7061 = vmul.f32 %v6874, %v6970
  %v7062 = vmul.f32 %v6876, %v6972
  %v7063 = vmul.f32 %v6878, %v6974
  %v7064 = vmul.f32 %v6880, %v6976
  %v7065 = vmul.f32 %v6882, %v6978
  %v7066 = vmul.f32 %v6884, %v6980
  %v7067 = vmul.f32 %v6886, %v6982
  %v7068 = vmul.f32 %v6888, %v6984
  %v7069 = vmul.f32 %v6890, %v6986
  %v7070 = vmul.f32 %v6892, %v6988
  %v7071 = vmul.f32 %v6894, %v6990
  %v7072 = vmul.f32 %v6896, %v6992
  %v7073 = vmul.f32 %v6898, %v6994
  %v7074 = vmul.f32 %v6900, %v6996
  %v7075 = vmul.f32 %v6902, %v6998
  %v7076 = vmul.f32 %v6904, %v7000
  %v7077 = vmul.f32 %v6906, %v7002
  %v7078 = vmul.f32 %v6908, %v7004
  %v7079 = vmul.f32 %v6910, %v7006
  %v7080 = vmul.f32 %v6912, %v7008
  %v7081 = vmul.f32 %v6914, %v7010
  %v7082 = vmul.f32 %v6916, %v7012
  %v7083 = vmul.f32 %v6918, %v7014
  %v7084 = vmul.f32 %v6920, %v7016
  %v7085 = vmul.f32 %v6922, %v7018
  %v7086 = vmul.f32 %v6924, %v7020
  %v7087 = vmul.f32 %v6926, %v7022
  %v7088 = vmul.f32 %v6928, %v7024
  %v7089 = vsub.f32 1.0, %v6866
  %v7090 = vsub.f32 1.0, %v6868
  %v7091 = vsub.f32 1.0, %v6870
  %v7092 = vsub.f32 1.0, %v6872
  %v7093 = vsub.f32 1.0, %v6874
  %v7094 = vsub.f32 1.0, %v6876
  %v7095 = vsub.f32 1.0, %v6878
  %v7096 = vsub.f32 1.0, %v6880
  %v7097 = vsub.f32 1.0, %v6882
  %v7098 = vsub.f32 1.0, %v6884
  %v7099 = vsub.f32 1.0, %v6886
  %v7100 = vsub.f32 1.0, %v6888
  %v7101 = vsub.f32 1.0, %v6890
  %v7102 = vsub.f32 1.0, %v6892
  %v7103 = vsub.f32 1.0, %v6894
  %v7104 = vsub.f32 1.0, %v6896
  %v7105 = vsub.f32 1.0, %v6898
  %v7106 = vsub.f32 1.0, %v6900
  %v7107 = vsub.f32 1.0, %v6902
  %v7108 = vsub.f32 1.0, %v6904
  %v7109 = vsub.f32 1.0, %v6906
  %v7110 = vsub.f32 1.0, %v6908
  %v7111 = vsub.f32 1.0, %v6910
  %v7112 = vsub.f32 1.0, %v6912
  %v7113 = vsub.f32 1.0, %v6914
  %v7114 = vsub.f32 1.0, %v6916
  %v7115 = vsub.f32 1.0, %v6918
  %v7116 = vsub.f32 1.0, %v6920
  %v7117 = vsub.f32 1.0, %v6922
  %v7118 = vsub.f32 1.0, %v6924
  %v7119 = vsub.f32 1.0, %v6926
  %v7120 = vsub.f32 1.0, %v6928
  %7121 = vrot.lane.b32.xlu0 %v6340, 32
  %v7122 = vpop.permute.xlu0 %7121
  %7123 = vrot.lane.b32.xlu0 %v6341, 32
  %v7124 = vpop.permute.xlu0 %7123
  %7125 = vrot.lane.b32.xlu0 %v6342, 32
  %v7126 = vpop.permute.xlu0 %7125
  %7127 = vrot.lane.b32.xlu0 %v6343, 32
  %v7128 = vpop.permute.xlu0 %7127
  %7129 = vrot.lane.b32.xlu0 %v6344, 32
  %v7130 = vpop.permute.xlu0 %7129
  %7131 = vrot.lane.b32.xlu0 %v6345, 32
  %v7132 = vpop.permute.xlu0 %7131
  %7133 = vrot.lane.b32.xlu0 %v6346, 32
  %v7134 = vpop.permute.xlu0 %7133
  %7135 = vrot.lane.b32.xlu0 %v6347, 32
  %v7136 = vpop.permute.xlu0 %7135
  %7137 = vrot.lane.b32.xlu0 %v6348, 32
  %v7138 = vpop.permute.xlu0 %7137
  %7139 = vrot.lane.b32.xlu0 %v6349, 32
  %v7140 = vpop.permute.xlu0 %7139
  %7141 = vrot.lane.b32.xlu0 %v6350, 32
  %v7142 = vpop.permute.xlu0 %7141
  %7143 = vrot.lane.b32.xlu0 %v6351, 32
  %v7144 = vpop.permute.xlu0 %7143
  %7145 = vrot.lane.b32.xlu0 %v6352, 32
  %v7146 = vpop.permute.xlu0 %7145
  %7147 = vrot.lane.b32.xlu0 %v6353, 32
  %v7148 = vpop.permute.xlu0 %7147
  %7149 = vrot.lane.b32.xlu0 %v6354, 32
  %v7150 = vpop.permute.xlu0 %7149
  %7151 = vrot.lane.b32.xlu0 %v6355, 32
  %v7152 = vpop.permute.xlu0 %7151
  %7153 = vrot.lane.b32.xlu0 %v6356, 32
  %v7154 = vpop.permute.xlu0 %7153
  %7155 = vrot.lane.b32.xlu0 %v6357, 32
  %v7156 = vpop.permute.xlu0 %7155
  %7157 = vrot.lane.b32.xlu0 %v6358, 32
  %v7158 = vpop.permute.xlu0 %7157
  %7159 = vrot.lane.b32.xlu0 %v6359, 32
  %v7160 = vpop.permute.xlu0 %7159
  %7161 = vrot.lane.b32.xlu0 %v6360, 32
  %v7162 = vpop.permute.xlu0 %7161
  %7163 = vrot.lane.b32.xlu0 %v6361, 32
  %v7164 = vpop.permute.xlu0 %7163
  %7165 = vrot.lane.b32.xlu0 %v6362, 32
  %v7166 = vpop.permute.xlu0 %7165
  %7167 = vrot.lane.b32.xlu0 %v6363, 32
  %v7168 = vpop.permute.xlu0 %7167
  %7169 = vrot.lane.b32.xlu0 %v6364, 32
  %v7170 = vpop.permute.xlu0 %7169
  %7171 = vrot.lane.b32.xlu0 %v6365, 32
  %v7172 = vpop.permute.xlu0 %7171
  %7173 = vrot.lane.b32.xlu0 %v6366, 32
  %v7174 = vpop.permute.xlu0 %7173
  %7175 = vrot.lane.b32.xlu0 %v6367, 32
  %v7176 = vpop.permute.xlu0 %7175
  %7177 = vrot.lane.b32.xlu0 %v6368, 32
  %v7178 = vpop.permute.xlu0 %7177
  %7179 = vrot.lane.b32.xlu0 %v6369, 32
  %v7180 = vpop.permute.xlu0 %7179
  %7181 = vrot.lane.b32.xlu0 %v6370, 32
  %v7182 = vpop.permute.xlu0 %7181
  %7183 = vrot.lane.b32.xlu0 %v6371, 32
  %v7184 = vpop.permute.xlu0 %7183
  %v7217 = vmul.f32 %v7089, %v7122
  %v7218 = vmul.f32 %v7090, %v7124
  %v7219 = vmul.f32 %v7091, %v7126
  %v7220 = vmul.f32 %v7092, %v7128
  %v7221 = vmul.f32 %v7093, %v7130
  %v7222 = vmul.f32 %v7094, %v7132
  %v7223 = vmul.f32 %v7095, %v7134
  %v7224 = vmul.f32 %v7096, %v7136
  %v7225 = vmul.f32 %v7097, %v7138
  %v7226 = vmul.f32 %v7098, %v7140
  %v7227 = vmul.f32 %v7099, %v7142
  %v7228 = vmul.f32 %v7100, %v7144
  %v7229 = vmul.f32 %v7101, %v7146
  %v7230 = vmul.f32 %v7102, %v7148
  %v7231 = vmul.f32 %v7103, %v7150
  %v7232 = vmul.f32 %v7104, %v7152
  %v7233 = vmul.f32 %v7105, %v7154
  %v7234 = vmul.f32 %v7106, %v7156
  %v7235 = vmul.f32 %v7107, %v7158
  %v7236 = vmul.f32 %v7108, %v7160
  %v7237 = vmul.f32 %v7109, %v7162
  %v7238 = vmul.f32 %v7110, %v7164
  %v7239 = vmul.f32 %v7111, %v7166
  %v7240 = vmul.f32 %v7112, %v7168
  %v7241 = vmul.f32 %v7113, %v7170
  %v7242 = vmul.f32 %v7114, %v7172
  %v7243 = vmul.f32 %v7115, %v7174
  %v7244 = vmul.f32 %v7116, %v7176
  %v7245 = vmul.f32 %v7117, %v7178
  %v7246 = vmul.f32 %v7118, %v7180
  %v7247 = vmul.f32 %v7119, %v7182
  %v7248 = vmul.f32 %v7120, %v7184
  %v7249 = vadd.f32 %v7057, %v7217
  %v7250 = vadd.f32 %v7058, %v7218
  %v7251 = vadd.f32 %v7059, %v7219
  %v7252 = vadd.f32 %v7060, %v7220
  %v7253 = vadd.f32 %v7061, %v7221
  %v7254 = vadd.f32 %v7062, %v7222
  %v7255 = vadd.f32 %v7063, %v7223
  %v7256 = vadd.f32 %v7064, %v7224
  %v7257 = vadd.f32 %v7065, %v7225
  %v7258 = vadd.f32 %v7066, %v7226
  %v7259 = vadd.f32 %v7067, %v7227
  %v7260 = vadd.f32 %v7068, %v7228
  %v7261 = vadd.f32 %v7069, %v7229
  %v7262 = vadd.f32 %v7070, %v7230
  %v7263 = vadd.f32 %v7071, %v7231
  %v7264 = vadd.f32 %v7072, %v7232
  %v7265 = vadd.f32 %v7073, %v7233
  %v7266 = vadd.f32 %v7074, %v7234
  %v7267 = vadd.f32 %v7075, %v7235
  %v7268 = vadd.f32 %v7076, %v7236
  %v7269 = vadd.f32 %v7077, %v7237
  %v7270 = vadd.f32 %v7078, %v7238
  %v7271 = vadd.f32 %v7079, %v7239
  %v7272 = vadd.f32 %v7080, %v7240
  %v7273 = vadd.f32 %v7081, %v7241
  %v7274 = vadd.f32 %v7082, %v7242
  %v7275 = vadd.f32 %v7083, %v7243
  %v7276 = vadd.f32 %v7084, %v7244
  %v7277 = vadd.f32 %v7085, %v7245
  %v7278 = vadd.f32 %v7086, %v7246
  %v7279 = vadd.f32 %v7087, %v7247
  %v7280 = vadd.f32 %v7088, %v7248
  %7313 = vrot.lane.b32.xlu0 %v7249, 96
  %v7314 = vpop.permute.xlu0 %7313
  %7315 = vrot.lane.b32.xlu0 %v7250, 96
  %v7316 = vpop.permute.xlu0 %7315
  %7317 = vrot.lane.b32.xlu0 %v7251, 96
  %v7318 = vpop.permute.xlu0 %7317
  %7319 = vrot.lane.b32.xlu0 %v7252, 96
  %v7320 = vpop.permute.xlu0 %7319
  %7321 = vrot.lane.b32.xlu0 %v7253, 96
  %v7322 = vpop.permute.xlu0 %7321
  %7323 = vrot.lane.b32.xlu0 %v7254, 96
  %v7324 = vpop.permute.xlu0 %7323
  %7325 = vrot.lane.b32.xlu0 %v7255, 96
  %v7326 = vpop.permute.xlu0 %7325
  %7327 = vrot.lane.b32.xlu0 %v7256, 96
  %v7328 = vpop.permute.xlu0 %7327
  %7329 = vrot.lane.b32.xlu0 %v7257, 96
  %v7330 = vpop.permute.xlu0 %7329
  %7331 = vrot.lane.b32.xlu0 %v7258, 96
  %v7332 = vpop.permute.xlu0 %7331
  %7333 = vrot.lane.b32.xlu0 %v7259, 96
  %v7334 = vpop.permute.xlu0 %7333
  %7335 = vrot.lane.b32.xlu0 %v7260, 96
  %v7336 = vpop.permute.xlu0 %7335
  %7337 = vrot.lane.b32.xlu0 %v7261, 96
  %v7338 = vpop.permute.xlu0 %7337
  %7339 = vrot.lane.b32.xlu0 %v7262, 96
  %v7340 = vpop.permute.xlu0 %7339
  %7341 = vrot.lane.b32.xlu0 %v7263, 96
  %v7342 = vpop.permute.xlu0 %7341
  %7343 = vrot.lane.b32.xlu0 %v7264, 96
  %v7344 = vpop.permute.xlu0 %7343
  %7345 = vrot.lane.b32.xlu0 %v7265, 96
  %v7346 = vpop.permute.xlu0 %7345
  %7347 = vrot.lane.b32.xlu0 %v7266, 96
  %v7348 = vpop.permute.xlu0 %7347
  %7349 = vrot.lane.b32.xlu0 %v7267, 96
  %v7350 = vpop.permute.xlu0 %7349
  %7351 = vrot.lane.b32.xlu0 %v7268, 96
  %v7352 = vpop.permute.xlu0 %7351
  %7353 = vrot.lane.b32.xlu0 %v7269, 96
  %v7354 = vpop.permute.xlu0 %7353
  %7355 = vrot.lane.b32.xlu0 %v7270, 96
  %v7356 = vpop.permute.xlu0 %7355
  %7357 = vrot.lane.b32.xlu0 %v7271, 96
  %v7358 = vpop.permute.xlu0 %7357
  %7359 = vrot.lane.b32.xlu0 %v7272, 96
  %v7360 = vpop.permute.xlu0 %7359
  %7361 = vrot.lane.b32.xlu0 %v7273, 96
  %v7362 = vpop.permute.xlu0 %7361
  %7363 = vrot.lane.b32.xlu0 %v7274, 96
  %v7364 = vpop.permute.xlu0 %7363
  %7365 = vrot.lane.b32.xlu0 %v7275, 96
  %v7366 = vpop.permute.xlu0 %7365
  %7367 = vrot.lane.b32.xlu0 %v7276, 96
  %v7368 = vpop.permute.xlu0 %7367
  %7369 = vrot.lane.b32.xlu0 %v7277, 96
  %v7370 = vpop.permute.xlu0 %7369
  %7371 = vrot.lane.b32.xlu0 %v7278, 96
  %v7372 = vpop.permute.xlu0 %7371
  %7373 = vrot.lane.b32.xlu0 %v7279, 96
  %v7374 = vpop.permute.xlu0 %7373
  %7375 = vrot.lane.b32.xlu0 %v7280, 96
  %v7376 = vpop.permute.xlu0 %7375
  %7409 = vst.msk [vmem:[%s7] sm:$0xff] %vm6383, %v7314
  %7410 = vst.msk [vmem:[%s7 + $0x8] sm:$0xff] %vm6383, %v7316
  %7411 = vst.msk [vmem:[%s7 + $0x10] sm:$0xff] %vm6383, %v7318
  %7412 = vst.msk [vmem:[%s7 + $0x18] sm:$0xff] %vm6383, %v7320
  %7413 = vst.msk [vmem:[%s7 + $0x20] sm:$0xff] %vm6383, %v7322
  %7414 = vst.msk [vmem:[%s7 + $0x28] sm:$0xff] %vm6383, %v7324
  %7415 = vst.msk [vmem:[%s7 + $0x30] sm:$0xff] %vm6383, %v7326
  %7416 = vst.msk [vmem:[%s7 + $0x38] sm:$0xff] %vm6383, %v7328
  %7417 = vst.msk [vmem:[%s7 + $0x40] sm:$0xff] %vm6383, %v7330
  %7418 = vst.msk [vmem:[%s7 + $0x48] sm:$0xff] %vm6383, %v7332
  %7419 = vst.msk [vmem:[%s7 + $0x50] sm:$0xff] %vm6383, %v7334
  %7420 = vst.msk [vmem:[%s7 + $0x58] sm:$0xff] %vm6383, %v7336
  %7421 = vst.msk [vmem:[%s7 + $0x60] sm:$0xff] %vm6383, %v7338
  %7422 = vst.msk [vmem:[%s7 + $0x68] sm:$0xff] %vm6383, %v7340
  %7423 = vst.msk [vmem:[%s7 + $0x70] sm:$0xff] %vm6383, %v7342
  %7424 = vst.msk [vmem:[%s7 + $0x78] sm:$0xff] %vm6383, %v7344
  %7425 = vst.msk [vmem:[%s7 + $0x80] sm:$0xff] %vm6383, %v7346
  %7426 = vst.msk [vmem:[%s7 + $0x88] sm:$0xff] %vm6383, %v7348
  %7427 = vst.msk [vmem:[%s7 + $0x90] sm:$0xff] %vm6383, %v7350
  %7428 = vst.msk [vmem:[%s7 + $0x98] sm:$0xff] %vm6383, %v7352
  %7429 = vst.msk [vmem:[%s7 + $0xa0] sm:$0xff] %vm6383, %v7354
  %7430 = vst.msk [vmem:[%s7 + $0xa8] sm:$0xff] %vm6383, %v7356
  %7431 = vst.msk [vmem:[%s7 + $0xb0] sm:$0xff] %vm6383, %v7358
  %7432 = vst.msk [vmem:[%s7 + $0xb8] sm:$0xff] %vm6383, %v7360
  %7433 = vst.msk [vmem:[%s7 + $0xc0] sm:$0xff] %vm6383, %v7362
  %7434 = vst.msk [vmem:[%s7 + $0xc8] sm:$0xff] %vm6383, %v7364
  %7435 = vst.msk [vmem:[%s7 + $0xd0] sm:$0xff] %vm6383, %v7366
  %7436 = vst.msk [vmem:[%s7 + $0xd8] sm:$0xff] %vm6383, %v7368
  %7437 = vst.msk [vmem:[%s7 + $0xe0] sm:$0xff] %vm6383, %v7370
  %7438 = vst.msk [vmem:[%s7 + $0xe8] sm:$0xff] %vm6383, %v7372
  %7439 = vst.msk [vmem:[%s7 + $0xf0] sm:$0xff] %vm6383, %v7374
  %7440 = vst.msk [vmem:[%s7 + $0xf8] sm:$0xff] %vm6383, %v7376
  // Predicated region
  $region30: #{model_embeddings_forward.1} parent=0 // pred_check
    _
  $region31: #{model_embeddings_forward.1} parent=0 // pred_check_branch
    %7442 = sbr.rel (0) target = $region33
  $region32: #{model_embeddings_forward.1} parent=0 // pred_region
    _
  $region33: #{model_embeddings_forward.1} parent=0 // pred_fallthru
    _
  // Predicated region
  $region34: #{model_embeddings_forward.1} parent=0 // pred_check
    _
  $region35: #{model_embeddings_forward.1} parent=0 // pred_check_branch
    %7444 = sbr.rel (0) target = $region37
  $region36: #{model_embeddings_forward.1} parent=0 // pred_region
    _
  $region37: #{model_embeddings_forward.1} parent=0 // pred_fallthru
    _

</llo_original>
